<compile_context>
chip_gen: v6e
topology: v6e:2x2x1
jax: 0.10.0
libtpu: 0.0.40
codegen_flags: <defaults>
</compile_context>

<pallas_src>
import jax
import jax.numpy as jnp
from jax.experimental import pallas as pl
from jax.experimental.pallas import tpu as pltpu


def _sigmoid(x):
    # sigmoid(x) == 0.5 * tanh(0.5 * x) + 0.5  -> single EUP tanh per gate.
    return 0.5 * jnp.tanh(0.5 * x) + 0.5


# ------------------------------ fused forward kernel -------------------------
def _make_fused_kernel(num_layers: int, T: int, Bt: int, H: int):
    """Fused LSTM-stack + FC-head kernel body for one batch tile.

    Ref layout (all VMEM blocks):
      x_ref                          (T, Bt, D)   time-major, f32
      per layer l: wih_l (D_l, 4H) bf16, whh_l (H, 4H) bf16, b_l (1, 4H) f32
      fw1 (H, H/2) bf16, fb1 (1, H/2) f32, fw2 (H/2, 1) bf16, fb2 (1, 1) f32
      o_ref                          (Bt, 1) f32
      scratch: seq   (T*Bt, H)  f32  inter-layer activations (reused in place)
               xproj (T*Bt, 4H) f32  hoisted input projection of current layer
    """

    def kernel(*refs):
        x_ref = refs[0]
        lstm_refs = refs[1:1 + 3 * num_layers]
        fw1_ref, fb1_ref, fw2_ref, fb2_ref = refs[1 + 3 * num_layers:5 + 3 * num_layers]
        o_ref = refs[5 + 3 * num_layers]
        seq, xproj = refs[6 + 3 * num_layers:8 + 3 * num_layers]

        h = jnp.zeros((Bt, H), jnp.float32)

        for layer in range(num_layers):
            wih_ref = lstm_refs[3 * layer + 0]
            whh_ref = lstm_refs[3 * layer + 1]
            b_ref = lstm_refs[3 * layer + 2]

            # Hoisted input projection (one MXU pass per layer, off the serial path).
            if layer == 0:
                # K = input_dim (tiny); do it per timestep so x stays 3-D and blockable.
                for t in range(T):
                    xt = x_ref[t].astype(jnp.bfloat16)            # (Bt, D)
                    xproj[pl.ds(t * Bt, Bt), :] = (
                        jnp.dot(xt, wih_ref[...],
                                preferred_element_type=jnp.float32)
                        + b_ref[...])
            else:
                # seq holds the previous layer's full (T*Bt, H) output; consume it
                # into xproj *before* this layer overwrites seq in the recurrence.
                xproj[...] = (
                    jnp.dot(seq[...].astype(jnp.bfloat16), wih_ref[...],
                            preferred_element_type=jnp.float32)
                    + b_ref[...])

            last = layer == num_layers - 1
            h = jnp.zeros((Bt, H), jnp.float32)
            c = jnp.zeros((Bt, H), jnp.float32)

            # Time recurrence: fully unrolled (T static & small) -> static, tile-aligned
            # slices and cross-step scheduling visibility.  NOTE: W_hh is fed straight
            # from its ref each step (never hoisted to a value across the unrolled loop:
            # a (128,512) f32 value is the whole vreg file and would spill).
            for t in range(T):
                gates = xproj[pl.ds(t * Bt, Bt), :] + jnp.dot(
                    h.astype(jnp.bfloat16), whh_ref[...],
                    preferred_element_type=jnp.float32)           # (Bt, 4H) f32
                # H == 128 -> each gate slice is a lane-aligned full-vreg chunk.
                i = _sigmoid(gates[:, 0:H])
                f = _sigmoid(gates[:, H:2 * H])
                g = jnp.tanh(gates[:, 2 * H:3 * H])
                o = _sigmoid(gates[:, 3 * H:4 * H])
                c = f * c + i * g
                h = o * jnp.tanh(c)
                if not last:                    # last layer: only h_{T-1} is needed
                    seq[pl.ds(t * Bt, Bt), :] = h
            # Inter-layer dropout: identity in eval mode.

        # FC head on the final hidden state (Dropout inside head = identity, eval).
        z = jnp.dot(h.astype(jnp.bfloat16), fw1_ref[...],
                    preferred_element_type=jnp.float32) + fb1_ref[...]
        z = jnp.maximum(z, 0.0)                 # ReLU
        o_ref[...] = (
            jnp.dot(z.astype(jnp.bfloat16), fw2_ref[...],
                    preferred_element_type=jnp.float32) + fb2_ref[...])

    return kernel


# --------------------------------- wrapper ------------------------------------
def passenger_predictor(x_btd, params, *, block_b: int = 128):
    """x_btd: (B, T, input_dim) float32, batch_first like the PyTorch module."""
    B, T, D = x_btd.shape
    num_layers = len(params["lstm"])
    H = params["lstm"][0]["whh_t"].shape[0]

    # Batch tiling: pad to a sublane multiple and tile so independent batch rows can
    # shard across TensorCores (v7x megacore) as B grows.
    b8 = ((B + 7) // 8) * 8
    Bt = min(block_b, b8)
    Bp = ((b8 + Bt - 1) // Bt) * Bt
    num_tiles = Bp // Bt

    # glue: batch-first -> time-major, pad batch.
    x = jnp.transpose(x_btd, (1, 0, 2))         # (T, B, D)
    if Bp != B:
        x = jnp.pad(x, ((0, 0), (0, Bp - B), (0, 0)))

    def const_spec(arr):                        # weight blocks: same tile every grid step
        zeros = (0,) * arr.ndim
        return pl.BlockSpec(arr.shape, lambda b, _z=zeros: _z)

    inputs = [x]
    in_specs = [pl.BlockSpec((T, Bt, D), lambda b: (0, b, 0))]

    for lp in params["lstm"]:
        wih = lp["wih_t"].astype(jnp.bfloat16)  # bf16 weights: native MXU dtype,
        whh = lp["whh_t"].astype(jnp.bfloat16)  # halves DMA + per-step weight push.
        bb = lp["b"]                            # biases stay f32
        inputs += [wih, whh, bb]
        in_specs += [const_spec(wih), const_spec(whh), const_spec(bb)]

    fcp = params["fc"]
    fw1 = fcp["w1"].astype(jnp.bfloat16)
    fw2 = fcp["w2"].astype(jnp.bfloat16)
    inputs += [fw1, fcp["b1"], fw2, fcp["b2"]]
    in_specs += [const_spec(fw1), const_spec(fcp["b1"]),
                 const_spec(fw2), const_spec(fcp["b2"])]

    out = pl.pallas_call(
        _make_fused_kernel(num_layers, T, Bt, H),
        out_shape=jax.ShapeDtypeStruct((Bp, 1), jnp.float32),
        grid=(num_tiles,),
        in_specs=in_specs,
        out_specs=pl.BlockSpec((Bt, 1), lambda b: (b, 0)),
        scratch_shapes=[
            pltpu.VMEM((T * Bt, H), jnp.float32),        # seq (in-place inter-layer buf)
            pltpu.VMEM((T * Bt, 4 * H), jnp.float32),    # xproj (hoisted projection)
        ],
        compiler_params=pltpu.CompilerParams(
            dimension_semantics=("parallel",)),          # batch tiles -> both v7x TCs
    )(*inputs)
    return out[:B, 0]                                    # .squeeze(-1) -> (B,)


# ------------------------------ parameter setup -------------------------------
def init_params(key, input_dim, hidden_dim, num_layers):
    """PyTorch-style uniform(-1/sqrt(H), 1/sqrt(H)) init, deterministic."""
    bound = 1.0 / jnp.sqrt(jnp.float32(hidden_dim))
    params = {"lstm": []}
    for layer in range(num_layers):
        d_in = input_dim if layer == 0 else hidden_dim
        key, k1, k2, k3, k4 = jax.random.split(key, 5)
        w_ih = jax.random.uniform(k1, (4 * hidden_dim, d_in), jnp.float32, -bound, bound)
        w_hh = jax.random.uniform(k2, (4 * hidden_dim, hidden_dim), jnp.float32, -bound, bound)
        b_ih = jax.random.uniform(k3, (4 * hidden_dim,), jnp.float32, -bound, bound)
        b_hh = jax.random.uniform(k4, (4 * hidden_dim,), jnp.float32, -bound, bound)
        params["lstm"].append(
            {
                "wih_t": w_ih.T,                                # (d_in, 4H), PyTorch gate order [i,f,g,o]
                "whh_t": w_hh.T,                                # (H, 4H)
                "b": (b_ih + b_hh).reshape(1, 4 * hidden_dim),  # (1, 4H)
            }
        )
    h2 = hidden_dim // 2
    key, k1, k2, k3, k4 = jax.random.split(key, 5)
    bnd1 = 1.0 / jnp.sqrt(jnp.float32(hidden_dim))
    bnd2 = 1.0 / jnp.sqrt(jnp.float32(h2))
    params["fc"] = {
        "w1": jax.random.uniform(k1, (hidden_dim, h2), jnp.float32, -bnd1, bnd1),
        "b1": jax.random.uniform(k2, (1, h2), jnp.float32, -bnd1, bnd1),
        "w2": jax.random.uniform(k3, (h2, 1), jnp.float32, -bnd2, bnd2),
        "b2": jax.random.uniform(k4, (1, 1), jnp.float32, -bnd2, bnd2),
    }
    return params


# ----------------------------------- main --------------------------------------
if __name__ == "__main__":
    # hidden_dim=128 / num_layers=3 match the module's ModelConfig defaults.
    B, T, INPUT_DIM, HIDDEN, LAYERS = 2, 8, 4, 128, 3

    key = jax.random.PRNGKey(0)
    kp, kx = jax.random.split(key)
    params = init_params(kp, INPUT_DIM, HIDDEN, LAYERS)
    x = jax.random.normal(kx, (B, T, INPUT_DIM), jnp.float32)

    out = passenger_predictor(x, params)
    out = jax.block_until_ready(out)
    assert out.shape == (B,), out.shape
    assert jnp.all(jnp.isfinite(out))
    print("KERNEL_OK")
</pallas_src>

<mosaic_0001>
module attributes {stable_mosaic.version = 11 : i64} {
  func.func @kernel(%arg0: i32, %arg1: memref<8x8x4xf32, #tpu.memory_space<vmem>>, %arg2: memref<4x512xbf16, #tpu.memory_space<vmem>>, %arg3: memref<128x512xbf16, #tpu.memory_space<vmem>>, %arg4: memref<1x512xf32, #tpu.memory_space<vmem>>, %arg5: memref<128x512xbf16, #tpu.memory_space<vmem>>, %arg6: memref<128x512xbf16, #tpu.memory_space<vmem>>, %arg7: memref<1x512xf32, #tpu.memory_space<vmem>>, %arg8: memref<128x512xbf16, #tpu.memory_space<vmem>>, %arg9: memref<128x512xbf16, #tpu.memory_space<vmem>>, %arg10: memref<1x512xf32, #tpu.memory_space<vmem>>, %arg11: memref<128x64xbf16, #tpu.memory_space<vmem>>, %arg12: memref<1x64xf32, #tpu.memory_space<vmem>>, %arg13: memref<64x1xbf16, #tpu.memory_space<vmem>>, %arg14: memref<1x1xf32, #tpu.memory_space<vmem>>, %arg15: memref<8x1xf32, #tpu.memory_space<vmem>>, %arg16: memref<64x128xf32, #tpu.memory_space<vmem>>, %arg17: memref<64x512xf32, #tpu.memory_space<vmem>>) attributes {dimension_semantics = [#tpu.dimension_semantics<parallel>], iteration_bounds = array<i64: 1>, scalar_prefetch = 0 : i64, scratch_operands = 2 : i64, tpu.core_type = #tpu.core_type<tc>, window_params = [{transform_indices = @transform_0, window_bounds = array<i64: 8, 8, 4>}, {pipeline_mode = #tpu.pipeline_mode<synchronous>, transform_indices = @transform_1, window_bounds = array<i64: 4, 512>}, {pipeline_mode = #tpu.pipeline_mode<synchronous>, transform_indices = @transform_2, window_bounds = array<i64: 128, 512>}, {pipeline_mode = #tpu.pipeline_mode<synchronous>, transform_indices = @transform_3, window_bounds = array<i64: 1, 512>}, {pipeline_mode = #tpu.pipeline_mode<synchronous>, transform_indices = @transform_4, window_bounds = array<i64: 128, 512>}, {pipeline_mode = #tpu.pipeline_mode<synchronous>, transform_indices = @transform_5, window_bounds = array<i64: 128, 512>}, {pipeline_mode = #tpu.pipeline_mode<synchronous>, transform_indices = @transform_6, window_bounds = array<i64: 1, 512>}, {pipeline_mode = #tpu.pipeline_mode<synchronous>, transform_indices = @transform_7, window_bounds = array<i64: 128, 512>}, {pipeline_mode = #tpu.pipeline_mode<synchronous>, transform_indices = @transform_8, window_bounds = array<i64: 128, 512>}, {pipeline_mode = #tpu.pipeline_mode<synchronous>, transform_indices = @transform_9, window_bounds = array<i64: 1, 512>}, {pipeline_mode = #tpu.pipeline_mode<synchronous>, transform_indices = @transform_10, window_bounds = array<i64: 128, 64>}, {pipeline_mode = #tpu.pipeline_mode<synchronous>, transform_indices = @transform_11, window_bounds = array<i64: 1, 64>}, {pipeline_mode = #tpu.pipeline_mode<synchronous>, transform_indices = @transform_12, window_bounds = array<i64: 64, 1>}, {pipeline_mode = #tpu.pipeline_mode<synchronous>, transform_indices = @transform_13, window_bounds = array<i64: 1, 1>}, {transform_indices = @transform_14, window_bounds = array<i64: 8, 1>}]} {
    %c0 = arith.constant 0 : index
    %c0_0 = arith.constant 0 : index
    %c0_1 = arith.constant 0 : index
    %0 = vector.load %arg1[%c0, %c0_0, %c0_1] : memref<8x8x4xf32, #tpu.memory_space<vmem>>, vector<1x8x4xf32>
    %1 = vector.shape_cast %0 : vector<1x8x4xf32> to vector<8x4xf32>
    %2 = arith.truncf %1 : vector<8x4xf32> to vector<8x4xbf16>
    %c0_2 = arith.constant 0 : index
    %c0_3 = arith.constant 0 : index
    %3 = vector.load %arg2[%c0_2, %c0_3] : memref<4x512xbf16, #tpu.memory_space<vmem>>, vector<4x512xbf16>
    %cst = arith.constant dense<0.000000e+00> : vector<8x512xf32>
    %4 = tpu.matmul %2, %3, %cst {dimension_numbers = #tpu.dot_dimension_numbers<[1], [0], [0], [1], [0, 0, 1, 1], [], []>} : vector<8x4xbf16>, vector<4x512xbf16>, vector<8x512xf32> -> vector<8x512xf32>
    %c0_4 = arith.constant 0 : index
    %c0_5 = arith.constant 0 : index
    %5 = vector.load %arg4[%c0_4, %c0_5] : memref<1x512xf32, #tpu.memory_space<vmem>>, vector<1x512xf32>
    %6 = vector.broadcast %5 : vector<1x512xf32> to vector<8x512xf32>
    %7 = arith.addf %4, %6 : vector<8x512xf32>
    %c0_6 = arith.constant 0 : index
    %c0_7 = arith.constant 0 : index
    %8 = vector.load %arg17[%c0_6, %c0_7] : memref<64x512xf32, #tpu.memory_space<vmem>>, vector<8x512xf32>
    tpu.vector_store %arg17[%c0_6, %c0_7], %7 {strides = array<i32>} : memref<64x512xf32, #tpu.memory_space<vmem>>, vector<8x512xf32>,
    %c1 = arith.constant 1 : index
    %c0_8 = arith.constant 0 : index
    %c0_9 = arith.constant 0 : index
    %9 = vector.load %arg1[%c1, %c0_8, %c0_9] : memref<8x8x4xf32, #tpu.memory_space<vmem>>, vector<1x8x4xf32>
    %10 = vector.shape_cast %9 : vector<1x8x4xf32> to vector<8x4xf32>
    %11 = arith.truncf %10 : vector<8x4xf32> to vector<8x4xbf16>
    %c0_10 = arith.constant 0 : index
    %c0_11 = arith.constant 0 : index
    %12 = vector.load %arg2[%c0_10, %c0_11] : memref<4x512xbf16, #tpu.memory_space<vmem>>, vector<4x512xbf16>
    %cst_12 = arith.constant dense<0.000000e+00> : vector<8x512xf32>
    %13 = tpu.matmul %11, %12, %cst_12 {dimension_numbers = #tpu.dot_dimension_numbers<[1], [0], [0], [1], [0, 0, 1, 1], [], []>} : vector<8x4xbf16>, vector<4x512xbf16>, vector<8x512xf32> -> vector<8x512xf32>
    %c0_13 = arith.constant 0 : index
    %c0_14 = arith.constant 0 : index
    %14 = vector.load %arg4[%c0_13, %c0_14] : memref<1x512xf32, #tpu.memory_space<vmem>>, vector<1x512xf32>
    %15 = vector.broadcast %14 : vector<1x512xf32> to vector<8x512xf32>
    %16 = arith.addf %13, %15 : vector<8x512xf32>
    %c8 = arith.constant 8 : index
    %c0_15 = arith.constant 0 : index
    %17 = vector.load %arg17[%c8, %c0_15] : memref<64x512xf32, #tpu.memory_space<vmem>>, vector<8x512xf32>
    tpu.vector_store %arg17[%c8, %c0_15], %16 {strides = array<i32>} : memref<64x512xf32, #tpu.memory_space<vmem>>, vector<8x512xf32>,
    %c2 = arith.constant 2 : index
    %c0_16 = arith.constant 0 : index
    %c0_17 = arith.constant 0 : index
    %18 = vector.load %arg1[%c2, %c0_16, %c0_17] : memref<8x8x4xf32, #tpu.memory_space<vmem>>, vector<1x8x4xf32>
    %19 = vector.shape_cast %18 : vector<1x8x4xf32> to vector<8x4xf32>
    %20 = arith.truncf %19 : vector<8x4xf32> to vector<8x4xbf16>
    %c0_18 = arith.constant 0 : index
    %c0_19 = arith.constant 0 : index
    %21 = vector.load %arg2[%c0_18, %c0_19] : memref<4x512xbf16, #tpu.memory_space<vmem>>, vector<4x512xbf16>
    %cst_20 = arith.constant dense<0.000000e+00> : vector<8x512xf32>
    %22 = tpu.matmul %20, %21, %cst_20 {dimension_numbers = #tpu.dot_dimension_numbers<[1], [0], [0], [1], [0, 0, 1, 1], [], []>} : vector<8x4xbf16>, vector<4x512xbf16>, vector<8x512xf32> -> vector<8x512xf32>
    %c0_21 = arith.constant 0 : index
    %c0_22 = arith.constant 0 : index
    %23 = vector.load %arg4[%c0_21, %c0_22] : memref<1x512xf32, #tpu.memory_space<vmem>>, vector<1x512xf32>
    %24 = vector.broadcast %23 : vector<1x512xf32> to vector<8x512xf32>
    %25 = arith.addf %22, %24 : vector<8x512xf32>
    %c16 = arith.constant 16 : index
    %c0_23 = arith.constant 0 : index
    %26 = vector.load %arg17[%c16, %c0_23] : memref<64x512xf32, #tpu.memory_space<vmem>>, vector<8x512xf32>
    tpu.vector_store %arg17[%c16, %c0_23], %25 {strides = array<i32>} : memref<64x512xf32, #tpu.memory_space<vmem>>, vector<8x512xf32>,
    %c3 = arith.constant 3 : index
    %c0_24 = arith.constant 0 : index
    %c0_25 = arith.constant 0 : index
    %27 = vector.load %arg1[%c3, %c0_24, %c0_25] : memref<8x8x4xf32, #tpu.memory_space<vmem>>, vector<1x8x4xf32>
    %28 = vector.shape_cast %27 : vector<1x8x4xf32> to vector<8x4xf32>
    %29 = arith.truncf %28 : vector<8x4xf32> to vector<8x4xbf16>
    %c0_26 = arith.constant 0 : index
    %c0_27 = arith.constant 0 : index
    %30 = vector.load %arg2[%c0_26, %c0_27] : memref<4x512xbf16, #tpu.memory_space<vmem>>, vector<4x512xbf16>
    %cst_28 = arith.constant dense<0.000000e+00> : vector<8x512xf32>
    %31 = tpu.matmul %29, %30, %cst_28 {dimension_numbers = #tpu.dot_dimension_numbers<[1], [0], [0], [1], [0, 0, 1, 1], [], []>} : vector<8x4xbf16>, vector<4x512xbf16>, vector<8x512xf32> -> vector<8x512xf32>
    %c0_29 = arith.constant 0 : index
    %c0_30 = arith.constant 0 : index
    %32 = vector.load %arg4[%c0_29, %c0_30] : memref<1x512xf32, #tpu.memory_space<vmem>>, vector<1x512xf32>
    %33 = vector.broadcast %32 : vector<1x512xf32> to vector<8x512xf32>
    %34 = arith.addf %31, %33 : vector<8x512xf32>
    %c24 = arith.constant 24 : index
    %c0_31 = arith.constant 0 : index
    %35 = vector.load %arg17[%c24, %c0_31] : memref<64x512xf32, #tpu.memory_space<vmem>>, vector<8x512xf32>
    tpu.vector_store %arg17[%c24, %c0_31], %34 {strides = array<i32>} : memref<64x512xf32, #tpu.memory_space<vmem>>, vector<8x512xf32>,
    %c4 = arith.constant 4 : index
    %c0_32 = arith.constant 0 : index
    %c0_33 = arith.constant 0 : index
    %36 = vector.load %arg1[%c4, %c0_32, %c0_33] : memref<8x8x4xf32, #tpu.memory_space<vmem>>, vector<1x8x4xf32>
    %37 = vector.shape_cast %36 : vector<1x8x4xf32> to vector<8x4xf32>
    %38 = arith.truncf %37 : vector<8x4xf32> to vector<8x4xbf16>
    %c0_34 = arith.constant 0 : index
    %c0_35 = arith.constant 0 : index
    %39 = vector.load %arg2[%c0_34, %c0_35] : memref<4x512xbf16, #tpu.memory_space<vmem>>, vector<4x512xbf16>
    %cst_36 = arith.constant dense<0.000000e+00> : vector<8x512xf32>
    %40 = tpu.matmul %38, %39, %cst_36 {dimension_numbers = #tpu.dot_dimension_numbers<[1], [0], [0], [1], [0, 0, 1, 1], [], []>} : vector<8x4xbf16>, vector<4x512xbf16>, vector<8x512xf32> -> vector<8x512xf32>
    %c0_37 = arith.constant 0 : index
    %c0_38 = arith.constant 0 : index
    %41 = vector.load %arg4[%c0_37, %c0_38] : memref<1x512xf32, #tpu.memory_space<vmem>>, vector<1x512xf32>
    %42 = vector.broadcast %41 : vector<1x512xf32> to vector<8x512xf32>
    %43 = arith.addf %40, %42 : vector<8x512xf32>
    %c32 = arith.constant 32 : index
    %c0_39 = arith.constant 0 : index
    %44 = vector.load %arg17[%c32, %c0_39] : memref<64x512xf32, #tpu.memory_space<vmem>>, vector<8x512xf32>
    tpu.vector_store %arg17[%c32, %c0_39], %43 {strides = array<i32>} : memref<64x512xf32, #tpu.memory_space<vmem>>, vector<8x512xf32>,
    %c5 = arith.constant 5 : index
    %c0_40 = arith.constant 0 : index
    %c0_41 = arith.constant 0 : index
    %45 = vector.load %arg1[%c5, %c0_40, %c0_41] : memref<8x8x4xf32, #tpu.memory_space<vmem>>, vector<1x8x4xf32>
    %46 = vector.shape_cast %45 : vector<1x8x4xf32> to vector<8x4xf32>
    %47 = arith.truncf %46 : vector<8x4xf32> to vector<8x4xbf16>
    %c0_42 = arith.constant 0 : index
    %c0_43 = arith.constant 0 : index
    %48 = vector.load %arg2[%c0_42, %c0_43] : memref<4x512xbf16, #tpu.memory_space<vmem>>, vector<4x512xbf16>
    %cst_44 = arith.constant dense<0.000000e+00> : vector<8x512xf32>
    %49 = tpu.matmul %47, %48, %cst_44 {dimension_numbers = #tpu.dot_dimension_numbers<[1], [0], [0], [1], [0, 0, 1, 1], [], []>} : vector<8x4xbf16>, vector<4x512xbf16>, vector<8x512xf32> -> vector<8x512xf32>
    %c0_45 = arith.constant 0 : index
    %c0_46 = arith.constant 0 : index
    %50 = vector.load %arg4[%c0_45, %c0_46] : memref<1x512xf32, #tpu.memory_space<vmem>>, vector<1x512xf32>
    %51 = vector.broadcast %50 : vector<1x512xf32> to vector<8x512xf32>
    %52 = arith.addf %49, %51 : vector<8x512xf32>
    %c40 = arith.constant 40 : index
    %c0_47 = arith.constant 0 : index
    %53 = vector.load %arg17[%c40, %c0_47] : memref<64x512xf32, #tpu.memory_space<vmem>>, vector<8x512xf32>
    tpu.vector_store %arg17[%c40, %c0_47], %52 {strides = array<i32>} : memref<64x512xf32, #tpu.memory_space<vmem>>, vector<8x512xf32>,
    %c6 = arith.constant 6 : index
    %c0_48 = arith.constant 0 : index
    %c0_49 = arith.constant 0 : index
    %54 = vector.load %arg1[%c6, %c0_48, %c0_49] : memref<8x8x4xf32, #tpu.memory_space<vmem>>, vector<1x8x4xf32>
    %55 = vector.shape_cast %54 : vector<1x8x4xf32> to vector<8x4xf32>
    %56 = arith.truncf %55 : vector<8x4xf32> to vector<8x4xbf16>
    %c0_50 = arith.constant 0 : index
    %c0_51 = arith.constant 0 : index
    %57 = vector.load %arg2[%c0_50, %c0_51] : memref<4x512xbf16, #tpu.memory_space<vmem>>, vector<4x512xbf16>
    %cst_52 = arith.constant dense<0.000000e+00> : vector<8x512xf32>
    %58 = tpu.matmul %56, %57, %cst_52 {dimension_numbers = #tpu.dot_dimension_numbers<[1], [0], [0], [1], [0, 0, 1, 1], [], []>} : vector<8x4xbf16>, vector<4x512xbf16>, vector<8x512xf32> -> vector<8x512xf32>
    %c0_53 = arith.constant 0 : index
    %c0_54 = arith.constant 0 : index
    %59 = vector.load %arg4[%c0_53, %c0_54] : memref<1x512xf32, #tpu.memory_space<vmem>>, vector<1x512xf32>
    %60 = vector.broadcast %59 : vector<1x512xf32> to vector<8x512xf32>
    %61 = arith.addf %58, %60 : vector<8x512xf32>
    %c48 = arith.constant 48 : index
    %c0_55 = arith.constant 0 : index
    %62 = vector.load %arg17[%c48, %c0_55] : memref<64x512xf32, #tpu.memory_space<vmem>>, vector<8x512xf32>
    tpu.vector_store %arg17[%c48, %c0_55], %61 {strides = array<i32>} : memref<64x512xf32, #tpu.memory_space<vmem>>, vector<8x512xf32>,
    %c7 = arith.constant 7 : index
    %c0_56 = arith.constant 0 : index
    %c0_57 = arith.constant 0 : index
    %63 = vector.load %arg1[%c7, %c0_56, %c0_57] : memref<8x8x4xf32, #tpu.memory_space<vmem>>, vector<1x8x4xf32>
    %64 = vector.shape_cast %63 : vector<1x8x4xf32> to vector<8x4xf32>
    %65 = arith.truncf %64 : vector<8x4xf32> to vector<8x4xbf16>
    %c0_58 = arith.constant 0 : index
    %c0_59 = arith.constant 0 : index
    %66 = vector.load %arg2[%c0_58, %c0_59] : memref<4x512xbf16, #tpu.memory_space<vmem>>, vector<4x512xbf16>
    %cst_60 = arith.constant dense<0.000000e+00> : vector<8x512xf32>
    %67 = tpu.matmul %65, %66, %cst_60 {dimension_numbers = #tpu.dot_dimension_numbers<[1], [0], [0], [1], [0, 0, 1, 1], [], []>} : vector<8x4xbf16>, vector<4x512xbf16>, vector<8x512xf32> -> vector<8x512xf32>
    %c0_61 = arith.constant 0 : index
    %c0_62 = arith.constant 0 : index
    %68 = vector.load %arg4[%c0_61, %c0_62] : memref<1x512xf32, #tpu.memory_space<vmem>>, vector<1x512xf32>
    %69 = vector.broadcast %68 : vector<1x512xf32> to vector<8x512xf32>
    %70 = arith.addf %67, %69 : vector<8x512xf32>
    %c56 = arith.constant 56 : index
    %c0_63 = arith.constant 0 : index
    %71 = vector.load %arg17[%c56, %c0_63] : memref<64x512xf32, #tpu.memory_space<vmem>>, vector<8x512xf32>
    tpu.vector_store %arg17[%c56, %c0_63], %70 {strides = array<i32>} : memref<64x512xf32, #tpu.memory_space<vmem>>, vector<8x512xf32>,
    %cst_64 = arith.constant 0.000000e+00 : f32
    %72 = vector.broadcast %cst_64 : f32 to vector<8x128xf32>
    %cst_65 = arith.constant 0.000000e+00 : f32
    %73 = vector.broadcast %cst_65 : f32 to vector<8x128xf32>
    %c0_66 = arith.constant 0 : index
    %c0_67 = arith.constant 0 : index
    %74 = vector.load %arg17[%c0_66, %c0_67] : memref<64x512xf32, #tpu.memory_space<vmem>>, vector<8x512xf32>
    %75 = arith.truncf %72 : vector<8x128xf32> to vector<8x128xbf16>
    %c0_68 = arith.constant 0 : index
    %c0_69 = arith.constant 0 : index
    %76 = vector.load %arg3[%c0_68, %c0_69] : memref<128x512xbf16, #tpu.memory_space<vmem>>, vector<128x512xbf16>
    %cst_70 = arith.constant dense<0.000000e+00> : vector<8x512xf32>
    %77 = tpu.matmul %75, %76, %cst_70 {dimension_numbers = #tpu.dot_dimension_numbers<[1], [0], [0], [1], [0, 0, 1, 1], [], []>} : vector<8x128xbf16>, vector<128x512xbf16>, vector<8x512xf32> -> vector<8x512xf32>
    %78 = arith.addf %74, %77 : vector<8x512xf32>
    %79 = vector.extract_strided_slice %78 {offsets = [0, 0], sizes = [8, 128], strides = [1, 1]} : vector<8x512xf32> to vector<8x128xf32>
    %cst_71 = arith.constant 5.000000e-01 : f32
    %80 = vector.broadcast %cst_71 : f32 to vector<8x128xf32>
    %81 = arith.mulf %80, %79 : vector<8x128xf32>
    %82 = math.tanh %81 : vector<8x128xf32>
    %cst_72 = arith.constant 5.000000e-01 : f32
    %83 = vector.broadcast %cst_72 : f32 to vector<8x128xf32>
    %84 = arith.mulf %83, %82 : vector<8x128xf32>
    %cst_73 = arith.constant 5.000000e-01 : f32
    %85 = vector.broadcast %cst_73 : f32 to vector<8x128xf32>
    %86 = arith.addf %84, %85 : vector<8x128xf32>
    %87 = vector.extract_strided_slice %78 {offsets = [0, 128], sizes = [8, 128], strides = [1, 1]} : vector<8x512xf32> to vector<8x128xf32>
    %cst_74 = arith.constant 5.000000e-01 : f32
    %88 = vector.broadcast %cst_74 : f32 to vector<8x128xf32>
    %89 = arith.mulf %88, %87 : vector<8x128xf32>
    %90 = math.tanh %89 : vector<8x128xf32>
    %cst_75 = arith.constant 5.000000e-01 : f32
    %91 = vector.broadcast %cst_75 : f32 to vector<8x128xf32>
    %92 = arith.mulf %91, %90 : vector<8x128xf32>
    %cst_76 = arith.constant 5.000000e-01 : f32
    %93 = vector.broadcast %cst_76 : f32 to vector<8x128xf32>
    %94 = arith.addf %92, %93 : vector<8x128xf32>
    %95 = vector.extract_strided_slice %78 {offsets = [0, 256], sizes = [8, 128], strides = [1, 1]} : vector<8x512xf32> to vector<8x128xf32>
    %96 = math.tanh %95 : vector<8x128xf32>
    %97 = vector.extract_strided_slice %78 {offsets = [0, 384], sizes = [8, 128], strides = [1, 1]} : vector<8x512xf32> to vector<8x128xf32>
    %cst_77 = arith.constant 5.000000e-01 : f32
    %98 = vector.broadcast %cst_77 : f32 to vector<8x128xf32>
    %99 = arith.mulf %98, %97 : vector<8x128xf32>
    %100 = math.tanh %99 : vector<8x128xf32>
    %cst_78 = arith.constant 5.000000e-01 : f32
    %101 = vector.broadcast %cst_78 : f32 to vector<8x128xf32>
    %102 = arith.mulf %101, %100 : vector<8x128xf32>
    %cst_79 = arith.constant 5.000000e-01 : f32
    %103 = vector.broadcast %cst_79 : f32 to vector<8x128xf32>
    %104 = arith.addf %102, %103 : vector<8x128xf32>
    %105 = arith.mulf %94, %73 : vector<8x128xf32>
    %106 = arith.mulf %86, %96 : vector<8x128xf32>
    %107 = arith.addf %105, %106 : vector<8x128xf32>
    %108 = math.tanh %107 : vector<8x128xf32>
    %109 = arith.mulf %104, %108 : vector<8x128xf32>
    %c0_80 = arith.constant 0 : index
    %c0_81 = arith.constant 0 : index
    %110 = vector.load %arg16[%c0_80, %c0_81] : memref<64x128xf32, #tpu.memory_space<vmem>>, vector<8x128xf32>
    tpu.vector_store %arg16[%c0_80, %c0_81], %109 {strides = array<i32>} : memref<64x128xf32, #tpu.memory_space<vmem>>, vector<8x128xf32>,
    %c8_82 = arith.constant 8 : index
    %c0_83 = arith.constant 0 : index
    %111 = vector.load %arg17[%c8_82, %c0_83] : memref<64x512xf32, #tpu.memory_space<vmem>>, vector<8x512xf32>
    %112 = arith.truncf %109 : vector<8x128xf32> to vector<8x128xbf16>
    %c0_84 = arith.constant 0 : index
    %c0_85 = arith.constant 0 : index
    %113 = vector.load %arg3[%c0_84, %c0_85] : memref<128x512xbf16, #tpu.memory_space<vmem>>, vector<128x512xbf16>
    %cst_86 = arith.constant dense<0.000000e+00> : vector<8x512xf32>
    %114 = tpu.matmul %112, %113, %cst_86 {dimension_numbers = #tpu.dot_dimension_numbers<[1], [0], [0], [1], [0, 0, 1, 1], [], []>} : vector<8x128xbf16>, vector<128x512xbf16>, vector<8x512xf32> -> vector<8x512xf32>
    %115 = arith.addf %111, %114 : vector<8x512xf32>
    %116 = vector.extract_strided_slice %115 {offsets = [0, 0], sizes = [8, 128], strides = [1, 1]} : vector<8x512xf32> to vector<8x128xf32>
    %cst_87 = arith.constant 5.000000e-01 : f32
    %117 = vector.broadcast %cst_87 : f32 to vector<8x128xf32>
    %118 = arith.mulf %117, %116 : vector<8x128xf32>
    %119 = math.tanh %118 : vector<8x128xf32>
    %cst_88 = arith.constant 5.000000e-01 : f32
    %120 = vector.broadcast %cst_88 : f32 to vector<8x128xf32>
    %121 = arith.mulf %120, %119 : vector<8x128xf32>
    %cst_89 = arith.constant 5.000000e-01 : f32
    %122 = vector.broadcast %cst_89 : f32 to vector<8x128xf32>
    %123 = arith.addf %121, %122 : vector<8x128xf32>
    %124 = vector.extract_strided_slice %115 {offsets = [0, 128], sizes = [8, 128], strides = [1, 1]} : vector<8x512xf32> to vector<8x128xf32>
    %cst_90 = arith.constant 5.000000e-01 : f32
    %125 = vector.broadcast %cst_90 : f32 to vector<8x128xf32>
    %126 = arith.mulf %125, %124 : vector<8x128xf32>
    %127 = math.tanh %126 : vector<8x128xf32>
    %cst_91 = arith.constant 5.000000e-01 : f32
    %128 = vector.broadcast %cst_91 : f32 to vector<8x128xf32>
    %129 = arith.mulf %128, %127 : vector<8x128xf32>
    %cst_92 = arith.constant 5.000000e-01 : f32
    %130 = vector.broadcast %cst_92 : f32 to vector<8x128xf32>
    %131 = arith.addf %129, %130 : vector<8x128xf32>
    %132 = vector.extract_strided_slice %115 {offsets = [0, 256], sizes = [8, 128], strides = [1, 1]} : vector<8x512xf32> to vector<8x128xf32>
    %133 = math.tanh %132 : vector<8x128xf32>
    %134 = vector.extract_strided_slice %115 {offsets = [0, 384], sizes = [8, 128], strides = [1, 1]} : vector<8x512xf32> to vector<8x128xf32>
    %cst_93 = arith.constant 5.000000e-01 : f32
    %135 = vector.broadcast %cst_93 : f32 to vector<8x128xf32>
    %136 = arith.mulf %135, %134 : vector<8x128xf32>
    %137 = math.tanh %136 : vector<8x128xf32>
    %cst_94 = arith.constant 5.000000e-01 : f32
    %138 = vector.broadcast %cst_94 : f32 to vector<8x128xf32>
    %139 = arith.mulf %138, %137 : vector<8x128xf32>
    %cst_95 = arith.constant 5.000000e-01 : f32
    %140 = vector.broadcast %cst_95 : f32 to vector<8x128xf32>
    %141 = arith.addf %139, %140 : vector<8x128xf32>
    %142 = arith.mulf %131, %107 : vector<8x128xf32>
    %143 = arith.mulf %123, %133 : vector<8x128xf32>
    %144 = arith.addf %142, %143 : vector<8x128xf32>
    %145 = math.tanh %144 : vector<8x128xf32>
    %146 = arith.mulf %141, %145 : vector<8x128xf32>
    %c8_96 = arith.constant 8 : index
    %c0_97 = arith.constant 0 : index
    %147 = vector.load %arg16[%c8_96, %c0_97] : memref<64x128xf32, #tpu.memory_space<vmem>>, vector<8x128xf32>
    tpu.vector_store %arg16[%c8_96, %c0_97], %146 {strides = array<i32>} : memref<64x128xf32, #tpu.memory_space<vmem>>, vector<8x128xf32>,
    %c16_98 = arith.constant 16 : index
    %c0_99 = arith.constant 0 : index
    %148 = vector.load %arg17[%c16_98, %c0_99] : memref<64x512xf32, #tpu.memory_space<vmem>>, vector<8x512xf32>
    %149 = arith.truncf %146 : vector<8x128xf32> to vector<8x128xbf16>
    %c0_100 = arith.constant 0 : index
    %c0_101 = arith.constant 0 : index
    %150 = vector.load %arg3[%c0_100, %c0_101] : memref<128x512xbf16, #tpu.memory_space<vmem>>, vector<128x512xbf16>
    %cst_102 = arith.constant dense<0.000000e+00> : vector<8x512xf32>
    %151 = tpu.matmul %149, %150, %cst_102 {dimension_numbers = #tpu.dot_dimension_numbers<[1], [0], [0], [1], [0, 0, 1, 1], [], []>} : vector<8x128xbf16>, vector<128x512xbf16>, vector<8x512xf32> -> vector<8x512xf32>
    %152 = arith.addf %148, %151 : vector<8x512xf32>
    %153 = vector.extract_strided_slice %152 {offsets = [0, 0], sizes = [8, 128], strides = [1, 1]} : vector<8x512xf32> to vector<8x128xf32>
    %cst_103 = arith.constant 5.000000e-01 : f32
    %154 = vector.broadcast %cst_103 : f32 to vector<8x128xf32>
    %155 = arith.mulf %154, %153 : vector<8x128xf32>
    %156 = math.tanh %155 : vector<8x128xf32>
    %cst_104 = arith.constant 5.000000e-01 : f32
    %157 = vector.broadcast %cst_104 : f32 to vector<8x128xf32>
    %158 = arith.mulf %157, %156 : vector<8x128xf32>
    %cst_105 = arith.constant 5.000000e-01 : f32
    %159 = vector.broadcast %cst_105 : f32 to vector<8x128xf32>
    %160 = arith.addf %158, %159 : vector<8x128xf32>
    %161 = vector.extract_strided_slice %152 {offsets = [0, 128], sizes = [8, 128], strides = [1, 1]} : vector<8x512xf32> to vector<8x128xf32>
    %cst_106 = arith.constant 5.000000e-01 : f32
    %162 = vector.broadcast %cst_106 : f32 to vector<8x128xf32>
    %163 = arith.mulf %162, %161 : vector<8x128xf32>
    %164 = math.tanh %163 : vector<8x128xf32>
    %cst_107 = arith.constant 5.000000e-01 : f32
    %165 = vector.broadcast %cst_107 : f32 to vector<8x128xf32>
    %166 = arith.mulf %165, %164 : vector<8x128xf32>
    %cst_108 = arith.constant 5.000000e-01 : f32
    %167 = vector.broadcast %cst_108 : f32 to vector<8x128xf32>
    %168 = arith.addf %166, %167 : vector<8x128xf32>
    %169 = vector.extract_strided_slice %152 {offsets = [0, 256], sizes = [8, 128], strides = [1, 1]} : vector<8x512xf32> to vector<8x128xf32>
    %170 = math.tanh %169 : vector<8x128xf32>
    %171 = vector.extract_strided_slice %152 {offsets = [0, 384], sizes = [8, 128], strides = [1, 1]} : vector<8x512xf32> to vector<8x128xf32>
    %cst_109 = arith.constant 5.000000e-01 : f32
    %172 = vector.broadcast %cst_109 : f32 to vector<8x128xf32>
    %173 = arith.mulf %172, %171 : vector<8x128xf32>
    %174 = math.tanh %173 : vector<8x128xf32>
    %cst_110 = arith.constant 5.000000e-01 : f32
    %175 = vector.broadcast %cst_110 : f32 to vector<8x128xf32>
    %176 = arith.mulf %175, %174 : vector<8x128xf32>
    %cst_111 = arith.constant 5.000000e-01 : f32
    %177 = vector.broadcast %cst_111 : f32 to vector<8x128xf32>
    %178 = arith.addf %176, %177 : vector<8x128xf32>
    %179 = arith.mulf %168, %144 : vector<8x128xf32>
    %180 = arith.mulf %160, %170 : vector<8x128xf32>
    %181 = arith.addf %179, %180 : vector<8x128xf32>
    %182 = math.tanh %181 : vector<8x128xf32>
    %183 = arith.mulf %178, %182 : vector<8x128xf32>
    %c16_112 = arith.constant 16 : index
    %c0_113 = arith.constant 0 : index
    %184 = vector.load %arg16[%c16_112, %c0_113] : memref<64x128xf32, #tpu.memory_space<vmem>>, vector<8x128xf32>
    tpu.vector_store %arg16[%c16_112, %c0_113], %183 {strides = array<i32>} : memref<64x128xf32, #tpu.memory_space<vmem>>, vector<8x128xf32>,
    %c24_114 = arith.constant 24 : index
    %c0_115 = arith.constant 0 : index
    %185 = vector.load %arg17[%c24_114, %c0_115] : memref<64x512xf32, #tpu.memory_space<vmem>>, vector<8x512xf32>
    %186 = arith.truncf %183 : vector<8x128xf32> to vector<8x128xbf16>
    %c0_116 = arith.constant 0 : index
    %c0_117 = arith.constant 0 : index
    %187 = vector.load %arg3[%c0_116, %c0_117] : memref<128x512xbf16, #tpu.memory_space<vmem>>, vector<128x512xbf16>
    %cst_118 = arith.constant dense<0.000000e+00> : vector<8x512xf32>
    %188 = tpu.matmul %186, %187, %cst_118 {dimension_numbers = #tpu.dot_dimension_numbers<[1], [0], [0], [1], [0, 0, 1, 1], [], []>} : vector<8x128xbf16>, vector<128x512xbf16>, vector<8x512xf32> -> vector<8x512xf32>
    %189 = arith.addf %185, %188 : vector<8x512xf32>
    %190 = vector.extract_strided_slice %189 {offsets = [0, 0], sizes = [8, 128], strides = [1, 1]} : vector<8x512xf32> to vector<8x128xf32>
    %cst_119 = arith.constant 5.000000e-01 : f32
    %191 = vector.broadcast %cst_119 : f32 to vector<8x128xf32>
    %192 = arith.mulf %191, %190 : vector<8x128xf32>
    %193 = math.tanh %192 : vector<8x128xf32>
    %cst_120 = arith.constant 5.000000e-01 : f32
    %194 = vector.broadcast %cst_120 : f32 to vector<8x128xf32>
    %195 = arith.mulf %194, %193 : vector<8x128xf32>
    %cst_121 = arith.constant 5.000000e-01 : f32
    %196 = vector.broadcast %cst_121 : f32 to vector<8x128xf32>
    %197 = arith.addf %195, %196 : vector<8x128xf32>
    %198 = vector.extract_strided_slice %189 {offsets = [0, 128], sizes = [8, 128], strides = [1, 1]} : vector<8x512xf32> to vector<8x128xf32>
    %cst_122 = arith.constant 5.000000e-01 : f32
    %199 = vector.broadcast %cst_122 : f32 to vector<8x128xf32>
    %200 = arith.mulf %199, %198 : vector<8x128xf32>
    %201 = math.tanh %200 : vector<8x128xf32>
    %cst_123 = arith.constant 5.000000e-01 : f32
    %202 = vector.broadcast %cst_123 : f32 to vector<8x128xf32>
    %203 = arith.mulf %202, %201 : vector<8x128xf32>
    %cst_124 = arith.constant 5.000000e-01 : f32
    %204 = vector.broadcast %cst_124 : f32 to vector<8x128xf32>
    %205 = arith.addf %203, %204 : vector<8x128xf32>
    %206 = vector.extract_strided_slice %189 {offsets = [0, 256], sizes = [8, 128], strides = [1, 1]} : vector<8x512xf32> to vector<8x128xf32>
    %207 = math.tanh %206 : vector<8x128xf32>
    %208 = vector.extract_strided_slice %189 {offsets = [0, 384], sizes = [8, 128], strides = [1, 1]} : vector<8x512xf32> to vector<8x128xf32>
    %cst_125 = arith.constant 5.000000e-01 : f32
    %209 = vector.broadcast %cst_125 : f32 to vector<8x128xf32>
    %210 = arith.mulf %209, %208 : vector<8x128xf32>
    %211 = math.tanh %210 : vector<8x128xf32>
    %cst_126 = arith.constant 5.000000e-01 : f32
    %212 = vector.broadcast %cst_126 : f32 to vector<8x128xf32>
    %213 = arith.mulf %212, %211 : vector<8x128xf32>
    %cst_127 = arith.constant 5.000000e-01 : f32
    %214 = vector.broadcast %cst_127 : f32 to vector<8x128xf32>
    %215 = arith.addf %213, %214 : vector<8x128xf32>
    %216 = arith.mulf %205, %181 : vector<8x128xf32>
    %217 = arith.mulf %197, %207 : vector<8x128xf32>
    %218 = arith.addf %216, %217 : vector<8x128xf32>
    %219 = math.tanh %218 : vector<8x128xf32>
    %220 = arith.mulf %215, %219 : vector<8x128xf32>
    %c24_128 = arith.constant 24 : index
    %c0_129 = arith.constant 0 : index
    %221 = vector.load %arg16[%c24_128, %c0_129] : memref<64x128xf32, #tpu.memory_space<vmem>>, vector<8x128xf32>
    tpu.vector_store %arg16[%c24_128, %c0_129], %220 {strides = array<i32>} : memref<64x128xf32, #tpu.memory_space<vmem>>, vector<8x128xf32>,
    %c32_130 = arith.constant 32 : index
    %c0_131 = arith.constant 0 : index
    %222 = vector.load %arg17[%c32_130, %c0_131] : memref<64x512xf32, #tpu.memory_space<vmem>>, vector<8x512xf32>
    %223 = arith.truncf %220 : vector<8x128xf32> to vector<8x128xbf16>
    %c0_132 = arith.constant 0 : index
    %c0_133 = arith.constant 0 : index
    %224 = vector.load %arg3[%c0_132, %c0_133] : memref<128x512xbf16, #tpu.memory_space<vmem>>, vector<128x512xbf16>
    %cst_134 = arith.constant dense<0.000000e+00> : vector<8x512xf32>
    %225 = tpu.matmul %223, %224, %cst_134 {dimension_numbers = #tpu.dot_dimension_numbers<[1], [0], [0], [1], [0, 0, 1, 1], [], []>} : vector<8x128xbf16>, vector<128x512xbf16>, vector<8x512xf32> -> vector<8x512xf32>
    %226 = arith.addf %222, %225 : vector<8x512xf32>
    %227 = vector.extract_strided_slice %226 {offsets = [0, 0], sizes = [8, 128], strides = [1, 1]} : vector<8x512xf32> to vector<8x128xf32>
    %cst_135 = arith.constant 5.000000e-01 : f32
    %228 = vector.broadcast %cst_135 : f32 to vector<8x128xf32>
    %229 = arith.mulf %228, %227 : vector<8x128xf32>
    %230 = math.tanh %229 : vector<8x128xf32>
    %cst_136 = arith.constant 5.000000e-01 : f32
    %231 = vector.broadcast %cst_136 : f32 to vector<8x128xf32>
    %232 = arith.mulf %231, %230 : vector<8x128xf32>
    %cst_137 = arith.constant 5.000000e-01 : f32
    %233 = vector.broadcast %cst_137 : f32 to vector<8x128xf32>
    %234 = arith.addf %232, %233 : vector<8x128xf32>
    %235 = vector.extract_strided_slice %226 {offsets = [0, 128], sizes = [8, 128], strides = [1, 1]} : vector<8x512xf32> to vector<8x128xf32>
    %cst_138 = arith.constant 5.000000e-01 : f32
    %236 = vector.broadcast %cst_138 : f32 to vector<8x128xf32>
    %237 = arith.mulf %236, %235 : vector<8x128xf32>
    %238 = math.tanh %237 : vector<8x128xf32>
    %cst_139 = arith.constant 5.000000e-01 : f32
    %239 = vector.broadcast %cst_139 : f32 to vector<8x128xf32>
    %240 = arith.mulf %239, %238 : vector<8x128xf32>
    %cst_140 = arith.constant 5.000000e-01 : f32
    %241 = vector.broadcast %cst_140 : f32 to vector<8x128xf32>
    %242 = arith.addf %240, %241 : vector<8x128xf32>
    %243 = vector.extract_strided_slice %226 {offsets = [0, 256], sizes = [8, 128], strides = [1, 1]} : vector<8x512xf32> to vector<8x128xf32>
    %244 = math.tanh %243 : vector<8x128xf32>
    %245 = vector.extract_strided_slice %226 {offsets = [0, 384], sizes = [8, 128], strides = [1, 1]} : vector<8x512xf32> to vector<8x128xf32>
    %cst_141 = arith.constant 5.000000e-01 : f32
    %246 = vector.broadcast %cst_141 : f32 to vector<8x128xf32>
    %247 = arith.mulf %246, %245 : vector<8x128xf32>
    %248 = math.tanh %247 : vector<8x128xf32>
    %cst_142 = arith.constant 5.000000e-01 : f32
    %249 = vector.broadcast %cst_142 : f32 to vector<8x128xf32>
    %250 = arith.mulf %249, %248 : vector<8x128xf32>
    %cst_143 = arith.constant 5.000000e-01 : f32
    %251 = vector.broadcast %cst_143 : f32 to vector<8x128xf32>
    %252 = arith.addf %250, %251 : vector<8x128xf32>
    %253 = arith.mulf %242, %218 : vector<8x128xf32>
    %254 = arith.mulf %234, %244 : vector<8x128xf32>
    %255 = arith.addf %253, %254 : vector<8x128xf32>
    %256 = math.tanh %255 : vector<8x128xf32>
    %257 = arith.mulf %252, %256 : vector<8x128xf32>
    %c32_144 = arith.constant 32 : index
    %c0_145 = arith.constant 0 : index
    %258 = vector.load %arg16[%c32_144, %c0_145] : memref<64x128xf32, #tpu.memory_space<vmem>>, vector<8x128xf32>
    tpu.vector_store %arg16[%c32_144, %c0_145], %257 {strides = array<i32>} : memref<64x128xf32, #tpu.memory_space<vmem>>, vector<8x128xf32>,
    %c40_146 = arith.constant 40 : index
    %c0_147 = arith.constant 0 : index
    %259 = vector.load %arg17[%c40_146, %c0_147] : memref<64x512xf32, #tpu.memory_space<vmem>>, vector<8x512xf32>
    %260 = arith.truncf %257 : vector<8x128xf32> to vector<8x128xbf16>
    %c0_148 = arith.constant 0 : index
    %c0_149 = arith.constant 0 : index
    %261 = vector.load %arg3[%c0_148, %c0_149] : memref<128x512xbf16, #tpu.memory_space<vmem>>, vector<128x512xbf16>
    %cst_150 = arith.constant dense<0.000000e+00> : vector<8x512xf32>
    %262 = tpu.matmul %260, %261, %cst_150 {dimension_numbers = #tpu.dot_dimension_numbers<[1], [0], [0], [1], [0, 0, 1, 1], [], []>} : vector<8x128xbf16>, vector<128x512xbf16>, vector<8x512xf32> -> vector<8x512xf32>
    %263 = arith.addf %259, %262 : vector<8x512xf32>
    %264 = vector.extract_strided_slice %263 {offsets = [0, 0], sizes = [8, 128], strides = [1, 1]} : vector<8x512xf32> to vector<8x128xf32>
    %cst_151 = arith.constant 5.000000e-01 : f32
    %265 = vector.broadcast %cst_151 : f32 to vector<8x128xf32>
    %266 = arith.mulf %265, %264 : vector<8x128xf32>
    %267 = math.tanh %266 : vector<8x128xf32>
    %cst_152 = arith.constant 5.000000e-01 : f32
    %268 = vector.broadcast %cst_152 : f32 to vector<8x128xf32>
    %269 = arith.mulf %268, %267 : vector<8x128xf32>
    %cst_153 = arith.constant 5.000000e-01 : f32
    %270 = vector.broadcast %cst_153 : f32 to vector<8x128xf32>
    %271 = arith.addf %269, %270 : vector<8x128xf32>
    %272 = vector.extract_strided_slice %263 {offsets = [0, 128], sizes = [8, 128], strides = [1, 1]} : vector<8x512xf32> to vector<8x128xf32>
    %cst_154 = arith.constant 5.000000e-01 : f32
    %273 = vector.broadcast %cst_154 : f32 to vector<8x128xf32>
    %274 = arith.mulf %273, %272 : vector<8x128xf32>
    %275 = math.tanh %274 : vector<8x128xf32>
    %cst_155 = arith.constant 5.000000e-01 : f32
    %276 = vector.broadcast %cst_155 : f32 to vector<8x128xf32>
    %277 = arith.mulf %276, %275 : vector<8x128xf32>
    %cst_156 = arith.constant 5.000000e-01 : f32
    %278 = vector.broadcast %cst_156 : f32 to vector<8x128xf32>
    %279 = arith.addf %277, %278 : vector<8x128xf32>
    %280 = vector.extract_strided_slice %263 {offsets = [0, 256], sizes = [8, 128], strides = [1, 1]} : vector<8x512xf32> to vector<8x128xf32>
    %281 = math.tanh %280 : vector<8x128xf32>
    %282 = vector.extract_strided_slice %263 {offsets = [0, 384], sizes = [8, 128], strides = [1, 1]} : vector<8x512xf32> to vector<8x128xf32>
    %cst_157 = arith.constant 5.000000e-01 : f32
    %283 = vector.broadcast %cst_157 : f32 to vector<8x128xf32>
    %284 = arith.mulf %283, %282 : vector<8x128xf32>
    %285 = math.tanh %284 : vector<8x128xf32>
    %cst_158 = arith.constant 5.000000e-01 : f32
    %286 = vector.broadcast %cst_158 : f32 to vector<8x128xf32>
    %287 = arith.mulf %286, %285 : vector<8x128xf32>
    %cst_159 = arith.constant 5.000000e-01 : f32
    %288 = vector.broadcast %cst_159 : f32 to vector<8x128xf32>
    %289 = arith.addf %287, %288 : vector<8x128xf32>
    %290 = arith.mulf %279, %255 : vector<8x128xf32>
    %291 = arith.mulf %271, %281 : vector<8x128xf32>
    %292 = arith.addf %290, %291 : vector<8x128xf32>
    %293 = math.tanh %292 : vector<8x128xf32>
    %294 = arith.mulf %289, %293 : vector<8x128xf32>
    %c40_160 = arith.constant 40 : index
    %c0_161 = arith.constant 0 : index
    %295 = vector.load %arg16[%c40_160, %c0_161] : memref<64x128xf32, #tpu.memory_space<vmem>>, vector<8x128xf32>
    tpu.vector_store %arg16[%c40_160, %c0_161], %294 {strides = array<i32>} : memref<64x128xf32, #tpu.memory_space<vmem>>, vector<8x128xf32>,
    %c48_162 = arith.constant 48 : index
    %c0_163 = arith.constant 0 : index
    %296 = vector.load %arg17[%c48_162, %c0_163] : memref<64x512xf32, #tpu.memory_space<vmem>>, vector<8x512xf32>
    %297 = arith.truncf %294 : vector<8x128xf32> to vector<8x128xbf16>
    %c0_164 = arith.constant 0 : index
    %c0_165 = arith.constant 0 : index
    %298 = vector.load %arg3[%c0_164, %c0_165] : memref<128x512xbf16, #tpu.memory_space<vmem>>, vector<128x512xbf16>
    %cst_166 = arith.constant dense<0.000000e+00> : vector<8x512xf32>
    %299 = tpu.matmul %297, %298, %cst_166 {dimension_numbers = #tpu.dot_dimension_numbers<[1], [0], [0], [1], [0, 0, 1, 1], [], []>} : vector<8x128xbf16>, vector<128x512xbf16>, vector<8x512xf32> -> vector<8x512xf32>
    %300 = arith.addf %296, %299 : vector<8x512xf32>
    %301 = vector.extract_strided_slice %300 {offsets = [0, 0], sizes = [8, 128], strides = [1, 1]} : vector<8x512xf32> to vector<8x128xf32>
    %cst_167 = arith.constant 5.000000e-01 : f32
    %302 = vector.broadcast %cst_167 : f32 to vector<8x128xf32>
    %303 = arith.mulf %302, %301 : vector<8x128xf32>
    %304 = math.tanh %303 : vector<8x128xf32>
    %cst_168 = arith.constant 5.000000e-01 : f32
    %305 = vector.broadcast %cst_168 : f32 to vector<8x128xf32>
    %306 = arith.mulf %305, %304 : vector<8x128xf32>
    %cst_169 = arith.constant 5.000000e-01 : f32
    %307 = vector.broadcast %cst_169 : f32 to vector<8x128xf32>
    %308 = arith.addf %306, %307 : vector<8x128xf32>
    %309 = vector.extract_strided_slice %300 {offsets = [0, 128], sizes = [8, 128], strides = [1, 1]} : vector<8x512xf32> to vector<8x128xf32>
    %cst_170 = arith.constant 5.000000e-01 : f32
    %310 = vector.broadcast %cst_170 : f32 to vector<8x128xf32>
    %311 = arith.mulf %310, %309 : vector<8x128xf32>
    %312 = math.tanh %311 : vector<8x128xf32>
    %cst_171 = arith.constant 5.000000e-01 : f32
    %313 = vector.broadcast %cst_171 : f32 to vector<8x128xf32>
    %314 = arith.mulf %313, %312 : vector<8x128xf32>
    %cst_172 = arith.constant 5.000000e-01 : f32
    %315 = vector.broadcast %cst_172 : f32 to vector<8x128xf32>
    %316 = arith.addf %314, %315 : vector<8x128xf32>
    %317 = vector.extract_strided_slice %300 {offsets = [0, 256], sizes = [8, 128], strides = [1, 1]} : vector<8x512xf32> to vector<8x128xf32>
    %318 = math.tanh %317 : vector<8x128xf32>
    %319 = vector.extract_strided_slice %300 {offsets = [0, 384], sizes = [8, 128], strides = [1, 1]} : vector<8x512xf32> to vector<8x128xf32>
    %cst_173 = arith.constant 5.000000e-01 : f32
    %320 = vector.broadcast %cst_173 : f32 to vector<8x128xf32>
    %321 = arith.mulf %320, %319 : vector<8x128xf32>
    %322 = math.tanh %321 : vector<8x128xf32>
    %cst_174 = arith.constant 5.000000e-01 : f32
    %323 = vector.broadcast %cst_174 : f32 to vector<8x128xf32>
    %324 = arith.mulf %323, %322 : vector<8x128xf32>
    %cst_175 = arith.constant 5.000000e-01 : f32
    %325 = vector.broadcast %cst_175 : f32 to vector<8x128xf32>
    %326 = arith.addf %324, %325 : vector<8x128xf32>
    %327 = arith.mulf %316, %292 : vector<8x128xf32>
    %328 = arith.mulf %308, %318 : vector<8x128xf32>
    %329 = arith.addf %327, %328 : vector<8x128xf32>
    %330 = math.tanh %329 : vector<8x128xf32>
    %331 = arith.mulf %326, %330 : vector<8x128xf32>
    %c48_176 = arith.constant 48 : index
    %c0_177 = arith.constant 0 : index
    %332 = vector.load %arg16[%c48_176, %c0_177] : memref<64x128xf32, #tpu.memory_space<vmem>>, vector<8x128xf32>
    tpu.vector_store %arg16[%c48_176, %c0_177], %331 {strides = array<i32>} : memref<64x128xf32, #tpu.memory_space<vmem>>, vector<8x128xf32>,
    %c56_178 = arith.constant 56 : index
    %c0_179 = arith.constant 0 : index
    %333 = vector.load %arg17[%c56_178, %c0_179] : memref<64x512xf32, #tpu.memory_space<vmem>>, vector<8x512xf32>
    %334 = arith.truncf %331 : vector<8x128xf32> to vector<8x128xbf16>
    %c0_180 = arith.constant 0 : index
    %c0_181 = arith.constant 0 : index
    %335 = vector.load %arg3[%c0_180, %c0_181] : memref<128x512xbf16, #tpu.memory_space<vmem>>, vector<128x512xbf16>
    %cst_182 = arith.constant dense<0.000000e+00> : vector<8x512xf32>
    %336 = tpu.matmul %334, %335, %cst_182 {dimension_numbers = #tpu.dot_dimension_numbers<[1], [0], [0], [1], [0, 0, 1, 1], [], []>} : vector<8x128xbf16>, vector<128x512xbf16>, vector<8x512xf32> -> vector<8x512xf32>
    %337 = arith.addf %333, %336 : vector<8x512xf32>
    %338 = vector.extract_strided_slice %337 {offsets = [0, 0], sizes = [8, 128], strides = [1, 1]} : vector<8x512xf32> to vector<8x128xf32>
    %cst_183 = arith.constant 5.000000e-01 : f32
    %339 = vector.broadcast %cst_183 : f32 to vector<8x128xf32>
    %340 = arith.mulf %339, %338 : vector<8x128xf32>
    %341 = math.tanh %340 : vector<8x128xf32>
    %cst_184 = arith.constant 5.000000e-01 : f32
    %342 = vector.broadcast %cst_184 : f32 to vector<8x128xf32>
    %343 = arith.mulf %342, %341 : vector<8x128xf32>
    %cst_185 = arith.constant 5.000000e-01 : f32
    %344 = vector.broadcast %cst_185 : f32 to vector<8x128xf32>
    %345 = arith.addf %343, %344 : vector<8x128xf32>
    %346 = vector.extract_strided_slice %337 {offsets = [0, 128], sizes = [8, 128], strides = [1, 1]} : vector<8x512xf32> to vector<8x128xf32>
    %cst_186 = arith.constant 5.000000e-01 : f32
    %347 = vector.broadcast %cst_186 : f32 to vector<8x128xf32>
    %348 = arith.mulf %347, %346 : vector<8x128xf32>
    %349 = math.tanh %348 : vector<8x128xf32>
    %cst_187 = arith.constant 5.000000e-01 : f32
    %350 = vector.broadcast %cst_187 : f32 to vector<8x128xf32>
    %351 = arith.mulf %350, %349 : vector<8x128xf32>
    %cst_188 = arith.constant 5.000000e-01 : f32
    %352 = vector.broadcast %cst_188 : f32 to vector<8x128xf32>
    %353 = arith.addf %351, %352 : vector<8x128xf32>
    %354 = vector.extract_strided_slice %337 {offsets = [0, 256], sizes = [8, 128], strides = [1, 1]} : vector<8x512xf32> to vector<8x128xf32>
    %355 = math.tanh %354 : vector<8x128xf32>
    %356 = vector.extract_strided_slice %337 {offsets = [0, 384], sizes = [8, 128], strides = [1, 1]} : vector<8x512xf32> to vector<8x128xf32>
    %cst_189 = arith.constant 5.000000e-01 : f32
    %357 = vector.broadcast %cst_189 : f32 to vector<8x128xf32>
    %358 = arith.mulf %357, %356 : vector<8x128xf32>
    %359 = math.tanh %358 : vector<8x128xf32>
    %cst_190 = arith.constant 5.000000e-01 : f32
    %360 = vector.broadcast %cst_190 : f32 to vector<8x128xf32>
    %361 = arith.mulf %360, %359 : vector<8x128xf32>
    %cst_191 = arith.constant 5.000000e-01 : f32
    %362 = vector.broadcast %cst_191 : f32 to vector<8x128xf32>
    %363 = arith.addf %361, %362 : vector<8x128xf32>
    %364 = arith.mulf %353, %329 : vector<8x128xf32>
    %365 = arith.mulf %345, %355 : vector<8x128xf32>
    %366 = arith.addf %364, %365 : vector<8x128xf32>
    %367 = math.tanh %366 : vector<8x128xf32>
    %368 = arith.mulf %363, %367 : vector<8x128xf32>
    %c56_192 = arith.constant 56 : index
    %c0_193 = arith.constant 0 : index
    %369 = vector.load %arg16[%c56_192, %c0_193] : memref<64x128xf32, #tpu.memory_space<vmem>>, vector<8x128xf32>
    tpu.vector_store %arg16[%c56_192, %c0_193], %368 {strides = array<i32>} : memref<64x128xf32, #tpu.memory_space<vmem>>, vector<8x128xf32>,
    %c0_194 = arith.constant 0 : index
    %c0_195 = arith.constant 0 : index
    %370 = vector.load %arg16[%c0_194, %c0_195] : memref<64x128xf32, #tpu.memory_space<vmem>>, vector<64x128xf32>
    %371 = arith.truncf %370 : vector<64x128xf32> to vector<64x128xbf16>
    %c0_196 = arith.constant 0 : index
    %c0_197 = arith.constant 0 : index
    %372 = vector.load %arg5[%c0_196, %c0_197] : memref<128x512xbf16, #tpu.memory_space<vmem>>, vector<128x512xbf16>
    %cst_198 = arith.constant dense<0.000000e+00> : vector<64x512xf32>
    %373 = tpu.matmul %371, %372, %cst_198 {dimension_numbers = #tpu.dot_dimension_numbers<[1], [0], [0], [1], [0, 0, 1, 1], [], []>} : vector<64x128xbf16>, vector<128x512xbf16>, vector<64x512xf32> -> vector<64x512xf32>
    %c0_199 = arith.constant 0 : index
    %c0_200 = arith.constant 0 : index
    %374 = vector.load %arg7[%c0_199, %c0_200] : memref<1x512xf32, #tpu.memory_space<vmem>>, vector<1x512xf32>
    %375 = vector.broadcast %374 : vector<1x512xf32> to vector<64x512xf32>
    %376 = arith.addf %373, %375 : vector<64x512xf32>
    %c0_201 = arith.constant 0 : index
    %c0_202 = arith.constant 0 : index
    %377 = vector.load %arg17[%c0_201, %c0_202] : memref<64x512xf32, #tpu.memory_space<vmem>>, vector<64x512xf32>
    tpu.vector_store %arg17[%c0_201, %c0_202], %376 {strides = array<i32>} : memref<64x512xf32, #tpu.memory_space<vmem>>, vector<64x512xf32>,
    %cst_203 = arith.constant 0.000000e+00 : f32
    %378 = vector.broadcast %cst_203 : f32 to vector<8x128xf32>
    %cst_204 = arith.constant 0.000000e+00 : f32
    %379 = vector.broadcast %cst_204 : f32 to vector<8x128xf32>
    %c0_205 = arith.constant 0 : index
    %c0_206 = arith.constant 0 : index
    %380 = vector.load %arg17[%c0_205, %c0_206] : memref<64x512xf32, #tpu.memory_space<vmem>>, vector<8x512xf32>
    %381 = arith.truncf %378 : vector<8x128xf32> to vector<8x128xbf16>
    %c0_207 = arith.constant 0 : index
    %c0_208 = arith.constant 0 : index
    %382 = vector.load %arg6[%c0_207, %c0_208] : memref<128x512xbf16, #tpu.memory_space<vmem>>, vector<128x512xbf16>
    %cst_209 = arith.constant dense<0.000000e+00> : vector<8x512xf32>
    %383 = tpu.matmul %381, %382, %cst_209 {dimension_numbers = #tpu.dot_dimension_numbers<[1], [0], [0], [1], [0, 0, 1, 1], [], []>} : vector<8x128xbf16>, vector<128x512xbf16>, vector<8x512xf32> -> vector<8x512xf32>
    %384 = arith.addf %380, %383 : vector<8x512xf32>
    %385 = vector.extract_strided_slice %384 {offsets = [0, 0], sizes = [8, 128], strides = [1, 1]} : vector<8x512xf32> to vector<8x128xf32>
    %cst_210 = arith.constant 5.000000e-01 : f32
    %386 = vector.broadcast %cst_210 : f32 to vector<8x128xf32>
    %387 = arith.mulf %386, %385 : vector<8x128xf32>
    %388 = math.tanh %387 : vector<8x128xf32>
    %cst_211 = arith.constant 5.000000e-01 : f32
    %389 = vector.broadcast %cst_211 : f32 to vector<8x128xf32>
    %390 = arith.mulf %389, %388 : vector<8x128xf32>
    %cst_212 = arith.constant 5.000000e-01 : f32
    %391 = vector.broadcast %cst_212 : f32 to vector<8x128xf32>
    %392 = arith.addf %390, %391 : vector<8x128xf32>
    %393 = vector.extract_strided_slice %384 {offsets = [0, 128], sizes = [8, 128], strides = [1, 1]} : vector<8x512xf32> to vector<8x128xf32>
    %cst_213 = arith.constant 5.000000e-01 : f32
    %394 = vector.broadcast %cst_213 : f32 to vector<8x128xf32>
    %395 = arith.mulf %394, %393 : vector<8x128xf32>
    %396 = math.tanh %395 : vector<8x128xf32>
    %cst_214 = arith.constant 5.000000e-01 : f32
    %397 = vector.broadcast %cst_214 : f32 to vector<8x128xf32>
    %398 = arith.mulf %397, %396 : vector<8x128xf32>
    %cst_215 = arith.constant 5.000000e-01 : f32
    %399 = vector.broadcast %cst_215 : f32 to vector<8x128xf32>
    %400 = arith.addf %398, %399 : vector<8x128xf32>
    %401 = vector.extract_strided_slice %384 {offsets = [0, 256], sizes = [8, 128], strides = [1, 1]} : vector<8x512xf32> to vector<8x128xf32>
    %402 = math.tanh %401 : vector<8x128xf32>
    %403 = vector.extract_strided_slice %384 {offsets = [0, 384], sizes = [8, 128], strides = [1, 1]} : vector<8x512xf32> to vector<8x128xf32>
    %cst_216 = arith.constant 5.000000e-01 : f32
    %404 = vector.broadcast %cst_216 : f32 to vector<8x128xf32>
    %405 = arith.mulf %404, %403 : vector<8x128xf32>
    %406 = math.tanh %405 : vector<8x128xf32>
    %cst_217 = arith.constant 5.000000e-01 : f32
    %407 = vector.broadcast %cst_217 : f32 to vector<8x128xf32>
    %408 = arith.mulf %407, %406 : vector<8x128xf32>
    %cst_218 = arith.constant 5.000000e-01 : f32
    %409 = vector.broadcast %cst_218 : f32 to vector<8x128xf32>
    %410 = arith.addf %408, %409 : vector<8x128xf32>
    %411 = arith.mulf %400, %379 : vector<8x128xf32>
    %412 = arith.mulf %392, %402 : vector<8x128xf32>
    %413 = arith.addf %411, %412 : vector<8x128xf32>
    %414 = math.tanh %413 : vector<8x128xf32>
    %415 = arith.mulf %410, %414 : vector<8x128xf32>
    %c0_219 = arith.constant 0 : index
    %c0_220 = arith.constant 0 : index
    %416 = vector.load %arg16[%c0_219, %c0_220] : memref<64x128xf32, #tpu.memory_space<vmem>>, vector<8x128xf32>
    tpu.vector_store %arg16[%c0_219, %c0_220], %415 {strides = array<i32>} : memref<64x128xf32, #tpu.memory_space<vmem>>, vector<8x128xf32>,
    %c8_221 = arith.constant 8 : index
    %c0_222 = arith.constant 0 : index
    %417 = vector.load %arg17[%c8_221, %c0_222] : memref<64x512xf32, #tpu.memory_space<vmem>>, vector<8x512xf32>
    %418 = arith.truncf %415 : vector<8x128xf32> to vector<8x128xbf16>
    %c0_223 = arith.constant 0 : index
    %c0_224 = arith.constant 0 : index
    %419 = vector.load %arg6[%c0_223, %c0_224] : memref<128x512xbf16, #tpu.memory_space<vmem>>, vector<128x512xbf16>
    %cst_225 = arith.constant dense<0.000000e+00> : vector<8x512xf32>
    %420 = tpu.matmul %418, %419, %cst_225 {dimension_numbers = #tpu.dot_dimension_numbers<[1], [0], [0], [1], [0, 0, 1, 1], [], []>} : vector<8x128xbf16>, vector<128x512xbf16>, vector<8x512xf32> -> vector<8x512xf32>
    %421 = arith.addf %417, %420 : vector<8x512xf32>
    %422 = vector.extract_strided_slice %421 {offsets = [0, 0], sizes = [8, 128], strides = [1, 1]} : vector<8x512xf32> to vector<8x128xf32>
    %cst_226 = arith.constant 5.000000e-01 : f32
    %423 = vector.broadcast %cst_226 : f32 to vector<8x128xf32>
    %424 = arith.mulf %423, %422 : vector<8x128xf32>
    %425 = math.tanh %424 : vector<8x128xf32>
    %cst_227 = arith.constant 5.000000e-01 : f32
    %426 = vector.broadcast %cst_227 : f32 to vector<8x128xf32>
    %427 = arith.mulf %426, %425 : vector<8x128xf32>
    %cst_228 = arith.constant 5.000000e-01 : f32
    %428 = vector.broadcast %cst_228 : f32 to vector<8x128xf32>
    %429 = arith.addf %427, %428 : vector<8x128xf32>
    %430 = vector.extract_strided_slice %421 {offsets = [0, 128], sizes = [8, 128], strides = [1, 1]} : vector<8x512xf32> to vector<8x128xf32>
    %cst_229 = arith.constant 5.000000e-01 : f32
    %431 = vector.broadcast %cst_229 : f32 to vector<8x128xf32>
    %432 = arith.mulf %431, %430 : vector<8x128xf32>
    %433 = math.tanh %432 : vector<8x128xf32>
    %cst_230 = arith.constant 5.000000e-01 : f32
    %434 = vector.broadcast %cst_230 : f32 to vector<8x128xf32>
    %435 = arith.mulf %434, %433 : vector<8x128xf32>
    %cst_231 = arith.constant 5.000000e-01 : f32
    %436 = vector.broadcast %cst_231 : f32 to vector<8x128xf32>
    %437 = arith.addf %435, %436 : vector<8x128xf32>
    %438 = vector.extract_strided_slice %421 {offsets = [0, 256], sizes = [8, 128], strides = [1, 1]} : vector<8x512xf32> to vector<8x128xf32>
    %439 = math.tanh %438 : vector<8x128xf32>
    %440 = vector.extract_strided_slice %421 {offsets = [0, 384], sizes = [8, 128], strides = [1, 1]} : vector<8x512xf32> to vector<8x128xf32>
    %cst_232 = arith.constant 5.000000e-01 : f32
    %441 = vector.broadcast %cst_232 : f32 to vector<8x128xf32>
    %442 = arith.mulf %441, %440 : vector<8x128xf32>
    %443 = math.tanh %442 : vector<8x128xf32>
    %cst_233 = arith.constant 5.000000e-01 : f32
    %444 = vector.broadcast %cst_233 : f32 to vector<8x128xf32>
    %445 = arith.mulf %444, %443 : vector<8x128xf32>
    %cst_234 = arith.constant 5.000000e-01 : f32
    %446 = vector.broadcast %cst_234 : f32 to vector<8x128xf32>
    %447 = arith.addf %445, %446 : vector<8x128xf32>
    %448 = arith.mulf %437, %413 : vector<8x128xf32>
    %449 = arith.mulf %429, %439 : vector<8x128xf32>
    %450 = arith.addf %448, %449 : vector<8x128xf32>
    %451 = math.tanh %450 : vector<8x128xf32>
    %452 = arith.mulf %447, %451 : vector<8x128xf32>
    %c8_235 = arith.constant 8 : index
    %c0_236 = arith.constant 0 : index
    %453 = vector.load %arg16[%c8_235, %c0_236] : memref<64x128xf32, #tpu.memory_space<vmem>>, vector<8x128xf32>
    tpu.vector_store %arg16[%c8_235, %c0_236], %452 {strides = array<i32>} : memref<64x128xf32, #tpu.memory_space<vmem>>, vector<8x128xf32>,
    %c16_237 = arith.constant 16 : index
    %c0_238 = arith.constant 0 : index
    %454 = vector.load %arg17[%c16_237, %c0_238] : memref<64x512xf32, #tpu.memory_space<vmem>>, vector<8x512xf32>
    %455 = arith.truncf %452 : vector<8x128xf32> to vector<8x128xbf16>
    %c0_239 = arith.constant 0 : index
    %c0_240 = arith.constant 0 : index
    %456 = vector.load %arg6[%c0_239, %c0_240] : memref<128x512xbf16, #tpu.memory_space<vmem>>, vector<128x512xbf16>
    %cst_241 = arith.constant dense<0.000000e+00> : vector<8x512xf32>
    %457 = tpu.matmul %455, %456, %cst_241 {dimension_numbers = #tpu.dot_dimension_numbers<[1], [0], [0], [1], [0, 0, 1, 1], [], []>} : vector<8x128xbf16>, vector<128x512xbf16>, vector<8x512xf32> -> vector<8x512xf32>
    %458 = arith.addf %454, %457 : vector<8x512xf32>
    %459 = vector.extract_strided_slice %458 {offsets = [0, 0], sizes = [8, 128], strides = [1, 1]} : vector<8x512xf32> to vector<8x128xf32>
    %cst_242 = arith.constant 5.000000e-01 : f32
    %460 = vector.broadcast %cst_242 : f32 to vector<8x128xf32>
    %461 = arith.mulf %460, %459 : vector<8x128xf32>
    %462 = math.tanh %461 : vector<8x128xf32>
    %cst_243 = arith.constant 5.000000e-01 : f32
    %463 = vector.broadcast %cst_243 : f32 to vector<8x128xf32>
    %464 = arith.mulf %463, %462 : vector<8x128xf32>
    %cst_244 = arith.constant 5.000000e-01 : f32
    %465 = vector.broadcast %cst_244 : f32 to vector<8x128xf32>
    %466 = arith.addf %464, %465 : vector<8x128xf32>
    %467 = vector.extract_strided_slice %458 {offsets = [0, 128], sizes = [8, 128], strides = [1, 1]} : vector<8x512xf32> to vector<8x128xf32>
    %cst_245 = arith.constant 5.000000e-01 : f32
    %468 = vector.broadcast %cst_245 : f32 to vector<8x128xf32>
    %469 = arith.mulf %468, %467 : vector<8x128xf32>
    %470 = math.tanh %469 : vector<8x128xf32>
    %cst_246 = arith.constant 5.000000e-01 : f32
    %471 = vector.broadcast %cst_246 : f32 to vector<8x128xf32>
    %472 = arith.mulf %471, %470 : vector<8x128xf32>
    %cst_247 = arith.constant 5.000000e-01 : f32
    %473 = vector.broadcast %cst_247 : f32 to vector<8x128xf32>
    %474 = arith.addf %472, %473 : vector<8x128xf32>
    %475 = vector.extract_strided_slice %458 {offsets = [0, 256], sizes = [8, 128], strides = [1, 1]} : vector<8x512xf32> to vector<8x128xf32>
    %476 = math.tanh %475 : vector<8x128xf32>
    %477 = vector.extract_strided_slice %458 {offsets = [0, 384], sizes = [8, 128], strides = [1, 1]} : vector<8x512xf32> to vector<8x128xf32>
    %cst_248 = arith.constant 5.000000e-01 : f32
    %478 = vector.broadcast %cst_248 : f32 to vector<8x128xf32>
    %479 = arith.mulf %478, %477 : vector<8x128xf32>
    %480 = math.tanh %479 : vector<8x128xf32>
    %cst_249 = arith.constant 5.000000e-01 : f32
    %481 = vector.broadcast %cst_249 : f32 to vector<8x128xf32>
    %482 = arith.mulf %481, %480 : vector<8x128xf32>
    %cst_250 = arith.constant 5.000000e-01 : f32
    %483 = vector.broadcast %cst_250 : f32 to vector<8x128xf32>
    %484 = arith.addf %482, %483 : vector<8x128xf32>
    %485 = arith.mulf %474, %450 : vector<8x128xf32>
    %486 = arith.mulf %466, %476 : vector<8x128xf32>
    %487 = arith.addf %485, %486 : vector<8x128xf32>
    %488 = math.tanh %487 : vector<8x128xf32>
    %489 = arith.mulf %484, %488 : vector<8x128xf32>
    %c16_251 = arith.constant 16 : index
    %c0_252 = arith.constant 0 : index
    %490 = vector.load %arg16[%c16_251, %c0_252] : memref<64x128xf32, #tpu.memory_space<vmem>>, vector<8x128xf32>
    tpu.vector_store %arg16[%c16_251, %c0_252], %489 {strides = array<i32>} : memref<64x128xf32, #tpu.memory_space<vmem>>, vector<8x128xf32>,
    %c24_253 = arith.constant 24 : index
    %c0_254 = arith.constant 0 : index
    %491 = vector.load %arg17[%c24_253, %c0_254] : memref<64x512xf32, #tpu.memory_space<vmem>>, vector<8x512xf32>
    %492 = arith.truncf %489 : vector<8x128xf32> to vector<8x128xbf16>
    %c0_255 = arith.constant 0 : index
    %c0_256 = arith.constant 0 : index
    %493 = vector.load %arg6[%c0_255, %c0_256] : memref<128x512xbf16, #tpu.memory_space<vmem>>, vector<128x512xbf16>
    %cst_257 = arith.constant dense<0.000000e+00> : vector<8x512xf32>
    %494 = tpu.matmul %492, %493, %cst_257 {dimension_numbers = #tpu.dot_dimension_numbers<[1], [0], [0], [1], [0, 0, 1, 1], [], []>} : vector<8x128xbf16>, vector<128x512xbf16>, vector<8x512xf32> -> vector<8x512xf32>
    %495 = arith.addf %491, %494 : vector<8x512xf32>
    %496 = vector.extract_strided_slice %495 {offsets = [0, 0], sizes = [8, 128], strides = [1, 1]} : vector<8x512xf32> to vector<8x128xf32>
    %cst_258 = arith.constant 5.000000e-01 : f32
    %497 = vector.broadcast %cst_258 : f32 to vector<8x128xf32>
    %498 = arith.mulf %497, %496 : vector<8x128xf32>
    %499 = math.tanh %498 : vector<8x128xf32>
    %cst_259 = arith.constant 5.000000e-01 : f32
    %500 = vector.broadcast %cst_259 : f32 to vector<8x128xf32>
    %501 = arith.mulf %500, %499 : vector<8x128xf32>
    %cst_260 = arith.constant 5.000000e-01 : f32
    %502 = vector.broadcast %cst_260 : f32 to vector<8x128xf32>
    %503 = arith.addf %501, %502 : vector<8x128xf32>
    %504 = vector.extract_strided_slice %495 {offsets = [0, 128], sizes = [8, 128], strides = [1, 1]} : vector<8x512xf32> to vector<8x128xf32>
    %cst_261 = arith.constant 5.000000e-01 : f32
    %505 = vector.broadcast %cst_261 : f32 to vector<8x128xf32>
    %506 = arith.mulf %505, %504 : vector<8x128xf32>
    %507 = math.tanh %506 : vector<8x128xf32>
    %cst_262 = arith.constant 5.000000e-01 : f32
    %508 = vector.broadcast %cst_262 : f32 to vector<8x128xf32>
    %509 = arith.mulf %508, %507 : vector<8x128xf32>
    %cst_263 = arith.constant 5.000000e-01 : f32
    %510 = vector.broadcast %cst_263 : f32 to vector<8x128xf32>
    %511 = arith.addf %509, %510 : vector<8x128xf32>
    %512 = vector.extract_strided_slice %495 {offsets = [0, 256], sizes = [8, 128], strides = [1, 1]} : vector<8x512xf32> to vector<8x128xf32>
    %513 = math.tanh %512 : vector<8x128xf32>
    %514 = vector.extract_strided_slice %495 {offsets = [0, 384], sizes = [8, 128], strides = [1, 1]} : vector<8x512xf32> to vector<8x128xf32>
    %cst_264 = arith.constant 5.000000e-01 : f32
    %515 = vector.broadcast %cst_264 : f32 to vector<8x128xf32>
    %516 = arith.mulf %515, %514 : vector<8x128xf32>
    %517 = math.tanh %516 : vector<8x128xf32>
    %cst_265 = arith.constant 5.000000e-01 : f32
    %518 = vector.broadcast %cst_265 : f32 to vector<8x128xf32>
    %519 = arith.mulf %518, %517 : vector<8x128xf32>
    %cst_266 = arith.constant 5.000000e-01 : f32
    %520 = vector.broadcast %cst_266 : f32 to vector<8x128xf32>
    %521 = arith.addf %519, %520 : vector<8x128xf32>
    %522 = arith.mulf %511, %487 : vector<8x128xf32>
    %523 = arith.mulf %503, %513 : vector<8x128xf32>
    %524 = arith.addf %522, %523 : vector<8x128xf32>
    %525 = math.tanh %524 : vector<8x128xf32>
    %526 = arith.mulf %521, %525 : vector<8x128xf32>
    %c24_267 = arith.constant 24 : index
    %c0_268 = arith.constant 0 : index
    %527 = vector.load %arg16[%c24_267, %c0_268] : memref<64x128xf32, #tpu.memory_space<vmem>>, vector<8x128xf32>
    tpu.vector_store %arg16[%c24_267, %c0_268], %526 {strides = array<i32>} : memref<64x128xf32, #tpu.memory_space<vmem>>, vector<8x128xf32>,
    %c32_269 = arith.constant 32 : index
    %c0_270 = arith.constant 0 : index
    %528 = vector.load %arg17[%c32_269, %c0_270] : memref<64x512xf32, #tpu.memory_space<vmem>>, vector<8x512xf32>
    %529 = arith.truncf %526 : vector<8x128xf32> to vector<8x128xbf16>
    %c0_271 = arith.constant 0 : index
    %c0_272 = arith.constant 0 : index
    %530 = vector.load %arg6[%c0_271, %c0_272] : memref<128x512xbf16, #tpu.memory_space<vmem>>, vector<128x512xbf16>
    %cst_273 = arith.constant dense<0.000000e+00> : vector<8x512xf32>
    %531 = tpu.matmul %529, %530, %cst_273 {dimension_numbers = #tpu.dot_dimension_numbers<[1], [0], [0], [1], [0, 0, 1, 1], [], []>} : vector<8x128xbf16>, vector<128x512xbf16>, vector<8x512xf32> -> vector<8x512xf32>
    %532 = arith.addf %528, %531 : vector<8x512xf32>
    %533 = vector.extract_strided_slice %532 {offsets = [0, 0], sizes = [8, 128], strides = [1, 1]} : vector<8x512xf32> to vector<8x128xf32>
    %cst_274 = arith.constant 5.000000e-01 : f32
    %534 = vector.broadcast %cst_274 : f32 to vector<8x128xf32>
    %535 = arith.mulf %534, %533 : vector<8x128xf32>
    %536 = math.tanh %535 : vector<8x128xf32>
    %cst_275 = arith.constant 5.000000e-01 : f32
    %537 = vector.broadcast %cst_275 : f32 to vector<8x128xf32>
    %538 = arith.mulf %537, %536 : vector<8x128xf32>
    %cst_276 = arith.constant 5.000000e-01 : f32
    %539 = vector.broadcast %cst_276 : f32 to vector<8x128xf32>
    %540 = arith.addf %538, %539 : vector<8x128xf32>
    %541 = vector.extract_strided_slice %532 {offsets = [0, 128], sizes = [8, 128], strides = [1, 1]} : vector<8x512xf32> to vector<8x128xf32>
    %cst_277 = arith.constant 5.000000e-01 : f32
    %542 = vector.broadcast %cst_277 : f32 to vector<8x128xf32>
    %543 = arith.mulf %542, %541 : vector<8x128xf32>
    %544 = math.tanh %543 : vector<8x128xf32>
    %cst_278 = arith.constant 5.000000e-01 : f32
    %545 = vector.broadcast %cst_278 : f32 to vector<8x128xf32>
    %546 = arith.mulf %545, %544 : vector<8x128xf32>
    %cst_279 = arith.constant 5.000000e-01 : f32
    %547 = vector.broadcast %cst_279 : f32 to vector<8x128xf32>
    %548 = arith.addf %546, %547 : vector<8x128xf32>
    %549 = vector.extract_strided_slice %532 {offsets = [0, 256], sizes = [8, 128], strides = [1, 1]} : vector<8x512xf32> to vector<8x128xf32>
    %550 = math.tanh %549 : vector<8x128xf32>
    %551 = vector.extract_strided_slice %532 {offsets = [0, 384], sizes = [8, 128], strides = [1, 1]} : vector<8x512xf32> to vector<8x128xf32>
    %cst_280 = arith.constant 5.000000e-01 : f32
    %552 = vector.broadcast %cst_280 : f32 to vector<8x128xf32>
    %553 = arith.mulf %552, %551 : vector<8x128xf32>
    %554 = math.tanh %553 : vector<8x128xf32>
    %cst_281 = arith.constant 5.000000e-01 : f32
    %555 = vector.broadcast %cst_281 : f32 to vector<8x128xf32>
    %556 = arith.mulf %555, %554 : vector<8x128xf32>
    %cst_282 = arith.constant 5.000000e-01 : f32
    %557 = vector.broadcast %cst_282 : f32 to vector<8x128xf32>
    %558 = arith.addf %556, %557 : vector<8x128xf32>
    %559 = arith.mulf %548, %524 : vector<8x128xf32>
    %560 = arith.mulf %540, %550 : vector<8x128xf32>
    %561 = arith.addf %559, %560 : vector<8x128xf32>
    %562 = math.tanh %561 : vector<8x128xf32>
    %563 = arith.mulf %558, %562 : vector<8x128xf32>
    %c32_283 = arith.constant 32 : index
    %c0_284 = arith.constant 0 : index
    %564 = vector.load %arg16[%c32_283, %c0_284] : memref<64x128xf32, #tpu.memory_space<vmem>>, vector<8x128xf32>
    tpu.vector_store %arg16[%c32_283, %c0_284], %563 {strides = array<i32>} : memref<64x128xf32, #tpu.memory_space<vmem>>, vector<8x128xf32>,
    %c40_285 = arith.constant 40 : index
    %c0_286 = arith.constant 0 : index
    %565 = vector.load %arg17[%c40_285, %c0_286] : memref<64x512xf32, #tpu.memory_space<vmem>>, vector<8x512xf32>
    %566 = arith.truncf %563 : vector<8x128xf32> to vector<8x128xbf16>
    %c0_287 = arith.constant 0 : index
    %c0_288 = arith.constant 0 : index
    %567 = vector.load %arg6[%c0_287, %c0_288] : memref<128x512xbf16, #tpu.memory_space<vmem>>, vector<128x512xbf16>
    %cst_289 = arith.constant dense<0.000000e+00> : vector<8x512xf32>
    %568 = tpu.matmul %566, %567, %cst_289 {dimension_numbers = #tpu.dot_dimension_numbers<[1], [0], [0], [1], [0, 0, 1, 1], [], []>} : vector<8x128xbf16>, vector<128x512xbf16>, vector<8x512xf32> -> vector<8x512xf32>
    %569 = arith.addf %565, %568 : vector<8x512xf32>
    %570 = vector.extract_strided_slice %569 {offsets = [0, 0], sizes = [8, 128], strides = [1, 1]} : vector<8x512xf32> to vector<8x128xf32>
    %cst_290 = arith.constant 5.000000e-01 : f32
    %571 = vector.broadcast %cst_290 : f32 to vector<8x128xf32>
    %572 = arith.mulf %571, %570 : vector<8x128xf32>
    %573 = math.tanh %572 : vector<8x128xf32>
    %cst_291 = arith.constant 5.000000e-01 : f32
    %574 = vector.broadcast %cst_291 : f32 to vector<8x128xf32>
    %575 = arith.mulf %574, %573 : vector<8x128xf32>
    %cst_292 = arith.constant 5.000000e-01 : f32
    %576 = vector.broadcast %cst_292 : f32 to vector<8x128xf32>
    %577 = arith.addf %575, %576 : vector<8x128xf32>
    %578 = vector.extract_strided_slice %569 {offsets = [0, 128], sizes = [8, 128], strides = [1, 1]} : vector<8x512xf32> to vector<8x128xf32>
    %cst_293 = arith.constant 5.000000e-01 : f32
    %579 = vector.broadcast %cst_293 : f32 to vector<8x128xf32>
    %580 = arith.mulf %579, %578 : vector<8x128xf32>
    %581 = math.tanh %580 : vector<8x128xf32>
    %cst_294 = arith.constant 5.000000e-01 : f32
    %582 = vector.broadcast %cst_294 : f32 to vector<8x128xf32>
    %583 = arith.mulf %582, %581 : vector<8x128xf32>
    %cst_295 = arith.constant 5.000000e-01 : f32
    %584 = vector.broadcast %cst_295 : f32 to vector<8x128xf32>
    %585 = arith.addf %583, %584 : vector<8x128xf32>
    %586 = vector.extract_strided_slice %569 {offsets = [0, 256], sizes = [8, 128], strides = [1, 1]} : vector<8x512xf32> to vector<8x128xf32>
    %587 = math.tanh %586 : vector<8x128xf32>
    %588 = vector.extract_strided_slice %569 {offsets = [0, 384], sizes = [8, 128], strides = [1, 1]} : vector<8x512xf32> to vector<8x128xf32>
    %cst_296 = arith.constant 5.000000e-01 : f32
    %589 = vector.broadcast %cst_296 : f32 to vector<8x128xf32>
    %590 = arith.mulf %589, %588 : vector<8x128xf32>
    %591 = math.tanh %590 : vector<8x128xf32>
    %cst_297 = arith.constant 5.000000e-01 : f32
    %592 = vector.broadcast %cst_297 : f32 to vector<8x128xf32>
    %593 = arith.mulf %592, %591 : vector<8x128xf32>
    %cst_298 = arith.constant 5.000000e-01 : f32
    %594 = vector.broadcast %cst_298 : f32 to vector<8x128xf32>
    %595 = arith.addf %593, %594 : vector<8x128xf32>
    %596 = arith.mulf %585, %561 : vector<8x128xf32>
    %597 = arith.mulf %577, %587 : vector<8x128xf32>
    %598 = arith.addf %596, %597 : vector<8x128xf32>
    %599 = math.tanh %598 : vector<8x128xf32>
    %600 = arith.mulf %595, %599 : vector<8x128xf32>
    %c40_299 = arith.constant 40 : index
    %c0_300 = arith.constant 0 : index
    %601 = vector.load %arg16[%c40_299, %c0_300] : memref<64x128xf32, #tpu.memory_space<vmem>>, vector<8x128xf32>
    tpu.vector_store %arg16[%c40_299, %c0_300], %600 {strides = array<i32>} : memref<64x128xf32, #tpu.memory_space<vmem>>, vector<8x128xf32>,
    %c48_301 = arith.constant 48 : index
    %c0_302 = arith.constant 0 : index
    %602 = vector.load %arg17[%c48_301, %c0_302] : memref<64x512xf32, #tpu.memory_space<vmem>>, vector<8x512xf32>
    %603 = arith.truncf %600 : vector<8x128xf32> to vector<8x128xbf16>
    %c0_303 = arith.constant 0 : index
    %c0_304 = arith.constant 0 : index
    %604 = vector.load %arg6[%c0_303, %c0_304] : memref<128x512xbf16, #tpu.memory_space<vmem>>, vector<128x512xbf16>
    %cst_305 = arith.constant dense<0.000000e+00> : vector<8x512xf32>
    %605 = tpu.matmul %603, %604, %cst_305 {dimension_numbers = #tpu.dot_dimension_numbers<[1], [0], [0], [1], [0, 0, 1, 1], [], []>} : vector<8x128xbf16>, vector<128x512xbf16>, vector<8x512xf32> -> vector<8x512xf32>
    %606 = arith.addf %602, %605 : vector<8x512xf32>
    %607 = vector.extract_strided_slice %606 {offsets = [0, 0], sizes = [8, 128], strides = [1, 1]} : vector<8x512xf32> to vector<8x128xf32>
    %cst_306 = arith.constant 5.000000e-01 : f32
    %608 = vector.broadcast %cst_306 : f32 to vector<8x128xf32>
    %609 = arith.mulf %608, %607 : vector<8x128xf32>
    %610 = math.tanh %609 : vector<8x128xf32>
    %cst_307 = arith.constant 5.000000e-01 : f32
    %611 = vector.broadcast %cst_307 : f32 to vector<8x128xf32>
    %612 = arith.mulf %611, %610 : vector<8x128xf32>
    %cst_308 = arith.constant 5.000000e-01 : f32
    %613 = vector.broadcast %cst_308 : f32 to vector<8x128xf32>
    %614 = arith.addf %612, %613 : vector<8x128xf32>
    %615 = vector.extract_strided_slice %606 {offsets = [0, 128], sizes = [8, 128], strides = [1, 1]} : vector<8x512xf32> to vector<8x128xf32>
    %cst_309 = arith.constant 5.000000e-01 : f32
    %616 = vector.broadcast %cst_309 : f32 to vector<8x128xf32>
    %617 = arith.mulf %616, %615 : vector<8x128xf32>
    %618 = math.tanh %617 : vector<8x128xf32>
    %cst_310 = arith.constant 5.000000e-01 : f32
    %619 = vector.broadcast %cst_310 : f32 to vector<8x128xf32>
    %620 = arith.mulf %619, %618 : vector<8x128xf32>
    %cst_311 = arith.constant 5.000000e-01 : f32
    %621 = vector.broadcast %cst_311 : f32 to vector<8x128xf32>
    %622 = arith.addf %620, %621 : vector<8x128xf32>
    %623 = vector.extract_strided_slice %606 {offsets = [0, 256], sizes = [8, 128], strides = [1, 1]} : vector<8x512xf32> to vector<8x128xf32>
    %624 = math.tanh %623 : vector<8x128xf32>
    %625 = vector.extract_strided_slice %606 {offsets = [0, 384], sizes = [8, 128], strides = [1, 1]} : vector<8x512xf32> to vector<8x128xf32>
    %cst_312 = arith.constant 5.000000e-01 : f32
    %626 = vector.broadcast %cst_312 : f32 to vector<8x128xf32>
    %627 = arith.mulf %626, %625 : vector<8x128xf32>
    %628 = math.tanh %627 : vector<8x128xf32>
    %cst_313 = arith.constant 5.000000e-01 : f32
    %629 = vector.broadcast %cst_313 : f32 to vector<8x128xf32>
    %630 = arith.mulf %629, %628 : vector<8x128xf32>
    %cst_314 = arith.constant 5.000000e-01 : f32
    %631 = vector.broadcast %cst_314 : f32 to vector<8x128xf32>
    %632 = arith.addf %630, %631 : vector<8x128xf32>
    %633 = arith.mulf %622, %598 : vector<8x128xf32>
    %634 = arith.mulf %614, %624 : vector<8x128xf32>
    %635 = arith.addf %633, %634 : vector<8x128xf32>
    %636 = math.tanh %635 : vector<8x128xf32>
    %637 = arith.mulf %632, %636 : vector<8x128xf32>
    %c48_315 = arith.constant 48 : index
    %c0_316 = arith.constant 0 : index
    %638 = vector.load %arg16[%c48_315, %c0_316] : memref<64x128xf32, #tpu.memory_space<vmem>>, vector<8x128xf32>
    tpu.vector_store %arg16[%c48_315, %c0_316], %637 {strides = array<i32>} : memref<64x128xf32, #tpu.memory_space<vmem>>, vector<8x128xf32>,
    %c56_317 = arith.constant 56 : index
    %c0_318 = arith.constant 0 : index
    %639 = vector.load %arg17[%c56_317, %c0_318] : memref<64x512xf32, #tpu.memory_space<vmem>>, vector<8x512xf32>
    %640 = arith.truncf %637 : vector<8x128xf32> to vector<8x128xbf16>
    %c0_319 = arith.constant 0 : index
    %c0_320 = arith.constant 0 : index
    %641 = vector.load %arg6[%c0_319, %c0_320] : memref<128x512xbf16, #tpu.memory_space<vmem>>, vector<128x512xbf16>
    %cst_321 = arith.constant dense<0.000000e+00> : vector<8x512xf32>
    %642 = tpu.matmul %640, %641, %cst_321 {dimension_numbers = #tpu.dot_dimension_numbers<[1], [0], [0], [1], [0, 0, 1, 1], [], []>} : vector<8x128xbf16>, vector<128x512xbf16>, vector<8x512xf32> -> vector<8x512xf32>
    %643 = arith.addf %639, %642 : vector<8x512xf32>
    %644 = vector.extract_strided_slice %643 {offsets = [0, 0], sizes = [8, 128], strides = [1, 1]} : vector<8x512xf32> to vector<8x128xf32>
    %cst_322 = arith.constant 5.000000e-01 : f32
    %645 = vector.broadcast %cst_322 : f32 to vector<8x128xf32>
    %646 = arith.mulf %645, %644 : vector<8x128xf32>
    %647 = math.tanh %646 : vector<8x128xf32>
    %cst_323 = arith.constant 5.000000e-01 : f32
    %648 = vector.broadcast %cst_323 : f32 to vector<8x128xf32>
    %649 = arith.mulf %648, %647 : vector<8x128xf32>
    %cst_324 = arith.constant 5.000000e-01 : f32
    %650 = vector.broadcast %cst_324 : f32 to vector<8x128xf32>
    %651 = arith.addf %649, %650 : vector<8x128xf32>
    %652 = vector.extract_strided_slice %643 {offsets = [0, 128], sizes = [8, 128], strides = [1, 1]} : vector<8x512xf32> to vector<8x128xf32>
    %cst_325 = arith.constant 5.000000e-01 : f32
    %653 = vector.broadcast %cst_325 : f32 to vector<8x128xf32>
    %654 = arith.mulf %653, %652 : vector<8x128xf32>
    %655 = math.tanh %654 : vector<8x128xf32>
    %cst_326 = arith.constant 5.000000e-01 : f32
    %656 = vector.broadcast %cst_326 : f32 to vector<8x128xf32>
    %657 = arith.mulf %656, %655 : vector<8x128xf32>
    %cst_327 = arith.constant 5.000000e-01 : f32
    %658 = vector.broadcast %cst_327 : f32 to vector<8x128xf32>
    %659 = arith.addf %657, %658 : vector<8x128xf32>
    %660 = vector.extract_strided_slice %643 {offsets = [0, 256], sizes = [8, 128], strides = [1, 1]} : vector<8x512xf32> to vector<8x128xf32>
    %661 = math.tanh %660 : vector<8x128xf32>
    %662 = vector.extract_strided_slice %643 {offsets = [0, 384], sizes = [8, 128], strides = [1, 1]} : vector<8x512xf32> to vector<8x128xf32>
    %cst_328 = arith.constant 5.000000e-01 : f32
    %663 = vector.broadcast %cst_328 : f32 to vector<8x128xf32>
    %664 = arith.mulf %663, %662 : vector<8x128xf32>
    %665 = math.tanh %664 : vector<8x128xf32>
    %cst_329 = arith.constant 5.000000e-01 : f32
    %666 = vector.broadcast %cst_329 : f32 to vector<8x128xf32>
    %667 = arith.mulf %666, %665 : vector<8x128xf32>
    %cst_330 = arith.constant 5.000000e-01 : f32
    %668 = vector.broadcast %cst_330 : f32 to vector<8x128xf32>
    %669 = arith.addf %667, %668 : vector<8x128xf32>
    %670 = arith.mulf %659, %635 : vector<8x128xf32>
    %671 = arith.mulf %651, %661 : vector<8x128xf32>
    %672 = arith.addf %670, %671 : vector<8x128xf32>
    %673 = math.tanh %672 : vector<8x128xf32>
    %674 = arith.mulf %669, %673 : vector<8x128xf32>
    %c56_331 = arith.constant 56 : index
    %c0_332 = arith.constant 0 : index
    %675 = vector.load %arg16[%c56_331, %c0_332] : memref<64x128xf32, #tpu.memory_space<vmem>>, vector<8x128xf32>
    tpu.vector_store %arg16[%c56_331, %c0_332], %674 {strides = array<i32>} : memref<64x128xf32, #tpu.memory_space<vmem>>, vector<8x128xf32>,
    %c0_333 = arith.constant 0 : index
    %c0_334 = arith.constant 0 : index
    %676 = vector.load %arg16[%c0_333, %c0_334] : memref<64x128xf32, #tpu.memory_space<vmem>>, vector<64x128xf32>
    %677 = arith.truncf %676 : vector<64x128xf32> to vector<64x128xbf16>
    %c0_335 = arith.constant 0 : index
    %c0_336 = arith.constant 0 : index
    %678 = vector.load %arg8[%c0_335, %c0_336] : memref<128x512xbf16, #tpu.memory_space<vmem>>, vector<128x512xbf16>
    %cst_337 = arith.constant dense<0.000000e+00> : vector<64x512xf32>
    %679 = tpu.matmul %677, %678, %cst_337 {dimension_numbers = #tpu.dot_dimension_numbers<[1], [0], [0], [1], [0, 0, 1, 1], [], []>} : vector<64x128xbf16>, vector<128x512xbf16>, vector<64x512xf32> -> vector<64x512xf32>
    %c0_338 = arith.constant 0 : index
    %c0_339 = arith.constant 0 : index
    %680 = vector.load %arg10[%c0_338, %c0_339] : memref<1x512xf32, #tpu.memory_space<vmem>>, vector<1x512xf32>
    %681 = vector.broadcast %680 : vector<1x512xf32> to vector<64x512xf32>
    %682 = arith.addf %679, %681 : vector<64x512xf32>
    %c0_340 = arith.constant 0 : index
    %c0_341 = arith.constant 0 : index
    %683 = vector.load %arg17[%c0_340, %c0_341] : memref<64x512xf32, #tpu.memory_space<vmem>>, vector<64x512xf32>
    tpu.vector_store %arg17[%c0_340, %c0_341], %682 {strides = array<i32>} : memref<64x512xf32, #tpu.memory_space<vmem>>, vector<64x512xf32>,
    %cst_342 = arith.constant 0.000000e+00 : f32
    %684 = vector.broadcast %cst_342 : f32 to vector<8x128xf32>
    %cst_343 = arith.constant 0.000000e+00 : f32
    %685 = vector.broadcast %cst_343 : f32 to vector<8x128xf32>
    %c0_344 = arith.constant 0 : index
    %c0_345 = arith.constant 0 : index
    %686 = vector.load %arg17[%c0_344, %c0_345] : memref<64x512xf32, #tpu.memory_space<vmem>>, vector<8x512xf32>
    %687 = arith.truncf %684 : vector<8x128xf32> to vector<8x128xbf16>
    %c0_346 = arith.constant 0 : index
    %c0_347 = arith.constant 0 : index
    %688 = vector.load %arg9[%c0_346, %c0_347] : memref<128x512xbf16, #tpu.memory_space<vmem>>, vector<128x512xbf16>
    %cst_348 = arith.constant dense<0.000000e+00> : vector<8x512xf32>
    %689 = tpu.matmul %687, %688, %cst_348 {dimension_numbers = #tpu.dot_dimension_numbers<[1], [0], [0], [1], [0, 0, 1, 1], [], []>} : vector<8x128xbf16>, vector<128x512xbf16>, vector<8x512xf32> -> vector<8x512xf32>
    %690 = arith.addf %686, %689 : vector<8x512xf32>
    %691 = vector.extract_strided_slice %690 {offsets = [0, 0], sizes = [8, 128], strides = [1, 1]} : vector<8x512xf32> to vector<8x128xf32>
    %cst_349 = arith.constant 5.000000e-01 : f32
    %692 = vector.broadcast %cst_349 : f32 to vector<8x128xf32>
    %693 = arith.mulf %692, %691 : vector<8x128xf32>
    %694 = math.tanh %693 : vector<8x128xf32>
    %cst_350 = arith.constant 5.000000e-01 : f32
    %695 = vector.broadcast %cst_350 : f32 to vector<8x128xf32>
    %696 = arith.mulf %695, %694 : vector<8x128xf32>
    %cst_351 = arith.constant 5.000000e-01 : f32
    %697 = vector.broadcast %cst_351 : f32 to vector<8x128xf32>
    %698 = arith.addf %696, %697 : vector<8x128xf32>
    %699 = vector.extract_strided_slice %690 {offsets = [0, 128], sizes = [8, 128], strides = [1, 1]} : vector<8x512xf32> to vector<8x128xf32>
    %cst_352 = arith.constant 5.000000e-01 : f32
    %700 = vector.broadcast %cst_352 : f32 to vector<8x128xf32>
    %701 = arith.mulf %700, %699 : vector<8x128xf32>
    %702 = math.tanh %701 : vector<8x128xf32>
    %cst_353 = arith.constant 5.000000e-01 : f32
    %703 = vector.broadcast %cst_353 : f32 to vector<8x128xf32>
    %704 = arith.mulf %703, %702 : vector<8x128xf32>
    %cst_354 = arith.constant 5.000000e-01 : f32
    %705 = vector.broadcast %cst_354 : f32 to vector<8x128xf32>
    %706 = arith.addf %704, %705 : vector<8x128xf32>
    %707 = vector.extract_strided_slice %690 {offsets = [0, 256], sizes = [8, 128], strides = [1, 1]} : vector<8x512xf32> to vector<8x128xf32>
    %708 = math.tanh %707 : vector<8x128xf32>
    %709 = vector.extract_strided_slice %690 {offsets = [0, 384], sizes = [8, 128], strides = [1, 1]} : vector<8x512xf32> to vector<8x128xf32>
    %cst_355 = arith.constant 5.000000e-01 : f32
    %710 = vector.broadcast %cst_355 : f32 to vector<8x128xf32>
    %711 = arith.mulf %710, %709 : vector<8x128xf32>
    %712 = math.tanh %711 : vector<8x128xf32>
    %cst_356 = arith.constant 5.000000e-01 : f32
    %713 = vector.broadcast %cst_356 : f32 to vector<8x128xf32>
    %714 = arith.mulf %713, %712 : vector<8x128xf32>
    %cst_357 = arith.constant 5.000000e-01 : f32
    %715 = vector.broadcast %cst_357 : f32 to vector<8x128xf32>
    %716 = arith.addf %714, %715 : vector<8x128xf32>
    %717 = arith.mulf %706, %685 : vector<8x128xf32>
    %718 = arith.mulf %698, %708 : vector<8x128xf32>
    %719 = arith.addf %717, %718 : vector<8x128xf32>
    %720 = math.tanh %719 : vector<8x128xf32>
    %721 = arith.mulf %716, %720 : vector<8x128xf32>
    %c8_358 = arith.constant 8 : index
    %c0_359 = arith.constant 0 : index
    %722 = vector.load %arg17[%c8_358, %c0_359] : memref<64x512xf32, #tpu.memory_space<vmem>>, vector<8x512xf32>
    %723 = arith.truncf %721 : vector<8x128xf32> to vector<8x128xbf16>
    %c0_360 = arith.constant 0 : index
    %c0_361 = arith.constant 0 : index
    %724 = vector.load %arg9[%c0_360, %c0_361] : memref<128x512xbf16, #tpu.memory_space<vmem>>, vector<128x512xbf16>
    %cst_362 = arith.constant dense<0.000000e+00> : vector<8x512xf32>
    %725 = tpu.matmul %723, %724, %cst_362 {dimension_numbers = #tpu.dot_dimension_numbers<[1], [0], [0], [1], [0, 0, 1, 1], [], []>} : vector<8x128xbf16>, vector<128x512xbf16>, vector<8x512xf32> -> vector<8x512xf32>
    %726 = arith.addf %722, %725 : vector<8x512xf32>
    %727 = vector.extract_strided_slice %726 {offsets = [0, 0], sizes = [8, 128], strides = [1, 1]} : vector<8x512xf32> to vector<8x128xf32>
    %cst_363 = arith.constant 5.000000e-01 : f32
    %728 = vector.broadcast %cst_363 : f32 to vector<8x128xf32>
    %729 = arith.mulf %728, %727 : vector<8x128xf32>
    %730 = math.tanh %729 : vector<8x128xf32>
    %cst_364 = arith.constant 5.000000e-01 : f32
    %731 = vector.broadcast %cst_364 : f32 to vector<8x128xf32>
    %732 = arith.mulf %731, %730 : vector<8x128xf32>
    %cst_365 = arith.constant 5.000000e-01 : f32
    %733 = vector.broadcast %cst_365 : f32 to vector<8x128xf32>
    %734 = arith.addf %732, %733 : vector<8x128xf32>
    %735 = vector.extract_strided_slice %726 {offsets = [0, 128], sizes = [8, 128], strides = [1, 1]} : vector<8x512xf32> to vector<8x128xf32>
    %cst_366 = arith.constant 5.000000e-01 : f32
    %736 = vector.broadcast %cst_366 : f32 to vector<8x128xf32>
    %737 = arith.mulf %736, %735 : vector<8x128xf32>
    %738 = math.tanh %737 : vector<8x128xf32>
    %cst_367 = arith.constant 5.000000e-01 : f32
    %739 = vector.broadcast %cst_367 : f32 to vector<8x128xf32>
    %740 = arith.mulf %739, %738 : vector<8x128xf32>
    %cst_368 = arith.constant 5.000000e-01 : f32
    %741 = vector.broadcast %cst_368 : f32 to vector<8x128xf32>
    %742 = arith.addf %740, %741 : vector<8x128xf32>
    %743 = vector.extract_strided_slice %726 {offsets = [0, 256], sizes = [8, 128], strides = [1, 1]} : vector<8x512xf32> to vector<8x128xf32>
    %744 = math.tanh %743 : vector<8x128xf32>
    %745 = vector.extract_strided_slice %726 {offsets = [0, 384], sizes = [8, 128], strides = [1, 1]} : vector<8x512xf32> to vector<8x128xf32>
    %cst_369 = arith.constant 5.000000e-01 : f32
    %746 = vector.broadcast %cst_369 : f32 to vector<8x128xf32>
    %747 = arith.mulf %746, %745 : vector<8x128xf32>
    %748 = math.tanh %747 : vector<8x128xf32>
    %cst_370 = arith.constant 5.000000e-01 : f32
    %749 = vector.broadcast %cst_370 : f32 to vector<8x128xf32>
    %750 = arith.mulf %749, %748 : vector<8x128xf32>
    %cst_371 = arith.constant 5.000000e-01 : f32
    %751 = vector.broadcast %cst_371 : f32 to vector<8x128xf32>
    %752 = arith.addf %750, %751 : vector<8x128xf32>
    %753 = arith.mulf %742, %719 : vector<8x128xf32>
    %754 = arith.mulf %734, %744 : vector<8x128xf32>
    %755 = arith.addf %753, %754 : vector<8x128xf32>
    %756 = math.tanh %755 : vector<8x128xf32>
    %757 = arith.mulf %752, %756 : vector<8x128xf32>
    %c16_372 = arith.constant 16 : index
    %c0_373 = arith.constant 0 : index
    %758 = vector.load %arg17[%c16_372, %c0_373] : memref<64x512xf32, #tpu.memory_space<vmem>>, vector<8x512xf32>
    %759 = arith.truncf %757 : vector<8x128xf32> to vector<8x128xbf16>
    %c0_374 = arith.constant 0 : index
    %c0_375 = arith.constant 0 : index
    %760 = vector.load %arg9[%c0_374, %c0_375] : memref<128x512xbf16, #tpu.memory_space<vmem>>, vector<128x512xbf16>
    %cst_376 = arith.constant dense<0.000000e+00> : vector<8x512xf32>
    %761 = tpu.matmul %759, %760, %cst_376 {dimension_numbers = #tpu.dot_dimension_numbers<[1], [0], [0], [1], [0, 0, 1, 1], [], []>} : vector<8x128xbf16>, vector<128x512xbf16>, vector<8x512xf32> -> vector<8x512xf32>
    %762 = arith.addf %758, %761 : vector<8x512xf32>
    %763 = vector.extract_strided_slice %762 {offsets = [0, 0], sizes = [8, 128], strides = [1, 1]} : vector<8x512xf32> to vector<8x128xf32>
    %cst_377 = arith.constant 5.000000e-01 : f32
    %764 = vector.broadcast %cst_377 : f32 to vector<8x128xf32>
    %765 = arith.mulf %764, %763 : vector<8x128xf32>
    %766 = math.tanh %765 : vector<8x128xf32>
    %cst_378 = arith.constant 5.000000e-01 : f32
    %767 = vector.broadcast %cst_378 : f32 to vector<8x128xf32>
    %768 = arith.mulf %767, %766 : vector<8x128xf32>
    %cst_379 = arith.constant 5.000000e-01 : f32
    %769 = vector.broadcast %cst_379 : f32 to vector<8x128xf32>
    %770 = arith.addf %768, %769 : vector<8x128xf32>
    %771 = vector.extract_strided_slice %762 {offsets = [0, 128], sizes = [8, 128], strides = [1, 1]} : vector<8x512xf32> to vector<8x128xf32>
    %cst_380 = arith.constant 5.000000e-01 : f32
    %772 = vector.broadcast %cst_380 : f32 to vector<8x128xf32>
    %773 = arith.mulf %772, %771 : vector<8x128xf32>
    %774 = math.tanh %773 : vector<8x128xf32>
    %cst_381 = arith.constant 5.000000e-01 : f32
    %775 = vector.broadcast %cst_381 : f32 to vector<8x128xf32>
    %776 = arith.mulf %775, %774 : vector<8x128xf32>
    %cst_382 = arith.constant 5.000000e-01 : f32
    %777 = vector.broadcast %cst_382 : f32 to vector<8x128xf32>
    %778 = arith.addf %776, %777 : vector<8x128xf32>
    %779 = vector.extract_strided_slice %762 {offsets = [0, 256], sizes = [8, 128], strides = [1, 1]} : vector<8x512xf32> to vector<8x128xf32>
    %780 = math.tanh %779 : vector<8x128xf32>
    %781 = vector.extract_strided_slice %762 {offsets = [0, 384], sizes = [8, 128], strides = [1, 1]} : vector<8x512xf32> to vector<8x128xf32>
    %cst_383 = arith.constant 5.000000e-01 : f32
    %782 = vector.broadcast %cst_383 : f32 to vector<8x128xf32>
    %783 = arith.mulf %782, %781 : vector<8x128xf32>
    %784 = math.tanh %783 : vector<8x128xf32>
    %cst_384 = arith.constant 5.000000e-01 : f32
    %785 = vector.broadcast %cst_384 : f32 to vector<8x128xf32>
    %786 = arith.mulf %785, %784 : vector<8x128xf32>
    %cst_385 = arith.constant 5.000000e-01 : f32
    %787 = vector.broadcast %cst_385 : f32 to vector<8x128xf32>
    %788 = arith.addf %786, %787 : vector<8x128xf32>
    %789 = arith.mulf %778, %755 : vector<8x128xf32>
    %790 = arith.mulf %770, %780 : vector<8x128xf32>
    %791 = arith.addf %789, %790 : vector<8x128xf32>
    %792 = math.tanh %791 : vector<8x128xf32>
    %793 = arith.mulf %788, %792 : vector<8x128xf32>
    %c24_386 = arith.constant 24 : index
    %c0_387 = arith.constant 0 : index
    %794 = vector.load %arg17[%c24_386, %c0_387] : memref<64x512xf32, #tpu.memory_space<vmem>>, vector<8x512xf32>
    %795 = arith.truncf %793 : vector<8x128xf32> to vector<8x128xbf16>
    %c0_388 = arith.constant 0 : index
    %c0_389 = arith.constant 0 : index
    %796 = vector.load %arg9[%c0_388, %c0_389] : memref<128x512xbf16, #tpu.memory_space<vmem>>, vector<128x512xbf16>
    %cst_390 = arith.constant dense<0.000000e+00> : vector<8x512xf32>
    %797 = tpu.matmul %795, %796, %cst_390 {dimension_numbers = #tpu.dot_dimension_numbers<[1], [0], [0], [1], [0, 0, 1, 1], [], []>} : vector<8x128xbf16>, vector<128x512xbf16>, vector<8x512xf32> -> vector<8x512xf32>
    %798 = arith.addf %794, %797 : vector<8x512xf32>
    %799 = vector.extract_strided_slice %798 {offsets = [0, 0], sizes = [8, 128], strides = [1, 1]} : vector<8x512xf32> to vector<8x128xf32>
    %cst_391 = arith.constant 5.000000e-01 : f32
    %800 = vector.broadcast %cst_391 : f32 to vector<8x128xf32>
    %801 = arith.mulf %800, %799 : vector<8x128xf32>
    %802 = math.tanh %801 : vector<8x128xf32>
    %cst_392 = arith.constant 5.000000e-01 : f32
    %803 = vector.broadcast %cst_392 : f32 to vector<8x128xf32>
    %804 = arith.mulf %803, %802 : vector<8x128xf32>
    %cst_393 = arith.constant 5.000000e-01 : f32
    %805 = vector.broadcast %cst_393 : f32 to vector<8x128xf32>
    %806 = arith.addf %804, %805 : vector<8x128xf32>
    %807 = vector.extract_strided_slice %798 {offsets = [0, 128], sizes = [8, 128], strides = [1, 1]} : vector<8x512xf32> to vector<8x128xf32>
    %cst_394 = arith.constant 5.000000e-01 : f32
    %808 = vector.broadcast %cst_394 : f32 to vector<8x128xf32>
    %809 = arith.mulf %808, %807 : vector<8x128xf32>
    %810 = math.tanh %809 : vector<8x128xf32>
    %cst_395 = arith.constant 5.000000e-01 : f32
    %811 = vector.broadcast %cst_395 : f32 to vector<8x128xf32>
    %812 = arith.mulf %811, %810 : vector<8x128xf32>
    %cst_396 = arith.constant 5.000000e-01 : f32
    %813 = vector.broadcast %cst_396 : f32 to vector<8x128xf32>
    %814 = arith.addf %812, %813 : vector<8x128xf32>
    %815 = vector.extract_strided_slice %798 {offsets = [0, 256], sizes = [8, 128], strides = [1, 1]} : vector<8x512xf32> to vector<8x128xf32>
    %816 = math.tanh %815 : vector<8x128xf32>
    %817 = vector.extract_strided_slice %798 {offsets = [0, 384], sizes = [8, 128], strides = [1, 1]} : vector<8x512xf32> to vector<8x128xf32>
    %cst_397 = arith.constant 5.000000e-01 : f32
    %818 = vector.broadcast %cst_397 : f32 to vector<8x128xf32>
    %819 = arith.mulf %818, %817 : vector<8x128xf32>
    %820 = math.tanh %819 : vector<8x128xf32>
    %cst_398 = arith.constant 5.000000e-01 : f32
    %821 = vector.broadcast %cst_398 : f32 to vector<8x128xf32>
    %822 = arith.mulf %821, %820 : vector<8x128xf32>
    %cst_399 = arith.constant 5.000000e-01 : f32
    %823 = vector.broadcast %cst_399 : f32 to vector<8x128xf32>
    %824 = arith.addf %822, %823 : vector<8x128xf32>
    %825 = arith.mulf %814, %791 : vector<8x128xf32>
    %826 = arith.mulf %806, %816 : vector<8x128xf32>
    %827 = arith.addf %825, %826 : vector<8x128xf32>
    %828 = math.tanh %827 : vector<8x128xf32>
    %829 = arith.mulf %824, %828 : vector<8x128xf32>
    %c32_400 = arith.constant 32 : index
    %c0_401 = arith.constant 0 : index
    %830 = vector.load %arg17[%c32_400, %c0_401] : memref<64x512xf32, #tpu.memory_space<vmem>>, vector<8x512xf32>
    %831 = arith.truncf %829 : vector<8x128xf32> to vector<8x128xbf16>
    %c0_402 = arith.constant 0 : index
    %c0_403 = arith.constant 0 : index
    %832 = vector.load %arg9[%c0_402, %c0_403] : memref<128x512xbf16, #tpu.memory_space<vmem>>, vector<128x512xbf16>
    %cst_404 = arith.constant dense<0.000000e+00> : vector<8x512xf32>
    %833 = tpu.matmul %831, %832, %cst_404 {dimension_numbers = #tpu.dot_dimension_numbers<[1], [0], [0], [1], [0, 0, 1, 1], [], []>} : vector<8x128xbf16>, vector<128x512xbf16>, vector<8x512xf32> -> vector<8x512xf32>
    %834 = arith.addf %830, %833 : vector<8x512xf32>
    %835 = vector.extract_strided_slice %834 {offsets = [0, 0], sizes = [8, 128], strides = [1, 1]} : vector<8x512xf32> to vector<8x128xf32>
    %cst_405 = arith.constant 5.000000e-01 : f32
    %836 = vector.broadcast %cst_405 : f32 to vector<8x128xf32>
    %837 = arith.mulf %836, %835 : vector<8x128xf32>
    %838 = math.tanh %837 : vector<8x128xf32>
    %cst_406 = arith.constant 5.000000e-01 : f32
    %839 = vector.broadcast %cst_406 : f32 to vector<8x128xf32>
    %840 = arith.mulf %839, %838 : vector<8x128xf32>
    %cst_407 = arith.constant 5.000000e-01 : f32
    %841 = vector.broadcast %cst_407 : f32 to vector<8x128xf32>
    %842 = arith.addf %840, %841 : vector<8x128xf32>
    %843 = vector.extract_strided_slice %834 {offsets = [0, 128], sizes = [8, 128], strides = [1, 1]} : vector<8x512xf32> to vector<8x128xf32>
    %cst_408 = arith.constant 5.000000e-01 : f32
    %844 = vector.broadcast %cst_408 : f32 to vector<8x128xf32>
    %845 = arith.mulf %844, %843 : vector<8x128xf32>
    %846 = math.tanh %845 : vector<8x128xf32>
    %cst_409 = arith.constant 5.000000e-01 : f32
    %847 = vector.broadcast %cst_409 : f32 to vector<8x128xf32>
    %848 = arith.mulf %847, %846 : vector<8x128xf32>
    %cst_410 = arith.constant 5.000000e-01 : f32
    %849 = vector.broadcast %cst_410 : f32 to vector<8x128xf32>
    %850 = arith.addf %848, %849 : vector<8x128xf32>
    %851 = vector.extract_strided_slice %834 {offsets = [0, 256], sizes = [8, 128], strides = [1, 1]} : vector<8x512xf32> to vector<8x128xf32>
    %852 = math.tanh %851 : vector<8x128xf32>
    %853 = vector.extract_strided_slice %834 {offsets = [0, 384], sizes = [8, 128], strides = [1, 1]} : vector<8x512xf32> to vector<8x128xf32>
    %cst_411 = arith.constant 5.000000e-01 : f32
    %854 = vector.broadcast %cst_411 : f32 to vector<8x128xf32>
    %855 = arith.mulf %854, %853 : vector<8x128xf32>
    %856 = math.tanh %855 : vector<8x128xf32>
    %cst_412 = arith.constant 5.000000e-01 : f32
    %857 = vector.broadcast %cst_412 : f32 to vector<8x128xf32>
    %858 = arith.mulf %857, %856 : vector<8x128xf32>
    %cst_413 = arith.constant 5.000000e-01 : f32
    %859 = vector.broadcast %cst_413 : f32 to vector<8x128xf32>
    %860 = arith.addf %858, %859 : vector<8x128xf32>
    %861 = arith.mulf %850, %827 : vector<8x128xf32>
    %862 = arith.mulf %842, %852 : vector<8x128xf32>
    %863 = arith.addf %861, %862 : vector<8x128xf32>
    %864 = math.tanh %863 : vector<8x128xf32>
    %865 = arith.mulf %860, %864 : vector<8x128xf32>
    %c40_414 = arith.constant 40 : index
    %c0_415 = arith.constant 0 : index
    %866 = vector.load %arg17[%c40_414, %c0_415] : memref<64x512xf32, #tpu.memory_space<vmem>>, vector<8x512xf32>
    %867 = arith.truncf %865 : vector<8x128xf32> to vector<8x128xbf16>
    %c0_416 = arith.constant 0 : index
    %c0_417 = arith.constant 0 : index
    %868 = vector.load %arg9[%c0_416, %c0_417] : memref<128x512xbf16, #tpu.memory_space<vmem>>, vector<128x512xbf16>
    %cst_418 = arith.constant dense<0.000000e+00> : vector<8x512xf32>
    %869 = tpu.matmul %867, %868, %cst_418 {dimension_numbers = #tpu.dot_dimension_numbers<[1], [0], [0], [1], [0, 0, 1, 1], [], []>} : vector<8x128xbf16>, vector<128x512xbf16>, vector<8x512xf32> -> vector<8x512xf32>
    %870 = arith.addf %866, %869 : vector<8x512xf32>
    %871 = vector.extract_strided_slice %870 {offsets = [0, 0], sizes = [8, 128], strides = [1, 1]} : vector<8x512xf32> to vector<8x128xf32>
    %cst_419 = arith.constant 5.000000e-01 : f32
    %872 = vector.broadcast %cst_419 : f32 to vector<8x128xf32>
    %873 = arith.mulf %872, %871 : vector<8x128xf32>
    %874 = math.tanh %873 : vector<8x128xf32>
    %cst_420 = arith.constant 5.000000e-01 : f32
    %875 = vector.broadcast %cst_420 : f32 to vector<8x128xf32>
    %876 = arith.mulf %875, %874 : vector<8x128xf32>
    %cst_421 = arith.constant 5.000000e-01 : f32
    %877 = vector.broadcast %cst_421 : f32 to vector<8x128xf32>
    %878 = arith.addf %876, %877 : vector<8x128xf32>
    %879 = vector.extract_strided_slice %870 {offsets = [0, 128], sizes = [8, 128], strides = [1, 1]} : vector<8x512xf32> to vector<8x128xf32>
    %cst_422 = arith.constant 5.000000e-01 : f32
    %880 = vector.broadcast %cst_422 : f32 to vector<8x128xf32>
    %881 = arith.mulf %880, %879 : vector<8x128xf32>
    %882 = math.tanh %881 : vector<8x128xf32>
    %cst_423 = arith.constant 5.000000e-01 : f32
    %883 = vector.broadcast %cst_423 : f32 to vector<8x128xf32>
    %884 = arith.mulf %883, %882 : vector<8x128xf32>
    %cst_424 = arith.constant 5.000000e-01 : f32
    %885 = vector.broadcast %cst_424 : f32 to vector<8x128xf32>
    %886 = arith.addf %884, %885 : vector<8x128xf32>
    %887 = vector.extract_strided_slice %870 {offsets = [0, 256], sizes = [8, 128], strides = [1, 1]} : vector<8x512xf32> to vector<8x128xf32>
    %888 = math.tanh %887 : vector<8x128xf32>
    %889 = vector.extract_strided_slice %870 {offsets = [0, 384], sizes = [8, 128], strides = [1, 1]} : vector<8x512xf32> to vector<8x128xf32>
    %cst_425 = arith.constant 5.000000e-01 : f32
    %890 = vector.broadcast %cst_425 : f32 to vector<8x128xf32>
    %891 = arith.mulf %890, %889 : vector<8x128xf32>
    %892 = math.tanh %891 : vector<8x128xf32>
    %cst_426 = arith.constant 5.000000e-01 : f32
    %893 = vector.broadcast %cst_426 : f32 to vector<8x128xf32>
    %894 = arith.mulf %893, %892 : vector<8x128xf32>
    %cst_427 = arith.constant 5.000000e-01 : f32
    %895 = vector.broadcast %cst_427 : f32 to vector<8x128xf32>
    %896 = arith.addf %894, %895 : vector<8x128xf32>
    %897 = arith.mulf %886, %863 : vector<8x128xf32>
    %898 = arith.mulf %878, %888 : vector<8x128xf32>
    %899 = arith.addf %897, %898 : vector<8x128xf32>
    %900 = math.tanh %899 : vector<8x128xf32>
    %901 = arith.mulf %896, %900 : vector<8x128xf32>
    %c48_428 = arith.constant 48 : index
    %c0_429 = arith.constant 0 : index
    %902 = vector.load %arg17[%c48_428, %c0_429] : memref<64x512xf32, #tpu.memory_space<vmem>>, vector<8x512xf32>
    %903 = arith.truncf %901 : vector<8x128xf32> to vector<8x128xbf16>
    %c0_430 = arith.constant 0 : index
    %c0_431 = arith.constant 0 : index
    %904 = vector.load %arg9[%c0_430, %c0_431] : memref<128x512xbf16, #tpu.memory_space<vmem>>, vector<128x512xbf16>
    %cst_432 = arith.constant dense<0.000000e+00> : vector<8x512xf32>
    %905 = tpu.matmul %903, %904, %cst_432 {dimension_numbers = #tpu.dot_dimension_numbers<[1], [0], [0], [1], [0, 0, 1, 1], [], []>} : vector<8x128xbf16>, vector<128x512xbf16>, vector<8x512xf32> -> vector<8x512xf32>
    %906 = arith.addf %902, %905 : vector<8x512xf32>
    %907 = vector.extract_strided_slice %906 {offsets = [0, 0], sizes = [8, 128], strides = [1, 1]} : vector<8x512xf32> to vector<8x128xf32>
    %cst_433 = arith.constant 5.000000e-01 : f32
    %908 = vector.broadcast %cst_433 : f32 to vector<8x128xf32>
    %909 = arith.mulf %908, %907 : vector<8x128xf32>
    %910 = math.tanh %909 : vector<8x128xf32>
    %cst_434 = arith.constant 5.000000e-01 : f32
    %911 = vector.broadcast %cst_434 : f32 to vector<8x128xf32>
    %912 = arith.mulf %911, %910 : vector<8x128xf32>
    %cst_435 = arith.constant 5.000000e-01 : f32
    %913 = vector.broadcast %cst_435 : f32 to vector<8x128xf32>
    %914 = arith.addf %912, %913 : vector<8x128xf32>
    %915 = vector.extract_strided_slice %906 {offsets = [0, 128], sizes = [8, 128], strides = [1, 1]} : vector<8x512xf32> to vector<8x128xf32>
    %cst_436 = arith.constant 5.000000e-01 : f32
    %916 = vector.broadcast %cst_436 : f32 to vector<8x128xf32>
    %917 = arith.mulf %916, %915 : vector<8x128xf32>
    %918 = math.tanh %917 : vector<8x128xf32>
    %cst_437 = arith.constant 5.000000e-01 : f32
    %919 = vector.broadcast %cst_437 : f32 to vector<8x128xf32>
    %920 = arith.mulf %919, %918 : vector<8x128xf32>
    %cst_438 = arith.constant 5.000000e-01 : f32
    %921 = vector.broadcast %cst_438 : f32 to vector<8x128xf32>
    %922 = arith.addf %920, %921 : vector<8x128xf32>
    %923 = vector.extract_strided_slice %906 {offsets = [0, 256], sizes = [8, 128], strides = [1, 1]} : vector<8x512xf32> to vector<8x128xf32>
    %924 = math.tanh %923 : vector<8x128xf32>
    %925 = vector.extract_strided_slice %906 {offsets = [0, 384], sizes = [8, 128], strides = [1, 1]} : vector<8x512xf32> to vector<8x128xf32>
    %cst_439 = arith.constant 5.000000e-01 : f32
    %926 = vector.broadcast %cst_439 : f32 to vector<8x128xf32>
    %927 = arith.mulf %926, %925 : vector<8x128xf32>
    %928 = math.tanh %927 : vector<8x128xf32>
    %cst_440 = arith.constant 5.000000e-01 : f32
    %929 = vector.broadcast %cst_440 : f32 to vector<8x128xf32>
    %930 = arith.mulf %929, %928 : vector<8x128xf32>
    %cst_441 = arith.constant 5.000000e-01 : f32
    %931 = vector.broadcast %cst_441 : f32 to vector<8x128xf32>
    %932 = arith.addf %930, %931 : vector<8x128xf32>
    %933 = arith.mulf %922, %899 : vector<8x128xf32>
    %934 = arith.mulf %914, %924 : vector<8x128xf32>
    %935 = arith.addf %933, %934 : vector<8x128xf32>
    %936 = math.tanh %935 : vector<8x128xf32>
    %937 = arith.mulf %932, %936 : vector<8x128xf32>
    %c56_442 = arith.constant 56 : index
    %c0_443 = arith.constant 0 : index
    %938 = vector.load %arg17[%c56_442, %c0_443] : memref<64x512xf32, #tpu.memory_space<vmem>>, vector<8x512xf32>
    %939 = arith.truncf %937 : vector<8x128xf32> to vector<8x128xbf16>
    %c0_444 = arith.constant 0 : index
    %c0_445 = arith.constant 0 : index
    %940 = vector.load %arg9[%c0_444, %c0_445] : memref<128x512xbf16, #tpu.memory_space<vmem>>, vector<128x512xbf16>
    %cst_446 = arith.constant dense<0.000000e+00> : vector<8x512xf32>
    %941 = tpu.matmul %939, %940, %cst_446 {dimension_numbers = #tpu.dot_dimension_numbers<[1], [0], [0], [1], [0, 0, 1, 1], [], []>} : vector<8x128xbf16>, vector<128x512xbf16>, vector<8x512xf32> -> vector<8x512xf32>
    %942 = arith.addf %938, %941 : vector<8x512xf32>
    %943 = vector.extract_strided_slice %942 {offsets = [0, 0], sizes = [8, 128], strides = [1, 1]} : vector<8x512xf32> to vector<8x128xf32>
    %cst_447 = arith.constant 5.000000e-01 : f32
    %944 = vector.broadcast %cst_447 : f32 to vector<8x128xf32>
    %945 = arith.mulf %944, %943 : vector<8x128xf32>
    %946 = math.tanh %945 : vector<8x128xf32>
    %cst_448 = arith.constant 5.000000e-01 : f32
    %947 = vector.broadcast %cst_448 : f32 to vector<8x128xf32>
    %948 = arith.mulf %947, %946 : vector<8x128xf32>
    %cst_449 = arith.constant 5.000000e-01 : f32
    %949 = vector.broadcast %cst_449 : f32 to vector<8x128xf32>
    %950 = arith.addf %948, %949 : vector<8x128xf32>
    %951 = vector.extract_strided_slice %942 {offsets = [0, 128], sizes = [8, 128], strides = [1, 1]} : vector<8x512xf32> to vector<8x128xf32>
    %cst_450 = arith.constant 5.000000e-01 : f32
    %952 = vector.broadcast %cst_450 : f32 to vector<8x128xf32>
    %953 = arith.mulf %952, %951 : vector<8x128xf32>
    %954 = math.tanh %953 : vector<8x128xf32>
    %cst_451 = arith.constant 5.000000e-01 : f32
    %955 = vector.broadcast %cst_451 : f32 to vector<8x128xf32>
    %956 = arith.mulf %955, %954 : vector<8x128xf32>
    %cst_452 = arith.constant 5.000000e-01 : f32
    %957 = vector.broadcast %cst_452 : f32 to vector<8x128xf32>
    %958 = arith.addf %956, %957 : vector<8x128xf32>
    %959 = vector.extract_strided_slice %942 {offsets = [0, 256], sizes = [8, 128], strides = [1, 1]} : vector<8x512xf32> to vector<8x128xf32>
    %960 = math.tanh %959 : vector<8x128xf32>
    %961 = vector.extract_strided_slice %942 {offsets = [0, 384], sizes = [8, 128], strides = [1, 1]} : vector<8x512xf32> to vector<8x128xf32>
    %cst_453 = arith.constant 5.000000e-01 : f32
    %962 = vector.broadcast %cst_453 : f32 to vector<8x128xf32>
    %963 = arith.mulf %962, %961 : vector<8x128xf32>
    %964 = math.tanh %963 : vector<8x128xf32>
    %cst_454 = arith.constant 5.000000e-01 : f32
    %965 = vector.broadcast %cst_454 : f32 to vector<8x128xf32>
    %966 = arith.mulf %965, %964 : vector<8x128xf32>
    %cst_455 = arith.constant 5.000000e-01 : f32
    %967 = vector.broadcast %cst_455 : f32 to vector<8x128xf32>
    %968 = arith.addf %966, %967 : vector<8x128xf32>
    %969 = arith.mulf %958, %935 : vector<8x128xf32>
    %970 = arith.mulf %950, %960 : vector<8x128xf32>
    %971 = arith.addf %969, %970 : vector<8x128xf32>
    %972 = math.tanh %971 : vector<8x128xf32>
    %973 = arith.mulf %968, %972 : vector<8x128xf32>
    %974 = arith.truncf %973 : vector<8x128xf32> to vector<8x128xbf16>
    %c0_456 = arith.constant 0 : index
    %c0_457 = arith.constant 0 : index
    %975 = vector.load %arg11[%c0_456, %c0_457] : memref<128x64xbf16, #tpu.memory_space<vmem>>, vector<128x64xbf16>
    %cst_458 = arith.constant dense<0.000000e+00> : vector<8x64xf32>
    %976 = tpu.matmul %974, %975, %cst_458 {dimension_numbers = #tpu.dot_dimension_numbers<[1], [0], [0], [1], [0, 0, 1, 1], [], []>} : vector<8x128xbf16>, vector<128x64xbf16>, vector<8x64xf32> -> vector<8x64xf32>
    %c0_459 = arith.constant 0 : index
    %c0_460 = arith.constant 0 : index
    %977 = vector.load %arg12[%c0_459, %c0_460] : memref<1x64xf32, #tpu.memory_space<vmem>>, vector<1x64xf32>
    %978 = vector.broadcast %977 : vector<1x64xf32> to vector<8x64xf32>
    %979 = arith.addf %976, %978 : vector<8x64xf32>
    %cst_461 = arith.constant 0.000000e+00 : f32
    %980 = vector.broadcast %cst_461 : f32 to vector<8x64xf32>
    %981 = arith.maximumf %979, %980 : vector<8x64xf32>
    %982 = arith.truncf %981 : vector<8x64xf32> to vector<8x64xbf16>
    %c0_462 = arith.constant 0 : index
    %c0_463 = arith.constant 0 : index
    %983 = vector.load %arg13[%c0_462, %c0_463] : memref<64x1xbf16, #tpu.memory_space<vmem>>, vector<64x1xbf16>
    %cst_464 = arith.constant dense<0.000000e+00> : vector<8x1xf32>
    %984 = tpu.matmul %982, %983, %cst_464 {dimension_numbers = #tpu.dot_dimension_numbers<[1], [0], [0], [1], [0, 0, 1, 1], [], []>} : vector<8x64xbf16>, vector<64x1xbf16>, vector<8x1xf32> -> vector<8x1xf32>
    %c0_465 = arith.constant 0 : index
    %c0_466 = arith.constant 0 : index
    %985 = vector.load %arg14[%c0_465, %c0_466] : memref<1x1xf32, #tpu.memory_space<vmem>>, vector<1x1xf32>
    %986 = vector.broadcast %985 : vector<1x1xf32> to vector<8x1xf32>
    %987 = arith.addf %984, %986 : vector<8x1xf32>
    %c0_467 = arith.constant 0 : index
    %c0_468 = arith.constant 0 : index
    %988 = vector.load %arg15[%c0_467, %c0_468] : memref<8x1xf32, #tpu.memory_space<vmem>>, vector<8x1xf32>
    tpu.vector_store %arg15[%c0_467, %c0_468], %987 {strides = array<i32>} : memref<8x1xf32, #tpu.memory_space<vmem>>, vector<8x1xf32>,
    return
  }
  func.func @transform_0(%arg0: i32) -> (i32, i32, i32) {
    %c0_i32 = arith.constant 0 : i32
    %c0_i32_0 = arith.constant 0 : i32
    %c0_i32_1 = arith.constant 0 : i32
    return %c0_i32, %arg0, %c0_i32_0 : i32, i32, i32
  }
  func.func @transform_1(%arg0: i32) -> (i32, i32) {
    %c0_i32 = arith.constant 0 : i32
    %c0_i32_0 = arith.constant 0 : i32
    %c0_i32_1 = arith.constant 0 : i32
    return %c0_i32, %c0_i32_0 : i32, i32
  }
  func.func @transform_2(%arg0: i32) -> (i32, i32) {
    %c0_i32 = arith.constant 0 : i32
    %c0_i32_0 = arith.constant 0 : i32
    %c0_i32_1 = arith.constant 0 : i32
    return %c0_i32, %c0_i32_0 : i32, i32
  }
  func.func @transform_3(%arg0: i32) -> (i32, i32) {
    %c0_i32 = arith.constant 0 : i32
    %c0_i32_0 = arith.constant 0 : i32
    %c0_i32_1 = arith.constant 0 : i32
    return %c0_i32, %c0_i32_0 : i32, i32
  }
  func.func @transform_4(%arg0: i32) -> (i32, i32) {
    %c0_i32 = arith.constant 0 : i32
    %c0_i32_0 = arith.constant 0 : i32
    %c0_i32_1 = arith.constant 0 : i32
    return %c0_i32, %c0_i32_0 : i32, i32
  }
  func.func @transform_5(%arg0: i32) -> (i32, i32) {
    %c0_i32 = arith.constant 0 : i32
    %c0_i32_0 = arith.constant 0 : i32
    %c0_i32_1 = arith.constant 0 : i32
    return %c0_i32, %c0_i32_0 : i32, i32
  }
  func.func @transform_6(%arg0: i32) -> (i32, i32) {
    %c0_i32 = arith.constant 0 : i32
    %c0_i32_0 = arith.constant 0 : i32
    %c0_i32_1 = arith.constant 0 : i32
    return %c0_i32, %c0_i32_0 : i32, i32
  }
  func.func @transform_7(%arg0: i32) -> (i32, i32) {
    %c0_i32 = arith.constant 0 : i32
    %c0_i32_0 = arith.constant 0 : i32
    %c0_i32_1 = arith.constant 0 : i32
    return %c0_i32, %c0_i32_0 : i32, i32
  }
  func.func @transform_8(%arg0: i32) -> (i32, i32) {
    %c0_i32 = arith.constant 0 : i32
    %c0_i32_0 = arith.constant 0 : i32
    %c0_i32_1 = arith.constant 0 : i32
    return %c0_i32, %c0_i32_0 : i32, i32
  }
  func.func @transform_9(%arg0: i32) -> (i32, i32) {
    %c0_i32 = arith.constant 0 : i32
    %c0_i32_0 = arith.constant 0 : i32
    %c0_i32_1 = arith.constant 0 : i32
    return %c0_i32, %c0_i32_0 : i32, i32
  }
  func.func @transform_10(%arg0: i32) -> (i32, i32) {
    %c0_i32 = arith.constant 0 : i32
    %c0_i32_0 = arith.constant 0 : i32
    %c0_i32_1 = arith.constant 0 : i32
    return %c0_i32, %c0_i32_0 : i32, i32
  }
  func.func @transform_11(%arg0: i32) -> (i32, i32) {
    %c0_i32 = arith.constant 0 : i32
    %c0_i32_0 = arith.constant 0 : i32
    %c0_i32_1 = arith.constant 0 : i32
    return %c0_i32, %c0_i32_0 : i32, i32
  }
  func.func @transform_12(%arg0: i32) -> (i32, i32) {
    %c0_i32 = arith.constant 0 : i32
    %c0_i32_0 = arith.constant 0 : i32
    %c0_i32_1 = arith.constant 0 : i32
    return %c0_i32, %c0_i32_0 : i32, i32
  }
  func.func @transform_13(%arg0: i32) -> (i32, i32) {
    %c0_i32 = arith.constant 0 : i32
    %c0_i32_0 = arith.constant 0 : i32
    %c0_i32_1 = arith.constant 0 : i32
    return %c0_i32, %c0_i32_0 : i32, i32
  }
  func.func @transform_14(%arg0: i32) -> (i32, i32) {
    %c0_i32 = arith.constant 0 : i32
    %c0_i32_0 = arith.constant 0 : i32
    return %arg0, %c0_i32 : i32, i32
  }
}

</mosaic_0001>

<llo_original>
// kernel: tpu_custom_call.1
$region0: #{tpu_custom_call.1}
  #allocation0 [shape = 'u32[]', space=smem, size = 0x4, offset = 0x4, fixed_abs, tag = 'smem constant byte address 0x4 - core index']
  #allocation1 [shape = 'u32[144,128]{1,0:T(1,128)}', space=vmem, size = 0x12000, scoped, tag = 'internal scratch']
  #allocation2 [shape = 'f32[64,128]{1,0:T(8,128)}', space=vmem, size = 0x8000, scoped, tag = 'scratch operand']
  #allocation3 [shape = 'f32[64,512]{1,0:T(8,128)}', space=vmem, size = 0x20000, scoped, tag = 'scratch operand']
  #allocation4 [shape = 'f32[1,1]{1,0:T(1,128)S(1)}', space=vmem, size = 0x200, scoped, tag = 'scoped memory for tpu_custom_call.1']
  %s0 = inlined_call_operand.vmem [shape: f32[8,8,4], index: 0, kind: input, shape index: {}]
  %s1 = inlined_call_operand.vmem [shape: bf16[4,512], index: 1, kind: input, shape index: {}]
  %s2 = inlined_call_operand.hbm [shape: bf16[128,512], index: 2, kind: input, shape index: {}]
  %s3 = inlined_call_operand.vmem [shape: f32[1,512], index: 3, kind: input, shape index: {}]
  %s4 = inlined_call_operand.hbm [shape: bf16[128,512], index: 4, kind: input, shape index: {}]
  %s5 = inlined_call_operand.hbm [shape: bf16[128,512], index: 5, kind: input, shape index: {}]
  %s6 = inlined_call_operand.vmem [shape: f32[1,512], index: 6, kind: input, shape index: {}]
  %s7 = inlined_call_operand.hbm [shape: bf16[128,512], index: 7, kind: input, shape index: {}]
  %s8 = inlined_call_operand.hbm [shape: bf16[128,512], index: 8, kind: input, shape index: {}]
  %s9 = inlined_call_operand.vmem [shape: f32[1,512], index: 9, kind: input, shape index: {}]
  %s10 = inlined_call_operand.vmem [shape: bf16[128,64], index: 10, kind: input, shape index: {}]
  %s11 = inlined_call_operand.vmem [shape: f32[1,64], index: 11, kind: input, shape index: {}]
  %s12 = inlined_call_operand.vmem [shape: bf16[64,1], index: 12, kind: input, shape index: {}]
  %s13 = inlined_call_operand.<no memory space> [shape: f32[1,1], index: 13, kind: input, shape index: {}]
  %s14 = inlined_call_operand.vmem [shape: f32[8,1], index: 14, kind: output, shape index: {}]
  %s15 = sld [smem:[#allocation0]]
  $region86: #{tpu_custom_call.1} parent=0
    _
  %s17 = ssub.s32 1, %s15
  %s18 = scalar_select 0, %s17, %s15
  %v19 = vstv %s13
  %20 = vst [vmem:[#allocation4] sm:$0x1] %v19
  $region1: #{tpu_custom_call.1} parent=0
    #allocation5 [shape = 'u8[131072]{0}', space=vmem, size = 0x20000, scoped, tag = 'input window, operand 2, single buffered']
    #allocation6 [shape = 's32[1]{0}', space=sflag, size = 0x4, scoped, tag = 'scoped memory for tpu_custom_call.1']
    #allocation7 [shape = 'u8[131072]{0}', space=vmem, size = 0x20000, scoped, tag = 'input window, operand 4, single buffered']
    #allocation8 [shape = 's32[1]{0}', space=sflag, size = 0x4, scoped, tag = 'scoped memory for tpu_custom_call.1']
    #allocation9 [shape = 'u8[131072]{0}', space=vmem, size = 0x20000, scoped, tag = 'input window, operand 5, single buffered']
    #allocation10 [shape = 'u8[131072]{0}', space=vmem, size = 0x20000, scoped, tag = 'input window, operand 7, single buffered']
    #allocation11 [shape = 's32[1]{0}', space=sflag, size = 0x4, scoped, tag = 'scoped memory for tpu_custom_call.1']
    #allocation12 [shape = 'u8[131072]{0}', space=vmem, size = 0x20000, scoped, tag = 'input window, operand 8, single buffered']
    %21 = vsyncpa [#allocation6], 0
    %22 = vsyncpa [#allocation8], 0
    %23 = vsyncpa [#allocation11], 0
    // Predicated region
    $region2: #{tpu_custom_call.1} parent=1 // pred_check
      _
    $region3: #{tpu_custom_call.1} parent=1 // pred_check_branch
      %25 = sbr.rel (0) target = $region5
    $region4: #{tpu_custom_call.1} parent=1 // pred_region
      _
    $region5: #{tpu_custom_call.1} parent=1 // pred_fallthru
      _
    // Predicated region
    $region6: #{tpu_custom_call.1} parent=1 // pred_check
      _
    $region7: #{tpu_custom_call.1} parent=1 // pred_check_branch
      %27 = sbr.rel (0) target = $region9
    $region8: #{tpu_custom_call.1} parent=1 // pred_region
      _
    $region9: #{tpu_custom_call.1} parent=1 // pred_fallthru
      _
    // Predicated region
    $region10: #{tpu_custom_call.1} parent=1 // pred_check
      _
    $region11: #{tpu_custom_call.1} parent=1 // pred_check_branch
      %29 = sbr.rel (0) target = $region13
    $region12: #{tpu_custom_call.1} parent=1 // pred_region
      %s31 = ssub.s32 4096, 4096
      %32 = vsyncadd [#allocation6], %s31
      %s33 = sshll.u32 [#allocation5], 4
      %s34 = int_to_ptr.vmem [resolvable:$true] %s33
      %39 = dma.hbm_to_vmem [thread:$0]  %s2, 4096, %s34, [#allocation6], 256, 256, 16
    $region13: #{tpu_custom_call.1} parent=1 // pred_fallthru
      _
    // Predicated region
    $region14: #{tpu_custom_call.1} parent=1 // pred_check
      _
    $region15: #{tpu_custom_call.1} parent=1 // pred_check_branch
      %41 = sbr.rel (0) target = $region17
    $region16: #{tpu_custom_call.1} parent=1 // pred_region
      _
    $region17: #{tpu_custom_call.1} parent=1 // pred_fallthru
      _
    // Predicated region
    $region18: #{tpu_custom_call.1} parent=1 // pred_check
      _
    $region19: #{tpu_custom_call.1} parent=1 // pred_check_branch
      %43 = sbr.rel (0) target = $region21
    $region20: #{tpu_custom_call.1} parent=1 // pred_region
      %s45 = ssub.s32 4096, 4096
      %46 = vsyncadd [#allocation8], %s45
      %s47 = sshll.u32 [#allocation7], 4
      %s48 = int_to_ptr.vmem [resolvable:$true] %s47
      %53 = dma.hbm_to_vmem [thread:$0]  %s4, 4096, %s48, [#allocation8], 256, 256, 16
    $region21: #{tpu_custom_call.1} parent=1 // pred_fallthru
      _
    // Predicated region
    $region22: #{tpu_custom_call.1} parent=1 // pred_check
      _
    $region23: #{tpu_custom_call.1} parent=1 // pred_check_branch
      %55 = sbr.rel (0) target = $region25
    $region24: #{tpu_custom_call.1} parent=1 // pred_region
      %s57 = ssub.s32 4096, 4096
      %58 = vsyncadd [#allocation8], %s57
      %s59 = sshll.u32 [#allocation9], 4
      %s60 = int_to_ptr.vmem [resolvable:$true] %s59
      %65 = dma.hbm_to_vmem [thread:$0]  %s5, 4096, %s60, [#allocation8], 256, 256, 16
    $region25: #{tpu_custom_call.1} parent=1 // pred_fallthru
      _
    // Predicated region
    $region26: #{tpu_custom_call.1} parent=1 // pred_check
      _
    $region27: #{tpu_custom_call.1} parent=1 // pred_check_branch
      %67 = sbr.rel (0) target = $region29
    $region28: #{tpu_custom_call.1} parent=1 // pred_region
      _
    $region29: #{tpu_custom_call.1} parent=1 // pred_fallthru
      _
    // Predicated region
    $region30: #{tpu_custom_call.1} parent=1 // pred_check
      _
    $region31: #{tpu_custom_call.1} parent=1 // pred_check_branch
      %69 = sbr.rel (0) target = $region33
    $region32: #{tpu_custom_call.1} parent=1 // pred_region
      %s71 = ssub.s32 4096, 4096
      %72 = vsyncadd [#allocation11], %s71
      %s73 = sshll.u32 [#allocation10], 4
      %s74 = int_to_ptr.vmem [resolvable:$true] %s73
      %79 = dma.hbm_to_vmem [thread:$0]  %s7, 4096, %s74, [#allocation11], 256, 256, 16
    $region33: #{tpu_custom_call.1} parent=1 // pred_fallthru
      _
    // Predicated region
    $region34: #{tpu_custom_call.1} parent=1 // pred_check
      _
    $region35: #{tpu_custom_call.1} parent=1 // pred_check_branch
      %81 = sbr.rel (0) target = $region37
    $region36: #{tpu_custom_call.1} parent=1 // pred_region
      %s83 = ssub.s32 4096, 4096
      %84 = vsyncadd [#allocation11], %s83
      %s85 = sshll.u32 [#allocation12], 4
      %s86 = int_to_ptr.vmem [resolvable:$true] %s85
      %91 = dma.hbm_to_vmem [thread:$0]  %s8, 4096, %s86, [#allocation11], 256, 256, 16
    $region37: #{tpu_custom_call.1} parent=1 // pred_fallthru
      _
    // Predicated region
    $region38: #{tpu_custom_call.1} parent=1 // pred_check
      _
    $region39: #{tpu_custom_call.1} parent=1 // pred_check_branch
      %93 = sbr.rel (0) target = $region41
    $region40: #{tpu_custom_call.1} parent=1 // pred_region
      _
    $region41: #{tpu_custom_call.1} parent=1 // pred_fallthru
      _
    // Predicated region
    $region42: #{tpu_custom_call.1} parent=1 // pred_check
      _
    $region43: #{tpu_custom_call.1} parent=1 // pred_check_branch
      %95 = sbr.rel (0) target = $region45
    $region44: #{tpu_custom_call.1} parent=1 // pred_region
      _
    $region45: #{tpu_custom_call.1} parent=1 // pred_fallthru
      _
    // Predicated region
    $region46: #{tpu_custom_call.1} parent=1 // pred_check
      _
    $region47: #{tpu_custom_call.1} parent=1 // pred_check_branch
      %97 = sbr.rel (0) target = $region49
    $region48: #{tpu_custom_call.1} parent=1 // pred_region
      _
    $region49: #{tpu_custom_call.1} parent=1 // pred_fallthru
      _
    // Predicated region
    $region50: #{tpu_custom_call.1} parent=1 // pred_check
      _
    $region51: #{tpu_custom_call.1} parent=1 // pred_check_branch
      %99 = sbr.rel (0) target = $region53
    $region52: #{tpu_custom_call.1} parent=1 // pred_region
      _
    $region53: #{tpu_custom_call.1} parent=1 // pred_fallthru
      _
    // Predicated region
    $region54: #{tpu_custom_call.1} parent=1 // pred_check
      _
    $region55: #{tpu_custom_call.1} parent=1 // pred_check_branch
      %101 = sbr.rel (0) target = $region57
    $region56: #{tpu_custom_call.1} parent=1 // pred_region
      _
    $region57: #{tpu_custom_call.1} parent=1 // pred_fallthru
      _
    // Predicated region
    $region58: #{tpu_custom_call.1} parent=1 // pred_check
      _
    $region59: #{tpu_custom_call.1} parent=1 // pred_check_branch
      %103 = sbr.rel (0) target = $region61
    $region60: #{tpu_custom_call.1} parent=1 // pred_region
      %104 = dma.done [#allocation6], 4096
    $region61: #{tpu_custom_call.1} parent=1 // pred_fallthru
      _
    // Predicated region
    $region62: #{tpu_custom_call.1} parent=1 // pred_check
      _
    $region63: #{tpu_custom_call.1} parent=1 // pred_check_branch
      %106 = sbr.rel (0) target = $region65
    $region64: #{tpu_custom_call.1} parent=1 // pred_region
      %107 = dma.done [#allocation8], 4096
    $region65: #{tpu_custom_call.1} parent=1 // pred_fallthru
      _
    // Predicated region
    $region66: #{tpu_custom_call.1} parent=1 // pred_check
      _
    $region67: #{tpu_custom_call.1} parent=1 // pred_check_branch
      %109 = sbr.rel (0) target = $region69
    $region68: #{tpu_custom_call.1} parent=1 // pred_region
      %110 = dma.done [#allocation8], 4096
    $region69: #{tpu_custom_call.1} parent=1 // pred_fallthru
      _
    // Predicated region
    $region70: #{tpu_custom_call.1} parent=1 // pred_check
      _
    $region71: #{tpu_custom_call.1} parent=1 // pred_check_branch
      %112 = sbr.rel (0) target = $region73
    $region72: #{tpu_custom_call.1} parent=1 // pred_region
      %113 = dma.done [#allocation11], 4096
    $region73: #{tpu_custom_call.1} parent=1 // pred_fallthru
      _
    // Predicated region
    $region74: #{tpu_custom_call.1} parent=1 // pred_check
      _
    $region75: #{tpu_custom_call.1} parent=1 // pred_check_branch
      %115 = sbr.rel (0) target = $region77
    $region76: #{tpu_custom_call.1} parent=1 // pred_region
      %116 = dma.done [#allocation11], 4096
    $region77: #{tpu_custom_call.1} parent=1 // pred_fallthru
      _
    %v118 = vld [vmem:[%s0] sm:$0xff]
    %v119 = vpack.c.bf16 %v118, %v118
    %v120 = vld [vmem:[%s1] sm:$0xff]
    %v121 = vld [vmem:[%s3] sm:$0xf]
    %v123 = vlaneseq
    %v124 = vshrl.u32 %v123, 7
    %v125 = vsub.s32 0, %v124
    %v126 = vrot.slane %v121, %v125
    %v127 = vlaneseq
    %v128 = vshrl.u32 %v127, 7
    %v129 = vsub.s32 1, %v128
    %v130 = vrot.slane %v121, %v129
    %v131 = vlaneseq
    %v132 = vshrl.u32 %v131, 7
    %v133 = vsub.s32 2, %v132
    %v134 = vrot.slane %v121, %v133
    %v135 = vlaneseq
    %v136 = vshrl.u32 %v135, 7
    %v137 = vsub.s32 3, %v136
    %v138 = vrot.slane %v121, %v137
    %v144 = vcombine.high %v120, %v120
    %v146 = vunpack.c.l.s4 1983009808
    %v147 = vunpack.c.0.s8 %v146
    %v148 = vlaneseq
    %v149 = vshrl.u32 %v148, 7
    %v150 = vsub.s32 %v147, %v149
    %v151 = vrot.slane %v120, %v150
    %v153 = vunpack.c.l.s4 1983009808
    %v154 = vunpack.c.0.s8 %v153
    %v155 = vlaneseq
    %v156 = vshrl.u32 %v155, 7
    %v157 = vsub.s32 %v154, %v156
    %v158 = vrot.slane %v144, %v157
    %v159 = vcombine.high %v151, %v151
    %v160 = vcombine.high %v158, %v158
    %vm161 = vcmask 31744
    %v163 = vsel %vm161, %v119, 0
    %vm165 = vcmask 1041408
    %v167 = vsel %vm165, %v151, 0
    %v170 = vsel %vm165, %v159, 0
    %v173 = vsel %vm165, %v158, 0
    %v176 = vsel %vm165, %v160, 0
    %178 = vmatprep.subr.bf16.mxu0 0
    %179 = vmatpush1.bf16.msra.mxu0 0
    %180 = vmatprep.subr.bf16.mxu0 0
    %181 = vmatpush1.bf16.msra.mxu0 0
    %182 = vmatprep.subr.bf16.mxu0 0
    %183 = vmatpush1.bf16.msra.mxu0 0
    %184 = vmatprep.subr.bf16.mxu0 0
    %185 = vmatpush1.bf16.msra.mxu0 0
    %186 = vmatprep.subr.bf16.mxu0 0
    %187 = vmatpush1.bf16.msra.mxu0 0
    %188 = vmatprep.subr.bf16.mxu0 0
    %189 = vmatpush1.bf16.msra.mxu0 0
    %190 = vmatprep.subr.bf16.mxu0 0
    %191 = vmatpush1.bf16.msra.mxu0 0
    %192 = vmatprep.subr.bf16.mxu0 %v170
    %193 = vmatpush1.bf16.msra.mxu0 %v167
    %194 = vmatprep.subr.bf16.mxu0 0
    %195 = vmatpush2.bf16.msra.mxu0 0
    %196 = vmatprep.subr.bf16.mxu0 0
    %197 = vmatpush2.bf16.msra.mxu0 0
    %198 = vmatprep.subr.bf16.mxu0 0
    %199 = vmatpush2.bf16.msra.mxu0 0
    %200 = vmatprep.subr.bf16.mxu0 0
    %201 = vmatpush2.bf16.msra.mxu0 0
    %202 = vmatprep.subr.bf16.mxu0 0
    %203 = vmatpush2.bf16.msra.mxu0 0
    %204 = vmatprep.subr.bf16.mxu0 0
    %205 = vmatpush2.bf16.msra.mxu0 0
    %206 = vmatprep.subr.bf16.mxu0 0
    %207 = vmatpush2.bf16.msra.mxu0 0
    %208 = vmatprep.subr.bf16.mxu0 0
    %209 = vmatpush2.bf16.msra.mxu0 0
    %210 = vmatprep.mubr.bf16.mxu0 0
    %211 = vmatmul.mubr.bf16.gmra.mxu0 %v163
    %v212 = vpop.f32.mrf.mxu0
    %v213 = vadd.f32 %v126, %v212
    %v214 = vpop.f32.mrf.mxu0
    %v215 = vadd.f32 %v130, %v214
    %v216 = vpop.f32.mrf.mxu0
    %v217 = vpop.f32.mrf.mxu0
    %218 = vdwg.mxu0
    %219 = vmatprep.subr.bf16.mxu0 0
    %220 = vmatpush1.bf16.msra.mxu0 0
    %221 = vmatprep.subr.bf16.mxu0 0
    %222 = vmatpush1.bf16.msra.mxu0 0
    %223 = vmatprep.subr.bf16.mxu0 0
    %224 = vmatpush1.bf16.msra.mxu0 0
    %225 = vmatprep.subr.bf16.mxu0 0
    %226 = vmatpush1.bf16.msra.mxu0 0
    %227 = vmatprep.subr.bf16.mxu0 0
    %228 = vmatpush1.bf16.msra.mxu0 0
    %229 = vmatprep.subr.bf16.mxu0 0
    %230 = vmatpush1.bf16.msra.mxu0 0
    %231 = vmatprep.subr.bf16.mxu0 0
    %232 = vmatpush1.bf16.msra.mxu0 0
    %233 = vmatprep.subr.bf16.mxu0 %v176
    %234 = vmatpush1.bf16.msra.mxu0 %v173
    %235 = vmatprep.subr.bf16.mxu0 0
    %236 = vmatpush2.bf16.msra.mxu0 0
    %237 = vmatprep.subr.bf16.mxu0 0
    %238 = vmatpush2.bf16.msra.mxu0 0
    %239 = vmatprep.subr.bf16.mxu0 0
    %240 = vmatpush2.bf16.msra.mxu0 0
    %241 = vmatprep.subr.bf16.mxu0 0
    %242 = vmatpush2.bf16.msra.mxu0 0
    %243 = vmatprep.subr.bf16.mxu0 0
    %244 = vmatpush2.bf16.msra.mxu0 0
    %245 = vmatprep.subr.bf16.mxu0 0
    %246 = vmatpush2.bf16.msra.mxu0 0
    %247 = vmatprep.subr.bf16.mxu0 0
    %248 = vmatpush2.bf16.msra.mxu0 0
    %249 = vmatprep.subr.bf16.mxu0 0
    %250 = vmatpush2.bf16.msra.mxu0 0
    %251 = vmatprep.mubr.bf16.mxu0 0
    %252 = vmatmul.mubr.bf16.gmra.mxu0 %v163
    %v253 = vpop.f32.mrf.mxu0
    %v254 = vadd.f32 %v134, %v253
    %v255 = vpop.f32.mrf.mxu0
    %v256 = vadd.f32 %v138, %v255
    %v257 = vpop.f32.mrf.mxu0
    %v258 = vpop.f32.mrf.mxu0
    %259 = vdwg.mxu0
    %260 = vst [vmem:[#allocation3] sm:$0xff] %v213
    %261 = vst [vmem:[#allocation3 + $0x8] sm:$0xff] %v215
    %262 = vst [vmem:[#allocation3 + $0x10] sm:$0xff] %v254
    %263 = vst [vmem:[#allocation3 + $0x18] sm:$0xff] %v256
    %s264 = scalar_lea.vmem %s0, 8
    %v265 = vld [vmem:[%s264] sm:$0xff]
    %v266 = vpack.c.bf16 %v265, %v265
    %v267 = vld [vmem:[%s1] sm:$0xff]
    %v268 = vld [vmem:[%s3] sm:$0xf]
    %v270 = vlaneseq
    %v271 = vshrl.u32 %v270, 7
    %v272 = vsub.s32 0, %v271
    %v273 = vrot.slane %v268, %v272
    %v274 = vlaneseq
    %v275 = vshrl.u32 %v274, 7
    %v276 = vsub.s32 1, %v275
    %v277 = vrot.slane %v268, %v276
    %v278 = vlaneseq
    %v279 = vshrl.u32 %v278, 7
    %v280 = vsub.s32 2, %v279
    %v281 = vrot.slane %v268, %v280
    %v282 = vlaneseq
    %v283 = vshrl.u32 %v282, 7
    %v284 = vsub.s32 3, %v283
    %v285 = vrot.slane %v268, %v284
    %v291 = vcombine.high %v267, %v267
    %v293 = vunpack.c.l.s4 1983009808
    %v294 = vunpack.c.0.s8 %v293
    %v295 = vlaneseq
    %v296 = vshrl.u32 %v295, 7
    %v297 = vsub.s32 %v294, %v296
    %v298 = vrot.slane %v267, %v297
    %v300 = vunpack.c.l.s4 1983009808
    %v301 = vunpack.c.0.s8 %v300
    %v302 = vlaneseq
    %v303 = vshrl.u32 %v302, 7
    %v304 = vsub.s32 %v301, %v303
    %v305 = vrot.slane %v291, %v304
    %v306 = vcombine.high %v298, %v298
    %v307 = vcombine.high %v305, %v305
    %v309 = vsel %vm161, %v266, 0
    %v312 = vsel %vm165, %v298, 0
    %v315 = vsel %vm165, %v306, 0
    %v318 = vsel %vm165, %v305, 0
    %v321 = vsel %vm165, %v307, 0
    %323 = vmatprep.subr.bf16.mxu0 0
    %324 = vmatpush1.bf16.msra.mxu0 0
    %325 = vmatprep.subr.bf16.mxu0 0
    %326 = vmatpush1.bf16.msra.mxu0 0
    %327 = vmatprep.subr.bf16.mxu0 0
    %328 = vmatpush1.bf16.msra.mxu0 0
    %329 = vmatprep.subr.bf16.mxu0 0
    %330 = vmatpush1.bf16.msra.mxu0 0
    %331 = vmatprep.subr.bf16.mxu0 0
    %332 = vmatpush1.bf16.msra.mxu0 0
    %333 = vmatprep.subr.bf16.mxu0 0
    %334 = vmatpush1.bf16.msra.mxu0 0
    %335 = vmatprep.subr.bf16.mxu0 0
    %336 = vmatpush1.bf16.msra.mxu0 0
    %337 = vmatprep.subr.bf16.mxu0 %v315
    %338 = vmatpush1.bf16.msra.mxu0 %v312
    %339 = vmatprep.subr.bf16.mxu0 0
    %340 = vmatpush2.bf16.msra.mxu0 0
    %341 = vmatprep.subr.bf16.mxu0 0
    %342 = vmatpush2.bf16.msra.mxu0 0
    %343 = vmatprep.subr.bf16.mxu0 0
    %344 = vmatpush2.bf16.msra.mxu0 0
    %345 = vmatprep.subr.bf16.mxu0 0
    %346 = vmatpush2.bf16.msra.mxu0 0
    %347 = vmatprep.subr.bf16.mxu0 0
    %348 = vmatpush2.bf16.msra.mxu0 0
    %349 = vmatprep.subr.bf16.mxu0 0
    %350 = vmatpush2.bf16.msra.mxu0 0
    %351 = vmatprep.subr.bf16.mxu0 0
    %352 = vmatpush2.bf16.msra.mxu0 0
    %353 = vmatprep.subr.bf16.mxu0 0
    %354 = vmatpush2.bf16.msra.mxu0 0
    %355 = vmatprep.mubr.bf16.mxu0 0
    %356 = vmatmul.mubr.bf16.gmra.mxu0 %v309
    %v357 = vpop.f32.mrf.mxu0
    %v358 = vadd.f32 %v273, %v357
    %v359 = vpop.f32.mrf.mxu0
    %v360 = vadd.f32 %v277, %v359
    %v361 = vpop.f32.mrf.mxu0
    %v362 = vpop.f32.mrf.mxu0
    %363 = vdwg.mxu0
    %364 = vmatprep.subr.bf16.mxu0 0
    %365 = vmatpush1.bf16.msra.mxu0 0
    %366 = vmatprep.subr.bf16.mxu0 0
    %367 = vmatpush1.bf16.msra.mxu0 0
    %368 = vmatprep.subr.bf16.mxu0 0
    %369 = vmatpush1.bf16.msra.mxu0 0
    %370 = vmatprep.subr.bf16.mxu0 0
    %371 = vmatpush1.bf16.msra.mxu0 0
    %372 = vmatprep.subr.bf16.mxu0 0
    %373 = vmatpush1.bf16.msra.mxu0 0
    %374 = vmatprep.subr.bf16.mxu0 0
    %375 = vmatpush1.bf16.msra.mxu0 0
    %376 = vmatprep.subr.bf16.mxu0 0
    %377 = vmatpush1.bf16.msra.mxu0 0
    %378 = vmatprep.subr.bf16.mxu0 %v321
    %379 = vmatpush1.bf16.msra.mxu0 %v318
    %380 = vmatprep.subr.bf16.mxu0 0
    %381 = vmatpush2.bf16.msra.mxu0 0
    %382 = vmatprep.subr.bf16.mxu0 0
    %383 = vmatpush2.bf16.msra.mxu0 0
    %384 = vmatprep.subr.bf16.mxu0 0
    %385 = vmatpush2.bf16.msra.mxu0 0
    %386 = vmatprep.subr.bf16.mxu0 0
    %387 = vmatpush2.bf16.msra.mxu0 0
    %388 = vmatprep.subr.bf16.mxu0 0
    %389 = vmatpush2.bf16.msra.mxu0 0
    %390 = vmatprep.subr.bf16.mxu0 0
    %391 = vmatpush2.bf16.msra.mxu0 0
    %392 = vmatprep.subr.bf16.mxu0 0
    %393 = vmatpush2.bf16.msra.mxu0 0
    %394 = vmatprep.subr.bf16.mxu0 0
    %395 = vmatpush2.bf16.msra.mxu0 0
    %396 = vmatprep.mubr.bf16.mxu0 0
    %397 = vmatmul.mubr.bf16.gmra.mxu0 %v309
    %v398 = vpop.f32.mrf.mxu0
    %v399 = vadd.f32 %v281, %v398
    %v400 = vpop.f32.mrf.mxu0
    %v401 = vadd.f32 %v285, %v400
    %v402 = vpop.f32.mrf.mxu0
    %v403 = vpop.f32.mrf.mxu0
    %404 = vdwg.mxu0
    %405 = vst [vmem:[#allocation3 + $0x20] sm:$0xff] %v358
    %406 = vst [vmem:[#allocation3 + $0x28] sm:$0xff] %v360
    %407 = vst [vmem:[#allocation3 + $0x30] sm:$0xff] %v399
    %408 = vst [vmem:[#allocation3 + $0x38] sm:$0xff] %v401
    %s409 = scalar_lea.vmem %s0, 16
    %v410 = vld [vmem:[%s409] sm:$0xff]
    %v411 = vpack.c.bf16 %v410, %v410
    %v412 = vld [vmem:[%s1] sm:$0xff]
    %v413 = vld [vmem:[%s3] sm:$0xf]
    %v415 = vlaneseq
    %v416 = vshrl.u32 %v415, 7
    %v417 = vsub.s32 0, %v416
    %v418 = vrot.slane %v413, %v417
    %v419 = vlaneseq
    %v420 = vshrl.u32 %v419, 7
    %v421 = vsub.s32 1, %v420
    %v422 = vrot.slane %v413, %v421
    %v423 = vlaneseq
    %v424 = vshrl.u32 %v423, 7
    %v425 = vsub.s32 2, %v424
    %v426 = vrot.slane %v413, %v425
    %v427 = vlaneseq
    %v428 = vshrl.u32 %v427, 7
    %v429 = vsub.s32 3, %v428
    %v430 = vrot.slane %v413, %v429
    %v436 = vcombine.high %v412, %v412
    %v438 = vunpack.c.l.s4 1983009808
    %v439 = vunpack.c.0.s8 %v438
    %v440 = vlaneseq
    %v441 = vshrl.u32 %v440, 7
    %v442 = vsub.s32 %v439, %v441
    %v443 = vrot.slane %v412, %v442
    %v445 = vunpack.c.l.s4 1983009808
    %v446 = vunpack.c.0.s8 %v445
    %v447 = vlaneseq
    %v448 = vshrl.u32 %v447, 7
    %v449 = vsub.s32 %v446, %v448
    %v450 = vrot.slane %v436, %v449
    %v451 = vcombine.high %v443, %v443
    %v452 = vcombine.high %v450, %v450
    %v454 = vsel %vm161, %v411, 0
    %v457 = vsel %vm165, %v443, 0
    %v460 = vsel %vm165, %v451, 0
    %v463 = vsel %vm165, %v450, 0
    %v466 = vsel %vm165, %v452, 0
    %468 = vmatprep.subr.bf16.mxu0 0
    %469 = vmatpush1.bf16.msra.mxu0 0
    %470 = vmatprep.subr.bf16.mxu0 0
    %471 = vmatpush1.bf16.msra.mxu0 0
    %472 = vmatprep.subr.bf16.mxu0 0
    %473 = vmatpush1.bf16.msra.mxu0 0
    %474 = vmatprep.subr.bf16.mxu0 0
    %475 = vmatpush1.bf16.msra.mxu0 0
    %476 = vmatprep.subr.bf16.mxu0 0
    %477 = vmatpush1.bf16.msra.mxu0 0
    %478 = vmatprep.subr.bf16.mxu0 0
    %479 = vmatpush1.bf16.msra.mxu0 0
    %480 = vmatprep.subr.bf16.mxu0 0
    %481 = vmatpush1.bf16.msra.mxu0 0
    %482 = vmatprep.subr.bf16.mxu0 %v460
    %483 = vmatpush1.bf16.msra.mxu0 %v457
    %484 = vmatprep.subr.bf16.mxu0 0
    %485 = vmatpush2.bf16.msra.mxu0 0
    %486 = vmatprep.subr.bf16.mxu0 0
    %487 = vmatpush2.bf16.msra.mxu0 0
    %488 = vmatprep.subr.bf16.mxu0 0
    %489 = vmatpush2.bf16.msra.mxu0 0
    %490 = vmatprep.subr.bf16.mxu0 0
    %491 = vmatpush2.bf16.msra.mxu0 0
    %492 = vmatprep.subr.bf16.mxu0 0
    %493 = vmatpush2.bf16.msra.mxu0 0
    %494 = vmatprep.subr.bf16.mxu0 0
    %495 = vmatpush2.bf16.msra.mxu0 0
    %496 = vmatprep.subr.bf16.mxu0 0
    %497 = vmatpush2.bf16.msra.mxu0 0
    %498 = vmatprep.subr.bf16.mxu0 0
    %499 = vmatpush2.bf16.msra.mxu0 0
    %500 = vmatprep.mubr.bf16.mxu0 0
    %501 = vmatmul.mubr.bf16.gmra.mxu0 %v454
    %v502 = vpop.f32.mrf.mxu0
    %v503 = vadd.f32 %v418, %v502
    %v504 = vpop.f32.mrf.mxu0
    %v505 = vadd.f32 %v422, %v504
    %v506 = vpop.f32.mrf.mxu0
    %v507 = vpop.f32.mrf.mxu0
    %508 = vdwg.mxu0
    %509 = vmatprep.subr.bf16.mxu0 0
    %510 = vmatpush1.bf16.msra.mxu0 0
    %511 = vmatprep.subr.bf16.mxu0 0
    %512 = vmatpush1.bf16.msra.mxu0 0
    %513 = vmatprep.subr.bf16.mxu0 0
    %514 = vmatpush1.bf16.msra.mxu0 0
    %515 = vmatprep.subr.bf16.mxu0 0
    %516 = vmatpush1.bf16.msra.mxu0 0
    %517 = vmatprep.subr.bf16.mxu0 0
    %518 = vmatpush1.bf16.msra.mxu0 0
    %519 = vmatprep.subr.bf16.mxu0 0
    %520 = vmatpush1.bf16.msra.mxu0 0
    %521 = vmatprep.subr.bf16.mxu0 0
    %522 = vmatpush1.bf16.msra.mxu0 0
    %523 = vmatprep.subr.bf16.mxu0 %v466
    %524 = vmatpush1.bf16.msra.mxu0 %v463
    %525 = vmatprep.subr.bf16.mxu0 0
    %526 = vmatpush2.bf16.msra.mxu0 0
    %527 = vmatprep.subr.bf16.mxu0 0
    %528 = vmatpush2.bf16.msra.mxu0 0
    %529 = vmatprep.subr.bf16.mxu0 0
    %530 = vmatpush2.bf16.msra.mxu0 0
    %531 = vmatprep.subr.bf16.mxu0 0
    %532 = vmatpush2.bf16.msra.mxu0 0
    %533 = vmatprep.subr.bf16.mxu0 0
    %534 = vmatpush2.bf16.msra.mxu0 0
    %535 = vmatprep.subr.bf16.mxu0 0
    %536 = vmatpush2.bf16.msra.mxu0 0
    %537 = vmatprep.subr.bf16.mxu0 0
    %538 = vmatpush2.bf16.msra.mxu0 0
    %539 = vmatprep.subr.bf16.mxu0 0
    %540 = vmatpush2.bf16.msra.mxu0 0
    %541 = vmatprep.mubr.bf16.mxu0 0
    %542 = vmatmul.mubr.bf16.gmra.mxu0 %v454
    %v543 = vpop.f32.mrf.mxu0
    %v544 = vadd.f32 %v426, %v543
    %v545 = vpop.f32.mrf.mxu0
    %v546 = vadd.f32 %v430, %v545
    %v547 = vpop.f32.mrf.mxu0
    %v548 = vpop.f32.mrf.mxu0
    %549 = vdwg.mxu0
    %550 = vst [vmem:[#allocation3 + $0x40] sm:$0xff] %v503
    %551 = vst [vmem:[#allocation3 + $0x48] sm:$0xff] %v505
    %552 = vst [vmem:[#allocation3 + $0x50] sm:$0xff] %v544
    %553 = vst [vmem:[#allocation3 + $0x58] sm:$0xff] %v546
    %s554 = scalar_lea.vmem %s0, 24
    %v555 = vld [vmem:[%s554] sm:$0xff]
    %v556 = vpack.c.bf16 %v555, %v555
    %v557 = vld [vmem:[%s1] sm:$0xff]
    %v558 = vld [vmem:[%s3] sm:$0xf]
    %v560 = vlaneseq
    %v561 = vshrl.u32 %v560, 7
    %v562 = vsub.s32 0, %v561
    %v563 = vrot.slane %v558, %v562
    %v564 = vlaneseq
    %v565 = vshrl.u32 %v564, 7
    %v566 = vsub.s32 1, %v565
    %v567 = vrot.slane %v558, %v566
    %v568 = vlaneseq
    %v569 = vshrl.u32 %v568, 7
    %v570 = vsub.s32 2, %v569
    %v571 = vrot.slane %v558, %v570
    %v572 = vlaneseq
    %v573 = vshrl.u32 %v572, 7
    %v574 = vsub.s32 3, %v573
    %v575 = vrot.slane %v558, %v574
    %v581 = vcombine.high %v557, %v557
    %v583 = vunpack.c.l.s4 1983009808
    %v584 = vunpack.c.0.s8 %v583
    %v585 = vlaneseq
    %v586 = vshrl.u32 %v585, 7
    %v587 = vsub.s32 %v584, %v586
    %v588 = vrot.slane %v557, %v587
    %v590 = vunpack.c.l.s4 1983009808
    %v591 = vunpack.c.0.s8 %v590
    %v592 = vlaneseq
    %v593 = vshrl.u32 %v592, 7
    %v594 = vsub.s32 %v591, %v593
    %v595 = vrot.slane %v581, %v594
    %v596 = vcombine.high %v588, %v588
    %v597 = vcombine.high %v595, %v595
    %v599 = vsel %vm161, %v556, 0
    %v602 = vsel %vm165, %v588, 0
    %v605 = vsel %vm165, %v596, 0
    %v608 = vsel %vm165, %v595, 0
    %v611 = vsel %vm165, %v597, 0
    %613 = vmatprep.subr.bf16.mxu0 0
    %614 = vmatpush1.bf16.msra.mxu0 0
    %615 = vmatprep.subr.bf16.mxu0 0
    %616 = vmatpush1.bf16.msra.mxu0 0
    %617 = vmatprep.subr.bf16.mxu0 0
    %618 = vmatpush1.bf16.msra.mxu0 0
    %619 = vmatprep.subr.bf16.mxu0 0
    %620 = vmatpush1.bf16.msra.mxu0 0
    %621 = vmatprep.subr.bf16.mxu0 0
    %622 = vmatpush1.bf16.msra.mxu0 0
    %623 = vmatprep.subr.bf16.mxu0 0
    %624 = vmatpush1.bf16.msra.mxu0 0
    %625 = vmatprep.subr.bf16.mxu0 0
    %626 = vmatpush1.bf16.msra.mxu0 0
    %627 = vmatprep.subr.bf16.mxu0 %v605
    %628 = vmatpush1.bf16.msra.mxu0 %v602
    %629 = vmatprep.subr.bf16.mxu0 0
    %630 = vmatpush2.bf16.msra.mxu0 0
    %631 = vmatprep.subr.bf16.mxu0 0
    %632 = vmatpush2.bf16.msra.mxu0 0
    %633 = vmatprep.subr.bf16.mxu0 0
    %634 = vmatpush2.bf16.msra.mxu0 0
    %635 = vmatprep.subr.bf16.mxu0 0
    %636 = vmatpush2.bf16.msra.mxu0 0
    %637 = vmatprep.subr.bf16.mxu0 0
    %638 = vmatpush2.bf16.msra.mxu0 0
    %639 = vmatprep.subr.bf16.mxu0 0
    %640 = vmatpush2.bf16.msra.mxu0 0
    %641 = vmatprep.subr.bf16.mxu0 0
    %642 = vmatpush2.bf16.msra.mxu0 0
    %643 = vmatprep.subr.bf16.mxu0 0
    %644 = vmatpush2.bf16.msra.mxu0 0
    %645 = vmatprep.mubr.bf16.mxu0 0
    %646 = vmatmul.mubr.bf16.gmra.mxu0 %v599
    %v647 = vpop.f32.mrf.mxu0
    %v648 = vadd.f32 %v563, %v647
    %v649 = vpop.f32.mrf.mxu0
    %v650 = vadd.f32 %v567, %v649
    %v651 = vpop.f32.mrf.mxu0
    %v652 = vpop.f32.mrf.mxu0
    %653 = vdwg.mxu0
    %654 = vmatprep.subr.bf16.mxu0 0
    %655 = vmatpush1.bf16.msra.mxu0 0
    %656 = vmatprep.subr.bf16.mxu0 0
    %657 = vmatpush1.bf16.msra.mxu0 0
    %658 = vmatprep.subr.bf16.mxu0 0
    %659 = vmatpush1.bf16.msra.mxu0 0
    %660 = vmatprep.subr.bf16.mxu0 0
    %661 = vmatpush1.bf16.msra.mxu0 0
    %662 = vmatprep.subr.bf16.mxu0 0
    %663 = vmatpush1.bf16.msra.mxu0 0
    %664 = vmatprep.subr.bf16.mxu0 0
    %665 = vmatpush1.bf16.msra.mxu0 0
    %666 = vmatprep.subr.bf16.mxu0 0
    %667 = vmatpush1.bf16.msra.mxu0 0
    %668 = vmatprep.subr.bf16.mxu0 %v611
    %669 = vmatpush1.bf16.msra.mxu0 %v608
    %670 = vmatprep.subr.bf16.mxu0 0
    %671 = vmatpush2.bf16.msra.mxu0 0
    %672 = vmatprep.subr.bf16.mxu0 0
    %673 = vmatpush2.bf16.msra.mxu0 0
    %674 = vmatprep.subr.bf16.mxu0 0
    %675 = vmatpush2.bf16.msra.mxu0 0
    %676 = vmatprep.subr.bf16.mxu0 0
    %677 = vmatpush2.bf16.msra.mxu0 0
    %678 = vmatprep.subr.bf16.mxu0 0
    %679 = vmatpush2.bf16.msra.mxu0 0
    %680 = vmatprep.subr.bf16.mxu0 0
    %681 = vmatpush2.bf16.msra.mxu0 0
    %682 = vmatprep.subr.bf16.mxu0 0
    %683 = vmatpush2.bf16.msra.mxu0 0
    %684 = vmatprep.subr.bf16.mxu0 0
    %685 = vmatpush2.bf16.msra.mxu0 0
    %686 = vmatprep.mubr.bf16.mxu0 0
    %687 = vmatmul.mubr.bf16.gmra.mxu0 %v599
    %v688 = vpop.f32.mrf.mxu0
    %v689 = vadd.f32 %v571, %v688
    %v690 = vpop.f32.mrf.mxu0
    %v691 = vadd.f32 %v575, %v690
    %v692 = vpop.f32.mrf.mxu0
    %v693 = vpop.f32.mrf.mxu0
    %694 = vdwg.mxu0
    %695 = vst [vmem:[#allocation3 + $0x60] sm:$0xff] %v648
    %696 = vst [vmem:[#allocation3 + $0x68] sm:$0xff] %v650
    %697 = vst [vmem:[#allocation3 + $0x70] sm:$0xff] %v689
    %698 = vst [vmem:[#allocation3 + $0x78] sm:$0xff] %v691
    %s699 = scalar_lea.vmem %s0, 32
    %v700 = vld [vmem:[%s699] sm:$0xff]
    %v701 = vpack.c.bf16 %v700, %v700
    %v702 = vld [vmem:[%s1] sm:$0xff]
    %v703 = vld [vmem:[%s3] sm:$0xf]
    %v705 = vlaneseq
    %v706 = vshrl.u32 %v705, 7
    %v707 = vsub.s32 0, %v706
    %v708 = vrot.slane %v703, %v707
    %v709 = vlaneseq
    %v710 = vshrl.u32 %v709, 7
    %v711 = vsub.s32 1, %v710
    %v712 = vrot.slane %v703, %v711
    %v713 = vlaneseq
    %v714 = vshrl.u32 %v713, 7
    %v715 = vsub.s32 2, %v714
    %v716 = vrot.slane %v703, %v715
    %v717 = vlaneseq
    %v718 = vshrl.u32 %v717, 7
    %v719 = vsub.s32 3, %v718
    %v720 = vrot.slane %v703, %v719
    %v726 = vcombine.high %v702, %v702
    %v728 = vunpack.c.l.s4 1983009808
    %v729 = vunpack.c.0.s8 %v728
    %v730 = vlaneseq
    %v731 = vshrl.u32 %v730, 7
    %v732 = vsub.s32 %v729, %v731
    %v733 = vrot.slane %v702, %v732
    %v735 = vunpack.c.l.s4 1983009808
    %v736 = vunpack.c.0.s8 %v735
    %v737 = vlaneseq
    %v738 = vshrl.u32 %v737, 7
    %v739 = vsub.s32 %v736, %v738
    %v740 = vrot.slane %v726, %v739
    %v741 = vcombine.high %v733, %v733
    %v742 = vcombine.high %v740, %v740
    %v744 = vsel %vm161, %v701, 0
    %v747 = vsel %vm165, %v733, 0
    %v750 = vsel %vm165, %v741, 0
    %v753 = vsel %vm165, %v740, 0
    %v756 = vsel %vm165, %v742, 0
    %758 = vmatprep.subr.bf16.mxu0 0
    %759 = vmatpush1.bf16.msra.mxu0 0
    %760 = vmatprep.subr.bf16.mxu0 0
    %761 = vmatpush1.bf16.msra.mxu0 0
    %762 = vmatprep.subr.bf16.mxu0 0
    %763 = vmatpush1.bf16.msra.mxu0 0
    %764 = vmatprep.subr.bf16.mxu0 0
    %765 = vmatpush1.bf16.msra.mxu0 0
    %766 = vmatprep.subr.bf16.mxu0 0
    %767 = vmatpush1.bf16.msra.mxu0 0
    %768 = vmatprep.subr.bf16.mxu0 0
    %769 = vmatpush1.bf16.msra.mxu0 0
    %770 = vmatprep.subr.bf16.mxu0 0
    %771 = vmatpush1.bf16.msra.mxu0 0
    %772 = vmatprep.subr.bf16.mxu0 %v750
    %773 = vmatpush1.bf16.msra.mxu0 %v747
    %774 = vmatprep.subr.bf16.mxu0 0
    %775 = vmatpush2.bf16.msra.mxu0 0
    %776 = vmatprep.subr.bf16.mxu0 0
    %777 = vmatpush2.bf16.msra.mxu0 0
    %778 = vmatprep.subr.bf16.mxu0 0
    %779 = vmatpush2.bf16.msra.mxu0 0
    %780 = vmatprep.subr.bf16.mxu0 0
    %781 = vmatpush2.bf16.msra.mxu0 0
    %782 = vmatprep.subr.bf16.mxu0 0
    %783 = vmatpush2.bf16.msra.mxu0 0
    %784 = vmatprep.subr.bf16.mxu0 0
    %785 = vmatpush2.bf16.msra.mxu0 0
    %786 = vmatprep.subr.bf16.mxu0 0
    %787 = vmatpush2.bf16.msra.mxu0 0
    %788 = vmatprep.subr.bf16.mxu0 0
    %789 = vmatpush2.bf16.msra.mxu0 0
    %790 = vmatprep.mubr.bf16.mxu0 0
    %791 = vmatmul.mubr.bf16.gmra.mxu0 %v744
    %v792 = vpop.f32.mrf.mxu0
    %v793 = vadd.f32 %v708, %v792
    %v794 = vpop.f32.mrf.mxu0
    %v795 = vadd.f32 %v712, %v794
    %v796 = vpop.f32.mrf.mxu0
    %v797 = vpop.f32.mrf.mxu0
    %798 = vdwg.mxu0
    %799 = vmatprep.subr.bf16.mxu0 0
    %800 = vmatpush1.bf16.msra.mxu0 0
    %801 = vmatprep.subr.bf16.mxu0 0
    %802 = vmatpush1.bf16.msra.mxu0 0
    %803 = vmatprep.subr.bf16.mxu0 0
    %804 = vmatpush1.bf16.msra.mxu0 0
    %805 = vmatprep.subr.bf16.mxu0 0
    %806 = vmatpush1.bf16.msra.mxu0 0
    %807 = vmatprep.subr.bf16.mxu0 0
    %808 = vmatpush1.bf16.msra.mxu0 0
    %809 = vmatprep.subr.bf16.mxu0 0
    %810 = vmatpush1.bf16.msra.mxu0 0
    %811 = vmatprep.subr.bf16.mxu0 0
    %812 = vmatpush1.bf16.msra.mxu0 0
    %813 = vmatprep.subr.bf16.mxu0 %v756
    %814 = vmatpush1.bf16.msra.mxu0 %v753
    %815 = vmatprep.subr.bf16.mxu0 0
    %816 = vmatpush2.bf16.msra.mxu0 0
    %817 = vmatprep.subr.bf16.mxu0 0
    %818 = vmatpush2.bf16.msra.mxu0 0
    %819 = vmatprep.subr.bf16.mxu0 0
    %820 = vmatpush2.bf16.msra.mxu0 0
    %821 = vmatprep.subr.bf16.mxu0 0
    %822 = vmatpush2.bf16.msra.mxu0 0
    %823 = vmatprep.subr.bf16.mxu0 0
    %824 = vmatpush2.bf16.msra.mxu0 0
    %825 = vmatprep.subr.bf16.mxu0 0
    %826 = vmatpush2.bf16.msra.mxu0 0
    %827 = vmatprep.subr.bf16.mxu0 0
    %828 = vmatpush2.bf16.msra.mxu0 0
    %829 = vmatprep.subr.bf16.mxu0 0
    %830 = vmatpush2.bf16.msra.mxu0 0
    %831 = vmatprep.mubr.bf16.mxu0 0
    %832 = vmatmul.mubr.bf16.gmra.mxu0 %v744
    %v833 = vpop.f32.mrf.mxu0
    %v834 = vadd.f32 %v716, %v833
    %v835 = vpop.f32.mrf.mxu0
    %v836 = vadd.f32 %v720, %v835
    %v837 = vpop.f32.mrf.mxu0
    %v838 = vpop.f32.mrf.mxu0
    %839 = vdwg.mxu0
    %840 = vst [vmem:[#allocation3 + $0x80] sm:$0xff] %v793
    %841 = vst [vmem:[#allocation3 + $0x88] sm:$0xff] %v795
    %842 = vst [vmem:[#allocation3 + $0x90] sm:$0xff] %v834
    %843 = vst [vmem:[#allocation3 + $0x98] sm:$0xff] %v836
    %s844 = scalar_lea.vmem %s0, 40
    %v845 = vld [vmem:[%s844] sm:$0xff]
    %v846 = vpack.c.bf16 %v845, %v845
    %v847 = vld [vmem:[%s1] sm:$0xff]
    %v848 = vld [vmem:[%s3] sm:$0xf]
    %v850 = vlaneseq
    %v851 = vshrl.u32 %v850, 7
    %v852 = vsub.s32 0, %v851
    %v853 = vrot.slane %v848, %v852
    %v854 = vlaneseq
    %v855 = vshrl.u32 %v854, 7
    %v856 = vsub.s32 1, %v855
    %v857 = vrot.slane %v848, %v856
    %v858 = vlaneseq
    %v859 = vshrl.u32 %v858, 7
    %v860 = vsub.s32 2, %v859
    %v861 = vrot.slane %v848, %v860
    %v862 = vlaneseq
    %v863 = vshrl.u32 %v862, 7
    %v864 = vsub.s32 3, %v863
    %v865 = vrot.slane %v848, %v864
    %v871 = vcombine.high %v847, %v847
    %v873 = vunpack.c.l.s4 1983009808
    %v874 = vunpack.c.0.s8 %v873
    %v875 = vlaneseq
    %v876 = vshrl.u32 %v875, 7
    %v877 = vsub.s32 %v874, %v876
    %v878 = vrot.slane %v847, %v877
    %v880 = vunpack.c.l.s4 1983009808
    %v881 = vunpack.c.0.s8 %v880
    %v882 = vlaneseq
    %v883 = vshrl.u32 %v882, 7
    %v884 = vsub.s32 %v881, %v883
    %v885 = vrot.slane %v871, %v884
    %v886 = vcombine.high %v878, %v878
    %v887 = vcombine.high %v885, %v885
    %v889 = vsel %vm161, %v846, 0
    %v892 = vsel %vm165, %v878, 0
    %v895 = vsel %vm165, %v886, 0
    %v898 = vsel %vm165, %v885, 0
    %v901 = vsel %vm165, %v887, 0
    %903 = vmatprep.subr.bf16.mxu0 0
    %904 = vmatpush1.bf16.msra.mxu0 0
    %905 = vmatprep.subr.bf16.mxu0 0
    %906 = vmatpush1.bf16.msra.mxu0 0
    %907 = vmatprep.subr.bf16.mxu0 0
    %908 = vmatpush1.bf16.msra.mxu0 0
    %909 = vmatprep.subr.bf16.mxu0 0
    %910 = vmatpush1.bf16.msra.mxu0 0
    %911 = vmatprep.subr.bf16.mxu0 0
    %912 = vmatpush1.bf16.msra.mxu0 0
    %913 = vmatprep.subr.bf16.mxu0 0
    %914 = vmatpush1.bf16.msra.mxu0 0
    %915 = vmatprep.subr.bf16.mxu0 0
    %916 = vmatpush1.bf16.msra.mxu0 0
    %917 = vmatprep.subr.bf16.mxu0 %v895
    %918 = vmatpush1.bf16.msra.mxu0 %v892
    %919 = vmatprep.subr.bf16.mxu0 0
    %920 = vmatpush2.bf16.msra.mxu0 0
    %921 = vmatprep.subr.bf16.mxu0 0
    %922 = vmatpush2.bf16.msra.mxu0 0
    %923 = vmatprep.subr.bf16.mxu0 0
    %924 = vmatpush2.bf16.msra.mxu0 0
    %925 = vmatprep.subr.bf16.mxu0 0
    %926 = vmatpush2.bf16.msra.mxu0 0
    %927 = vmatprep.subr.bf16.mxu0 0
    %928 = vmatpush2.bf16.msra.mxu0 0
    %929 = vmatprep.subr.bf16.mxu0 0
    %930 = vmatpush2.bf16.msra.mxu0 0
    %931 = vmatprep.subr.bf16.mxu0 0
    %932 = vmatpush2.bf16.msra.mxu0 0
    %933 = vmatprep.subr.bf16.mxu0 0
    %934 = vmatpush2.bf16.msra.mxu0 0
    %935 = vmatprep.mubr.bf16.mxu0 0
    %936 = vmatmul.mubr.bf16.gmra.mxu0 %v889
    %v937 = vpop.f32.mrf.mxu0
    %v938 = vadd.f32 %v853, %v937
    %v939 = vpop.f32.mrf.mxu0
    %v940 = vadd.f32 %v857, %v939
    %v941 = vpop.f32.mrf.mxu0
    %v942 = vpop.f32.mrf.mxu0
    %943 = vdwg.mxu0
    %944 = vmatprep.subr.bf16.mxu0 0
    %945 = vmatpush1.bf16.msra.mxu0 0
    %946 = vmatprep.subr.bf16.mxu0 0
    %947 = vmatpush1.bf16.msra.mxu0 0
    %948 = vmatprep.subr.bf16.mxu0 0
    %949 = vmatpush1.bf16.msra.mxu0 0
    %950 = vmatprep.subr.bf16.mxu0 0
    %951 = vmatpush1.bf16.msra.mxu0 0
    %952 = vmatprep.subr.bf16.mxu0 0
    %953 = vmatpush1.bf16.msra.mxu0 0
    %954 = vmatprep.subr.bf16.mxu0 0
    %955 = vmatpush1.bf16.msra.mxu0 0
    %956 = vmatprep.subr.bf16.mxu0 0
    %957 = vmatpush1.bf16.msra.mxu0 0
    %958 = vmatprep.subr.bf16.mxu0 %v901
    %959 = vmatpush1.bf16.msra.mxu0 %v898
    %960 = vmatprep.subr.bf16.mxu0 0
    %961 = vmatpush2.bf16.msra.mxu0 0
    %962 = vmatprep.subr.bf16.mxu0 0
    %963 = vmatpush2.bf16.msra.mxu0 0
    %964 = vmatprep.subr.bf16.mxu0 0
    %965 = vmatpush2.bf16.msra.mxu0 0
    %966 = vmatprep.subr.bf16.mxu0 0
    %967 = vmatpush2.bf16.msra.mxu0 0
    %968 = vmatprep.subr.bf16.mxu0 0
    %969 = vmatpush2.bf16.msra.mxu0 0
    %970 = vmatprep.subr.bf16.mxu0 0
    %971 = vmatpush2.bf16.msra.mxu0 0
    %972 = vmatprep.subr.bf16.mxu0 0
    %973 = vmatpush2.bf16.msra.mxu0 0
    %974 = vmatprep.subr.bf16.mxu0 0
    %975 = vmatpush2.bf16.msra.mxu0 0
    %976 = vmatprep.mubr.bf16.mxu0 0
    %977 = vmatmul.mubr.bf16.gmra.mxu0 %v889
    %v978 = vpop.f32.mrf.mxu0
    %v979 = vadd.f32 %v861, %v978
    %v980 = vpop.f32.mrf.mxu0
    %v981 = vadd.f32 %v865, %v980
    %v982 = vpop.f32.mrf.mxu0
    %v983 = vpop.f32.mrf.mxu0
    %984 = vdwg.mxu0
    %985 = vst [vmem:[#allocation3 + $0xa0] sm:$0xff] %v938
    %986 = vst [vmem:[#allocation3 + $0xa8] sm:$0xff] %v940
    %987 = vst [vmem:[#allocation3 + $0xb0] sm:$0xff] %v979
    %988 = vst [vmem:[#allocation3 + $0xb8] sm:$0xff] %v981
    %s989 = scalar_lea.vmem %s0, 48
    %v990 = vld [vmem:[%s989] sm:$0xff]
    %v991 = vpack.c.bf16 %v990, %v990
    %v992 = vld [vmem:[%s1] sm:$0xff]
    %v993 = vld [vmem:[%s3] sm:$0xf]
    %v995 = vlaneseq
    %v996 = vshrl.u32 %v995, 7
    %v997 = vsub.s32 0, %v996
    %v998 = vrot.slane %v993, %v997
    %v999 = vlaneseq
    %v1000 = vshrl.u32 %v999, 7
    %v1001 = vsub.s32 1, %v1000
    %v1002 = vrot.slane %v993, %v1001
    %v1003 = vlaneseq
    %v1004 = vshrl.u32 %v1003, 7
    %v1005 = vsub.s32 2, %v1004
    %v1006 = vrot.slane %v993, %v1005
    %v1007 = vlaneseq
    %v1008 = vshrl.u32 %v1007, 7
    %v1009 = vsub.s32 3, %v1008
    %v1010 = vrot.slane %v993, %v1009
    %v1016 = vcombine.high %v992, %v992
    %v1018 = vunpack.c.l.s4 1983009808
    %v1019 = vunpack.c.0.s8 %v1018
    %v1020 = vlaneseq
    %v1021 = vshrl.u32 %v1020, 7
    %v1022 = vsub.s32 %v1019, %v1021
    %v1023 = vrot.slane %v992, %v1022
    %v1025 = vunpack.c.l.s4 1983009808
    %v1026 = vunpack.c.0.s8 %v1025
    %v1027 = vlaneseq
    %v1028 = vshrl.u32 %v1027, 7
    %v1029 = vsub.s32 %v1026, %v1028
    %v1030 = vrot.slane %v1016, %v1029
    %v1031 = vcombine.high %v1023, %v1023
    %v1032 = vcombine.high %v1030, %v1030
    %v1034 = vsel %vm161, %v991, 0
    %v1037 = vsel %vm165, %v1023, 0
    %v1040 = vsel %vm165, %v1031, 0
    %v1043 = vsel %vm165, %v1030, 0
    %v1046 = vsel %vm165, %v1032, 0
    %1048 = vmatprep.subr.bf16.mxu0 0
    %1049 = vmatpush1.bf16.msra.mxu0 0
    %1050 = vmatprep.subr.bf16.mxu0 0
    %1051 = vmatpush1.bf16.msra.mxu0 0
    %1052 = vmatprep.subr.bf16.mxu0 0
    %1053 = vmatpush1.bf16.msra.mxu0 0
    %1054 = vmatprep.subr.bf16.mxu0 0
    %1055 = vmatpush1.bf16.msra.mxu0 0
    %1056 = vmatprep.subr.bf16.mxu0 0
    %1057 = vmatpush1.bf16.msra.mxu0 0
    %1058 = vmatprep.subr.bf16.mxu0 0
    %1059 = vmatpush1.bf16.msra.mxu0 0
    %1060 = vmatprep.subr.bf16.mxu0 0
    %1061 = vmatpush1.bf16.msra.mxu0 0
    %1062 = vmatprep.subr.bf16.mxu0 %v1040
    %1063 = vmatpush1.bf16.msra.mxu0 %v1037
    %1064 = vmatprep.subr.bf16.mxu0 0
    %1065 = vmatpush2.bf16.msra.mxu0 0
    %1066 = vmatprep.subr.bf16.mxu0 0
    %1067 = vmatpush2.bf16.msra.mxu0 0
    %1068 = vmatprep.subr.bf16.mxu0 0
    %1069 = vmatpush2.bf16.msra.mxu0 0
    %1070 = vmatprep.subr.bf16.mxu0 0
    %1071 = vmatpush2.bf16.msra.mxu0 0
    %1072 = vmatprep.subr.bf16.mxu0 0
    %1073 = vmatpush2.bf16.msra.mxu0 0
    %1074 = vmatprep.subr.bf16.mxu0 0
    %1075 = vmatpush2.bf16.msra.mxu0 0
    %1076 = vmatprep.subr.bf16.mxu0 0
    %1077 = vmatpush2.bf16.msra.mxu0 0
    %1078 = vmatprep.subr.bf16.mxu0 0
    %1079 = vmatpush2.bf16.msra.mxu0 0
    %1080 = vmatprep.mubr.bf16.mxu0 0
    %1081 = vmatmul.mubr.bf16.gmra.mxu0 %v1034
    %v1082 = vpop.f32.mrf.mxu0
    %v1083 = vadd.f32 %v998, %v1082
    %v1084 = vpop.f32.mrf.mxu0
    %v1085 = vadd.f32 %v1002, %v1084
    %v1086 = vpop.f32.mrf.mxu0
    %v1087 = vpop.f32.mrf.mxu0
    %1088 = vdwg.mxu0
    %1089 = vmatprep.subr.bf16.mxu0 0
    %1090 = vmatpush1.bf16.msra.mxu0 0
    %1091 = vmatprep.subr.bf16.mxu0 0
    %1092 = vmatpush1.bf16.msra.mxu0 0
    %1093 = vmatprep.subr.bf16.mxu0 0
    %1094 = vmatpush1.bf16.msra.mxu0 0
    %1095 = vmatprep.subr.bf16.mxu0 0
    %1096 = vmatpush1.bf16.msra.mxu0 0
    %1097 = vmatprep.subr.bf16.mxu0 0
    %1098 = vmatpush1.bf16.msra.mxu0 0
    %1099 = vmatprep.subr.bf16.mxu0 0
    %1100 = vmatpush1.bf16.msra.mxu0 0
    %1101 = vmatprep.subr.bf16.mxu0 0
    %1102 = vmatpush1.bf16.msra.mxu0 0
    %1103 = vmatprep.subr.bf16.mxu0 %v1046
    %1104 = vmatpush1.bf16.msra.mxu0 %v1043
    %1105 = vmatprep.subr.bf16.mxu0 0
    %1106 = vmatpush2.bf16.msra.mxu0 0
    %1107 = vmatprep.subr.bf16.mxu0 0
    %1108 = vmatpush2.bf16.msra.mxu0 0
    %1109 = vmatprep.subr.bf16.mxu0 0
    %1110 = vmatpush2.bf16.msra.mxu0 0
    %1111 = vmatprep.subr.bf16.mxu0 0
    %1112 = vmatpush2.bf16.msra.mxu0 0
    %1113 = vmatprep.subr.bf16.mxu0 0
    %1114 = vmatpush2.bf16.msra.mxu0 0
    %1115 = vmatprep.subr.bf16.mxu0 0
    %1116 = vmatpush2.bf16.msra.mxu0 0
    %1117 = vmatprep.subr.bf16.mxu0 0
    %1118 = vmatpush2.bf16.msra.mxu0 0
    %1119 = vmatprep.subr.bf16.mxu0 0
    %1120 = vmatpush2.bf16.msra.mxu0 0
    %1121 = vmatprep.mubr.bf16.mxu0 0
    %1122 = vmatmul.mubr.bf16.gmra.mxu0 %v1034
    %v1123 = vpop.f32.mrf.mxu0
    %v1124 = vadd.f32 %v1006, %v1123
    %v1125 = vpop.f32.mrf.mxu0
    %v1126 = vadd.f32 %v1010, %v1125
    %v1127 = vpop.f32.mrf.mxu0
    %v1128 = vpop.f32.mrf.mxu0
    %1129 = vdwg.mxu0
    %1130 = vst [vmem:[#allocation3 + $0xc0] sm:$0xff] %v1083
    %1131 = vst [vmem:[#allocation3 + $0xc8] sm:$0xff] %v1085
    %1132 = vst [vmem:[#allocation3 + $0xd0] sm:$0xff] %v1124
    %1133 = vst [vmem:[#allocation3 + $0xd8] sm:$0xff] %v1126
    %s1134 = scalar_lea.vmem %s0, 56
    %v1135 = vld [vmem:[%s1134] sm:$0xff]
    %v1136 = vpack.c.bf16 %v1135, %v1135
    %v1137 = vld [vmem:[%s1] sm:$0xff]
    %v1138 = vld [vmem:[%s3] sm:$0xf]
    %v1140 = vlaneseq
    %v1141 = vshrl.u32 %v1140, 7
    %v1142 = vsub.s32 0, %v1141
    %v1143 = vrot.slane %v1138, %v1142
    %v1144 = vlaneseq
    %v1145 = vshrl.u32 %v1144, 7
    %v1146 = vsub.s32 1, %v1145
    %v1147 = vrot.slane %v1138, %v1146
    %v1148 = vlaneseq
    %v1149 = vshrl.u32 %v1148, 7
    %v1150 = vsub.s32 2, %v1149
    %v1151 = vrot.slane %v1138, %v1150
    %v1152 = vlaneseq
    %v1153 = vshrl.u32 %v1152, 7
    %v1154 = vsub.s32 3, %v1153
    %v1155 = vrot.slane %v1138, %v1154
    %v1161 = vcombine.high %v1137, %v1137
    %v1163 = vunpack.c.l.s4 1983009808
    %v1164 = vunpack.c.0.s8 %v1163
    %v1165 = vlaneseq
    %v1166 = vshrl.u32 %v1165, 7
    %v1167 = vsub.s32 %v1164, %v1166
    %v1168 = vrot.slane %v1137, %v1167
    %v1170 = vunpack.c.l.s4 1983009808
    %v1171 = vunpack.c.0.s8 %v1170
    %v1172 = vlaneseq
    %v1173 = vshrl.u32 %v1172, 7
    %v1174 = vsub.s32 %v1171, %v1173
    %v1175 = vrot.slane %v1161, %v1174
    %v1176 = vcombine.high %v1168, %v1168
    %v1177 = vcombine.high %v1175, %v1175
    %v1179 = vsel %vm161, %v1136, 0
    %v1182 = vsel %vm165, %v1168, 0
    %v1185 = vsel %vm165, %v1176, 0
    %v1188 = vsel %vm165, %v1175, 0
    %v1191 = vsel %vm165, %v1177, 0
    %1193 = vmatprep.subr.bf16.mxu0 0
    %1194 = vmatpush1.bf16.msra.mxu0 0
    %1195 = vmatprep.subr.bf16.mxu0 0
    %1196 = vmatpush1.bf16.msra.mxu0 0
    %1197 = vmatprep.subr.bf16.mxu0 0
    %1198 = vmatpush1.bf16.msra.mxu0 0
    %1199 = vmatprep.subr.bf16.mxu0 0
    %1200 = vmatpush1.bf16.msra.mxu0 0
    %1201 = vmatprep.subr.bf16.mxu0 0
    %1202 = vmatpush1.bf16.msra.mxu0 0
    %1203 = vmatprep.subr.bf16.mxu0 0
    %1204 = vmatpush1.bf16.msra.mxu0 0
    %1205 = vmatprep.subr.bf16.mxu0 0
    %1206 = vmatpush1.bf16.msra.mxu0 0
    %1207 = vmatprep.subr.bf16.mxu0 %v1185
    %1208 = vmatpush1.bf16.msra.mxu0 %v1182
    %1209 = vmatprep.subr.bf16.mxu0 0
    %1210 = vmatpush2.bf16.msra.mxu0 0
    %1211 = vmatprep.subr.bf16.mxu0 0
    %1212 = vmatpush2.bf16.msra.mxu0 0
    %1213 = vmatprep.subr.bf16.mxu0 0
    %1214 = vmatpush2.bf16.msra.mxu0 0
    %1215 = vmatprep.subr.bf16.mxu0 0
    %1216 = vmatpush2.bf16.msra.mxu0 0
    %1217 = vmatprep.subr.bf16.mxu0 0
    %1218 = vmatpush2.bf16.msra.mxu0 0
    %1219 = vmatprep.subr.bf16.mxu0 0
    %1220 = vmatpush2.bf16.msra.mxu0 0
    %1221 = vmatprep.subr.bf16.mxu0 0
    %1222 = vmatpush2.bf16.msra.mxu0 0
    %1223 = vmatprep.subr.bf16.mxu0 0
    %1224 = vmatpush2.bf16.msra.mxu0 0
    %1225 = vmatprep.mubr.bf16.mxu0 0
    %1226 = vmatmul.mubr.bf16.gmra.mxu0 %v1179
    %v1227 = vpop.f32.mrf.mxu0
    %v1228 = vadd.f32 %v1143, %v1227
    %v1229 = vpop.f32.mrf.mxu0
    %v1230 = vadd.f32 %v1147, %v1229
    %v1231 = vpop.f32.mrf.mxu0
    %v1232 = vpop.f32.mrf.mxu0
    %1233 = vdwg.mxu0
    %1234 = vmatprep.subr.bf16.mxu0 0
    %1235 = vmatpush1.bf16.msra.mxu0 0
    %1236 = vmatprep.subr.bf16.mxu0 0
    %1237 = vmatpush1.bf16.msra.mxu0 0
    %1238 = vmatprep.subr.bf16.mxu0 0
    %1239 = vmatpush1.bf16.msra.mxu0 0
    %1240 = vmatprep.subr.bf16.mxu0 0
    %1241 = vmatpush1.bf16.msra.mxu0 0
    %1242 = vmatprep.subr.bf16.mxu0 0
    %1243 = vmatpush1.bf16.msra.mxu0 0
    %1244 = vmatprep.subr.bf16.mxu0 0
    %1245 = vmatpush1.bf16.msra.mxu0 0
    %1246 = vmatprep.subr.bf16.mxu0 0
    %1247 = vmatpush1.bf16.msra.mxu0 0
    %1248 = vmatprep.subr.bf16.mxu0 %v1191
    %1249 = vmatpush1.bf16.msra.mxu0 %v1188
    %1250 = vmatprep.subr.bf16.mxu0 0
    %1251 = vmatpush2.bf16.msra.mxu0 0
    %1252 = vmatprep.subr.bf16.mxu0 0
    %1253 = vmatpush2.bf16.msra.mxu0 0
    %1254 = vmatprep.subr.bf16.mxu0 0
    %1255 = vmatpush2.bf16.msra.mxu0 0
    %1256 = vmatprep.subr.bf16.mxu0 0
    %1257 = vmatpush2.bf16.msra.mxu0 0
    %1258 = vmatprep.subr.bf16.mxu0 0
    %1259 = vmatpush2.bf16.msra.mxu0 0
    %1260 = vmatprep.subr.bf16.mxu0 0
    %1261 = vmatpush2.bf16.msra.mxu0 0
    %1262 = vmatprep.subr.bf16.mxu0 0
    %1263 = vmatpush2.bf16.msra.mxu0 0
    %1264 = vmatprep.subr.bf16.mxu0 0
    %1265 = vmatpush2.bf16.msra.mxu0 0
    %1266 = vmatprep.mubr.bf16.mxu0 0
    %1267 = vmatmul.mubr.bf16.gmra.mxu0 %v1179
    %v1268 = vpop.f32.mrf.mxu0
    %v1269 = vadd.f32 %v1151, %v1268
    %v1270 = vpop.f32.mrf.mxu0
    %v1271 = vadd.f32 %v1155, %v1270
    %v1272 = vpop.f32.mrf.mxu0
    %v1273 = vpop.f32.mrf.mxu0
    %1274 = vdwg.mxu0
    %1275 = vst [vmem:[#allocation3 + $0xe0] sm:$0xff] %v1228
    %1276 = vst [vmem:[#allocation3 + $0xe8] sm:$0xff] %v1230
    %1277 = vst [vmem:[#allocation3 + $0xf0] sm:$0xff] %v1269
    %1278 = vst [vmem:[#allocation3 + $0xf8] sm:$0xff] %v1271
    %v1279 = vld [vmem:[#allocation3] sm:$0xff]
    %v1280 = vld [vmem:[#allocation3 + $0x8] sm:$0xff]
    %v1281 = vld [vmem:[#allocation3 + $0x10] sm:$0xff]
    %v1282 = vld [vmem:[#allocation3 + $0x18] sm:$0xff]
    %v1283 = vld [vmem:[#allocation5] sm:$0xff]
    %v1284 = vld [vmem:[#allocation5 + $0x8] sm:$0xff]
    %v1285 = vld [vmem:[#allocation5 + $0x10] sm:$0xff]
    %v1286 = vld [vmem:[#allocation5 + $0x18] sm:$0xff]
    %v1287 = vld [vmem:[#allocation5 + $0x20] sm:$0xff]
    %v1288 = vld [vmem:[#allocation5 + $0x28] sm:$0xff]
    %v1289 = vld [vmem:[#allocation5 + $0x30] sm:$0xff]
    %v1290 = vld [vmem:[#allocation5 + $0x38] sm:$0xff]
    %v1291 = vld [vmem:[#allocation5 + $0x40] sm:$0xff]
    %v1292 = vld [vmem:[#allocation5 + $0x48] sm:$0xff]
    %v1293 = vld [vmem:[#allocation5 + $0x50] sm:$0xff]
    %v1294 = vld [vmem:[#allocation5 + $0x58] sm:$0xff]
    %v1295 = vld [vmem:[#allocation5 + $0x60] sm:$0xff]
    %v1296 = vld [vmem:[#allocation5 + $0x68] sm:$0xff]
    %v1297 = vld [vmem:[#allocation5 + $0x70] sm:$0xff]
    %v1298 = vld [vmem:[#allocation5 + $0x78] sm:$0xff]
    %v1299 = vld [vmem:[#allocation5 + $0x80] sm:$0xff]
    %v1300 = vld [vmem:[#allocation5 + $0x88] sm:$0xff]
    %v1301 = vld [vmem:[#allocation5 + $0x90] sm:$0xff]
    %v1302 = vld [vmem:[#allocation5 + $0x98] sm:$0xff]
    %v1303 = vld [vmem:[#allocation5 + $0xa0] sm:$0xff]
    %v1304 = vld [vmem:[#allocation5 + $0xa8] sm:$0xff]
    %v1305 = vld [vmem:[#allocation5 + $0xb0] sm:$0xff]
    %v1306 = vld [vmem:[#allocation5 + $0xb8] sm:$0xff]
    %v1307 = vld [vmem:[#allocation5 + $0xc0] sm:$0xff]
    %v1308 = vld [vmem:[#allocation5 + $0xc8] sm:$0xff]
    %v1309 = vld [vmem:[#allocation5 + $0xd0] sm:$0xff]
    %v1310 = vld [vmem:[#allocation5 + $0xd8] sm:$0xff]
    %v1311 = vld [vmem:[#allocation5 + $0xe0] sm:$0xff]
    %v1312 = vld [vmem:[#allocation5 + $0xe8] sm:$0xff]
    %v1313 = vld [vmem:[#allocation5 + $0xf0] sm:$0xff]
    %v1314 = vld [vmem:[#allocation5 + $0xf8] sm:$0xff]
    %v1347 = vunpack.c.l.b16 %v1283
    %v1348 = vunpack.c.h.b16 %v1283
    %v1349 = vunpack.c.l.b16 %v1284
    %v1350 = vunpack.c.h.b16 %v1284
    %v1351 = vunpack.c.l.b16 %v1285
    %v1352 = vunpack.c.h.b16 %v1285
    %v1353 = vunpack.c.l.b16 %v1286
    %v1354 = vunpack.c.h.b16 %v1286
    %v1355 = vunpack.c.l.b16 %v1287
    %v1356 = vunpack.c.h.b16 %v1287
    %v1357 = vunpack.c.l.b16 %v1288
    %v1358 = vunpack.c.h.b16 %v1288
    %v1359 = vunpack.c.l.b16 %v1289
    %v1360 = vunpack.c.h.b16 %v1289
    %v1361 = vunpack.c.l.b16 %v1290
    %v1362 = vunpack.c.h.b16 %v1290
    %v1363 = vunpack.c.l.b16 %v1291
    %v1364 = vunpack.c.h.b16 %v1291
    %v1365 = vunpack.c.l.b16 %v1292
    %v1366 = vunpack.c.h.b16 %v1292
    %v1367 = vunpack.c.l.b16 %v1293
    %v1368 = vunpack.c.h.b16 %v1293
    %v1369 = vunpack.c.l.b16 %v1294
    %v1370 = vunpack.c.h.b16 %v1294
    %v1371 = vunpack.c.l.b16 %v1295
    %v1372 = vunpack.c.h.b16 %v1295
    %v1373 = vunpack.c.l.b16 %v1296
    %v1374 = vunpack.c.h.b16 %v1296
    %v1375 = vunpack.c.l.b16 %v1297
    %v1376 = vunpack.c.h.b16 %v1297
    %v1377 = vunpack.c.l.b16 %v1298
    %v1378 = vunpack.c.h.b16 %v1298
    %v1379 = vunpack.c.l.b16 %v1299
    %v1380 = vunpack.c.h.b16 %v1299
    %v1381 = vunpack.c.l.b16 %v1300
    %v1382 = vunpack.c.h.b16 %v1300
    %v1383 = vunpack.c.l.b16 %v1301
    %v1384 = vunpack.c.h.b16 %v1301
    %v1385 = vunpack.c.l.b16 %v1302
    %v1386 = vunpack.c.h.b16 %v1302
    %v1387 = vunpack.c.l.b16 %v1303
    %v1388 = vunpack.c.h.b16 %v1303
    %v1389 = vunpack.c.l.b16 %v1304
    %v1390 = vunpack.c.h.b16 %v1304
    %v1391 = vunpack.c.l.b16 %v1305
    %v1392 = vunpack.c.h.b16 %v1305
    %v1393 = vunpack.c.l.b16 %v1306
    %v1394 = vunpack.c.h.b16 %v1306
    %v1395 = vunpack.c.l.b16 %v1307
    %v1396 = vunpack.c.h.b16 %v1307
    %v1397 = vunpack.c.l.b16 %v1308
    %v1398 = vunpack.c.h.b16 %v1308
    %v1399 = vunpack.c.l.b16 %v1309
    %v1400 = vunpack.c.h.b16 %v1309
    %v1401 = vunpack.c.l.b16 %v1310
    %v1402 = vunpack.c.h.b16 %v1310
    %v1403 = vunpack.c.l.b16 %v1311
    %v1404 = vunpack.c.h.b16 %v1311
    %v1405 = vunpack.c.l.b16 %v1312
    %v1406 = vunpack.c.h.b16 %v1312
    %v1407 = vunpack.c.l.b16 %v1313
    %v1408 = vunpack.c.h.b16 %v1313
    %v1409 = vunpack.c.l.b16 %v1314
    %v1410 = vunpack.c.h.b16 %v1314
    %v1411 = vpack.c.b16 %v1351, %v1347
    %v1412 = vpack.c.b16 %v1352, %v1348
    %v1413 = vpack.c.b16 %v1353, %v1349
    %v1414 = vpack.c.b16 %v1354, %v1350
    %v1415 = vpack.c.b16 %v1359, %v1355
    %v1416 = vpack.c.b16 %v1360, %v1356
    %v1417 = vpack.c.b16 %v1361, %v1357
    %v1418 = vpack.c.b16 %v1362, %v1358
    %v1419 = vpack.c.b16 %v1367, %v1363
    %v1420 = vpack.c.b16 %v1368, %v1364
    %v1421 = vpack.c.b16 %v1369, %v1365
    %v1422 = vpack.c.b16 %v1370, %v1366
    %v1423 = vpack.c.b16 %v1375, %v1371
    %v1424 = vpack.c.b16 %v1376, %v1372
    %v1425 = vpack.c.b16 %v1377, %v1373
    %v1426 = vpack.c.b16 %v1378, %v1374
    %v1427 = vpack.c.b16 %v1383, %v1379
    %v1428 = vpack.c.b16 %v1384, %v1380
    %v1429 = vpack.c.b16 %v1385, %v1381
    %v1430 = vpack.c.b16 %v1386, %v1382
    %v1431 = vpack.c.b16 %v1391, %v1387
    %v1432 = vpack.c.b16 %v1392, %v1388
    %v1433 = vpack.c.b16 %v1393, %v1389
    %v1434 = vpack.c.b16 %v1394, %v1390
    %v1435 = vpack.c.b16 %v1399, %v1395
    %v1436 = vpack.c.b16 %v1400, %v1396
    %v1437 = vpack.c.b16 %v1401, %v1397
    %v1438 = vpack.c.b16 %v1402, %v1398
    %v1439 = vpack.c.b16 %v1407, %v1403
    %v1440 = vpack.c.b16 %v1408, %v1404
    %v1441 = vpack.c.b16 %v1409, %v1405
    %v1442 = vpack.c.b16 %v1410, %v1406
    %1475 = vmatprep.subr.bf16.mxu0 %v1440
    %1476 = vmatpush1.bf16.msra.mxu0 %v1439
    %1477 = vmatprep.subr.bf16.mxu0 %v1436
    %1478 = vmatpush1.bf16.msra.mxu0 %v1435
    %1479 = vmatprep.subr.bf16.mxu0 %v1432
    %1480 = vmatpush1.bf16.msra.mxu0 %v1431
    %1481 = vmatprep.subr.bf16.mxu0 %v1428
    %1482 = vmatpush1.bf16.msra.mxu0 %v1427
    %1483 = vmatprep.subr.bf16.mxu0 %v1424
    %1484 = vmatpush1.bf16.msra.mxu0 %v1423
    %1485 = vmatprep.subr.bf16.mxu0 %v1420
    %1486 = vmatpush1.bf16.msra.mxu0 %v1419
    %1487 = vmatprep.subr.bf16.mxu0 %v1416
    %1488 = vmatpush1.bf16.msra.mxu0 %v1415
    %1489 = vmatprep.subr.bf16.mxu0 %v1412
    %1490 = vmatpush1.bf16.msra.mxu0 %v1411
    %1491 = vmatprep.subr.bf16.mxu0 0
    %1492 = vmatpush2.bf16.msra.mxu0 0
    %1493 = vmatprep.subr.bf16.mxu0 0
    %1494 = vmatpush2.bf16.msra.mxu0 0
    %1495 = vmatprep.subr.bf16.mxu0 0
    %1496 = vmatpush2.bf16.msra.mxu0 0
    %1497 = vmatprep.subr.bf16.mxu0 0
    %1498 = vmatpush2.bf16.msra.mxu0 0
    %1499 = vmatprep.subr.bf16.mxu0 0
    %1500 = vmatpush2.bf16.msra.mxu0 0
    %1501 = vmatprep.subr.bf16.mxu0 0
    %1502 = vmatpush2.bf16.msra.mxu0 0
    %1503 = vmatprep.subr.bf16.mxu0 0
    %1504 = vmatpush2.bf16.msra.mxu0 0
    %1505 = vmatprep.subr.bf16.mxu0 0
    %1506 = vmatpush2.bf16.msra.mxu0 0
    %1507 = vmatprep.mubr.bf16.mxu0 0
    %1508 = vmatmul.mubr.bf16.gmra.mxu0 0
    %v1509 = vpop.f32.mrf.mxu0
    %v1510 = vadd.f32 0.0, %v1509
    %v1511 = vpop.f32.mrf.mxu0
    %v1512 = vadd.f32 0.0, %v1511
    %v1513 = vpop.f32.mrf.mxu0
    %v1514 = vpop.f32.mrf.mxu0
    %1515 = vdwg.mxu0
    %1516 = vmatprep.subr.bf16.mxu0 %v1442
    %1517 = vmatpush1.bf16.msra.mxu0 %v1441
    %1518 = vmatprep.subr.bf16.mxu0 %v1438
    %1519 = vmatpush1.bf16.msra.mxu0 %v1437
    %1520 = vmatprep.subr.bf16.mxu0 %v1434
    %1521 = vmatpush1.bf16.msra.mxu0 %v1433
    %1522 = vmatprep.subr.bf16.mxu0 %v1430
    %1523 = vmatpush1.bf16.msra.mxu0 %v1429
    %1524 = vmatprep.subr.bf16.mxu0 %v1426
    %1525 = vmatpush1.bf16.msra.mxu0 %v1425
    %1526 = vmatprep.subr.bf16.mxu0 %v1422
    %1527 = vmatpush1.bf16.msra.mxu0 %v1421
    %1528 = vmatprep.subr.bf16.mxu0 %v1418
    %1529 = vmatpush1.bf16.msra.mxu0 %v1417
    %1530 = vmatprep.subr.bf16.mxu0 %v1414
    %1531 = vmatpush1.bf16.msra.mxu0 %v1413
    %1532 = vmatprep.subr.bf16.mxu0 0
    %1533 = vmatpush2.bf16.msra.mxu0 0
    %1534 = vmatprep.subr.bf16.mxu0 0
    %1535 = vmatpush2.bf16.msra.mxu0 0
    %1536 = vmatprep.subr.bf16.mxu0 0
    %1537 = vmatpush2.bf16.msra.mxu0 0
    %1538 = vmatprep.subr.bf16.mxu0 0
    %1539 = vmatpush2.bf16.msra.mxu0 0
    %1540 = vmatprep.subr.bf16.mxu0 0
    %1541 = vmatpush2.bf16.msra.mxu0 0
    %1542 = vmatprep.subr.bf16.mxu0 0
    %1543 = vmatpush2.bf16.msra.mxu0 0
    %1544 = vmatprep.subr.bf16.mxu0 0
    %1545 = vmatpush2.bf16.msra.mxu0 0
    %1546 = vmatprep.subr.bf16.mxu0 0
    %1547 = vmatpush2.bf16.msra.mxu0 0
    %1548 = vmatprep.mubr.bf16.mxu0 0
    %1549 = vmatmul.mubr.bf16.gmra.mxu0 0
    %v1550 = vpop.f32.mrf.mxu0
    %v1551 = vadd.f32 0.0, %v1550
    %v1552 = vpop.f32.mrf.mxu0
    %v1553 = vadd.f32 0.0, %v1552
    %v1554 = vpop.f32.mrf.mxu0
    %v1555 = vpop.f32.mrf.mxu0
    %1556 = vdwg.mxu0
    %v1557 = vadd.f32 %v1279, %v1510
    %v1558 = vadd.f32 %v1280, %v1512
    %v1559 = vadd.f32 %v1281, %v1551
    %v1560 = vadd.f32 %v1282, %v1553
    %v1561 = vmul.f32 %v1557, 0.5
    %v1562 = vtanh.pop %v1561
    %v1563 = vmul.f32 %v1562, 0.5
    %v1564 = vadd.f32 %v1563, 0.5
    %v1565 = vmul.f32 %v1558, 0.5
    %v1566 = vtanh.pop %v1565
    %v1567 = vmul.f32 %v1566, 0.5
    %v1568 = vadd.f32 %v1567, 0.5
    %v1569 = vtanh.pop %v1559
    %v1570 = vmul.f32 %v1560, 0.5
    %v1571 = vtanh.pop %v1570
    %v1572 = vmul.f32 %v1571, 0.5
    %v1573 = vadd.f32 %v1572, 0.5
    %v1574 = vmul.f32 %v1568, 0.0
    %v1575 = vmul.f32 %v1564, %v1569
    %v1576 = vadd.f32 %v1574, %v1575
    %v1577 = vtanh.pop %v1576
    %v1578 = vmul.f32 %v1573, %v1577
    %1579 = vst [vmem:[#allocation2] sm:$0xff] %v1578
    %v1580 = vld [vmem:[#allocation3 + $0x20] sm:$0xff]
    %v1581 = vld [vmem:[#allocation3 + $0x28] sm:$0xff]
    %v1582 = vld [vmem:[#allocation3 + $0x30] sm:$0xff]
    %v1583 = vld [vmem:[#allocation3 + $0x38] sm:$0xff]
    %v1584 = vpack.c.bf16 %v1578, %v1578
    %v1585 = vld [vmem:[#allocation5] sm:$0xff]
    %v1586 = vld [vmem:[#allocation5 + $0x8] sm:$0xff]
    %v1587 = vld [vmem:[#allocation5 + $0x10] sm:$0xff]
    %v1588 = vld [vmem:[#allocation5 + $0x18] sm:$0xff]
    %v1589 = vld [vmem:[#allocation5 + $0x20] sm:$0xff]
    %v1590 = vld [vmem:[#allocation5 + $0x28] sm:$0xff]
    %v1591 = vld [vmem:[#allocation5 + $0x30] sm:$0xff]
    %v1592 = vld [vmem:[#allocation5 + $0x38] sm:$0xff]
    %v1593 = vld [vmem:[#allocation5 + $0x40] sm:$0xff]
    %v1594 = vld [vmem:[#allocation5 + $0x48] sm:$0xff]
    %v1595 = vld [vmem:[#allocation5 + $0x50] sm:$0xff]
    %v1596 = vld [vmem:[#allocation5 + $0x58] sm:$0xff]
    %v1597 = vld [vmem:[#allocation5 + $0x60] sm:$0xff]
    %v1598 = vld [vmem:[#allocation5 + $0x68] sm:$0xff]
    %v1599 = vld [vmem:[#allocation5 + $0x70] sm:$0xff]
    %v1600 = vld [vmem:[#allocation5 + $0x78] sm:$0xff]
    %v1601 = vld [vmem:[#allocation5 + $0x80] sm:$0xff]
    %v1602 = vld [vmem:[#allocation5 + $0x88] sm:$0xff]
    %v1603 = vld [vmem:[#allocation5 + $0x90] sm:$0xff]
    %v1604 = vld [vmem:[#allocation5 + $0x98] sm:$0xff]
    %v1605 = vld [vmem:[#allocation5 + $0xa0] sm:$0xff]
    %v1606 = vld [vmem:[#allocation5 + $0xa8] sm:$0xff]
    %v1607 = vld [vmem:[#allocation5 + $0xb0] sm:$0xff]
    %v1608 = vld [vmem:[#allocation5 + $0xb8] sm:$0xff]
    %v1609 = vld [vmem:[#allocation5 + $0xc0] sm:$0xff]
    %v1610 = vld [vmem:[#allocation5 + $0xc8] sm:$0xff]
    %v1611 = vld [vmem:[#allocation5 + $0xd0] sm:$0xff]
    %v1612 = vld [vmem:[#allocation5 + $0xd8] sm:$0xff]
    %v1613 = vld [vmem:[#allocation5 + $0xe0] sm:$0xff]
    %v1614 = vld [vmem:[#allocation5 + $0xe8] sm:$0xff]
    %v1615 = vld [vmem:[#allocation5 + $0xf0] sm:$0xff]
    %v1616 = vld [vmem:[#allocation5 + $0xf8] sm:$0xff]
    %v1649 = vunpack.c.l.b16 %v1585
    %v1650 = vunpack.c.h.b16 %v1585
    %v1651 = vunpack.c.l.b16 %v1586
    %v1652 = vunpack.c.h.b16 %v1586
    %v1653 = vunpack.c.l.b16 %v1587
    %v1654 = vunpack.c.h.b16 %v1587
    %v1655 = vunpack.c.l.b16 %v1588
    %v1656 = vunpack.c.h.b16 %v1588
    %v1657 = vunpack.c.l.b16 %v1589
    %v1658 = vunpack.c.h.b16 %v1589
    %v1659 = vunpack.c.l.b16 %v1590
    %v1660 = vunpack.c.h.b16 %v1590
    %v1661 = vunpack.c.l.b16 %v1591
    %v1662 = vunpack.c.h.b16 %v1591
    %v1663 = vunpack.c.l.b16 %v1592
    %v1664 = vunpack.c.h.b16 %v1592
    %v1665 = vunpack.c.l.b16 %v1593
    %v1666 = vunpack.c.h.b16 %v1593
    %v1667 = vunpack.c.l.b16 %v1594
    %v1668 = vunpack.c.h.b16 %v1594
    %v1669 = vunpack.c.l.b16 %v1595
    %v1670 = vunpack.c.h.b16 %v1595
    %v1671 = vunpack.c.l.b16 %v1596
    %v1672 = vunpack.c.h.b16 %v1596
    %v1673 = vunpack.c.l.b16 %v1597
    %v1674 = vunpack.c.h.b16 %v1597
    %v1675 = vunpack.c.l.b16 %v1598
    %v1676 = vunpack.c.h.b16 %v1598
    %v1677 = vunpack.c.l.b16 %v1599
    %v1678 = vunpack.c.h.b16 %v1599
    %v1679 = vunpack.c.l.b16 %v1600
    %v1680 = vunpack.c.h.b16 %v1600
    %v1681 = vunpack.c.l.b16 %v1601
    %v1682 = vunpack.c.h.b16 %v1601
    %v1683 = vunpack.c.l.b16 %v1602
    %v1684 = vunpack.c.h.b16 %v1602
    %v1685 = vunpack.c.l.b16 %v1603
    %v1686 = vunpack.c.h.b16 %v1603
    %v1687 = vunpack.c.l.b16 %v1604
    %v1688 = vunpack.c.h.b16 %v1604
    %v1689 = vunpack.c.l.b16 %v1605
    %v1690 = vunpack.c.h.b16 %v1605
    %v1691 = vunpack.c.l.b16 %v1606
    %v1692 = vunpack.c.h.b16 %v1606
    %v1693 = vunpack.c.l.b16 %v1607
    %v1694 = vunpack.c.h.b16 %v1607
    %v1695 = vunpack.c.l.b16 %v1608
    %v1696 = vunpack.c.h.b16 %v1608
    %v1697 = vunpack.c.l.b16 %v1609
    %v1698 = vunpack.c.h.b16 %v1609
    %v1699 = vunpack.c.l.b16 %v1610
    %v1700 = vunpack.c.h.b16 %v1610
    %v1701 = vunpack.c.l.b16 %v1611
    %v1702 = vunpack.c.h.b16 %v1611
    %v1703 = vunpack.c.l.b16 %v1612
    %v1704 = vunpack.c.h.b16 %v1612
    %v1705 = vunpack.c.l.b16 %v1613
    %v1706 = vunpack.c.h.b16 %v1613
    %v1707 = vunpack.c.l.b16 %v1614
    %v1708 = vunpack.c.h.b16 %v1614
    %v1709 = vunpack.c.l.b16 %v1615
    %v1710 = vunpack.c.h.b16 %v1615
    %v1711 = vunpack.c.l.b16 %v1616
    %v1712 = vunpack.c.h.b16 %v1616
    %v1713 = vpack.c.b16 %v1653, %v1649
    %v1714 = vpack.c.b16 %v1654, %v1650
    %v1715 = vpack.c.b16 %v1655, %v1651
    %v1716 = vpack.c.b16 %v1656, %v1652
    %v1717 = vpack.c.b16 %v1661, %v1657
    %v1718 = vpack.c.b16 %v1662, %v1658
    %v1719 = vpack.c.b16 %v1663, %v1659
    %v1720 = vpack.c.b16 %v1664, %v1660
    %v1721 = vpack.c.b16 %v1669, %v1665
    %v1722 = vpack.c.b16 %v1670, %v1666
    %v1723 = vpack.c.b16 %v1671, %v1667
    %v1724 = vpack.c.b16 %v1672, %v1668
    %v1725 = vpack.c.b16 %v1677, %v1673
    %v1726 = vpack.c.b16 %v1678, %v1674
    %v1727 = vpack.c.b16 %v1679, %v1675
    %v1728 = vpack.c.b16 %v1680, %v1676
    %v1729 = vpack.c.b16 %v1685, %v1681
    %v1730 = vpack.c.b16 %v1686, %v1682
    %v1731 = vpack.c.b16 %v1687, %v1683
    %v1732 = vpack.c.b16 %v1688, %v1684
    %v1733 = vpack.c.b16 %v1693, %v1689
    %v1734 = vpack.c.b16 %v1694, %v1690
    %v1735 = vpack.c.b16 %v1695, %v1691
    %v1736 = vpack.c.b16 %v1696, %v1692
    %v1737 = vpack.c.b16 %v1701, %v1697
    %v1738 = vpack.c.b16 %v1702, %v1698
    %v1739 = vpack.c.b16 %v1703, %v1699
    %v1740 = vpack.c.b16 %v1704, %v1700
    %v1741 = vpack.c.b16 %v1709, %v1705
    %v1742 = vpack.c.b16 %v1710, %v1706
    %v1743 = vpack.c.b16 %v1711, %v1707
    %v1744 = vpack.c.b16 %v1712, %v1708
    %1777 = vmatprep.subr.bf16.mxu0 %v1742
    %1778 = vmatpush1.bf16.msra.mxu0 %v1741
    %1779 = vmatprep.subr.bf16.mxu0 %v1738
    %1780 = vmatpush1.bf16.msra.mxu0 %v1737
    %1781 = vmatprep.subr.bf16.mxu0 %v1734
    %1782 = vmatpush1.bf16.msra.mxu0 %v1733
    %1783 = vmatprep.subr.bf16.mxu0 %v1730
    %1784 = vmatpush1.bf16.msra.mxu0 %v1729
    %1785 = vmatprep.subr.bf16.mxu0 %v1726
    %1786 = vmatpush1.bf16.msra.mxu0 %v1725
    %1787 = vmatprep.subr.bf16.mxu0 %v1722
    %1788 = vmatpush1.bf16.msra.mxu0 %v1721
    %1789 = vmatprep.subr.bf16.mxu0 %v1718
    %1790 = vmatpush1.bf16.msra.mxu0 %v1717
    %1791 = vmatprep.subr.bf16.mxu0 %v1714
    %1792 = vmatpush1.bf16.msra.mxu0 %v1713
    %1793 = vmatprep.subr.bf16.mxu0 0
    %1794 = vmatpush2.bf16.msra.mxu0 0
    %1795 = vmatprep.subr.bf16.mxu0 0
    %1796 = vmatpush2.bf16.msra.mxu0 0
    %1797 = vmatprep.subr.bf16.mxu0 0
    %1798 = vmatpush2.bf16.msra.mxu0 0
    %1799 = vmatprep.subr.bf16.mxu0 0
    %1800 = vmatpush2.bf16.msra.mxu0 0
    %1801 = vmatprep.subr.bf16.mxu0 0
    %1802 = vmatpush2.bf16.msra.mxu0 0
    %1803 = vmatprep.subr.bf16.mxu0 0
    %1804 = vmatpush2.bf16.msra.mxu0 0
    %1805 = vmatprep.subr.bf16.mxu0 0
    %1806 = vmatpush2.bf16.msra.mxu0 0
    %1807 = vmatprep.subr.bf16.mxu0 0
    %1808 = vmatpush2.bf16.msra.mxu0 0
    %1809 = vmatprep.mubr.bf16.mxu0 0
    %1810 = vmatmul.mubr.bf16.gmra.mxu0 %v1584
    %v1811 = vpop.f32.mrf.mxu0
    %v1812 = vadd.f32 0.0, %v1811
    %v1813 = vpop.f32.mrf.mxu0
    %v1814 = vadd.f32 0.0, %v1813
    %v1815 = vpop.f32.mrf.mxu0
    %v1816 = vpop.f32.mrf.mxu0
    %1817 = vdwg.mxu0
    %1818 = vmatprep.subr.bf16.mxu0 %v1744
    %1819 = vmatpush1.bf16.msra.mxu0 %v1743
    %1820 = vmatprep.subr.bf16.mxu0 %v1740
    %1821 = vmatpush1.bf16.msra.mxu0 %v1739
    %1822 = vmatprep.subr.bf16.mxu0 %v1736
    %1823 = vmatpush1.bf16.msra.mxu0 %v1735
    %1824 = vmatprep.subr.bf16.mxu0 %v1732
    %1825 = vmatpush1.bf16.msra.mxu0 %v1731
    %1826 = vmatprep.subr.bf16.mxu0 %v1728
    %1827 = vmatpush1.bf16.msra.mxu0 %v1727
    %1828 = vmatprep.subr.bf16.mxu0 %v1724
    %1829 = vmatpush1.bf16.msra.mxu0 %v1723
    %1830 = vmatprep.subr.bf16.mxu0 %v1720
    %1831 = vmatpush1.bf16.msra.mxu0 %v1719
    %1832 = vmatprep.subr.bf16.mxu0 %v1716
    %1833 = vmatpush1.bf16.msra.mxu0 %v1715
    %1834 = vmatprep.subr.bf16.mxu0 0
    %1835 = vmatpush2.bf16.msra.mxu0 0
    %1836 = vmatprep.subr.bf16.mxu0 0
    %1837 = vmatpush2.bf16.msra.mxu0 0
    %1838 = vmatprep.subr.bf16.mxu0 0
    %1839 = vmatpush2.bf16.msra.mxu0 0
    %1840 = vmatprep.subr.bf16.mxu0 0
    %1841 = vmatpush2.bf16.msra.mxu0 0
    %1842 = vmatprep.subr.bf16.mxu0 0
    %1843 = vmatpush2.bf16.msra.mxu0 0
    %1844 = vmatprep.subr.bf16.mxu0 0
    %1845 = vmatpush2.bf16.msra.mxu0 0
    %1846 = vmatprep.subr.bf16.mxu0 0
    %1847 = vmatpush2.bf16.msra.mxu0 0
    %1848 = vmatprep.subr.bf16.mxu0 0
    %1849 = vmatpush2.bf16.msra.mxu0 0
    %1850 = vmatprep.mubr.bf16.mxu0 0
    %1851 = vmatmul.mubr.bf16.gmra.mxu0 %v1584
    %v1852 = vpop.f32.mrf.mxu0
    %v1853 = vadd.f32 0.0, %v1852
    %v1854 = vpop.f32.mrf.mxu0
    %v1855 = vadd.f32 0.0, %v1854
    %v1856 = vpop.f32.mrf.mxu0
    %v1857 = vpop.f32.mrf.mxu0
    %1858 = vdwg.mxu0
    %v1859 = vadd.f32 %v1580, %v1812
    %v1860 = vadd.f32 %v1581, %v1814
    %v1861 = vadd.f32 %v1582, %v1853
    %v1862 = vadd.f32 %v1583, %v1855
    %v1863 = vmul.f32 %v1859, 0.5
    %v1864 = vtanh.pop %v1863
    %v1865 = vmul.f32 %v1864, 0.5
    %v1866 = vadd.f32 %v1865, 0.5
    %v1867 = vmul.f32 %v1860, 0.5
    %v1868 = vtanh.pop %v1867
    %v1869 = vmul.f32 %v1868, 0.5
    %v1870 = vadd.f32 %v1869, 0.5
    %v1871 = vtanh.pop %v1861
    %v1872 = vmul.f32 %v1862, 0.5
    %v1873 = vtanh.pop %v1872
    %v1874 = vmul.f32 %v1873, 0.5
    %v1875 = vadd.f32 %v1874, 0.5
    %v1876 = vmul.f32 %v1870, %v1576
    %v1877 = vmul.f32 %v1866, %v1871
    %v1878 = vadd.f32 %v1876, %v1877
    %v1879 = vtanh.pop %v1878
    %v1880 = vmul.f32 %v1875, %v1879
    %1881 = vst [vmem:[#allocation2 + $0x8] sm:$0xff] %v1880
    %v1882 = vld [vmem:[#allocation3 + $0x40] sm:$0xff]
    %v1883 = vld [vmem:[#allocation3 + $0x48] sm:$0xff]
    %v1884 = vld [vmem:[#allocation3 + $0x50] sm:$0xff]
    %v1885 = vld [vmem:[#allocation3 + $0x58] sm:$0xff]
    %v1886 = vpack.c.bf16 %v1880, %v1880
    %v1887 = vld [vmem:[#allocation5] sm:$0xff]
    %v1888 = vld [vmem:[#allocation5 + $0x8] sm:$0xff]
    %v1889 = vld [vmem:[#allocation5 + $0x10] sm:$0xff]
    %v1890 = vld [vmem:[#allocation5 + $0x18] sm:$0xff]
    %v1891 = vld [vmem:[#allocation5 + $0x20] sm:$0xff]
    %v1892 = vld [vmem:[#allocation5 + $0x28] sm:$0xff]
    %v1893 = vld [vmem:[#allocation5 + $0x30] sm:$0xff]
    %v1894 = vld [vmem:[#allocation5 + $0x38] sm:$0xff]
    %v1895 = vld [vmem:[#allocation5 + $0x40] sm:$0xff]
    %v1896 = vld [vmem:[#allocation5 + $0x48] sm:$0xff]
    %v1897 = vld [vmem:[#allocation5 + $0x50] sm:$0xff]
    %v1898 = vld [vmem:[#allocation5 + $0x58] sm:$0xff]
    %v1899 = vld [vmem:[#allocation5 + $0x60] sm:$0xff]
    %v1900 = vld [vmem:[#allocation5 + $0x68] sm:$0xff]
    %v1901 = vld [vmem:[#allocation5 + $0x70] sm:$0xff]
    %v1902 = vld [vmem:[#allocation5 + $0x78] sm:$0xff]
    %v1903 = vld [vmem:[#allocation5 + $0x80] sm:$0xff]
    %v1904 = vld [vmem:[#allocation5 + $0x88] sm:$0xff]
    %v1905 = vld [vmem:[#allocation5 + $0x90] sm:$0xff]
    %v1906 = vld [vmem:[#allocation5 + $0x98] sm:$0xff]
    %v1907 = vld [vmem:[#allocation5 + $0xa0] sm:$0xff]
    %v1908 = vld [vmem:[#allocation5 + $0xa8] sm:$0xff]
    %v1909 = vld [vmem:[#allocation5 + $0xb0] sm:$0xff]
    %v1910 = vld [vmem:[#allocation5 + $0xb8] sm:$0xff]
    %v1911 = vld [vmem:[#allocation5 + $0xc0] sm:$0xff]
    %v1912 = vld [vmem:[#allocation5 + $0xc8] sm:$0xff]
    %v1913 = vld [vmem:[#allocation5 + $0xd0] sm:$0xff]
    %v1914 = vld [vmem:[#allocation5 + $0xd8] sm:$0xff]
    %v1915 = vld [vmem:[#allocation5 + $0xe0] sm:$0xff]
    %v1916 = vld [vmem:[#allocation5 + $0xe8] sm:$0xff]
    %v1917 = vld [vmem:[#allocation5 + $0xf0] sm:$0xff]
    %v1918 = vld [vmem:[#allocation5 + $0xf8] sm:$0xff]
    %v1951 = vunpack.c.l.b16 %v1887
    %v1952 = vunpack.c.h.b16 %v1887
    %v1953 = vunpack.c.l.b16 %v1888
    %v1954 = vunpack.c.h.b16 %v1888
    %v1955 = vunpack.c.l.b16 %v1889
    %v1956 = vunpack.c.h.b16 %v1889
    %v1957 = vunpack.c.l.b16 %v1890
    %v1958 = vunpack.c.h.b16 %v1890
    %v1959 = vunpack.c.l.b16 %v1891
    %v1960 = vunpack.c.h.b16 %v1891
    %v1961 = vunpack.c.l.b16 %v1892
    %v1962 = vunpack.c.h.b16 %v1892
    %v1963 = vunpack.c.l.b16 %v1893
    %v1964 = vunpack.c.h.b16 %v1893
    %v1965 = vunpack.c.l.b16 %v1894
    %v1966 = vunpack.c.h.b16 %v1894
    %v1967 = vunpack.c.l.b16 %v1895
    %v1968 = vunpack.c.h.b16 %v1895
    %v1969 = vunpack.c.l.b16 %v1896
    %v1970 = vunpack.c.h.b16 %v1896
    %v1971 = vunpack.c.l.b16 %v1897
    %v1972 = vunpack.c.h.b16 %v1897
    %v1973 = vunpack.c.l.b16 %v1898
    %v1974 = vunpack.c.h.b16 %v1898
    %v1975 = vunpack.c.l.b16 %v1899
    %v1976 = vunpack.c.h.b16 %v1899
    %v1977 = vunpack.c.l.b16 %v1900
    %v1978 = vunpack.c.h.b16 %v1900
    %v1979 = vunpack.c.l.b16 %v1901
    %v1980 = vunpack.c.h.b16 %v1901
    %v1981 = vunpack.c.l.b16 %v1902
    %v1982 = vunpack.c.h.b16 %v1902
    %v1983 = vunpack.c.l.b16 %v1903
    %v1984 = vunpack.c.h.b16 %v1903
    %v1985 = vunpack.c.l.b16 %v1904
    %v1986 = vunpack.c.h.b16 %v1904
    %v1987 = vunpack.c.l.b16 %v1905
    %v1988 = vunpack.c.h.b16 %v1905
    %v1989 = vunpack.c.l.b16 %v1906
    %v1990 = vunpack.c.h.b16 %v1906
    %v1991 = vunpack.c.l.b16 %v1907
    %v1992 = vunpack.c.h.b16 %v1907
    %v1993 = vunpack.c.l.b16 %v1908
    %v1994 = vunpack.c.h.b16 %v1908
    %v1995 = vunpack.c.l.b16 %v1909
    %v1996 = vunpack.c.h.b16 %v1909
    %v1997 = vunpack.c.l.b16 %v1910
    %v1998 = vunpack.c.h.b16 %v1910
    %v1999 = vunpack.c.l.b16 %v1911
    %v2000 = vunpack.c.h.b16 %v1911
    %v2001 = vunpack.c.l.b16 %v1912
    %v2002 = vunpack.c.h.b16 %v1912
    %v2003 = vunpack.c.l.b16 %v1913
    %v2004 = vunpack.c.h.b16 %v1913
    %v2005 = vunpack.c.l.b16 %v1914
    %v2006 = vunpack.c.h.b16 %v1914
    %v2007 = vunpack.c.l.b16 %v1915
    %v2008 = vunpack.c.h.b16 %v1915
    %v2009 = vunpack.c.l.b16 %v1916
    %v2010 = vunpack.c.h.b16 %v1916
    %v2011 = vunpack.c.l.b16 %v1917
    %v2012 = vunpack.c.h.b16 %v1917
    %v2013 = vunpack.c.l.b16 %v1918
    %v2014 = vunpack.c.h.b16 %v1918
    %v2015 = vpack.c.b16 %v1955, %v1951
    %v2016 = vpack.c.b16 %v1956, %v1952
    %v2017 = vpack.c.b16 %v1957, %v1953
    %v2018 = vpack.c.b16 %v1958, %v1954
    %v2019 = vpack.c.b16 %v1963, %v1959
    %v2020 = vpack.c.b16 %v1964, %v1960
    %v2021 = vpack.c.b16 %v1965, %v1961
    %v2022 = vpack.c.b16 %v1966, %v1962
    %v2023 = vpack.c.b16 %v1971, %v1967
    %v2024 = vpack.c.b16 %v1972, %v1968
    %v2025 = vpack.c.b16 %v1973, %v1969
    %v2026 = vpack.c.b16 %v1974, %v1970
    %v2027 = vpack.c.b16 %v1979, %v1975
    %v2028 = vpack.c.b16 %v1980, %v1976
    %v2029 = vpack.c.b16 %v1981, %v1977
    %v2030 = vpack.c.b16 %v1982, %v1978
    %v2031 = vpack.c.b16 %v1987, %v1983
    %v2032 = vpack.c.b16 %v1988, %v1984
    %v2033 = vpack.c.b16 %v1989, %v1985
    %v2034 = vpack.c.b16 %v1990, %v1986
    %v2035 = vpack.c.b16 %v1995, %v1991
    %v2036 = vpack.c.b16 %v1996, %v1992
    %v2037 = vpack.c.b16 %v1997, %v1993
    %v2038 = vpack.c.b16 %v1998, %v1994
    %v2039 = vpack.c.b16 %v2003, %v1999
    %v2040 = vpack.c.b16 %v2004, %v2000
    %v2041 = vpack.c.b16 %v2005, %v2001
    %v2042 = vpack.c.b16 %v2006, %v2002
    %v2043 = vpack.c.b16 %v2011, %v2007
    %v2044 = vpack.c.b16 %v2012, %v2008
    %v2045 = vpack.c.b16 %v2013, %v2009
    %v2046 = vpack.c.b16 %v2014, %v2010
    %2079 = vmatprep.subr.bf16.mxu0 %v2044
    %2080 = vmatpush1.bf16.msra.mxu0 %v2043
    %2081 = vmatprep.subr.bf16.mxu0 %v2040
    %2082 = vmatpush1.bf16.msra.mxu0 %v2039
    %2083 = vmatprep.subr.bf16.mxu0 %v2036
    %2084 = vmatpush1.bf16.msra.mxu0 %v2035
    %2085 = vmatprep.subr.bf16.mxu0 %v2032
    %2086 = vmatpush1.bf16.msra.mxu0 %v2031
    %2087 = vmatprep.subr.bf16.mxu0 %v2028
    %2088 = vmatpush1.bf16.msra.mxu0 %v2027
    %2089 = vmatprep.subr.bf16.mxu0 %v2024
    %2090 = vmatpush1.bf16.msra.mxu0 %v2023
    %2091 = vmatprep.subr.bf16.mxu0 %v2020
    %2092 = vmatpush1.bf16.msra.mxu0 %v2019
    %2093 = vmatprep.subr.bf16.mxu0 %v2016
    %2094 = vmatpush1.bf16.msra.mxu0 %v2015
    %2095 = vmatprep.subr.bf16.mxu0 0
    %2096 = vmatpush2.bf16.msra.mxu0 0
    %2097 = vmatprep.subr.bf16.mxu0 0
    %2098 = vmatpush2.bf16.msra.mxu0 0
    %2099 = vmatprep.subr.bf16.mxu0 0
    %2100 = vmatpush2.bf16.msra.mxu0 0
    %2101 = vmatprep.subr.bf16.mxu0 0
    %2102 = vmatpush2.bf16.msra.mxu0 0
    %2103 = vmatprep.subr.bf16.mxu0 0
    %2104 = vmatpush2.bf16.msra.mxu0 0
    %2105 = vmatprep.subr.bf16.mxu0 0
    %2106 = vmatpush2.bf16.msra.mxu0 0
    %2107 = vmatprep.subr.bf16.mxu0 0
    %2108 = vmatpush2.bf16.msra.mxu0 0
    %2109 = vmatprep.subr.bf16.mxu0 0
    %2110 = vmatpush2.bf16.msra.mxu0 0
    %2111 = vmatprep.mubr.bf16.mxu0 0
    %2112 = vmatmul.mubr.bf16.gmra.mxu0 %v1886
    %v2113 = vpop.f32.mrf.mxu0
    %v2114 = vadd.f32 0.0, %v2113
    %v2115 = vpop.f32.mrf.mxu0
    %v2116 = vadd.f32 0.0, %v2115
    %v2117 = vpop.f32.mrf.mxu0
    %v2118 = vpop.f32.mrf.mxu0
    %2119 = vdwg.mxu0
    %2120 = vmatprep.subr.bf16.mxu0 %v2046
    %2121 = vmatpush1.bf16.msra.mxu0 %v2045
    %2122 = vmatprep.subr.bf16.mxu0 %v2042
    %2123 = vmatpush1.bf16.msra.mxu0 %v2041
    %2124 = vmatprep.subr.bf16.mxu0 %v2038
    %2125 = vmatpush1.bf16.msra.mxu0 %v2037
    %2126 = vmatprep.subr.bf16.mxu0 %v2034
    %2127 = vmatpush1.bf16.msra.mxu0 %v2033
    %2128 = vmatprep.subr.bf16.mxu0 %v2030
    %2129 = vmatpush1.bf16.msra.mxu0 %v2029
    %2130 = vmatprep.subr.bf16.mxu0 %v2026
    %2131 = vmatpush1.bf16.msra.mxu0 %v2025
    %2132 = vmatprep.subr.bf16.mxu0 %v2022
    %2133 = vmatpush1.bf16.msra.mxu0 %v2021
    %2134 = vmatprep.subr.bf16.mxu0 %v2018
    %2135 = vmatpush1.bf16.msra.mxu0 %v2017
    %2136 = vmatprep.subr.bf16.mxu0 0
    %2137 = vmatpush2.bf16.msra.mxu0 0
    %2138 = vmatprep.subr.bf16.mxu0 0
    %2139 = vmatpush2.bf16.msra.mxu0 0
    %2140 = vmatprep.subr.bf16.mxu0 0
    %2141 = vmatpush2.bf16.msra.mxu0 0
    %2142 = vmatprep.subr.bf16.mxu0 0
    %2143 = vmatpush2.bf16.msra.mxu0 0
    %2144 = vmatprep.subr.bf16.mxu0 0
    %2145 = vmatpush2.bf16.msra.mxu0 0
    %2146 = vmatprep.subr.bf16.mxu0 0
    %2147 = vmatpush2.bf16.msra.mxu0 0
    %2148 = vmatprep.subr.bf16.mxu0 0
    %2149 = vmatpush2.bf16.msra.mxu0 0
    %2150 = vmatprep.subr.bf16.mxu0 0
    %2151 = vmatpush2.bf16.msra.mxu0 0
    %2152 = vmatprep.mubr.bf16.mxu0 0
    %2153 = vmatmul.mubr.bf16.gmra.mxu0 %v1886
    %v2154 = vpop.f32.mrf.mxu0
    %v2155 = vadd.f32 0.0, %v2154
    %v2156 = vpop.f32.mrf.mxu0
    %v2157 = vadd.f32 0.0, %v2156
    %v2158 = vpop.f32.mrf.mxu0
    %v2159 = vpop.f32.mrf.mxu0
    %2160 = vdwg.mxu0
    %v2161 = vadd.f32 %v1882, %v2114
    %v2162 = vadd.f32 %v1883, %v2116
    %v2163 = vadd.f32 %v1884, %v2155
    %v2164 = vadd.f32 %v1885, %v2157
    %v2165 = vmul.f32 %v2161, 0.5
    %v2166 = vtanh.pop %v2165
    %v2167 = vmul.f32 %v2166, 0.5
    %v2168 = vadd.f32 %v2167, 0.5
    %v2169 = vmul.f32 %v2162, 0.5
    %v2170 = vtanh.pop %v2169
    %v2171 = vmul.f32 %v2170, 0.5
    %v2172 = vadd.f32 %v2171, 0.5
    %v2173 = vtanh.pop %v2163
    %v2174 = vmul.f32 %v2164, 0.5
    %v2175 = vtanh.pop %v2174
    %v2176 = vmul.f32 %v2175, 0.5
    %v2177 = vadd.f32 %v2176, 0.5
    %v2178 = vmul.f32 %v2172, %v1878
    %v2179 = vmul.f32 %v2168, %v2173
    %v2180 = vadd.f32 %v2178, %v2179
    %v2181 = vtanh.pop %v2180
    %v2182 = vmul.f32 %v2177, %v2181
    %2183 = vst [vmem:[#allocation2 + $0x10] sm:$0xff] %v2182
    %v2184 = vld [vmem:[#allocation3 + $0x60] sm:$0xff]
    %v2185 = vld [vmem:[#allocation3 + $0x68] sm:$0xff]
    %v2186 = vld [vmem:[#allocation3 + $0x70] sm:$0xff]
    %v2187 = vld [vmem:[#allocation3 + $0x78] sm:$0xff]
    %v2188 = vpack.c.bf16 %v2182, %v2182
    %v2189 = vld [vmem:[#allocation5] sm:$0xff]
    %v2190 = vld [vmem:[#allocation5 + $0x8] sm:$0xff]
    %v2191 = vld [vmem:[#allocation5 + $0x10] sm:$0xff]
    %v2192 = vld [vmem:[#allocation5 + $0x18] sm:$0xff]
    %v2193 = vld [vmem:[#allocation5 + $0x20] sm:$0xff]
    %v2194 = vld [vmem:[#allocation5 + $0x28] sm:$0xff]
    %v2195 = vld [vmem:[#allocation5 + $0x30] sm:$0xff]
    %v2196 = vld [vmem:[#allocation5 + $0x38] sm:$0xff]
    %v2197 = vld [vmem:[#allocation5 + $0x40] sm:$0xff]
    %v2198 = vld [vmem:[#allocation5 + $0x48] sm:$0xff]
    %v2199 = vld [vmem:[#allocation5 + $0x50] sm:$0xff]
    %v2200 = vld [vmem:[#allocation5 + $0x58] sm:$0xff]
    %v2201 = vld [vmem:[#allocation5 + $0x60] sm:$0xff]
    %v2202 = vld [vmem:[#allocation5 + $0x68] sm:$0xff]
    %v2203 = vld [vmem:[#allocation5 + $0x70] sm:$0xff]
    %v2204 = vld [vmem:[#allocation5 + $0x78] sm:$0xff]
    %v2205 = vld [vmem:[#allocation5 + $0x80] sm:$0xff]
    %v2206 = vld [vmem:[#allocation5 + $0x88] sm:$0xff]
    %v2207 = vld [vmem:[#allocation5 + $0x90] sm:$0xff]
    %v2208 = vld [vmem:[#allocation5 + $0x98] sm:$0xff]
    %v2209 = vld [vmem:[#allocation5 + $0xa0] sm:$0xff]
    %v2210 = vld [vmem:[#allocation5 + $0xa8] sm:$0xff]
    %v2211 = vld [vmem:[#allocation5 + $0xb0] sm:$0xff]
    %v2212 = vld [vmem:[#allocation5 + $0xb8] sm:$0xff]
    %v2213 = vld [vmem:[#allocation5 + $0xc0] sm:$0xff]
    %v2214 = vld [vmem:[#allocation5 + $0xc8] sm:$0xff]
    %v2215 = vld [vmem:[#allocation5 + $0xd0] sm:$0xff]
    %v2216 = vld [vmem:[#allocation5 + $0xd8] sm:$0xff]
    %v2217 = vld [vmem:[#allocation5 + $0xe0] sm:$0xff]
    %v2218 = vld [vmem:[#allocation5 + $0xe8] sm:$0xff]
    %v2219 = vld [vmem:[#allocation5 + $0xf0] sm:$0xff]
    %v2220 = vld [vmem:[#allocation5 + $0xf8] sm:$0xff]
    %v2253 = vunpack.c.l.b16 %v2189
    %v2254 = vunpack.c.h.b16 %v2189
    %v2255 = vunpack.c.l.b16 %v2190
    %v2256 = vunpack.c.h.b16 %v2190
    %v2257 = vunpack.c.l.b16 %v2191
    %v2258 = vunpack.c.h.b16 %v2191
    %v2259 = vunpack.c.l.b16 %v2192
    %v2260 = vunpack.c.h.b16 %v2192
    %v2261 = vunpack.c.l.b16 %v2193
    %v2262 = vunpack.c.h.b16 %v2193
    %v2263 = vunpack.c.l.b16 %v2194
    %v2264 = vunpack.c.h.b16 %v2194
    %v2265 = vunpack.c.l.b16 %v2195
    %v2266 = vunpack.c.h.b16 %v2195
    %v2267 = vunpack.c.l.b16 %v2196
    %v2268 = vunpack.c.h.b16 %v2196
    %v2269 = vunpack.c.l.b16 %v2197
    %v2270 = vunpack.c.h.b16 %v2197
    %v2271 = vunpack.c.l.b16 %v2198
    %v2272 = vunpack.c.h.b16 %v2198
    %v2273 = vunpack.c.l.b16 %v2199
    %v2274 = vunpack.c.h.b16 %v2199
    %v2275 = vunpack.c.l.b16 %v2200
    %v2276 = vunpack.c.h.b16 %v2200
    %v2277 = vunpack.c.l.b16 %v2201
    %v2278 = vunpack.c.h.b16 %v2201
    %v2279 = vunpack.c.l.b16 %v2202
    %v2280 = vunpack.c.h.b16 %v2202
    %v2281 = vunpack.c.l.b16 %v2203
    %v2282 = vunpack.c.h.b16 %v2203
    %v2283 = vunpack.c.l.b16 %v2204
    %v2284 = vunpack.c.h.b16 %v2204
    %v2285 = vunpack.c.l.b16 %v2205
    %v2286 = vunpack.c.h.b16 %v2205
    %v2287 = vunpack.c.l.b16 %v2206
    %v2288 = vunpack.c.h.b16 %v2206
    %v2289 = vunpack.c.l.b16 %v2207
    %v2290 = vunpack.c.h.b16 %v2207
    %v2291 = vunpack.c.l.b16 %v2208
    %v2292 = vunpack.c.h.b16 %v2208
    %v2293 = vunpack.c.l.b16 %v2209
    %v2294 = vunpack.c.h.b16 %v2209
    %v2295 = vunpack.c.l.b16 %v2210
    %v2296 = vunpack.c.h.b16 %v2210
    %v2297 = vunpack.c.l.b16 %v2211
    %v2298 = vunpack.c.h.b16 %v2211
    %v2299 = vunpack.c.l.b16 %v2212
    %v2300 = vunpack.c.h.b16 %v2212
    %v2301 = vunpack.c.l.b16 %v2213
    %v2302 = vunpack.c.h.b16 %v2213
    %v2303 = vunpack.c.l.b16 %v2214
    %v2304 = vunpack.c.h.b16 %v2214
    %v2305 = vunpack.c.l.b16 %v2215
    %v2306 = vunpack.c.h.b16 %v2215
    %v2307 = vunpack.c.l.b16 %v2216
    %v2308 = vunpack.c.h.b16 %v2216
    %v2309 = vunpack.c.l.b16 %v2217
    %v2310 = vunpack.c.h.b16 %v2217
    %v2311 = vunpack.c.l.b16 %v2218
    %v2312 = vunpack.c.h.b16 %v2218
    %v2313 = vunpack.c.l.b16 %v2219
    %v2314 = vunpack.c.h.b16 %v2219
    %v2315 = vunpack.c.l.b16 %v2220
    %v2316 = vunpack.c.h.b16 %v2220
    %v2317 = vpack.c.b16 %v2257, %v2253
    %v2318 = vpack.c.b16 %v2258, %v2254
    %v2319 = vpack.c.b16 %v2259, %v2255
    %v2320 = vpack.c.b16 %v2260, %v2256
    %v2321 = vpack.c.b16 %v2265, %v2261
    %v2322 = vpack.c.b16 %v2266, %v2262
    %v2323 = vpack.c.b16 %v2267, %v2263
    %v2324 = vpack.c.b16 %v2268, %v2264
    %v2325 = vpack.c.b16 %v2273, %v2269
    %v2326 = vpack.c.b16 %v2274, %v2270
    %v2327 = vpack.c.b16 %v2275, %v2271
    %v2328 = vpack.c.b16 %v2276, %v2272
    %v2329 = vpack.c.b16 %v2281, %v2277
    %v2330 = vpack.c.b16 %v2282, %v2278
    %v2331 = vpack.c.b16 %v2283, %v2279
    %v2332 = vpack.c.b16 %v2284, %v2280
    %v2333 = vpack.c.b16 %v2289, %v2285
    %v2334 = vpack.c.b16 %v2290, %v2286
    %v2335 = vpack.c.b16 %v2291, %v2287
    %v2336 = vpack.c.b16 %v2292, %v2288
    %v2337 = vpack.c.b16 %v2297, %v2293
    %v2338 = vpack.c.b16 %v2298, %v2294
    %v2339 = vpack.c.b16 %v2299, %v2295
    %v2340 = vpack.c.b16 %v2300, %v2296
    %v2341 = vpack.c.b16 %v2305, %v2301
    %v2342 = vpack.c.b16 %v2306, %v2302
    %v2343 = vpack.c.b16 %v2307, %v2303
    %v2344 = vpack.c.b16 %v2308, %v2304
    %v2345 = vpack.c.b16 %v2313, %v2309
    %v2346 = vpack.c.b16 %v2314, %v2310
    %v2347 = vpack.c.b16 %v2315, %v2311
    %v2348 = vpack.c.b16 %v2316, %v2312
    %2381 = vmatprep.subr.bf16.mxu0 %v2346
    %2382 = vmatpush1.bf16.msra.mxu0 %v2345
    %2383 = vmatprep.subr.bf16.mxu0 %v2342
    %2384 = vmatpush1.bf16.msra.mxu0 %v2341
    %2385 = vmatprep.subr.bf16.mxu0 %v2338
    %2386 = vmatpush1.bf16.msra.mxu0 %v2337
    %2387 = vmatprep.subr.bf16.mxu0 %v2334
    %2388 = vmatpush1.bf16.msra.mxu0 %v2333
    %2389 = vmatprep.subr.bf16.mxu0 %v2330
    %2390 = vmatpush1.bf16.msra.mxu0 %v2329
    %2391 = vmatprep.subr.bf16.mxu0 %v2326
    %2392 = vmatpush1.bf16.msra.mxu0 %v2325
    %2393 = vmatprep.subr.bf16.mxu0 %v2322
    %2394 = vmatpush1.bf16.msra.mxu0 %v2321
    %2395 = vmatprep.subr.bf16.mxu0 %v2318
    %2396 = vmatpush1.bf16.msra.mxu0 %v2317
    %2397 = vmatprep.subr.bf16.mxu0 0
    %2398 = vmatpush2.bf16.msra.mxu0 0
    %2399 = vmatprep.subr.bf16.mxu0 0
    %2400 = vmatpush2.bf16.msra.mxu0 0
    %2401 = vmatprep.subr.bf16.mxu0 0
    %2402 = vmatpush2.bf16.msra.mxu0 0
    %2403 = vmatprep.subr.bf16.mxu0 0
    %2404 = vmatpush2.bf16.msra.mxu0 0
    %2405 = vmatprep.subr.bf16.mxu0 0
    %2406 = vmatpush2.bf16.msra.mxu0 0
    %2407 = vmatprep.subr.bf16.mxu0 0
    %2408 = vmatpush2.bf16.msra.mxu0 0
    %2409 = vmatprep.subr.bf16.mxu0 0
    %2410 = vmatpush2.bf16.msra.mxu0 0
    %2411 = vmatprep.subr.bf16.mxu0 0
    %2412 = vmatpush2.bf16.msra.mxu0 0
    %2413 = vmatprep.mubr.bf16.mxu0 0
    %2414 = vmatmul.mubr.bf16.gmra.mxu0 %v2188
    %v2415 = vpop.f32.mrf.mxu0
    %v2416 = vadd.f32 0.0, %v2415
    %v2417 = vpop.f32.mrf.mxu0
    %v2418 = vadd.f32 0.0, %v2417
    %v2419 = vpop.f32.mrf.mxu0
    %v2420 = vpop.f32.mrf.mxu0
    %2421 = vdwg.mxu0
    %2422 = vmatprep.subr.bf16.mxu0 %v2348
    %2423 = vmatpush1.bf16.msra.mxu0 %v2347
    %2424 = vmatprep.subr.bf16.mxu0 %v2344
    %2425 = vmatpush1.bf16.msra.mxu0 %v2343
    %2426 = vmatprep.subr.bf16.mxu0 %v2340
    %2427 = vmatpush1.bf16.msra.mxu0 %v2339
    %2428 = vmatprep.subr.bf16.mxu0 %v2336
    %2429 = vmatpush1.bf16.msra.mxu0 %v2335
    %2430 = vmatprep.subr.bf16.mxu0 %v2332
    %2431 = vmatpush1.bf16.msra.mxu0 %v2331
    %2432 = vmatprep.subr.bf16.mxu0 %v2328
    %2433 = vmatpush1.bf16.msra.mxu0 %v2327
    %2434 = vmatprep.subr.bf16.mxu0 %v2324
    %2435 = vmatpush1.bf16.msra.mxu0 %v2323
    %2436 = vmatprep.subr.bf16.mxu0 %v2320
    %2437 = vmatpush1.bf16.msra.mxu0 %v2319
    %2438 = vmatprep.subr.bf16.mxu0 0
    %2439 = vmatpush2.bf16.msra.mxu0 0
    %2440 = vmatprep.subr.bf16.mxu0 0
    %2441 = vmatpush2.bf16.msra.mxu0 0
    %2442 = vmatprep.subr.bf16.mxu0 0
    %2443 = vmatpush2.bf16.msra.mxu0 0
    %2444 = vmatprep.subr.bf16.mxu0 0
    %2445 = vmatpush2.bf16.msra.mxu0 0
    %2446 = vmatprep.subr.bf16.mxu0 0
    %2447 = vmatpush2.bf16.msra.mxu0 0
    %2448 = vmatprep.subr.bf16.mxu0 0
    %2449 = vmatpush2.bf16.msra.mxu0 0
    %2450 = vmatprep.subr.bf16.mxu0 0
    %2451 = vmatpush2.bf16.msra.mxu0 0
    %2452 = vmatprep.subr.bf16.mxu0 0
    %2453 = vmatpush2.bf16.msra.mxu0 0
    %2454 = vmatprep.mubr.bf16.mxu0 0
    %2455 = vmatmul.mubr.bf16.gmra.mxu0 %v2188
    %v2456 = vpop.f32.mrf.mxu0
    %v2457 = vadd.f32 0.0, %v2456
    %v2458 = vpop.f32.mrf.mxu0
    %v2459 = vadd.f32 0.0, %v2458
    %v2460 = vpop.f32.mrf.mxu0
    %v2461 = vpop.f32.mrf.mxu0
    %2462 = vdwg.mxu0
    %v2463 = vadd.f32 %v2184, %v2416
    %v2464 = vadd.f32 %v2185, %v2418
    %v2465 = vadd.f32 %v2186, %v2457
    %v2466 = vadd.f32 %v2187, %v2459
    %v2467 = vmul.f32 %v2463, 0.5
    %v2468 = vtanh.pop %v2467
    %v2469 = vmul.f32 %v2468, 0.5
    %v2470 = vadd.f32 %v2469, 0.5
    %v2471 = vmul.f32 %v2464, 0.5
    %v2472 = vtanh.pop %v2471
    %v2473 = vmul.f32 %v2472, 0.5
    %v2474 = vadd.f32 %v2473, 0.5
    %v2475 = vtanh.pop %v2465
    %v2476 = vmul.f32 %v2466, 0.5
    %v2477 = vtanh.pop %v2476
    %v2478 = vmul.f32 %v2477, 0.5
    %v2479 = vadd.f32 %v2478, 0.5
    %v2480 = vmul.f32 %v2474, %v2180
    %v2481 = vmul.f32 %v2470, %v2475
    %v2482 = vadd.f32 %v2480, %v2481
    %v2483 = vtanh.pop %v2482
    %v2484 = vmul.f32 %v2479, %v2483
    %2485 = vst [vmem:[#allocation2 + $0x18] sm:$0xff] %v2484
    %v2486 = vld [vmem:[#allocation3 + $0x80] sm:$0xff]
    %v2487 = vld [vmem:[#allocation3 + $0x88] sm:$0xff]
    %v2488 = vld [vmem:[#allocation3 + $0x90] sm:$0xff]
    %v2489 = vld [vmem:[#allocation3 + $0x98] sm:$0xff]
    %v2490 = vpack.c.bf16 %v2484, %v2484
    %v2491 = vld [vmem:[#allocation5] sm:$0xff]
    %v2492 = vld [vmem:[#allocation5 + $0x8] sm:$0xff]
    %v2493 = vld [vmem:[#allocation5 + $0x10] sm:$0xff]
    %v2494 = vld [vmem:[#allocation5 + $0x18] sm:$0xff]
    %v2495 = vld [vmem:[#allocation5 + $0x20] sm:$0xff]
    %v2496 = vld [vmem:[#allocation5 + $0x28] sm:$0xff]
    %v2497 = vld [vmem:[#allocation5 + $0x30] sm:$0xff]
    %v2498 = vld [vmem:[#allocation5 + $0x38] sm:$0xff]
    %v2499 = vld [vmem:[#allocation5 + $0x40] sm:$0xff]
    %v2500 = vld [vmem:[#allocation5 + $0x48] sm:$0xff]
    %v2501 = vld [vmem:[#allocation5 + $0x50] sm:$0xff]
    %v2502 = vld [vmem:[#allocation5 + $0x58] sm:$0xff]
    %v2503 = vld [vmem:[#allocation5 + $0x60] sm:$0xff]
    %v2504 = vld [vmem:[#allocation5 + $0x68] sm:$0xff]
    %v2505 = vld [vmem:[#allocation5 + $0x70] sm:$0xff]
    %v2506 = vld [vmem:[#allocation5 + $0x78] sm:$0xff]
    %v2507 = vld [vmem:[#allocation5 + $0x80] sm:$0xff]
    %v2508 = vld [vmem:[#allocation5 + $0x88] sm:$0xff]
    %v2509 = vld [vmem:[#allocation5 + $0x90] sm:$0xff]
    %v2510 = vld [vmem:[#allocation5 + $0x98] sm:$0xff]
    %v2511 = vld [vmem:[#allocation5 + $0xa0] sm:$0xff]
    %v2512 = vld [vmem:[#allocation5 + $0xa8] sm:$0xff]
    %v2513 = vld [vmem:[#allocation5 + $0xb0] sm:$0xff]
    %v2514 = vld [vmem:[#allocation5 + $0xb8] sm:$0xff]
    %v2515 = vld [vmem:[#allocation5 + $0xc0] sm:$0xff]
    %v2516 = vld [vmem:[#allocation5 + $0xc8] sm:$0xff]
    %v2517 = vld [vmem:[#allocation5 + $0xd0] sm:$0xff]
    %v2518 = vld [vmem:[#allocation5 + $0xd8] sm:$0xff]
    %v2519 = vld [vmem:[#allocation5 + $0xe0] sm:$0xff]
    %v2520 = vld [vmem:[#allocation5 + $0xe8] sm:$0xff]
    %v2521 = vld [vmem:[#allocation5 + $0xf0] sm:$0xff]
    %v2522 = vld [vmem:[#allocation5 + $0xf8] sm:$0xff]
    %v2555 = vunpack.c.l.b16 %v2491
    %v2556 = vunpack.c.h.b16 %v2491
    %v2557 = vunpack.c.l.b16 %v2492
    %v2558 = vunpack.c.h.b16 %v2492
    %v2559 = vunpack.c.l.b16 %v2493
    %v2560 = vunpack.c.h.b16 %v2493
    %v2561 = vunpack.c.l.b16 %v2494
    %v2562 = vunpack.c.h.b16 %v2494
    %v2563 = vunpack.c.l.b16 %v2495
    %v2564 = vunpack.c.h.b16 %v2495
    %v2565 = vunpack.c.l.b16 %v2496
    %v2566 = vunpack.c.h.b16 %v2496
    %v2567 = vunpack.c.l.b16 %v2497
    %v2568 = vunpack.c.h.b16 %v2497
    %v2569 = vunpack.c.l.b16 %v2498
    %v2570 = vunpack.c.h.b16 %v2498
    %v2571 = vunpack.c.l.b16 %v2499
    %v2572 = vunpack.c.h.b16 %v2499
    %v2573 = vunpack.c.l.b16 %v2500
    %v2574 = vunpack.c.h.b16 %v2500
    %v2575 = vunpack.c.l.b16 %v2501
    %v2576 = vunpack.c.h.b16 %v2501
    %v2577 = vunpack.c.l.b16 %v2502
    %v2578 = vunpack.c.h.b16 %v2502
    %v2579 = vunpack.c.l.b16 %v2503
    %v2580 = vunpack.c.h.b16 %v2503
    %v2581 = vunpack.c.l.b16 %v2504
    %v2582 = vunpack.c.h.b16 %v2504
    %v2583 = vunpack.c.l.b16 %v2505
    %v2584 = vunpack.c.h.b16 %v2505
    %v2585 = vunpack.c.l.b16 %v2506
    %v2586 = vunpack.c.h.b16 %v2506
    %v2587 = vunpack.c.l.b16 %v2507
    %v2588 = vunpack.c.h.b16 %v2507
    %v2589 = vunpack.c.l.b16 %v2508
    %v2590 = vunpack.c.h.b16 %v2508
    %v2591 = vunpack.c.l.b16 %v2509
    %v2592 = vunpack.c.h.b16 %v2509
    %v2593 = vunpack.c.l.b16 %v2510
    %v2594 = vunpack.c.h.b16 %v2510
    %v2595 = vunpack.c.l.b16 %v2511
    %v2596 = vunpack.c.h.b16 %v2511
    %v2597 = vunpack.c.l.b16 %v2512
    %v2598 = vunpack.c.h.b16 %v2512
    %v2599 = vunpack.c.l.b16 %v2513
    %v2600 = vunpack.c.h.b16 %v2513
    %v2601 = vunpack.c.l.b16 %v2514
    %v2602 = vunpack.c.h.b16 %v2514
    %v2603 = vunpack.c.l.b16 %v2515
    %v2604 = vunpack.c.h.b16 %v2515
    %v2605 = vunpack.c.l.b16 %v2516
    %v2606 = vunpack.c.h.b16 %v2516
    %v2607 = vunpack.c.l.b16 %v2517
    %v2608 = vunpack.c.h.b16 %v2517
    %v2609 = vunpack.c.l.b16 %v2518
    %v2610 = vunpack.c.h.b16 %v2518
    %v2611 = vunpack.c.l.b16 %v2519
    %v2612 = vunpack.c.h.b16 %v2519
    %v2613 = vunpack.c.l.b16 %v2520
    %v2614 = vunpack.c.h.b16 %v2520
    %v2615 = vunpack.c.l.b16 %v2521
    %v2616 = vunpack.c.h.b16 %v2521
    %v2617 = vunpack.c.l.b16 %v2522
    %v2618 = vunpack.c.h.b16 %v2522
    %v2619 = vpack.c.b16 %v2559, %v2555
    %v2620 = vpack.c.b16 %v2560, %v2556
    %v2621 = vpack.c.b16 %v2561, %v2557
    %v2622 = vpack.c.b16 %v2562, %v2558
    %v2623 = vpack.c.b16 %v2567, %v2563
    %v2624 = vpack.c.b16 %v2568, %v2564
    %v2625 = vpack.c.b16 %v2569, %v2565
    %v2626 = vpack.c.b16 %v2570, %v2566
    %v2627 = vpack.c.b16 %v2575, %v2571
    %v2628 = vpack.c.b16 %v2576, %v2572
    %v2629 = vpack.c.b16 %v2577, %v2573
    %v2630 = vpack.c.b16 %v2578, %v2574
    %v2631 = vpack.c.b16 %v2583, %v2579
    %v2632 = vpack.c.b16 %v2584, %v2580
    %v2633 = vpack.c.b16 %v2585, %v2581
    %v2634 = vpack.c.b16 %v2586, %v2582
    %v2635 = vpack.c.b16 %v2591, %v2587
    %v2636 = vpack.c.b16 %v2592, %v2588
    %v2637 = vpack.c.b16 %v2593, %v2589
    %v2638 = vpack.c.b16 %v2594, %v2590
    %v2639 = vpack.c.b16 %v2599, %v2595
    %v2640 = vpack.c.b16 %v2600, %v2596
    %v2641 = vpack.c.b16 %v2601, %v2597
    %v2642 = vpack.c.b16 %v2602, %v2598
    %v2643 = vpack.c.b16 %v2607, %v2603
    %v2644 = vpack.c.b16 %v2608, %v2604
    %v2645 = vpack.c.b16 %v2609, %v2605
    %v2646 = vpack.c.b16 %v2610, %v2606
    %v2647 = vpack.c.b16 %v2615, %v2611
    %v2648 = vpack.c.b16 %v2616, %v2612
    %v2649 = vpack.c.b16 %v2617, %v2613
    %v2650 = vpack.c.b16 %v2618, %v2614
    %2683 = vmatprep.subr.bf16.mxu0 %v2648
    %2684 = vmatpush1.bf16.msra.mxu0 %v2647
    %2685 = vmatprep.subr.bf16.mxu0 %v2644
    %2686 = vmatpush1.bf16.msra.mxu0 %v2643
    %2687 = vmatprep.subr.bf16.mxu0 %v2640
    %2688 = vmatpush1.bf16.msra.mxu0 %v2639
    %2689 = vmatprep.subr.bf16.mxu0 %v2636
    %2690 = vmatpush1.bf16.msra.mxu0 %v2635
    %2691 = vmatprep.subr.bf16.mxu0 %v2632
    %2692 = vmatpush1.bf16.msra.mxu0 %v2631
    %2693 = vmatprep.subr.bf16.mxu0 %v2628
    %2694 = vmatpush1.bf16.msra.mxu0 %v2627
    %2695 = vmatprep.subr.bf16.mxu0 %v2624
    %2696 = vmatpush1.bf16.msra.mxu0 %v2623
    %2697 = vmatprep.subr.bf16.mxu0 %v2620
    %2698 = vmatpush1.bf16.msra.mxu0 %v2619
    %2699 = vmatprep.subr.bf16.mxu0 0
    %2700 = vmatpush2.bf16.msra.mxu0 0
    %2701 = vmatprep.subr.bf16.mxu0 0
    %2702 = vmatpush2.bf16.msra.mxu0 0
    %2703 = vmatprep.subr.bf16.mxu0 0
    %2704 = vmatpush2.bf16.msra.mxu0 0
    %2705 = vmatprep.subr.bf16.mxu0 0
    %2706 = vmatpush2.bf16.msra.mxu0 0
    %2707 = vmatprep.subr.bf16.mxu0 0
    %2708 = vmatpush2.bf16.msra.mxu0 0
    %2709 = vmatprep.subr.bf16.mxu0 0
    %2710 = vmatpush2.bf16.msra.mxu0 0
    %2711 = vmatprep.subr.bf16.mxu0 0
    %2712 = vmatpush2.bf16.msra.mxu0 0
    %2713 = vmatprep.subr.bf16.mxu0 0
    %2714 = vmatpush2.bf16.msra.mxu0 0
    %2715 = vmatprep.mubr.bf16.mxu0 0
    %2716 = vmatmul.mubr.bf16.gmra.mxu0 %v2490
    %v2717 = vpop.f32.mrf.mxu0
    %v2718 = vadd.f32 0.0, %v2717
    %v2719 = vpop.f32.mrf.mxu0
    %v2720 = vadd.f32 0.0, %v2719
    %v2721 = vpop.f32.mrf.mxu0
    %v2722 = vpop.f32.mrf.mxu0
    %2723 = vdwg.mxu0
    %2724 = vmatprep.subr.bf16.mxu0 %v2650
    %2725 = vmatpush1.bf16.msra.mxu0 %v2649
    %2726 = vmatprep.subr.bf16.mxu0 %v2646
    %2727 = vmatpush1.bf16.msra.mxu0 %v2645
    %2728 = vmatprep.subr.bf16.mxu0 %v2642
    %2729 = vmatpush1.bf16.msra.mxu0 %v2641
    %2730 = vmatprep.subr.bf16.mxu0 %v2638
    %2731 = vmatpush1.bf16.msra.mxu0 %v2637
    %2732 = vmatprep.subr.bf16.mxu0 %v2634
    %2733 = vmatpush1.bf16.msra.mxu0 %v2633
    %2734 = vmatprep.subr.bf16.mxu0 %v2630
    %2735 = vmatpush1.bf16.msra.mxu0 %v2629
    %2736 = vmatprep.subr.bf16.mxu0 %v2626
    %2737 = vmatpush1.bf16.msra.mxu0 %v2625
    %2738 = vmatprep.subr.bf16.mxu0 %v2622
    %2739 = vmatpush1.bf16.msra.mxu0 %v2621
    %2740 = vmatprep.subr.bf16.mxu0 0
    %2741 = vmatpush2.bf16.msra.mxu0 0
    %2742 = vmatprep.subr.bf16.mxu0 0
    %2743 = vmatpush2.bf16.msra.mxu0 0
    %2744 = vmatprep.subr.bf16.mxu0 0
    %2745 = vmatpush2.bf16.msra.mxu0 0
    %2746 = vmatprep.subr.bf16.mxu0 0
    %2747 = vmatpush2.bf16.msra.mxu0 0
    %2748 = vmatprep.subr.bf16.mxu0 0
    %2749 = vmatpush2.bf16.msra.mxu0 0
    %2750 = vmatprep.subr.bf16.mxu0 0
    %2751 = vmatpush2.bf16.msra.mxu0 0
    %2752 = vmatprep.subr.bf16.mxu0 0
    %2753 = vmatpush2.bf16.msra.mxu0 0
    %2754 = vmatprep.subr.bf16.mxu0 0
    %2755 = vmatpush2.bf16.msra.mxu0 0
    %2756 = vmatprep.mubr.bf16.mxu0 0
    %2757 = vmatmul.mubr.bf16.gmra.mxu0 %v2490
    %v2758 = vpop.f32.mrf.mxu0
    %v2759 = vadd.f32 0.0, %v2758
    %v2760 = vpop.f32.mrf.mxu0
    %v2761 = vadd.f32 0.0, %v2760
    %v2762 = vpop.f32.mrf.mxu0
    %v2763 = vpop.f32.mrf.mxu0
    %2764 = vdwg.mxu0
    %v2765 = vadd.f32 %v2486, %v2718
    %v2766 = vadd.f32 %v2487, %v2720
    %v2767 = vadd.f32 %v2488, %v2759
    %v2768 = vadd.f32 %v2489, %v2761
    %v2769 = vmul.f32 %v2765, 0.5
    %v2770 = vtanh.pop %v2769
    %v2771 = vmul.f32 %v2770, 0.5
    %v2772 = vadd.f32 %v2771, 0.5
    %v2773 = vmul.f32 %v2766, 0.5
    %v2774 = vtanh.pop %v2773
    %v2775 = vmul.f32 %v2774, 0.5
    %v2776 = vadd.f32 %v2775, 0.5
    %v2777 = vtanh.pop %v2767
    %v2778 = vmul.f32 %v2768, 0.5
    %v2779 = vtanh.pop %v2778
    %v2780 = vmul.f32 %v2779, 0.5
    %v2781 = vadd.f32 %v2780, 0.5
    %v2782 = vmul.f32 %v2776, %v2482
    %v2783 = vmul.f32 %v2772, %v2777
    %v2784 = vadd.f32 %v2782, %v2783
    %v2785 = vtanh.pop %v2784
    %v2786 = vmul.f32 %v2781, %v2785
    %2787 = vst [vmem:[#allocation2 + $0x20] sm:$0xff] %v2786
    %v2788 = vld [vmem:[#allocation3 + $0xa0] sm:$0xff]
    %v2789 = vld [vmem:[#allocation3 + $0xa8] sm:$0xff]
    %v2790 = vld [vmem:[#allocation3 + $0xb0] sm:$0xff]
    %v2791 = vld [vmem:[#allocation3 + $0xb8] sm:$0xff]
    %v2792 = vpack.c.bf16 %v2786, %v2786
    %v2793 = vld [vmem:[#allocation5] sm:$0xff]
    %v2794 = vld [vmem:[#allocation5 + $0x8] sm:$0xff]
    %v2795 = vld [vmem:[#allocation5 + $0x10] sm:$0xff]
    %v2796 = vld [vmem:[#allocation5 + $0x18] sm:$0xff]
    %v2797 = vld [vmem:[#allocation5 + $0x20] sm:$0xff]
    %v2798 = vld [vmem:[#allocation5 + $0x28] sm:$0xff]
    %v2799 = vld [vmem:[#allocation5 + $0x30] sm:$0xff]
    %v2800 = vld [vmem:[#allocation5 + $0x38] sm:$0xff]
    %v2801 = vld [vmem:[#allocation5 + $0x40] sm:$0xff]
    %v2802 = vld [vmem:[#allocation5 + $0x48] sm:$0xff]
    %v2803 = vld [vmem:[#allocation5 + $0x50] sm:$0xff]
    %v2804 = vld [vmem:[#allocation5 + $0x58] sm:$0xff]
    %v2805 = vld [vmem:[#allocation5 + $0x60] sm:$0xff]
    %v2806 = vld [vmem:[#allocation5 + $0x68] sm:$0xff]
    %v2807 = vld [vmem:[#allocation5 + $0x70] sm:$0xff]
    %v2808 = vld [vmem:[#allocation5 + $0x78] sm:$0xff]
    %v2809 = vld [vmem:[#allocation5 + $0x80] sm:$0xff]
    %v2810 = vld [vmem:[#allocation5 + $0x88] sm:$0xff]
    %v2811 = vld [vmem:[#allocation5 + $0x90] sm:$0xff]
    %v2812 = vld [vmem:[#allocation5 + $0x98] sm:$0xff]
    %v2813 = vld [vmem:[#allocation5 + $0xa0] sm:$0xff]
    %v2814 = vld [vmem:[#allocation5 + $0xa8] sm:$0xff]
    %v2815 = vld [vmem:[#allocation5 + $0xb0] sm:$0xff]
    %v2816 = vld [vmem:[#allocation5 + $0xb8] sm:$0xff]
    %v2817 = vld [vmem:[#allocation5 + $0xc0] sm:$0xff]
    %v2818 = vld [vmem:[#allocation5 + $0xc8] sm:$0xff]
    %v2819 = vld [vmem:[#allocation5 + $0xd0] sm:$0xff]
    %v2820 = vld [vmem:[#allocation5 + $0xd8] sm:$0xff]
    %v2821 = vld [vmem:[#allocation5 + $0xe0] sm:$0xff]
    %v2822 = vld [vmem:[#allocation5 + $0xe8] sm:$0xff]
    %v2823 = vld [vmem:[#allocation5 + $0xf0] sm:$0xff]
    %v2824 = vld [vmem:[#allocation5 + $0xf8] sm:$0xff]
    %v2857 = vunpack.c.l.b16 %v2793
    %v2858 = vunpack.c.h.b16 %v2793
    %v2859 = vunpack.c.l.b16 %v2794
    %v2860 = vunpack.c.h.b16 %v2794
    %v2861 = vunpack.c.l.b16 %v2795
    %v2862 = vunpack.c.h.b16 %v2795
    %v2863 = vunpack.c.l.b16 %v2796
    %v2864 = vunpack.c.h.b16 %v2796
    %v2865 = vunpack.c.l.b16 %v2797
    %v2866 = vunpack.c.h.b16 %v2797
    %v2867 = vunpack.c.l.b16 %v2798
    %v2868 = vunpack.c.h.b16 %v2798
    %v2869 = vunpack.c.l.b16 %v2799
    %v2870 = vunpack.c.h.b16 %v2799
    %v2871 = vunpack.c.l.b16 %v2800
    %v2872 = vunpack.c.h.b16 %v2800
    %v2873 = vunpack.c.l.b16 %v2801
    %v2874 = vunpack.c.h.b16 %v2801
    %v2875 = vunpack.c.l.b16 %v2802
    %v2876 = vunpack.c.h.b16 %v2802
    %v2877 = vunpack.c.l.b16 %v2803
    %v2878 = vunpack.c.h.b16 %v2803
    %v2879 = vunpack.c.l.b16 %v2804
    %v2880 = vunpack.c.h.b16 %v2804
    %v2881 = vunpack.c.l.b16 %v2805
    %v2882 = vunpack.c.h.b16 %v2805
    %v2883 = vunpack.c.l.b16 %v2806
    %v2884 = vunpack.c.h.b16 %v2806
    %v2885 = vunpack.c.l.b16 %v2807
    %v2886 = vunpack.c.h.b16 %v2807
    %v2887 = vunpack.c.l.b16 %v2808
    %v2888 = vunpack.c.h.b16 %v2808
    %v2889 = vunpack.c.l.b16 %v2809
    %v2890 = vunpack.c.h.b16 %v2809
    %v2891 = vunpack.c.l.b16 %v2810
    %v2892 = vunpack.c.h.b16 %v2810
    %v2893 = vunpack.c.l.b16 %v2811
    %v2894 = vunpack.c.h.b16 %v2811
    %v2895 = vunpack.c.l.b16 %v2812
    %v2896 = vunpack.c.h.b16 %v2812
    %v2897 = vunpack.c.l.b16 %v2813
    %v2898 = vunpack.c.h.b16 %v2813
    %v2899 = vunpack.c.l.b16 %v2814
    %v2900 = vunpack.c.h.b16 %v2814
    %v2901 = vunpack.c.l.b16 %v2815
    %v2902 = vunpack.c.h.b16 %v2815
    %v2903 = vunpack.c.l.b16 %v2816
    %v2904 = vunpack.c.h.b16 %v2816
    %v2905 = vunpack.c.l.b16 %v2817
    %v2906 = vunpack.c.h.b16 %v2817
    %v2907 = vunpack.c.l.b16 %v2818
    %v2908 = vunpack.c.h.b16 %v2818
    %v2909 = vunpack.c.l.b16 %v2819
    %v2910 = vunpack.c.h.b16 %v2819
    %v2911 = vunpack.c.l.b16 %v2820
    %v2912 = vunpack.c.h.b16 %v2820
    %v2913 = vunpack.c.l.b16 %v2821
    %v2914 = vunpack.c.h.b16 %v2821
    %v2915 = vunpack.c.l.b16 %v2822
    %v2916 = vunpack.c.h.b16 %v2822
    %v2917 = vunpack.c.l.b16 %v2823
    %v2918 = vunpack.c.h.b16 %v2823
    %v2919 = vunpack.c.l.b16 %v2824
    %v2920 = vunpack.c.h.b16 %v2824
    %v2921 = vpack.c.b16 %v2861, %v2857
    %v2922 = vpack.c.b16 %v2862, %v2858
    %v2923 = vpack.c.b16 %v2863, %v2859
    %v2924 = vpack.c.b16 %v2864, %v2860
    %v2925 = vpack.c.b16 %v2869, %v2865
    %v2926 = vpack.c.b16 %v2870, %v2866
    %v2927 = vpack.c.b16 %v2871, %v2867
    %v2928 = vpack.c.b16 %v2872, %v2868
    %v2929 = vpack.c.b16 %v2877, %v2873
    %v2930 = vpack.c.b16 %v2878, %v2874
    %v2931 = vpack.c.b16 %v2879, %v2875
    %v2932 = vpack.c.b16 %v2880, %v2876
    %v2933 = vpack.c.b16 %v2885, %v2881
    %v2934 = vpack.c.b16 %v2886, %v2882
    %v2935 = vpack.c.b16 %v2887, %v2883
    %v2936 = vpack.c.b16 %v2888, %v2884
    %v2937 = vpack.c.b16 %v2893, %v2889
    %v2938 = vpack.c.b16 %v2894, %v2890
    %v2939 = vpack.c.b16 %v2895, %v2891
    %v2940 = vpack.c.b16 %v2896, %v2892
    %v2941 = vpack.c.b16 %v2901, %v2897
    %v2942 = vpack.c.b16 %v2902, %v2898
    %v2943 = vpack.c.b16 %v2903, %v2899
    %v2944 = vpack.c.b16 %v2904, %v2900
    %v2945 = vpack.c.b16 %v2909, %v2905
    %v2946 = vpack.c.b16 %v2910, %v2906
    %v2947 = vpack.c.b16 %v2911, %v2907
    %v2948 = vpack.c.b16 %v2912, %v2908
    %v2949 = vpack.c.b16 %v2917, %v2913
    %v2950 = vpack.c.b16 %v2918, %v2914
    %v2951 = vpack.c.b16 %v2919, %v2915
    %v2952 = vpack.c.b16 %v2920, %v2916
    %2985 = vmatprep.subr.bf16.mxu0 %v2950
    %2986 = vmatpush1.bf16.msra.mxu0 %v2949
    %2987 = vmatprep.subr.bf16.mxu0 %v2946
    %2988 = vmatpush1.bf16.msra.mxu0 %v2945
    %2989 = vmatprep.subr.bf16.mxu0 %v2942
    %2990 = vmatpush1.bf16.msra.mxu0 %v2941
    %2991 = vmatprep.subr.bf16.mxu0 %v2938
    %2992 = vmatpush1.bf16.msra.mxu0 %v2937
    %2993 = vmatprep.subr.bf16.mxu0 %v2934
    %2994 = vmatpush1.bf16.msra.mxu0 %v2933
    %2995 = vmatprep.subr.bf16.mxu0 %v2930
    %2996 = vmatpush1.bf16.msra.mxu0 %v2929
    %2997 = vmatprep.subr.bf16.mxu0 %v2926
    %2998 = vmatpush1.bf16.msra.mxu0 %v2925
    %2999 = vmatprep.subr.bf16.mxu0 %v2922
    %3000 = vmatpush1.bf16.msra.mxu0 %v2921
    %3001 = vmatprep.subr.bf16.mxu0 0
    %3002 = vmatpush2.bf16.msra.mxu0 0
    %3003 = vmatprep.subr.bf16.mxu0 0
    %3004 = vmatpush2.bf16.msra.mxu0 0
    %3005 = vmatprep.subr.bf16.mxu0 0
    %3006 = vmatpush2.bf16.msra.mxu0 0
    %3007 = vmatprep.subr.bf16.mxu0 0
    %3008 = vmatpush2.bf16.msra.mxu0 0
    %3009 = vmatprep.subr.bf16.mxu0 0
    %3010 = vmatpush2.bf16.msra.mxu0 0
    %3011 = vmatprep.subr.bf16.mxu0 0
    %3012 = vmatpush2.bf16.msra.mxu0 0
    %3013 = vmatprep.subr.bf16.mxu0 0
    %3014 = vmatpush2.bf16.msra.mxu0 0
    %3015 = vmatprep.subr.bf16.mxu0 0
    %3016 = vmatpush2.bf16.msra.mxu0 0
    %3017 = vmatprep.mubr.bf16.mxu0 0
    %3018 = vmatmul.mubr.bf16.gmra.mxu0 %v2792
    %v3019 = vpop.f32.mrf.mxu0
    %v3020 = vadd.f32 0.0, %v3019
    %v3021 = vpop.f32.mrf.mxu0
    %v3022 = vadd.f32 0.0, %v3021
    %v3023 = vpop.f32.mrf.mxu0
    %v3024 = vpop.f32.mrf.mxu0
    %3025 = vdwg.mxu0
    %3026 = vmatprep.subr.bf16.mxu0 %v2952
    %3027 = vmatpush1.bf16.msra.mxu0 %v2951
    %3028 = vmatprep.subr.bf16.mxu0 %v2948
    %3029 = vmatpush1.bf16.msra.mxu0 %v2947
    %3030 = vmatprep.subr.bf16.mxu0 %v2944
    %3031 = vmatpush1.bf16.msra.mxu0 %v2943
    %3032 = vmatprep.subr.bf16.mxu0 %v2940
    %3033 = vmatpush1.bf16.msra.mxu0 %v2939
    %3034 = vmatprep.subr.bf16.mxu0 %v2936
    %3035 = vmatpush1.bf16.msra.mxu0 %v2935
    %3036 = vmatprep.subr.bf16.mxu0 %v2932
    %3037 = vmatpush1.bf16.msra.mxu0 %v2931
    %3038 = vmatprep.subr.bf16.mxu0 %v2928
    %3039 = vmatpush1.bf16.msra.mxu0 %v2927
    %3040 = vmatprep.subr.bf16.mxu0 %v2924
    %3041 = vmatpush1.bf16.msra.mxu0 %v2923
    %3042 = vmatprep.subr.bf16.mxu0 0
    %3043 = vmatpush2.bf16.msra.mxu0 0
    %3044 = vmatprep.subr.bf16.mxu0 0
    %3045 = vmatpush2.bf16.msra.mxu0 0
    %3046 = vmatprep.subr.bf16.mxu0 0
    %3047 = vmatpush2.bf16.msra.mxu0 0
    %3048 = vmatprep.subr.bf16.mxu0 0
    %3049 = vmatpush2.bf16.msra.mxu0 0
    %3050 = vmatprep.subr.bf16.mxu0 0
    %3051 = vmatpush2.bf16.msra.mxu0 0
    %3052 = vmatprep.subr.bf16.mxu0 0
    %3053 = vmatpush2.bf16.msra.mxu0 0
    %3054 = vmatprep.subr.bf16.mxu0 0
    %3055 = vmatpush2.bf16.msra.mxu0 0
    %3056 = vmatprep.subr.bf16.mxu0 0
    %3057 = vmatpush2.bf16.msra.mxu0 0
    %3058 = vmatprep.mubr.bf16.mxu0 0
    %3059 = vmatmul.mubr.bf16.gmra.mxu0 %v2792
    %v3060 = vpop.f32.mrf.mxu0
    %v3061 = vadd.f32 0.0, %v3060
    %v3062 = vpop.f32.mrf.mxu0
    %v3063 = vadd.f32 0.0, %v3062
    %v3064 = vpop.f32.mrf.mxu0
    %v3065 = vpop.f32.mrf.mxu0
    %3066 = vdwg.mxu0
    %v3067 = vadd.f32 %v2788, %v3020
    %v3068 = vadd.f32 %v2789, %v3022
    %v3069 = vadd.f32 %v2790, %v3061
    %v3070 = vadd.f32 %v2791, %v3063
    %v3071 = vmul.f32 %v3067, 0.5
    %v3072 = vtanh.pop %v3071
    %v3073 = vmul.f32 %v3072, 0.5
    %v3074 = vadd.f32 %v3073, 0.5
    %v3075 = vmul.f32 %v3068, 0.5
    %v3076 = vtanh.pop %v3075
    %v3077 = vmul.f32 %v3076, 0.5
    %v3078 = vadd.f32 %v3077, 0.5
    %v3079 = vtanh.pop %v3069
    %v3080 = vmul.f32 %v3070, 0.5
    %v3081 = vtanh.pop %v3080
    %v3082 = vmul.f32 %v3081, 0.5
    %v3083 = vadd.f32 %v3082, 0.5
    %v3084 = vmul.f32 %v3078, %v2784
    %v3085 = vmul.f32 %v3074, %v3079
    %v3086 = vadd.f32 %v3084, %v3085
    %v3087 = vtanh.pop %v3086
    %v3088 = vmul.f32 %v3083, %v3087
    %3089 = vst [vmem:[#allocation2 + $0x28] sm:$0xff] %v3088
    %v3090 = vld [vmem:[#allocation3 + $0xc0] sm:$0xff]
    %v3091 = vld [vmem:[#allocation3 + $0xc8] sm:$0xff]
    %v3092 = vld [vmem:[#allocation3 + $0xd0] sm:$0xff]
    %v3093 = vld [vmem:[#allocation3 + $0xd8] sm:$0xff]
    %v3094 = vpack.c.bf16 %v3088, %v3088
    %v3095 = vld [vmem:[#allocation5] sm:$0xff]
    %v3096 = vld [vmem:[#allocation5 + $0x8] sm:$0xff]
    %v3097 = vld [vmem:[#allocation5 + $0x10] sm:$0xff]
    %v3098 = vld [vmem:[#allocation5 + $0x18] sm:$0xff]
    %v3099 = vld [vmem:[#allocation5 + $0x20] sm:$0xff]
    %v3100 = vld [vmem:[#allocation5 + $0x28] sm:$0xff]
    %v3101 = vld [vmem:[#allocation5 + $0x30] sm:$0xff]
    %v3102 = vld [vmem:[#allocation5 + $0x38] sm:$0xff]
    %v3103 = vld [vmem:[#allocation5 + $0x40] sm:$0xff]
    %v3104 = vld [vmem:[#allocation5 + $0x48] sm:$0xff]
    %v3105 = vld [vmem:[#allocation5 + $0x50] sm:$0xff]
    %v3106 = vld [vmem:[#allocation5 + $0x58] sm:$0xff]
    %v3107 = vld [vmem:[#allocation5 + $0x60] sm:$0xff]
    %v3108 = vld [vmem:[#allocation5 + $0x68] sm:$0xff]
    %v3109 = vld [vmem:[#allocation5 + $0x70] sm:$0xff]
    %v3110 = vld [vmem:[#allocation5 + $0x78] sm:$0xff]
    %v3111 = vld [vmem:[#allocation5 + $0x80] sm:$0xff]
    %v3112 = vld [vmem:[#allocation5 + $0x88] sm:$0xff]
    %v3113 = vld [vmem:[#allocation5 + $0x90] sm:$0xff]
    %v3114 = vld [vmem:[#allocation5 + $0x98] sm:$0xff]
    %v3115 = vld [vmem:[#allocation5 + $0xa0] sm:$0xff]
    %v3116 = vld [vmem:[#allocation5 + $0xa8] sm:$0xff]
    %v3117 = vld [vmem:[#allocation5 + $0xb0] sm:$0xff]
    %v3118 = vld [vmem:[#allocation5 + $0xb8] sm:$0xff]
    %v3119 = vld [vmem:[#allocation5 + $0xc0] sm:$0xff]
    %v3120 = vld [vmem:[#allocation5 + $0xc8] sm:$0xff]
    %v3121 = vld [vmem:[#allocation5 + $0xd0] sm:$0xff]
    %v3122 = vld [vmem:[#allocation5 + $0xd8] sm:$0xff]
    %v3123 = vld [vmem:[#allocation5 + $0xe0] sm:$0xff]
    %v3124 = vld [vmem:[#allocation5 + $0xe8] sm:$0xff]
    %v3125 = vld [vmem:[#allocation5 + $0xf0] sm:$0xff]
    %v3126 = vld [vmem:[#allocation5 + $0xf8] sm:$0xff]
    %v3159 = vunpack.c.l.b16 %v3095
    %v3160 = vunpack.c.h.b16 %v3095
    %v3161 = vunpack.c.l.b16 %v3096
    %v3162 = vunpack.c.h.b16 %v3096
    %v3163 = vunpack.c.l.b16 %v3097
    %v3164 = vunpack.c.h.b16 %v3097
    %v3165 = vunpack.c.l.b16 %v3098
    %v3166 = vunpack.c.h.b16 %v3098
    %v3167 = vunpack.c.l.b16 %v3099
    %v3168 = vunpack.c.h.b16 %v3099
    %v3169 = vunpack.c.l.b16 %v3100
    %v3170 = vunpack.c.h.b16 %v3100
    %v3171 = vunpack.c.l.b16 %v3101
    %v3172 = vunpack.c.h.b16 %v3101
    %v3173 = vunpack.c.l.b16 %v3102
    %v3174 = vunpack.c.h.b16 %v3102
    %v3175 = vunpack.c.l.b16 %v3103
    %v3176 = vunpack.c.h.b16 %v3103
    %v3177 = vunpack.c.l.b16 %v3104
    %v3178 = vunpack.c.h.b16 %v3104
    %v3179 = vunpack.c.l.b16 %v3105
    %v3180 = vunpack.c.h.b16 %v3105
    %v3181 = vunpack.c.l.b16 %v3106
    %v3182 = vunpack.c.h.b16 %v3106
    %v3183 = vunpack.c.l.b16 %v3107
    %v3184 = vunpack.c.h.b16 %v3107
    %v3185 = vunpack.c.l.b16 %v3108
    %v3186 = vunpack.c.h.b16 %v3108
    %v3187 = vunpack.c.l.b16 %v3109
    %v3188 = vunpack.c.h.b16 %v3109
    %v3189 = vunpack.c.l.b16 %v3110
    %v3190 = vunpack.c.h.b16 %v3110
    %v3191 = vunpack.c.l.b16 %v3111
    %v3192 = vunpack.c.h.b16 %v3111
    %v3193 = vunpack.c.l.b16 %v3112
    %v3194 = vunpack.c.h.b16 %v3112
    %v3195 = vunpack.c.l.b16 %v3113
    %v3196 = vunpack.c.h.b16 %v3113
    %v3197 = vunpack.c.l.b16 %v3114
    %v3198 = vunpack.c.h.b16 %v3114
    %v3199 = vunpack.c.l.b16 %v3115
    %v3200 = vunpack.c.h.b16 %v3115
    %v3201 = vunpack.c.l.b16 %v3116
    %v3202 = vunpack.c.h.b16 %v3116
    %v3203 = vunpack.c.l.b16 %v3117
    %v3204 = vunpack.c.h.b16 %v3117
    %v3205 = vunpack.c.l.b16 %v3118
    %v3206 = vunpack.c.h.b16 %v3118
    %v3207 = vunpack.c.l.b16 %v3119
    %v3208 = vunpack.c.h.b16 %v3119
    %v3209 = vunpack.c.l.b16 %v3120
    %v3210 = vunpack.c.h.b16 %v3120
    %v3211 = vunpack.c.l.b16 %v3121
    %v3212 = vunpack.c.h.b16 %v3121
    %v3213 = vunpack.c.l.b16 %v3122
    %v3214 = vunpack.c.h.b16 %v3122
    %v3215 = vunpack.c.l.b16 %v3123
    %v3216 = vunpack.c.h.b16 %v3123
    %v3217 = vunpack.c.l.b16 %v3124
    %v3218 = vunpack.c.h.b16 %v3124
    %v3219 = vunpack.c.l.b16 %v3125
    %v3220 = vunpack.c.h.b16 %v3125
    %v3221 = vunpack.c.l.b16 %v3126
    %v3222 = vunpack.c.h.b16 %v3126
    %v3223 = vpack.c.b16 %v3163, %v3159
    %v3224 = vpack.c.b16 %v3164, %v3160
    %v3225 = vpack.c.b16 %v3165, %v3161
    %v3226 = vpack.c.b16 %v3166, %v3162
    %v3227 = vpack.c.b16 %v3171, %v3167
    %v3228 = vpack.c.b16 %v3172, %v3168
    %v3229 = vpack.c.b16 %v3173, %v3169
    %v3230 = vpack.c.b16 %v3174, %v3170
    %v3231 = vpack.c.b16 %v3179, %v3175
    %v3232 = vpack.c.b16 %v3180, %v3176
    %v3233 = vpack.c.b16 %v3181, %v3177
    %v3234 = vpack.c.b16 %v3182, %v3178
    %v3235 = vpack.c.b16 %v3187, %v3183
    %v3236 = vpack.c.b16 %v3188, %v3184
    %v3237 = vpack.c.b16 %v3189, %v3185
    %v3238 = vpack.c.b16 %v3190, %v3186
    %v3239 = vpack.c.b16 %v3195, %v3191
    %v3240 = vpack.c.b16 %v3196, %v3192
    %v3241 = vpack.c.b16 %v3197, %v3193
    %v3242 = vpack.c.b16 %v3198, %v3194
    %v3243 = vpack.c.b16 %v3203, %v3199
    %v3244 = vpack.c.b16 %v3204, %v3200
    %v3245 = vpack.c.b16 %v3205, %v3201
    %v3246 = vpack.c.b16 %v3206, %v3202
    %v3247 = vpack.c.b16 %v3211, %v3207
    %v3248 = vpack.c.b16 %v3212, %v3208
    %v3249 = vpack.c.b16 %v3213, %v3209
    %v3250 = vpack.c.b16 %v3214, %v3210
    %v3251 = vpack.c.b16 %v3219, %v3215
    %v3252 = vpack.c.b16 %v3220, %v3216
    %v3253 = vpack.c.b16 %v3221, %v3217
    %v3254 = vpack.c.b16 %v3222, %v3218
    %3287 = vmatprep.subr.bf16.mxu0 %v3252
    %3288 = vmatpush1.bf16.msra.mxu0 %v3251
    %3289 = vmatprep.subr.bf16.mxu0 %v3248
    %3290 = vmatpush1.bf16.msra.mxu0 %v3247
    %3291 = vmatprep.subr.bf16.mxu0 %v3244
    %3292 = vmatpush1.bf16.msra.mxu0 %v3243
    %3293 = vmatprep.subr.bf16.mxu0 %v3240
    %3294 = vmatpush1.bf16.msra.mxu0 %v3239
    %3295 = vmatprep.subr.bf16.mxu0 %v3236
    %3296 = vmatpush1.bf16.msra.mxu0 %v3235
    %3297 = vmatprep.subr.bf16.mxu0 %v3232
    %3298 = vmatpush1.bf16.msra.mxu0 %v3231
    %3299 = vmatprep.subr.bf16.mxu0 %v3228
    %3300 = vmatpush1.bf16.msra.mxu0 %v3227
    %3301 = vmatprep.subr.bf16.mxu0 %v3224
    %3302 = vmatpush1.bf16.msra.mxu0 %v3223
    %3303 = vmatprep.subr.bf16.mxu0 0
    %3304 = vmatpush2.bf16.msra.mxu0 0
    %3305 = vmatprep.subr.bf16.mxu0 0
    %3306 = vmatpush2.bf16.msra.mxu0 0
    %3307 = vmatprep.subr.bf16.mxu0 0
    %3308 = vmatpush2.bf16.msra.mxu0 0
    %3309 = vmatprep.subr.bf16.mxu0 0
    %3310 = vmatpush2.bf16.msra.mxu0 0
    %3311 = vmatprep.subr.bf16.mxu0 0
    %3312 = vmatpush2.bf16.msra.mxu0 0
    %3313 = vmatprep.subr.bf16.mxu0 0
    %3314 = vmatpush2.bf16.msra.mxu0 0
    %3315 = vmatprep.subr.bf16.mxu0 0
    %3316 = vmatpush2.bf16.msra.mxu0 0
    %3317 = vmatprep.subr.bf16.mxu0 0
    %3318 = vmatpush2.bf16.msra.mxu0 0
    %3319 = vmatprep.mubr.bf16.mxu0 0
    %3320 = vmatmul.mubr.bf16.gmra.mxu0 %v3094
    %v3321 = vpop.f32.mrf.mxu0
    %v3322 = vadd.f32 0.0, %v3321
    %v3323 = vpop.f32.mrf.mxu0
    %v3324 = vadd.f32 0.0, %v3323
    %v3325 = vpop.f32.mrf.mxu0
    %v3326 = vpop.f32.mrf.mxu0
    %3327 = vdwg.mxu0
    %3328 = vmatprep.subr.bf16.mxu0 %v3254
    %3329 = vmatpush1.bf16.msra.mxu0 %v3253
    %3330 = vmatprep.subr.bf16.mxu0 %v3250
    %3331 = vmatpush1.bf16.msra.mxu0 %v3249
    %3332 = vmatprep.subr.bf16.mxu0 %v3246
    %3333 = vmatpush1.bf16.msra.mxu0 %v3245
    %3334 = vmatprep.subr.bf16.mxu0 %v3242
    %3335 = vmatpush1.bf16.msra.mxu0 %v3241
    %3336 = vmatprep.subr.bf16.mxu0 %v3238
    %3337 = vmatpush1.bf16.msra.mxu0 %v3237
    %3338 = vmatprep.subr.bf16.mxu0 %v3234
    %3339 = vmatpush1.bf16.msra.mxu0 %v3233
    %3340 = vmatprep.subr.bf16.mxu0 %v3230
    %3341 = vmatpush1.bf16.msra.mxu0 %v3229
    %3342 = vmatprep.subr.bf16.mxu0 %v3226
    %3343 = vmatpush1.bf16.msra.mxu0 %v3225
    %3344 = vmatprep.subr.bf16.mxu0 0
    %3345 = vmatpush2.bf16.msra.mxu0 0
    %3346 = vmatprep.subr.bf16.mxu0 0
    %3347 = vmatpush2.bf16.msra.mxu0 0
    %3348 = vmatprep.subr.bf16.mxu0 0
    %3349 = vmatpush2.bf16.msra.mxu0 0
    %3350 = vmatprep.subr.bf16.mxu0 0
    %3351 = vmatpush2.bf16.msra.mxu0 0
    %3352 = vmatprep.subr.bf16.mxu0 0
    %3353 = vmatpush2.bf16.msra.mxu0 0
    %3354 = vmatprep.subr.bf16.mxu0 0
    %3355 = vmatpush2.bf16.msra.mxu0 0
    %3356 = vmatprep.subr.bf16.mxu0 0
    %3357 = vmatpush2.bf16.msra.mxu0 0
    %3358 = vmatprep.subr.bf16.mxu0 0
    %3359 = vmatpush2.bf16.msra.mxu0 0
    %3360 = vmatprep.mubr.bf16.mxu0 0
    %3361 = vmatmul.mubr.bf16.gmra.mxu0 %v3094
    %v3362 = vpop.f32.mrf.mxu0
    %v3363 = vadd.f32 0.0, %v3362
    %v3364 = vpop.f32.mrf.mxu0
    %v3365 = vadd.f32 0.0, %v3364
    %v3366 = vpop.f32.mrf.mxu0
    %v3367 = vpop.f32.mrf.mxu0
    %3368 = vdwg.mxu0
    %v3369 = vadd.f32 %v3090, %v3322
    %v3370 = vadd.f32 %v3091, %v3324
    %v3371 = vadd.f32 %v3092, %v3363
    %v3372 = vadd.f32 %v3093, %v3365
    %v3373 = vmul.f32 %v3369, 0.5
    %v3374 = vtanh.pop %v3373
    %v3375 = vmul.f32 %v3374, 0.5
    %v3376 = vadd.f32 %v3375, 0.5
    %v3377 = vmul.f32 %v3370, 0.5
    %v3378 = vtanh.pop %v3377
    %v3379 = vmul.f32 %v3378, 0.5
    %v3380 = vadd.f32 %v3379, 0.5
    %v3381 = vtanh.pop %v3371
    %v3382 = vmul.f32 %v3372, 0.5
    %v3383 = vtanh.pop %v3382
    %v3384 = vmul.f32 %v3383, 0.5
    %v3385 = vadd.f32 %v3384, 0.5
    %v3386 = vmul.f32 %v3380, %v3086
    %v3387 = vmul.f32 %v3376, %v3381
    %v3388 = vadd.f32 %v3386, %v3387
    %v3389 = vtanh.pop %v3388
    %v3390 = vmul.f32 %v3385, %v3389
    %3391 = vst [vmem:[#allocation2 + $0x30] sm:$0xff] %v3390
    %v3392 = vld [vmem:[#allocation3 + $0xe0] sm:$0xff]
    %v3393 = vld [vmem:[#allocation3 + $0xe8] sm:$0xff]
    %v3394 = vld [vmem:[#allocation3 + $0xf0] sm:$0xff]
    %v3395 = vld [vmem:[#allocation3 + $0xf8] sm:$0xff]
    %v3396 = vpack.c.bf16 %v3390, %v3390
    %v3397 = vld [vmem:[#allocation5] sm:$0xff]
    %v3398 = vld [vmem:[#allocation5 + $0x8] sm:$0xff]
    %v3399 = vld [vmem:[#allocation5 + $0x10] sm:$0xff]
    %v3400 = vld [vmem:[#allocation5 + $0x18] sm:$0xff]
    %v3401 = vld [vmem:[#allocation5 + $0x20] sm:$0xff]
    %v3402 = vld [vmem:[#allocation5 + $0x28] sm:$0xff]
    %v3403 = vld [vmem:[#allocation5 + $0x30] sm:$0xff]
    %v3404 = vld [vmem:[#allocation5 + $0x38] sm:$0xff]
    %v3405 = vld [vmem:[#allocation5 + $0x40] sm:$0xff]
    %v3406 = vld [vmem:[#allocation5 + $0x48] sm:$0xff]
    %v3407 = vld [vmem:[#allocation5 + $0x50] sm:$0xff]
    %v3408 = vld [vmem:[#allocation5 + $0x58] sm:$0xff]
    %v3409 = vld [vmem:[#allocation5 + $0x60] sm:$0xff]
    %v3410 = vld [vmem:[#allocation5 + $0x68] sm:$0xff]
    %v3411 = vld [vmem:[#allocation5 + $0x70] sm:$0xff]
    %v3412 = vld [vmem:[#allocation5 + $0x78] sm:$0xff]
    %v3413 = vld [vmem:[#allocation5 + $0x80] sm:$0xff]
    %v3414 = vld [vmem:[#allocation5 + $0x88] sm:$0xff]
    %v3415 = vld [vmem:[#allocation5 + $0x90] sm:$0xff]
    %v3416 = vld [vmem:[#allocation5 + $0x98] sm:$0xff]
    %v3417 = vld [vmem:[#allocation5 + $0xa0] sm:$0xff]
    %v3418 = vld [vmem:[#allocation5 + $0xa8] sm:$0xff]
    %v3419 = vld [vmem:[#allocation5 + $0xb0] sm:$0xff]
    %v3420 = vld [vmem:[#allocation5 + $0xb8] sm:$0xff]
    %v3421 = vld [vmem:[#allocation5 + $0xc0] sm:$0xff]
    %v3422 = vld [vmem:[#allocation5 + $0xc8] sm:$0xff]
    %v3423 = vld [vmem:[#allocation5 + $0xd0] sm:$0xff]
    %v3424 = vld [vmem:[#allocation5 + $0xd8] sm:$0xff]
    %v3425 = vld [vmem:[#allocation5 + $0xe0] sm:$0xff]
    %v3426 = vld [vmem:[#allocation5 + $0xe8] sm:$0xff]
    %v3427 = vld [vmem:[#allocation5 + $0xf0] sm:$0xff]
    %v3428 = vld [vmem:[#allocation5 + $0xf8] sm:$0xff]
    %v3461 = vunpack.c.l.b16 %v3397
    %v3462 = vunpack.c.h.b16 %v3397
    %v3463 = vunpack.c.l.b16 %v3398
    %v3464 = vunpack.c.h.b16 %v3398
    %v3465 = vunpack.c.l.b16 %v3399
    %v3466 = vunpack.c.h.b16 %v3399
    %v3467 = vunpack.c.l.b16 %v3400
    %v3468 = vunpack.c.h.b16 %v3400
    %v3469 = vunpack.c.l.b16 %v3401
    %v3470 = vunpack.c.h.b16 %v3401
    %v3471 = vunpack.c.l.b16 %v3402
    %v3472 = vunpack.c.h.b16 %v3402
    %v3473 = vunpack.c.l.b16 %v3403
    %v3474 = vunpack.c.h.b16 %v3403
    %v3475 = vunpack.c.l.b16 %v3404
    %v3476 = vunpack.c.h.b16 %v3404
    %v3477 = vunpack.c.l.b16 %v3405
    %v3478 = vunpack.c.h.b16 %v3405
    %v3479 = vunpack.c.l.b16 %v3406
    %v3480 = vunpack.c.h.b16 %v3406
    %v3481 = vunpack.c.l.b16 %v3407
    %v3482 = vunpack.c.h.b16 %v3407
    %v3483 = vunpack.c.l.b16 %v3408
    %v3484 = vunpack.c.h.b16 %v3408
    %v3485 = vunpack.c.l.b16 %v3409
    %v3486 = vunpack.c.h.b16 %v3409
    %v3487 = vunpack.c.l.b16 %v3410
    %v3488 = vunpack.c.h.b16 %v3410
    %v3489 = vunpack.c.l.b16 %v3411
    %v3490 = vunpack.c.h.b16 %v3411
    %v3491 = vunpack.c.l.b16 %v3412
    %v3492 = vunpack.c.h.b16 %v3412
    %v3493 = vunpack.c.l.b16 %v3413
    %v3494 = vunpack.c.h.b16 %v3413
    %v3495 = vunpack.c.l.b16 %v3414
    %v3496 = vunpack.c.h.b16 %v3414
    %v3497 = vunpack.c.l.b16 %v3415
    %v3498 = vunpack.c.h.b16 %v3415
    %v3499 = vunpack.c.l.b16 %v3416
    %v3500 = vunpack.c.h.b16 %v3416
    %v3501 = vunpack.c.l.b16 %v3417
    %v3502 = vunpack.c.h.b16 %v3417
    %v3503 = vunpack.c.l.b16 %v3418
    %v3504 = vunpack.c.h.b16 %v3418
    %v3505 = vunpack.c.l.b16 %v3419
    %v3506 = vunpack.c.h.b16 %v3419
    %v3507 = vunpack.c.l.b16 %v3420
    %v3508 = vunpack.c.h.b16 %v3420
    %v3509 = vunpack.c.l.b16 %v3421
    %v3510 = vunpack.c.h.b16 %v3421
    %v3511 = vunpack.c.l.b16 %v3422
    %v3512 = vunpack.c.h.b16 %v3422
    %v3513 = vunpack.c.l.b16 %v3423
    %v3514 = vunpack.c.h.b16 %v3423
    %v3515 = vunpack.c.l.b16 %v3424
    %v3516 = vunpack.c.h.b16 %v3424
    %v3517 = vunpack.c.l.b16 %v3425
    %v3518 = vunpack.c.h.b16 %v3425
    %v3519 = vunpack.c.l.b16 %v3426
    %v3520 = vunpack.c.h.b16 %v3426
    %v3521 = vunpack.c.l.b16 %v3427
    %v3522 = vunpack.c.h.b16 %v3427
    %v3523 = vunpack.c.l.b16 %v3428
    %v3524 = vunpack.c.h.b16 %v3428
    %v3525 = vpack.c.b16 %v3465, %v3461
    %v3526 = vpack.c.b16 %v3466, %v3462
    %v3527 = vpack.c.b16 %v3467, %v3463
    %v3528 = vpack.c.b16 %v3468, %v3464
    %v3529 = vpack.c.b16 %v3473, %v3469
    %v3530 = vpack.c.b16 %v3474, %v3470
    %v3531 = vpack.c.b16 %v3475, %v3471
    %v3532 = vpack.c.b16 %v3476, %v3472
    %v3533 = vpack.c.b16 %v3481, %v3477
    %v3534 = vpack.c.b16 %v3482, %v3478
    %v3535 = vpack.c.b16 %v3483, %v3479
    %v3536 = vpack.c.b16 %v3484, %v3480
    %v3537 = vpack.c.b16 %v3489, %v3485
    %v3538 = vpack.c.b16 %v3490, %v3486
    %v3539 = vpack.c.b16 %v3491, %v3487
    %v3540 = vpack.c.b16 %v3492, %v3488
    %v3541 = vpack.c.b16 %v3497, %v3493
    %v3542 = vpack.c.b16 %v3498, %v3494
    %v3543 = vpack.c.b16 %v3499, %v3495
    %v3544 = vpack.c.b16 %v3500, %v3496
    %v3545 = vpack.c.b16 %v3505, %v3501
    %v3546 = vpack.c.b16 %v3506, %v3502
    %v3547 = vpack.c.b16 %v3507, %v3503
    %v3548 = vpack.c.b16 %v3508, %v3504
    %v3549 = vpack.c.b16 %v3513, %v3509
    %v3550 = vpack.c.b16 %v3514, %v3510
    %v3551 = vpack.c.b16 %v3515, %v3511
    %v3552 = vpack.c.b16 %v3516, %v3512
    %v3553 = vpack.c.b16 %v3521, %v3517
    %v3554 = vpack.c.b16 %v3522, %v3518
    %v3555 = vpack.c.b16 %v3523, %v3519
    %v3556 = vpack.c.b16 %v3524, %v3520
    %3589 = vmatprep.subr.bf16.mxu0 %v3554
    %3590 = vmatpush1.bf16.msra.mxu0 %v3553
    %3591 = vmatprep.subr.bf16.mxu0 %v3550
    %3592 = vmatpush1.bf16.msra.mxu0 %v3549
    %3593 = vmatprep.subr.bf16.mxu0 %v3546
    %3594 = vmatpush1.bf16.msra.mxu0 %v3545
    %3595 = vmatprep.subr.bf16.mxu0 %v3542
    %3596 = vmatpush1.bf16.msra.mxu0 %v3541
    %3597 = vmatprep.subr.bf16.mxu0 %v3538
    %3598 = vmatpush1.bf16.msra.mxu0 %v3537
    %3599 = vmatprep.subr.bf16.mxu0 %v3534
    %3600 = vmatpush1.bf16.msra.mxu0 %v3533
    %3601 = vmatprep.subr.bf16.mxu0 %v3530
    %3602 = vmatpush1.bf16.msra.mxu0 %v3529
    %3603 = vmatprep.subr.bf16.mxu0 %v3526
    %3604 = vmatpush1.bf16.msra.mxu0 %v3525
    %3605 = vmatprep.subr.bf16.mxu0 0
    %3606 = vmatpush2.bf16.msra.mxu0 0
    %3607 = vmatprep.subr.bf16.mxu0 0
    %3608 = vmatpush2.bf16.msra.mxu0 0
    %3609 = vmatprep.subr.bf16.mxu0 0
    %3610 = vmatpush2.bf16.msra.mxu0 0
    %3611 = vmatprep.subr.bf16.mxu0 0
    %3612 = vmatpush2.bf16.msra.mxu0 0
    %3613 = vmatprep.subr.bf16.mxu0 0
    %3614 = vmatpush2.bf16.msra.mxu0 0
    %3615 = vmatprep.subr.bf16.mxu0 0
    %3616 = vmatpush2.bf16.msra.mxu0 0
    %3617 = vmatprep.subr.bf16.mxu0 0
    %3618 = vmatpush2.bf16.msra.mxu0 0
    %3619 = vmatprep.subr.bf16.mxu0 0
    %3620 = vmatpush2.bf16.msra.mxu0 0
    %3621 = vmatprep.mubr.bf16.mxu0 0
    %3622 = vmatmul.mubr.bf16.gmra.mxu0 %v3396
    %v3623 = vpop.f32.mrf.mxu0
    %v3624 = vadd.f32 0.0, %v3623
    %v3625 = vpop.f32.mrf.mxu0
    %v3626 = vadd.f32 0.0, %v3625
    %v3627 = vpop.f32.mrf.mxu0
    %v3628 = vpop.f32.mrf.mxu0
    %3629 = vdwg.mxu0
    %3630 = vmatprep.subr.bf16.mxu0 %v3556
    %3631 = vmatpush1.bf16.msra.mxu0 %v3555
    %3632 = vmatprep.subr.bf16.mxu0 %v3552
    %3633 = vmatpush1.bf16.msra.mxu0 %v3551
    %3634 = vmatprep.subr.bf16.mxu0 %v3548
    %3635 = vmatpush1.bf16.msra.mxu0 %v3547
    %3636 = vmatprep.subr.bf16.mxu0 %v3544
    %3637 = vmatpush1.bf16.msra.mxu0 %v3543
    %3638 = vmatprep.subr.bf16.mxu0 %v3540
    %3639 = vmatpush1.bf16.msra.mxu0 %v3539
    %3640 = vmatprep.subr.bf16.mxu0 %v3536
    %3641 = vmatpush1.bf16.msra.mxu0 %v3535
    %3642 = vmatprep.subr.bf16.mxu0 %v3532
    %3643 = vmatpush1.bf16.msra.mxu0 %v3531
    %3644 = vmatprep.subr.bf16.mxu0 %v3528
    %3645 = vmatpush1.bf16.msra.mxu0 %v3527
    %3646 = vmatprep.subr.bf16.mxu0 0
    %3647 = vmatpush2.bf16.msra.mxu0 0
    %3648 = vmatprep.subr.bf16.mxu0 0
    %3649 = vmatpush2.bf16.msra.mxu0 0
    %3650 = vmatprep.subr.bf16.mxu0 0
    %3651 = vmatpush2.bf16.msra.mxu0 0
    %3652 = vmatprep.subr.bf16.mxu0 0
    %3653 = vmatpush2.bf16.msra.mxu0 0
    %3654 = vmatprep.subr.bf16.mxu0 0
    %3655 = vmatpush2.bf16.msra.mxu0 0
    %3656 = vmatprep.subr.bf16.mxu0 0
    %3657 = vmatpush2.bf16.msra.mxu0 0
    %3658 = vmatprep.subr.bf16.mxu0 0
    %3659 = vmatpush2.bf16.msra.mxu0 0
    %3660 = vmatprep.subr.bf16.mxu0 0
    %3661 = vmatpush2.bf16.msra.mxu0 0
    %3662 = vmatprep.mubr.bf16.mxu0 0
    %3663 = vmatmul.mubr.bf16.gmra.mxu0 %v3396
    %v3664 = vpop.f32.mrf.mxu0
    %v3665 = vadd.f32 0.0, %v3664
    %v3666 = vpop.f32.mrf.mxu0
    %v3667 = vadd.f32 0.0, %v3666
    %v3668 = vpop.f32.mrf.mxu0
    %v3669 = vpop.f32.mrf.mxu0
    %3670 = vdwg.mxu0
    %v3671 = vadd.f32 %v3392, %v3624
    %v3672 = vadd.f32 %v3393, %v3626
    %v3673 = vadd.f32 %v3394, %v3665
    %v3674 = vadd.f32 %v3395, %v3667
    %v3675 = vmul.f32 %v3671, 0.5
    %v3676 = vtanh.pop %v3675
    %v3677 = vmul.f32 %v3676, 0.5
    %v3678 = vadd.f32 %v3677, 0.5
    %v3679 = vmul.f32 %v3672, 0.5
    %v3680 = vtanh.pop %v3679
    %v3681 = vmul.f32 %v3680, 0.5
    %v3682 = vadd.f32 %v3681, 0.5
    %v3683 = vtanh.pop %v3673
    %v3684 = vmul.f32 %v3674, 0.5
    %v3685 = vtanh.pop %v3684
    %v3686 = vmul.f32 %v3685, 0.5
    %v3687 = vadd.f32 %v3686, 0.5
    %v3688 = vmul.f32 %v3682, %v3388
    %v3689 = vmul.f32 %v3678, %v3683
    %v3690 = vadd.f32 %v3688, %v3689
    %v3691 = vtanh.pop %v3690
    %v3692 = vmul.f32 %v3687, %v3691
    %3693 = vst [vmem:[#allocation2 + $0x38] sm:$0xff] %v3692
    %v3694 = vld [vmem:[#allocation2] sm:$0xff]
    %v3695 = vld [vmem:[#allocation2 + $0x8] sm:$0xff]
    %v3696 = vld [vmem:[#allocation2 + $0x10] sm:$0xff]
    %v3697 = vld [vmem:[#allocation2 + $0x18] sm:$0xff]
    %v3698 = vld [vmem:[#allocation2 + $0x20] sm:$0xff]
    %v3699 = vld [vmem:[#allocation2 + $0x28] sm:$0xff]
    %v3700 = vld [vmem:[#allocation2 + $0x30] sm:$0xff]
    %v3701 = vld [vmem:[#allocation2 + $0x38] sm:$0xff]
    %v3702 = vpack.c.bf16 %v3695, %v3694
    %v3703 = vpack.c.bf16 %v3697, %v3696
    %v3704 = vpack.c.bf16 %v3699, %v3698
    %v3705 = vpack.c.bf16 %v3701, %v3700
    %v3706 = vld [vmem:[#allocation7] sm:$0xff]
    %v3707 = vld [vmem:[#allocation7 + $0x8] sm:$0xff]
    %v3708 = vld [vmem:[#allocation7 + $0x10] sm:$0xff]
    %v3709 = vld [vmem:[#allocation7 + $0x18] sm:$0xff]
    %v3710 = vld [vmem:[#allocation7 + $0x20] sm:$0xff]
    %v3711 = vld [vmem:[#allocation7 + $0x28] sm:$0xff]
    %v3712 = vld [vmem:[#allocation7 + $0x30] sm:$0xff]
    %v3713 = vld [vmem:[#allocation7 + $0x38] sm:$0xff]
    %v3714 = vld [vmem:[#allocation7 + $0x40] sm:$0xff]
    %v3715 = vld [vmem:[#allocation7 + $0x48] sm:$0xff]
    %v3716 = vld [vmem:[#allocation7 + $0x50] sm:$0xff]
    %v3717 = vld [vmem:[#allocation7 + $0x58] sm:$0xff]
    %v3718 = vld [vmem:[#allocation7 + $0x60] sm:$0xff]
    %v3719 = vld [vmem:[#allocation7 + $0x68] sm:$0xff]
    %v3720 = vld [vmem:[#allocation7 + $0x70] sm:$0xff]
    %v3721 = vld [vmem:[#allocation7 + $0x78] sm:$0xff]
    %v3722 = vld [vmem:[#allocation7 + $0x80] sm:$0xff]
    %v3723 = vld [vmem:[#allocation7 + $0x88] sm:$0xff]
    %v3724 = vld [vmem:[#allocation7 + $0x90] sm:$0xff]
    %v3725 = vld [vmem:[#allocation7 + $0x98] sm:$0xff]
    %v3726 = vld [vmem:[#allocation7 + $0xa0] sm:$0xff]
    %v3727 = vld [vmem:[#allocation7 + $0xa8] sm:$0xff]
    %v3728 = vld [vmem:[#allocation7 + $0xb0] sm:$0xff]
    %v3729 = vld [vmem:[#allocation7 + $0xb8] sm:$0xff]
    %v3730 = vld [vmem:[#allocation7 + $0xc0] sm:$0xff]
    %v3731 = vld [vmem:[#allocation7 + $0xc8] sm:$0xff]
    %v3732 = vld [vmem:[#allocation7 + $0xd0] sm:$0xff]
    %v3733 = vld [vmem:[#allocation7 + $0xd8] sm:$0xff]
    %v3734 = vld [vmem:[#allocation7 + $0xe0] sm:$0xff]
    %v3735 = vld [vmem:[#allocation7 + $0xe8] sm:$0xff]
    %v3736 = vld [vmem:[#allocation7 + $0xf0] sm:$0xff]
    %v3737 = vld [vmem:[#allocation7 + $0xf8] sm:$0xff]
    %v3738 = vld [vmem:[%s6] sm:$0xf]
    %v3740 = vlaneseq
    %v3741 = vshrl.u32 %v3740, 7
    %v3742 = vsub.s32 0, %v3741
    %v3743 = vrot.slane %v3738, %v3742
    %v3744 = vlaneseq
    %v3745 = vshrl.u32 %v3744, 7
    %v3746 = vsub.s32 1, %v3745
    %v3747 = vrot.slane %v3738, %v3746
    %v3748 = vlaneseq
    %v3749 = vshrl.u32 %v3748, 7
    %v3750 = vsub.s32 2, %v3749
    %v3751 = vrot.slane %v3738, %v3750
    %v3752 = vlaneseq
    %v3753 = vshrl.u32 %v3752, 7
    %v3754 = vsub.s32 3, %v3753
    %v3755 = vrot.slane %v3738, %v3754
    %v3792 = vunpack.c.l.b16 %v3706
    %v3793 = vunpack.c.h.b16 %v3706
    %v3794 = vunpack.c.l.b16 %v3707
    %v3795 = vunpack.c.h.b16 %v3707
    %v3796 = vunpack.c.l.b16 %v3708
    %v3797 = vunpack.c.h.b16 %v3708
    %v3798 = vunpack.c.l.b16 %v3709
    %v3799 = vunpack.c.h.b16 %v3709
    %v3800 = vunpack.c.l.b16 %v3710
    %v3801 = vunpack.c.h.b16 %v3710
    %v3802 = vunpack.c.l.b16 %v3711
    %v3803 = vunpack.c.h.b16 %v3711
    %v3804 = vunpack.c.l.b16 %v3712
    %v3805 = vunpack.c.h.b16 %v3712
    %v3806 = vunpack.c.l.b16 %v3713
    %v3807 = vunpack.c.h.b16 %v3713
    %v3808 = vunpack.c.l.b16 %v3714
    %v3809 = vunpack.c.h.b16 %v3714
    %v3810 = vunpack.c.l.b16 %v3715
    %v3811 = vunpack.c.h.b16 %v3715
    %v3812 = vunpack.c.l.b16 %v3716
    %v3813 = vunpack.c.h.b16 %v3716
    %v3814 = vunpack.c.l.b16 %v3717
    %v3815 = vunpack.c.h.b16 %v3717
    %v3816 = vunpack.c.l.b16 %v3718
    %v3817 = vunpack.c.h.b16 %v3718
    %v3818 = vunpack.c.l.b16 %v3719
    %v3819 = vunpack.c.h.b16 %v3719
    %v3820 = vunpack.c.l.b16 %v3720
    %v3821 = vunpack.c.h.b16 %v3720
    %v3822 = vunpack.c.l.b16 %v3721
    %v3823 = vunpack.c.h.b16 %v3721
    %v3824 = vunpack.c.l.b16 %v3722
    %v3825 = vunpack.c.h.b16 %v3722
    %v3826 = vunpack.c.l.b16 %v3723
    %v3827 = vunpack.c.h.b16 %v3723
    %v3828 = vunpack.c.l.b16 %v3724
    %v3829 = vunpack.c.h.b16 %v3724
    %v3830 = vunpack.c.l.b16 %v3725
    %v3831 = vunpack.c.h.b16 %v3725
    %v3832 = vunpack.c.l.b16 %v3726
    %v3833 = vunpack.c.h.b16 %v3726
    %v3834 = vunpack.c.l.b16 %v3727
    %v3835 = vunpack.c.h.b16 %v3727
    %v3836 = vunpack.c.l.b16 %v3728
    %v3837 = vunpack.c.h.b16 %v3728
    %v3838 = vunpack.c.l.b16 %v3729
    %v3839 = vunpack.c.h.b16 %v3729
    %v3840 = vunpack.c.l.b16 %v3730
    %v3841 = vunpack.c.h.b16 %v3730
    %v3842 = vunpack.c.l.b16 %v3731
    %v3843 = vunpack.c.h.b16 %v3731
    %v3844 = vunpack.c.l.b16 %v3732
    %v3845 = vunpack.c.h.b16 %v3732
    %v3846 = vunpack.c.l.b16 %v3733
    %v3847 = vunpack.c.h.b16 %v3733
    %v3848 = vunpack.c.l.b16 %v3734
    %v3849 = vunpack.c.h.b16 %v3734
    %v3850 = vunpack.c.l.b16 %v3735
    %v3851 = vunpack.c.h.b16 %v3735
    %v3852 = vunpack.c.l.b16 %v3736
    %v3853 = vunpack.c.h.b16 %v3736
    %v3854 = vunpack.c.l.b16 %v3737
    %v3855 = vunpack.c.h.b16 %v3737
    %v3856 = vpack.c.b16 %v3796, %v3792
    %v3857 = vpack.c.b16 %v3797, %v3793
    %v3858 = vpack.c.b16 %v3798, %v3794
    %v3859 = vpack.c.b16 %v3799, %v3795
    %v3860 = vpack.c.b16 %v3804, %v3800
    %v3861 = vpack.c.b16 %v3805, %v3801
    %v3862 = vpack.c.b16 %v3806, %v3802
    %v3863 = vpack.c.b16 %v3807, %v3803
    %v3864 = vpack.c.b16 %v3812, %v3808
    %v3865 = vpack.c.b16 %v3813, %v3809
    %v3866 = vpack.c.b16 %v3814, %v3810
    %v3867 = vpack.c.b16 %v3815, %v3811
    %v3868 = vpack.c.b16 %v3820, %v3816
    %v3869 = vpack.c.b16 %v3821, %v3817
    %v3870 = vpack.c.b16 %v3822, %v3818
    %v3871 = vpack.c.b16 %v3823, %v3819
    %v3872 = vpack.c.b16 %v3828, %v3824
    %v3873 = vpack.c.b16 %v3829, %v3825
    %v3874 = vpack.c.b16 %v3830, %v3826
    %v3875 = vpack.c.b16 %v3831, %v3827
    %v3876 = vpack.c.b16 %v3836, %v3832
    %v3877 = vpack.c.b16 %v3837, %v3833
    %v3878 = vpack.c.b16 %v3838, %v3834
    %v3879 = vpack.c.b16 %v3839, %v3835
    %v3880 = vpack.c.b16 %v3844, %v3840
    %v3881 = vpack.c.b16 %v3845, %v3841
    %v3882 = vpack.c.b16 %v3846, %v3842
    %v3883 = vpack.c.b16 %v3847, %v3843
    %v3884 = vpack.c.b16 %v3852, %v3848
    %v3885 = vpack.c.b16 %v3853, %v3849
    %v3886 = vpack.c.b16 %v3854, %v3850
    %v3887 = vpack.c.b16 %v3855, %v3851
    %3920 = vmatprep.subr.bf16.mxu0 %v3885
    %3921 = vmatpush1.bf16.msra.mxu0 %v3884
    %3922 = vmatprep.subr.bf16.mxu0 %v3881
    %3923 = vmatpush1.bf16.msra.mxu0 %v3880
    %3924 = vmatprep.subr.bf16.mxu0 %v3877
    %3925 = vmatpush1.bf16.msra.mxu0 %v3876
    %3926 = vmatprep.subr.bf16.mxu0 %v3873
    %3927 = vmatpush1.bf16.msra.mxu0 %v3872
    %3928 = vmatprep.subr.bf16.mxu0 %v3869
    %3929 = vmatpush1.bf16.msra.mxu0 %v3868
    %3930 = vmatprep.subr.bf16.mxu0 %v3865
    %3931 = vmatpush1.bf16.msra.mxu0 %v3864
    %3932 = vmatprep.subr.bf16.mxu0 %v3861
    %3933 = vmatpush1.bf16.msra.mxu0 %v3860
    %3934 = vmatprep.subr.bf16.mxu0 %v3857
    %3935 = vmatpush1.bf16.msra.mxu0 %v3856
    %3936 = vmatprep.subr.bf16.mxu0 0
    %3937 = vmatpush2.bf16.msra.mxu0 0
    %3938 = vmatprep.subr.bf16.mxu0 0
    %3939 = vmatpush2.bf16.msra.mxu0 0
    %3940 = vmatprep.subr.bf16.mxu0 0
    %3941 = vmatpush2.bf16.msra.mxu0 0
    %3942 = vmatprep.subr.bf16.mxu0 0
    %3943 = vmatpush2.bf16.msra.mxu0 0
    %3944 = vmatprep.subr.bf16.mxu0 0
    %3945 = vmatpush2.bf16.msra.mxu0 0
    %3946 = vmatprep.subr.bf16.mxu0 0
    %3947 = vmatpush2.bf16.msra.mxu0 0
    %3948 = vmatprep.subr.bf16.mxu0 0
    %3949 = vmatpush2.bf16.msra.mxu0 0
    %3950 = vmatprep.subr.bf16.mxu0 0
    %3951 = vmatpush2.bf16.msra.mxu0 0
    %3952 = vmatprep.mubr.bf16.mxu0 0
    %3953 = vmatmul.mubr.bf16.gmra.mxu0 %v3702
    %v3954 = vpop.f32.mrf.mxu0
    %v3955 = vadd.f32 %v3743, %v3954
    %v3956 = vpop.f32.mrf.mxu0
    %v3957 = vadd.f32 %v3747, %v3956
    %v3958 = vpop.f32.mrf.mxu0
    %v3959 = vadd.f32 %v3743, %v3958
    %v3960 = vpop.f32.mrf.mxu0
    %v3961 = vadd.f32 %v3747, %v3960
    %3962 = vmatprep.mubr.bf16.mxu0 0
    %3963 = vmatmul.mubr.bf16.gmra.mxu0 %v3703
    %v3964 = vpop.f32.mrf.mxu0
    %v3965 = vadd.f32 %v3743, %v3964
    %v3966 = vpop.f32.mrf.mxu0
    %v3967 = vadd.f32 %v3747, %v3966
    %v3968 = vpop.f32.mrf.mxu0
    %v3969 = vadd.f32 %v3743, %v3968
    %v3970 = vpop.f32.mrf.mxu0
    %v3971 = vadd.f32 %v3747, %v3970
    %3972 = vmatprep.mubr.bf16.mxu0 0
    %3973 = vmatmul.mubr.bf16.gmra.mxu0 %v3704
    %v3974 = vpop.f32.mrf.mxu0
    %v3975 = vadd.f32 %v3743, %v3974
    %v3976 = vpop.f32.mrf.mxu0
    %v3977 = vadd.f32 %v3747, %v3976
    %v3978 = vpop.f32.mrf.mxu0
    %v3979 = vadd.f32 %v3743, %v3978
    %v3980 = vpop.f32.mrf.mxu0
    %v3981 = vadd.f32 %v3747, %v3980
    %3982 = vmatprep.mubr.bf16.mxu0 0
    %3983 = vmatmul.mubr.bf16.gmra.mxu0 %v3705
    %v3984 = vpop.f32.mrf.mxu0
    %v3985 = vadd.f32 %v3743, %v3984
    %v3986 = vpop.f32.mrf.mxu0
    %v3987 = vadd.f32 %v3747, %v3986
    %v3988 = vpop.f32.mrf.mxu0
    %v3989 = vadd.f32 %v3743, %v3988
    %v3990 = vpop.f32.mrf.mxu0
    %v3991 = vadd.f32 %v3747, %v3990
    %3992 = vdwg.mxu0
    %3993 = vmatprep.subr.bf16.mxu0 %v3887
    %3994 = vmatpush1.bf16.msra.mxu0 %v3886
    %3995 = vmatprep.subr.bf16.mxu0 %v3883
    %3996 = vmatpush1.bf16.msra.mxu0 %v3882
    %3997 = vmatprep.subr.bf16.mxu0 %v3879
    %3998 = vmatpush1.bf16.msra.mxu0 %v3878
    %3999 = vmatprep.subr.bf16.mxu0 %v3875
    %4000 = vmatpush1.bf16.msra.mxu0 %v3874
    %4001 = vmatprep.subr.bf16.mxu0 %v3871
    %4002 = vmatpush1.bf16.msra.mxu0 %v3870
    %4003 = vmatprep.subr.bf16.mxu0 %v3867
    %4004 = vmatpush1.bf16.msra.mxu0 %v3866
    %4005 = vmatprep.subr.bf16.mxu0 %v3863
    %4006 = vmatpush1.bf16.msra.mxu0 %v3862
    %4007 = vmatprep.subr.bf16.mxu0 %v3859
    %4008 = vmatpush1.bf16.msra.mxu0 %v3858
    %4009 = vmatprep.subr.bf16.mxu0 0
    %4010 = vmatpush2.bf16.msra.mxu0 0
    %4011 = vmatprep.subr.bf16.mxu0 0
    %4012 = vmatpush2.bf16.msra.mxu0 0
    %4013 = vmatprep.subr.bf16.mxu0 0
    %4014 = vmatpush2.bf16.msra.mxu0 0
    %4015 = vmatprep.subr.bf16.mxu0 0
    %4016 = vmatpush2.bf16.msra.mxu0 0
    %4017 = vmatprep.subr.bf16.mxu0 0
    %4018 = vmatpush2.bf16.msra.mxu0 0
    %4019 = vmatprep.subr.bf16.mxu0 0
    %4020 = vmatpush2.bf16.msra.mxu0 0
    %4021 = vmatprep.subr.bf16.mxu0 0
    %4022 = vmatpush2.bf16.msra.mxu0 0
    %4023 = vmatprep.subr.bf16.mxu0 0
    %4024 = vmatpush2.bf16.msra.mxu0 0
    %4025 = vmatprep.mubr.bf16.mxu0 0
    %4026 = vmatmul.mubr.bf16.gmra.mxu0 %v3702
    %v4027 = vpop.f32.mrf.mxu0
    %v4028 = vadd.f32 %v3751, %v4027
    %v4029 = vpop.f32.mrf.mxu0
    %v4030 = vadd.f32 %v3755, %v4029
    %v4031 = vpop.f32.mrf.mxu0
    %v4032 = vadd.f32 %v3751, %v4031
    %v4033 = vpop.f32.mrf.mxu0
    %v4034 = vadd.f32 %v3755, %v4033
    %4035 = vmatprep.mubr.bf16.mxu0 0
    %4036 = vmatmul.mubr.bf16.gmra.mxu0 %v3703
    %v4037 = vpop.f32.mrf.mxu0
    %v4038 = vadd.f32 %v3751, %v4037
    %v4039 = vpop.f32.mrf.mxu0
    %v4040 = vadd.f32 %v3755, %v4039
    %v4041 = vpop.f32.mrf.mxu0
    %v4042 = vadd.f32 %v3751, %v4041
    %v4043 = vpop.f32.mrf.mxu0
    %v4044 = vadd.f32 %v3755, %v4043
    %4045 = vmatprep.mubr.bf16.mxu0 0
    %4046 = vmatmul.mubr.bf16.gmra.mxu0 %v3704
    %v4047 = vpop.f32.mrf.mxu0
    %v4048 = vadd.f32 %v3751, %v4047
    %v4049 = vpop.f32.mrf.mxu0
    %v4050 = vadd.f32 %v3755, %v4049
    %v4051 = vpop.f32.mrf.mxu0
    %v4052 = vadd.f32 %v3751, %v4051
    %v4053 = vpop.f32.mrf.mxu0
    %v4054 = vadd.f32 %v3755, %v4053
    %4055 = vmatprep.mubr.bf16.mxu0 0
    %4056 = vmatmul.mubr.bf16.gmra.mxu0 %v3705
    %v4057 = vpop.f32.mrf.mxu0
    %v4058 = vadd.f32 %v3751, %v4057
    %v4059 = vpop.f32.mrf.mxu0
    %v4060 = vadd.f32 %v3755, %v4059
    %v4061 = vpop.f32.mrf.mxu0
    %v4062 = vadd.f32 %v3751, %v4061
    %v4063 = vpop.f32.mrf.mxu0
    %v4064 = vadd.f32 %v3755, %v4063
    %4065 = vdwg.mxu0
    %4066 = vst [vmem:[#allocation3] sm:$0xff] %v3955
    %4067 = vst [vmem:[#allocation3 + $0x8] sm:$0xff] %v3957
    %4068 = vst [vmem:[#allocation3 + $0x10] sm:$0xff] %v4028
    %4069 = vst [vmem:[#allocation3 + $0x18] sm:$0xff] %v4030
    %4070 = vst [vmem:[#allocation3 + $0x20] sm:$0xff] %v3959
    %4071 = vst [vmem:[#allocation3 + $0x28] sm:$0xff] %v3961
    %4072 = vst [vmem:[#allocation3 + $0x30] sm:$0xff] %v4032
    %4073 = vst [vmem:[#allocation3 + $0x38] sm:$0xff] %v4034
    %4074 = vst [vmem:[#allocation3 + $0x40] sm:$0xff] %v3965
    %4075 = vst [vmem:[#allocation3 + $0x48] sm:$0xff] %v3967
    %4076 = vst [vmem:[#allocation3 + $0x50] sm:$0xff] %v4038
    %4077 = vst [vmem:[#allocation3 + $0x58] sm:$0xff] %v4040
    %4078 = vst [vmem:[#allocation3 + $0x60] sm:$0xff] %v3969
    %4079 = vst [vmem:[#allocation3 + $0x68] sm:$0xff] %v3971
    %4080 = vst [vmem:[#allocation3 + $0x70] sm:$0xff] %v4042
    %4081 = vst [vmem:[#allocation3 + $0x78] sm:$0xff] %v4044
    %4082 = vst [vmem:[#allocation3 + $0x80] sm:$0xff] %v3975
    %4083 = vst [vmem:[#allocation3 + $0x88] sm:$0xff] %v3977
    %4084 = vst [vmem:[#allocation3 + $0x90] sm:$0xff] %v4048
    %4085 = vst [vmem:[#allocation3 + $0x98] sm:$0xff] %v4050
    %4086 = vst [vmem:[#allocation3 + $0xa0] sm:$0xff] %v3979
    %4087 = vst [vmem:[#allocation3 + $0xa8] sm:$0xff] %v3981
    %4088 = vst [vmem:[#allocation3 + $0xb0] sm:$0xff] %v4052
    %4089 = vst [vmem:[#allocation3 + $0xb8] sm:$0xff] %v4054
    %4090 = vst [vmem:[#allocation3 + $0xc0] sm:$0xff] %v3985
    %4091 = vst [vmem:[#allocation3 + $0xc8] sm:$0xff] %v3987
    %4092 = vst [vmem:[#allocation3 + $0xd0] sm:$0xff] %v4058
    %4093 = vst [vmem:[#allocation3 + $0xd8] sm:$0xff] %v4060
    %4094 = vst [vmem:[#allocation3 + $0xe0] sm:$0xff] %v3989
    %4095 = vst [vmem:[#allocation3 + $0xe8] sm:$0xff] %v3991
    %4096 = vst [vmem:[#allocation3 + $0xf0] sm:$0xff] %v4062
    %4097 = vst [vmem:[#allocation3 + $0xf8] sm:$0xff] %v4064
    %v4098 = vld [vmem:[#allocation3] sm:$0xff]
    %v4099 = vld [vmem:[#allocation3 + $0x8] sm:$0xff]
    %v4100 = vld [vmem:[#allocation3 + $0x10] sm:$0xff]
    %v4101 = vld [vmem:[#allocation3 + $0x18] sm:$0xff]
    %v4102 = vld [vmem:[#allocation9] sm:$0xff]
    %v4103 = vld [vmem:[#allocation9 + $0x8] sm:$0xff]
    %v4104 = vld [vmem:[#allocation9 + $0x10] sm:$0xff]
    %v4105 = vld [vmem:[#allocation9 + $0x18] sm:$0xff]
    %v4106 = vld [vmem:[#allocation9 + $0x20] sm:$0xff]
    %v4107 = vld [vmem:[#allocation9 + $0x28] sm:$0xff]
    %v4108 = vld [vmem:[#allocation9 + $0x30] sm:$0xff]
    %v4109 = vld [vmem:[#allocation9 + $0x38] sm:$0xff]
    %v4110 = vld [vmem:[#allocation9 + $0x40] sm:$0xff]
    %v4111 = vld [vmem:[#allocation9 + $0x48] sm:$0xff]
    %v4112 = vld [vmem:[#allocation9 + $0x50] sm:$0xff]
    %v4113 = vld [vmem:[#allocation9 + $0x58] sm:$0xff]
    %v4114 = vld [vmem:[#allocation9 + $0x60] sm:$0xff]
    %v4115 = vld [vmem:[#allocation9 + $0x68] sm:$0xff]
    %v4116 = vld [vmem:[#allocation9 + $0x70] sm:$0xff]
    %v4117 = vld [vmem:[#allocation9 + $0x78] sm:$0xff]
    %v4118 = vld [vmem:[#allocation9 + $0x80] sm:$0xff]
    %v4119 = vld [vmem:[#allocation9 + $0x88] sm:$0xff]
    %v4120 = vld [vmem:[#allocation9 + $0x90] sm:$0xff]
    %v4121 = vld [vmem:[#allocation9 + $0x98] sm:$0xff]
    %v4122 = vld [vmem:[#allocation9 + $0xa0] sm:$0xff]
    %v4123 = vld [vmem:[#allocation9 + $0xa8] sm:$0xff]
    %v4124 = vld [vmem:[#allocation9 + $0xb0] sm:$0xff]
    %v4125 = vld [vmem:[#allocation9 + $0xb8] sm:$0xff]
    %v4126 = vld [vmem:[#allocation9 + $0xc0] sm:$0xff]
    %v4127 = vld [vmem:[#allocation9 + $0xc8] sm:$0xff]
    %v4128 = vld [vmem:[#allocation9 + $0xd0] sm:$0xff]
    %v4129 = vld [vmem:[#allocation9 + $0xd8] sm:$0xff]
    %v4130 = vld [vmem:[#allocation9 + $0xe0] sm:$0xff]
    %v4131 = vld [vmem:[#allocation9 + $0xe8] sm:$0xff]
    %v4132 = vld [vmem:[#allocation9 + $0xf0] sm:$0xff]
    %v4133 = vld [vmem:[#allocation9 + $0xf8] sm:$0xff]
    %v4166 = vunpack.c.l.b16 %v4102
    %v4167 = vunpack.c.h.b16 %v4102
    %v4168 = vunpack.c.l.b16 %v4103
    %v4169 = vunpack.c.h.b16 %v4103
    %v4170 = vunpack.c.l.b16 %v4104
    %v4171 = vunpack.c.h.b16 %v4104
    %v4172 = vunpack.c.l.b16 %v4105
    %v4173 = vunpack.c.h.b16 %v4105
    %v4174 = vunpack.c.l.b16 %v4106
    %v4175 = vunpack.c.h.b16 %v4106
    %v4176 = vunpack.c.l.b16 %v4107
    %v4177 = vunpack.c.h.b16 %v4107
    %v4178 = vunpack.c.l.b16 %v4108
    %v4179 = vunpack.c.h.b16 %v4108
    %v4180 = vunpack.c.l.b16 %v4109
    %v4181 = vunpack.c.h.b16 %v4109
    %v4182 = vunpack.c.l.b16 %v4110
    %v4183 = vunpack.c.h.b16 %v4110
    %v4184 = vunpack.c.l.b16 %v4111
    %v4185 = vunpack.c.h.b16 %v4111
    %v4186 = vunpack.c.l.b16 %v4112
    %v4187 = vunpack.c.h.b16 %v4112
    %v4188 = vunpack.c.l.b16 %v4113
    %v4189 = vunpack.c.h.b16 %v4113
    %v4190 = vunpack.c.l.b16 %v4114
    %v4191 = vunpack.c.h.b16 %v4114
    %v4192 = vunpack.c.l.b16 %v4115
    %v4193 = vunpack.c.h.b16 %v4115
    %v4194 = vunpack.c.l.b16 %v4116
    %v4195 = vunpack.c.h.b16 %v4116
    %v4196 = vunpack.c.l.b16 %v4117
    %v4197 = vunpack.c.h.b16 %v4117
    %v4198 = vunpack.c.l.b16 %v4118
    %v4199 = vunpack.c.h.b16 %v4118
    %v4200 = vunpack.c.l.b16 %v4119
    %v4201 = vunpack.c.h.b16 %v4119
    %v4202 = vunpack.c.l.b16 %v4120
    %v4203 = vunpack.c.h.b16 %v4120
    %v4204 = vunpack.c.l.b16 %v4121
    %v4205 = vunpack.c.h.b16 %v4121
    %v4206 = vunpack.c.l.b16 %v4122
    %v4207 = vunpack.c.h.b16 %v4122
    %v4208 = vunpack.c.l.b16 %v4123
    %v4209 = vunpack.c.h.b16 %v4123
    %v4210 = vunpack.c.l.b16 %v4124
    %v4211 = vunpack.c.h.b16 %v4124
    %v4212 = vunpack.c.l.b16 %v4125
    %v4213 = vunpack.c.h.b16 %v4125
    %v4214 = vunpack.c.l.b16 %v4126
    %v4215 = vunpack.c.h.b16 %v4126
    %v4216 = vunpack.c.l.b16 %v4127
    %v4217 = vunpack.c.h.b16 %v4127
    %v4218 = vunpack.c.l.b16 %v4128
    %v4219 = vunpack.c.h.b16 %v4128
    %v4220 = vunpack.c.l.b16 %v4129
    %v4221 = vunpack.c.h.b16 %v4129
    %v4222 = vunpack.c.l.b16 %v4130
    %v4223 = vunpack.c.h.b16 %v4130
    %v4224 = vunpack.c.l.b16 %v4131
    %v4225 = vunpack.c.h.b16 %v4131
    %v4226 = vunpack.c.l.b16 %v4132
    %v4227 = vunpack.c.h.b16 %v4132
    %v4228 = vunpack.c.l.b16 %v4133
    %v4229 = vunpack.c.h.b16 %v4133
    %v4230 = vpack.c.b16 %v4170, %v4166
    %v4231 = vpack.c.b16 %v4171, %v4167
    %v4232 = vpack.c.b16 %v4172, %v4168
    %v4233 = vpack.c.b16 %v4173, %v4169
    %v4234 = vpack.c.b16 %v4178, %v4174
    %v4235 = vpack.c.b16 %v4179, %v4175
    %v4236 = vpack.c.b16 %v4180, %v4176
    %v4237 = vpack.c.b16 %v4181, %v4177
    %v4238 = vpack.c.b16 %v4186, %v4182
    %v4239 = vpack.c.b16 %v4187, %v4183
    %v4240 = vpack.c.b16 %v4188, %v4184
    %v4241 = vpack.c.b16 %v4189, %v4185
    %v4242 = vpack.c.b16 %v4194, %v4190
    %v4243 = vpack.c.b16 %v4195, %v4191
    %v4244 = vpack.c.b16 %v4196, %v4192
    %v4245 = vpack.c.b16 %v4197, %v4193
    %v4246 = vpack.c.b16 %v4202, %v4198
    %v4247 = vpack.c.b16 %v4203, %v4199
    %v4248 = vpack.c.b16 %v4204, %v4200
    %v4249 = vpack.c.b16 %v4205, %v4201
    %v4250 = vpack.c.b16 %v4210, %v4206
    %v4251 = vpack.c.b16 %v4211, %v4207
    %v4252 = vpack.c.b16 %v4212, %v4208
    %v4253 = vpack.c.b16 %v4213, %v4209
    %v4254 = vpack.c.b16 %v4218, %v4214
    %v4255 = vpack.c.b16 %v4219, %v4215
    %v4256 = vpack.c.b16 %v4220, %v4216
    %v4257 = vpack.c.b16 %v4221, %v4217
    %v4258 = vpack.c.b16 %v4226, %v4222
    %v4259 = vpack.c.b16 %v4227, %v4223
    %v4260 = vpack.c.b16 %v4228, %v4224
    %v4261 = vpack.c.b16 %v4229, %v4225
    %4294 = vmatprep.subr.bf16.mxu0 %v4259
    %4295 = vmatpush1.bf16.msra.mxu0 %v4258
    %4296 = vmatprep.subr.bf16.mxu0 %v4255
    %4297 = vmatpush1.bf16.msra.mxu0 %v4254
    %4298 = vmatprep.subr.bf16.mxu0 %v4251
    %4299 = vmatpush1.bf16.msra.mxu0 %v4250
    %4300 = vmatprep.subr.bf16.mxu0 %v4247
    %4301 = vmatpush1.bf16.msra.mxu0 %v4246
    %4302 = vmatprep.subr.bf16.mxu0 %v4243
    %4303 = vmatpush1.bf16.msra.mxu0 %v4242
    %4304 = vmatprep.subr.bf16.mxu0 %v4239
    %4305 = vmatpush1.bf16.msra.mxu0 %v4238
    %4306 = vmatprep.subr.bf16.mxu0 %v4235
    %4307 = vmatpush1.bf16.msra.mxu0 %v4234
    %4308 = vmatprep.subr.bf16.mxu0 %v4231
    %4309 = vmatpush1.bf16.msra.mxu0 %v4230
    %4310 = vmatprep.subr.bf16.mxu0 0
    %4311 = vmatpush2.bf16.msra.mxu0 0
    %4312 = vmatprep.subr.bf16.mxu0 0
    %4313 = vmatpush2.bf16.msra.mxu0 0
    %4314 = vmatprep.subr.bf16.mxu0 0
    %4315 = vmatpush2.bf16.msra.mxu0 0
    %4316 = vmatprep.subr.bf16.mxu0 0
    %4317 = vmatpush2.bf16.msra.mxu0 0
    %4318 = vmatprep.subr.bf16.mxu0 0
    %4319 = vmatpush2.bf16.msra.mxu0 0
    %4320 = vmatprep.subr.bf16.mxu0 0
    %4321 = vmatpush2.bf16.msra.mxu0 0
    %4322 = vmatprep.subr.bf16.mxu0 0
    %4323 = vmatpush2.bf16.msra.mxu0 0
    %4324 = vmatprep.subr.bf16.mxu0 0
    %4325 = vmatpush2.bf16.msra.mxu0 0
    %4326 = vmatprep.mubr.bf16.mxu0 0
    %4327 = vmatmul.mubr.bf16.gmra.mxu0 0
    %v4328 = vpop.f32.mrf.mxu0
    %v4329 = vadd.f32 0.0, %v4328
    %v4330 = vpop.f32.mrf.mxu0
    %v4331 = vadd.f32 0.0, %v4330
    %v4332 = vpop.f32.mrf.mxu0
    %v4333 = vpop.f32.mrf.mxu0
    %4334 = vdwg.mxu0
    %4335 = vmatprep.subr.bf16.mxu0 %v4261
    %4336 = vmatpush1.bf16.msra.mxu0 %v4260
    %4337 = vmatprep.subr.bf16.mxu0 %v4257
    %4338 = vmatpush1.bf16.msra.mxu0 %v4256
    %4339 = vmatprep.subr.bf16.mxu0 %v4253
    %4340 = vmatpush1.bf16.msra.mxu0 %v4252
    %4341 = vmatprep.subr.bf16.mxu0 %v4249
    %4342 = vmatpush1.bf16.msra.mxu0 %v4248
    %4343 = vmatprep.subr.bf16.mxu0 %v4245
    %4344 = vmatpush1.bf16.msra.mxu0 %v4244
    %4345 = vmatprep.subr.bf16.mxu0 %v4241
    %4346 = vmatpush1.bf16.msra.mxu0 %v4240
    %4347 = vmatprep.subr.bf16.mxu0 %v4237
    %4348 = vmatpush1.bf16.msra.mxu0 %v4236
    %4349 = vmatprep.subr.bf16.mxu0 %v4233
    %4350 = vmatpush1.bf16.msra.mxu0 %v4232
    %4351 = vmatprep.subr.bf16.mxu0 0
    %4352 = vmatpush2.bf16.msra.mxu0 0
    %4353 = vmatprep.subr.bf16.mxu0 0
    %4354 = vmatpush2.bf16.msra.mxu0 0
    %4355 = vmatprep.subr.bf16.mxu0 0
    %4356 = vmatpush2.bf16.msra.mxu0 0
    %4357 = vmatprep.subr.bf16.mxu0 0
    %4358 = vmatpush2.bf16.msra.mxu0 0
    %4359 = vmatprep.subr.bf16.mxu0 0
    %4360 = vmatpush2.bf16.msra.mxu0 0
    %4361 = vmatprep.subr.bf16.mxu0 0
    %4362 = vmatpush2.bf16.msra.mxu0 0
    %4363 = vmatprep.subr.bf16.mxu0 0
    %4364 = vmatpush2.bf16.msra.mxu0 0
    %4365 = vmatprep.subr.bf16.mxu0 0
    %4366 = vmatpush2.bf16.msra.mxu0 0
    %4367 = vmatprep.mubr.bf16.mxu0 0
    %4368 = vmatmul.mubr.bf16.gmra.mxu0 0
    %v4369 = vpop.f32.mrf.mxu0
    %v4370 = vadd.f32 0.0, %v4369
    %v4371 = vpop.f32.mrf.mxu0
    %v4372 = vadd.f32 0.0, %v4371
    %v4373 = vpop.f32.mrf.mxu0
    %v4374 = vpop.f32.mrf.mxu0
    %4375 = vdwg.mxu0
    %v4376 = vadd.f32 %v4098, %v4329
    %v4377 = vadd.f32 %v4099, %v4331
    %v4378 = vadd.f32 %v4100, %v4370
    %v4379 = vadd.f32 %v4101, %v4372
    %v4380 = vmul.f32 %v4376, 0.5
    %v4381 = vtanh.pop %v4380
    %v4382 = vmul.f32 %v4381, 0.5
    %v4383 = vadd.f32 %v4382, 0.5
    %v4384 = vmul.f32 %v4377, 0.5
    %v4385 = vtanh.pop %v4384
    %v4386 = vmul.f32 %v4385, 0.5
    %v4387 = vadd.f32 %v4386, 0.5
    %v4388 = vtanh.pop %v4378
    %v4389 = vmul.f32 %v4379, 0.5
    %v4390 = vtanh.pop %v4389
    %v4391 = vmul.f32 %v4390, 0.5
    %v4392 = vadd.f32 %v4391, 0.5
    %v4393 = vmul.f32 %v4387, 0.0
    %v4394 = vmul.f32 %v4383, %v4388
    %v4395 = vadd.f32 %v4393, %v4394
    %v4396 = vtanh.pop %v4395
    %v4397 = vmul.f32 %v4392, %v4396
    %4398 = vst [vmem:[#allocation2] sm:$0xff] %v4397
    %v4399 = vld [vmem:[#allocation3 + $0x20] sm:$0xff]
    %v4400 = vld [vmem:[#allocation3 + $0x28] sm:$0xff]
    %v4401 = vld [vmem:[#allocation3 + $0x30] sm:$0xff]
    %v4402 = vld [vmem:[#allocation3 + $0x38] sm:$0xff]
    %v4403 = vpack.c.bf16 %v4397, %v4397
    %v4404 = vld [vmem:[#allocation9] sm:$0xff]
    %v4405 = vld [vmem:[#allocation9 + $0x8] sm:$0xff]
    %v4406 = vld [vmem:[#allocation9 + $0x10] sm:$0xff]
    %v4407 = vld [vmem:[#allocation9 + $0x18] sm:$0xff]
    %v4408 = vld [vmem:[#allocation9 + $0x20] sm:$0xff]
    %v4409 = vld [vmem:[#allocation9 + $0x28] sm:$0xff]
    %v4410 = vld [vmem:[#allocation9 + $0x30] sm:$0xff]
    %v4411 = vld [vmem:[#allocation9 + $0x38] sm:$0xff]
    %v4412 = vld [vmem:[#allocation9 + $0x40] sm:$0xff]
    %v4413 = vld [vmem:[#allocation9 + $0x48] sm:$0xff]
    %v4414 = vld [vmem:[#allocation9 + $0x50] sm:$0xff]
    %v4415 = vld [vmem:[#allocation9 + $0x58] sm:$0xff]
    %v4416 = vld [vmem:[#allocation9 + $0x60] sm:$0xff]
    %v4417 = vld [vmem:[#allocation9 + $0x68] sm:$0xff]
    %v4418 = vld [vmem:[#allocation9 + $0x70] sm:$0xff]
    %v4419 = vld [vmem:[#allocation9 + $0x78] sm:$0xff]
    %v4420 = vld [vmem:[#allocation9 + $0x80] sm:$0xff]
    %v4421 = vld [vmem:[#allocation9 + $0x88] sm:$0xff]
    %v4422 = vld [vmem:[#allocation9 + $0x90] sm:$0xff]
    %v4423 = vld [vmem:[#allocation9 + $0x98] sm:$0xff]
    %v4424 = vld [vmem:[#allocation9 + $0xa0] sm:$0xff]
    %v4425 = vld [vmem:[#allocation9 + $0xa8] sm:$0xff]
    %v4426 = vld [vmem:[#allocation9 + $0xb0] sm:$0xff]
    %v4427 = vld [vmem:[#allocation9 + $0xb8] sm:$0xff]
    %v4428 = vld [vmem:[#allocation9 + $0xc0] sm:$0xff]
    %v4429 = vld [vmem:[#allocation9 + $0xc8] sm:$0xff]
    %v4430 = vld [vmem:[#allocation9 + $0xd0] sm:$0xff]
    %v4431 = vld [vmem:[#allocation9 + $0xd8] sm:$0xff]
    %v4432 = vld [vmem:[#allocation9 + $0xe0] sm:$0xff]
    %v4433 = vld [vmem:[#allocation9 + $0xe8] sm:$0xff]
    %v4434 = vld [vmem:[#allocation9 + $0xf0] sm:$0xff]
    %v4435 = vld [vmem:[#allocation9 + $0xf8] sm:$0xff]
    %v4468 = vunpack.c.l.b16 %v4404
    %v4469 = vunpack.c.h.b16 %v4404
    %v4470 = vunpack.c.l.b16 %v4405
    %v4471 = vunpack.c.h.b16 %v4405
    %v4472 = vunpack.c.l.b16 %v4406
    %v4473 = vunpack.c.h.b16 %v4406
    %v4474 = vunpack.c.l.b16 %v4407
    %v4475 = vunpack.c.h.b16 %v4407
    %v4476 = vunpack.c.l.b16 %v4408
    %v4477 = vunpack.c.h.b16 %v4408
    %v4478 = vunpack.c.l.b16 %v4409
    %v4479 = vunpack.c.h.b16 %v4409
    %v4480 = vunpack.c.l.b16 %v4410
    %v4481 = vunpack.c.h.b16 %v4410
    %v4482 = vunpack.c.l.b16 %v4411
    %v4483 = vunpack.c.h.b16 %v4411
    %v4484 = vunpack.c.l.b16 %v4412
    %v4485 = vunpack.c.h.b16 %v4412
    %v4486 = vunpack.c.l.b16 %v4413
    %v4487 = vunpack.c.h.b16 %v4413
    %v4488 = vunpack.c.l.b16 %v4414
    %v4489 = vunpack.c.h.b16 %v4414
    %v4490 = vunpack.c.l.b16 %v4415
    %v4491 = vunpack.c.h.b16 %v4415
    %v4492 = vunpack.c.l.b16 %v4416
    %v4493 = vunpack.c.h.b16 %v4416
    %v4494 = vunpack.c.l.b16 %v4417
    %v4495 = vunpack.c.h.b16 %v4417
    %v4496 = vunpack.c.l.b16 %v4418
    %v4497 = vunpack.c.h.b16 %v4418
    %v4498 = vunpack.c.l.b16 %v4419
    %v4499 = vunpack.c.h.b16 %v4419
    %v4500 = vunpack.c.l.b16 %v4420
    %v4501 = vunpack.c.h.b16 %v4420
    %v4502 = vunpack.c.l.b16 %v4421
    %v4503 = vunpack.c.h.b16 %v4421
    %v4504 = vunpack.c.l.b16 %v4422
    %v4505 = vunpack.c.h.b16 %v4422
    %v4506 = vunpack.c.l.b16 %v4423
    %v4507 = vunpack.c.h.b16 %v4423
    %v4508 = vunpack.c.l.b16 %v4424
    %v4509 = vunpack.c.h.b16 %v4424
    %v4510 = vunpack.c.l.b16 %v4425
    %v4511 = vunpack.c.h.b16 %v4425
    %v4512 = vunpack.c.l.b16 %v4426
    %v4513 = vunpack.c.h.b16 %v4426
    %v4514 = vunpack.c.l.b16 %v4427
    %v4515 = vunpack.c.h.b16 %v4427
    %v4516 = vunpack.c.l.b16 %v4428
    %v4517 = vunpack.c.h.b16 %v4428
    %v4518 = vunpack.c.l.b16 %v4429
    %v4519 = vunpack.c.h.b16 %v4429
    %v4520 = vunpack.c.l.b16 %v4430
    %v4521 = vunpack.c.h.b16 %v4430
    %v4522 = vunpack.c.l.b16 %v4431
    %v4523 = vunpack.c.h.b16 %v4431
    %v4524 = vunpack.c.l.b16 %v4432
    %v4525 = vunpack.c.h.b16 %v4432
    %v4526 = vunpack.c.l.b16 %v4433
    %v4527 = vunpack.c.h.b16 %v4433
    %v4528 = vunpack.c.l.b16 %v4434
    %v4529 = vunpack.c.h.b16 %v4434
    %v4530 = vunpack.c.l.b16 %v4435
    %v4531 = vunpack.c.h.b16 %v4435
    %v4532 = vpack.c.b16 %v4472, %v4468
    %v4533 = vpack.c.b16 %v4473, %v4469
    %v4534 = vpack.c.b16 %v4474, %v4470
    %v4535 = vpack.c.b16 %v4475, %v4471
    %v4536 = vpack.c.b16 %v4480, %v4476
    %v4537 = vpack.c.b16 %v4481, %v4477
    %v4538 = vpack.c.b16 %v4482, %v4478
    %v4539 = vpack.c.b16 %v4483, %v4479
    %v4540 = vpack.c.b16 %v4488, %v4484
    %v4541 = vpack.c.b16 %v4489, %v4485
    %v4542 = vpack.c.b16 %v4490, %v4486
    %v4543 = vpack.c.b16 %v4491, %v4487
    %v4544 = vpack.c.b16 %v4496, %v4492
    %v4545 = vpack.c.b16 %v4497, %v4493
    %v4546 = vpack.c.b16 %v4498, %v4494
    %v4547 = vpack.c.b16 %v4499, %v4495
    %v4548 = vpack.c.b16 %v4504, %v4500
    %v4549 = vpack.c.b16 %v4505, %v4501
    %v4550 = vpack.c.b16 %v4506, %v4502
    %v4551 = vpack.c.b16 %v4507, %v4503
    %v4552 = vpack.c.b16 %v4512, %v4508
    %v4553 = vpack.c.b16 %v4513, %v4509
    %v4554 = vpack.c.b16 %v4514, %v4510
    %v4555 = vpack.c.b16 %v4515, %v4511
    %v4556 = vpack.c.b16 %v4520, %v4516
    %v4557 = vpack.c.b16 %v4521, %v4517
    %v4558 = vpack.c.b16 %v4522, %v4518
    %v4559 = vpack.c.b16 %v4523, %v4519
    %v4560 = vpack.c.b16 %v4528, %v4524
    %v4561 = vpack.c.b16 %v4529, %v4525
    %v4562 = vpack.c.b16 %v4530, %v4526
    %v4563 = vpack.c.b16 %v4531, %v4527
    %4596 = vmatprep.subr.bf16.mxu0 %v4561
    %4597 = vmatpush1.bf16.msra.mxu0 %v4560
    %4598 = vmatprep.subr.bf16.mxu0 %v4557
    %4599 = vmatpush1.bf16.msra.mxu0 %v4556
    %4600 = vmatprep.subr.bf16.mxu0 %v4553
    %4601 = vmatpush1.bf16.msra.mxu0 %v4552
    %4602 = vmatprep.subr.bf16.mxu0 %v4549
    %4603 = vmatpush1.bf16.msra.mxu0 %v4548
    %4604 = vmatprep.subr.bf16.mxu0 %v4545
    %4605 = vmatpush1.bf16.msra.mxu0 %v4544
    %4606 = vmatprep.subr.bf16.mxu0 %v4541
    %4607 = vmatpush1.bf16.msra.mxu0 %v4540
    %4608 = vmatprep.subr.bf16.mxu0 %v4537
    %4609 = vmatpush1.bf16.msra.mxu0 %v4536
    %4610 = vmatprep.subr.bf16.mxu0 %v4533
    %4611 = vmatpush1.bf16.msra.mxu0 %v4532
    %4612 = vmatprep.subr.bf16.mxu0 0
    %4613 = vmatpush2.bf16.msra.mxu0 0
    %4614 = vmatprep.subr.bf16.mxu0 0
    %4615 = vmatpush2.bf16.msra.mxu0 0
    %4616 = vmatprep.subr.bf16.mxu0 0
    %4617 = vmatpush2.bf16.msra.mxu0 0
    %4618 = vmatprep.subr.bf16.mxu0 0
    %4619 = vmatpush2.bf16.msra.mxu0 0
    %4620 = vmatprep.subr.bf16.mxu0 0
    %4621 = vmatpush2.bf16.msra.mxu0 0
    %4622 = vmatprep.subr.bf16.mxu0 0
    %4623 = vmatpush2.bf16.msra.mxu0 0
    %4624 = vmatprep.subr.bf16.mxu0 0
    %4625 = vmatpush2.bf16.msra.mxu0 0
    %4626 = vmatprep.subr.bf16.mxu0 0
    %4627 = vmatpush2.bf16.msra.mxu0 0
    %4628 = vmatprep.mubr.bf16.mxu0 0
    %4629 = vmatmul.mubr.bf16.gmra.mxu0 %v4403
    %v4630 = vpop.f32.mrf.mxu0
    %v4631 = vadd.f32 0.0, %v4630
    %v4632 = vpop.f32.mrf.mxu0
    %v4633 = vadd.f32 0.0, %v4632
    %v4634 = vpop.f32.mrf.mxu0
    %v4635 = vpop.f32.mrf.mxu0
    %4636 = vdwg.mxu0
    %4637 = vmatprep.subr.bf16.mxu0 %v4563
    %4638 = vmatpush1.bf16.msra.mxu0 %v4562
    %4639 = vmatprep.subr.bf16.mxu0 %v4559
    %4640 = vmatpush1.bf16.msra.mxu0 %v4558
    %4641 = vmatprep.subr.bf16.mxu0 %v4555
    %4642 = vmatpush1.bf16.msra.mxu0 %v4554
    %4643 = vmatprep.subr.bf16.mxu0 %v4551
    %4644 = vmatpush1.bf16.msra.mxu0 %v4550
    %4645 = vmatprep.subr.bf16.mxu0 %v4547
    %4646 = vmatpush1.bf16.msra.mxu0 %v4546
    %4647 = vmatprep.subr.bf16.mxu0 %v4543
    %4648 = vmatpush1.bf16.msra.mxu0 %v4542
    %4649 = vmatprep.subr.bf16.mxu0 %v4539
    %4650 = vmatpush1.bf16.msra.mxu0 %v4538
    %4651 = vmatprep.subr.bf16.mxu0 %v4535
    %4652 = vmatpush1.bf16.msra.mxu0 %v4534
    %4653 = vmatprep.subr.bf16.mxu0 0
    %4654 = vmatpush2.bf16.msra.mxu0 0
    %4655 = vmatprep.subr.bf16.mxu0 0
    %4656 = vmatpush2.bf16.msra.mxu0 0
    %4657 = vmatprep.subr.bf16.mxu0 0
    %4658 = vmatpush2.bf16.msra.mxu0 0
    %4659 = vmatprep.subr.bf16.mxu0 0
    %4660 = vmatpush2.bf16.msra.mxu0 0
    %4661 = vmatprep.subr.bf16.mxu0 0
    %4662 = vmatpush2.bf16.msra.mxu0 0
    %4663 = vmatprep.subr.bf16.mxu0 0
    %4664 = vmatpush2.bf16.msra.mxu0 0
    %4665 = vmatprep.subr.bf16.mxu0 0
    %4666 = vmatpush2.bf16.msra.mxu0 0
    %4667 = vmatprep.subr.bf16.mxu0 0
    %4668 = vmatpush2.bf16.msra.mxu0 0
    %4669 = vmatprep.mubr.bf16.mxu0 0
    %4670 = vmatmul.mubr.bf16.gmra.mxu0 %v4403
    %v4671 = vpop.f32.mrf.mxu0
    %v4672 = vadd.f32 0.0, %v4671
    %v4673 = vpop.f32.mrf.mxu0
    %v4674 = vadd.f32 0.0, %v4673
    %v4675 = vpop.f32.mrf.mxu0
    %v4676 = vpop.f32.mrf.mxu0
    %4677 = vdwg.mxu0
    %v4678 = vadd.f32 %v4399, %v4631
    %v4679 = vadd.f32 %v4400, %v4633
    %v4680 = vadd.f32 %v4401, %v4672
    %v4681 = vadd.f32 %v4402, %v4674
    %v4682 = vmul.f32 %v4678, 0.5
    %v4683 = vtanh.pop %v4682
    %v4684 = vmul.f32 %v4683, 0.5
    %v4685 = vadd.f32 %v4684, 0.5
    %v4686 = vmul.f32 %v4679, 0.5
    %v4687 = vtanh.pop %v4686
    %v4688 = vmul.f32 %v4687, 0.5
    %v4689 = vadd.f32 %v4688, 0.5
    %v4690 = vtanh.pop %v4680
    %v4691 = vmul.f32 %v4681, 0.5
    %v4692 = vtanh.pop %v4691
    %v4693 = vmul.f32 %v4692, 0.5
    %v4694 = vadd.f32 %v4693, 0.5
    %v4695 = vmul.f32 %v4689, %v4395
    %v4696 = vmul.f32 %v4685, %v4690
    %v4697 = vadd.f32 %v4695, %v4696
    %v4698 = vtanh.pop %v4697
    %v4699 = vmul.f32 %v4694, %v4698
    %4700 = vst [vmem:[#allocation2 + $0x8] sm:$0xff] %v4699
    %v4701 = vld [vmem:[#allocation3 + $0x40] sm:$0xff]
    %v4702 = vld [vmem:[#allocation3 + $0x48] sm:$0xff]
    %v4703 = vld [vmem:[#allocation3 + $0x50] sm:$0xff]
    %v4704 = vld [vmem:[#allocation3 + $0x58] sm:$0xff]
    %v4705 = vpack.c.bf16 %v4699, %v4699
    %v4706 = vld [vmem:[#allocation9] sm:$0xff]
    %v4707 = vld [vmem:[#allocation9 + $0x8] sm:$0xff]
    %v4708 = vld [vmem:[#allocation9 + $0x10] sm:$0xff]
    %v4709 = vld [vmem:[#allocation9 + $0x18] sm:$0xff]
    %v4710 = vld [vmem:[#allocation9 + $0x20] sm:$0xff]
    %v4711 = vld [vmem:[#allocation9 + $0x28] sm:$0xff]
    %v4712 = vld [vmem:[#allocation9 + $0x30] sm:$0xff]
    %v4713 = vld [vmem:[#allocation9 + $0x38] sm:$0xff]
    %v4714 = vld [vmem:[#allocation9 + $0x40] sm:$0xff]
    %v4715 = vld [vmem:[#allocation9 + $0x48] sm:$0xff]
    %v4716 = vld [vmem:[#allocation9 + $0x50] sm:$0xff]
    %v4717 = vld [vmem:[#allocation9 + $0x58] sm:$0xff]
    %v4718 = vld [vmem:[#allocation9 + $0x60] sm:$0xff]
    %v4719 = vld [vmem:[#allocation9 + $0x68] sm:$0xff]
    %v4720 = vld [vmem:[#allocation9 + $0x70] sm:$0xff]
    %v4721 = vld [vmem:[#allocation9 + $0x78] sm:$0xff]
    %v4722 = vld [vmem:[#allocation9 + $0x80] sm:$0xff]
    %v4723 = vld [vmem:[#allocation9 + $0x88] sm:$0xff]
    %v4724 = vld [vmem:[#allocation9 + $0x90] sm:$0xff]
    %v4725 = vld [vmem:[#allocation9 + $0x98] sm:$0xff]
    %v4726 = vld [vmem:[#allocation9 + $0xa0] sm:$0xff]
    %v4727 = vld [vmem:[#allocation9 + $0xa8] sm:$0xff]
    %v4728 = vld [vmem:[#allocation9 + $0xb0] sm:$0xff]
    %v4729 = vld [vmem:[#allocation9 + $0xb8] sm:$0xff]
    %v4730 = vld [vmem:[#allocation9 + $0xc0] sm:$0xff]
    %v4731 = vld [vmem:[#allocation9 + $0xc8] sm:$0xff]
    %v4732 = vld [vmem:[#allocation9 + $0xd0] sm:$0xff]
    %v4733 = vld [vmem:[#allocation9 + $0xd8] sm:$0xff]
    %v4734 = vld [vmem:[#allocation9 + $0xe0] sm:$0xff]
    %v4735 = vld [vmem:[#allocation9 + $0xe8] sm:$0xff]
    %v4736 = vld [vmem:[#allocation9 + $0xf0] sm:$0xff]
    %v4737 = vld [vmem:[#allocation9 + $0xf8] sm:$0xff]
    %v4770 = vunpack.c.l.b16 %v4706
    %v4771 = vunpack.c.h.b16 %v4706
    %v4772 = vunpack.c.l.b16 %v4707
    %v4773 = vunpack.c.h.b16 %v4707
    %v4774 = vunpack.c.l.b16 %v4708
    %v4775 = vunpack.c.h.b16 %v4708
    %v4776 = vunpack.c.l.b16 %v4709
    %v4777 = vunpack.c.h.b16 %v4709
    %v4778 = vunpack.c.l.b16 %v4710
    %v4779 = vunpack.c.h.b16 %v4710
    %v4780 = vunpack.c.l.b16 %v4711
    %v4781 = vunpack.c.h.b16 %v4711
    %v4782 = vunpack.c.l.b16 %v4712
    %v4783 = vunpack.c.h.b16 %v4712
    %v4784 = vunpack.c.l.b16 %v4713
    %v4785 = vunpack.c.h.b16 %v4713
    %v4786 = vunpack.c.l.b16 %v4714
    %v4787 = vunpack.c.h.b16 %v4714
    %v4788 = vunpack.c.l.b16 %v4715
    %v4789 = vunpack.c.h.b16 %v4715
    %v4790 = vunpack.c.l.b16 %v4716
    %v4791 = vunpack.c.h.b16 %v4716
    %v4792 = vunpack.c.l.b16 %v4717
    %v4793 = vunpack.c.h.b16 %v4717
    %v4794 = vunpack.c.l.b16 %v4718
    %v4795 = vunpack.c.h.b16 %v4718
    %v4796 = vunpack.c.l.b16 %v4719
    %v4797 = vunpack.c.h.b16 %v4719
    %v4798 = vunpack.c.l.b16 %v4720
    %v4799 = vunpack.c.h.b16 %v4720
    %v4800 = vunpack.c.l.b16 %v4721
    %v4801 = vunpack.c.h.b16 %v4721
    %v4802 = vunpack.c.l.b16 %v4722
    %v4803 = vunpack.c.h.b16 %v4722
    %v4804 = vunpack.c.l.b16 %v4723
    %v4805 = vunpack.c.h.b16 %v4723
    %v4806 = vunpack.c.l.b16 %v4724
    %v4807 = vunpack.c.h.b16 %v4724
    %v4808 = vunpack.c.l.b16 %v4725
    %v4809 = vunpack.c.h.b16 %v4725
    %v4810 = vunpack.c.l.b16 %v4726
    %v4811 = vunpack.c.h.b16 %v4726
    %v4812 = vunpack.c.l.b16 %v4727
    %v4813 = vunpack.c.h.b16 %v4727
    %v4814 = vunpack.c.l.b16 %v4728
    %v4815 = vunpack.c.h.b16 %v4728
    %v4816 = vunpack.c.l.b16 %v4729
    %v4817 = vunpack.c.h.b16 %v4729
    %v4818 = vunpack.c.l.b16 %v4730
    %v4819 = vunpack.c.h.b16 %v4730
    %v4820 = vunpack.c.l.b16 %v4731
    %v4821 = vunpack.c.h.b16 %v4731
    %v4822 = vunpack.c.l.b16 %v4732
    %v4823 = vunpack.c.h.b16 %v4732
    %v4824 = vunpack.c.l.b16 %v4733
    %v4825 = vunpack.c.h.b16 %v4733
    %v4826 = vunpack.c.l.b16 %v4734
    %v4827 = vunpack.c.h.b16 %v4734
    %v4828 = vunpack.c.l.b16 %v4735
    %v4829 = vunpack.c.h.b16 %v4735
    %v4830 = vunpack.c.l.b16 %v4736
    %v4831 = vunpack.c.h.b16 %v4736
    %v4832 = vunpack.c.l.b16 %v4737
    %v4833 = vunpack.c.h.b16 %v4737
    %v4834 = vpack.c.b16 %v4774, %v4770
    %v4835 = vpack.c.b16 %v4775, %v4771
    %v4836 = vpack.c.b16 %v4776, %v4772
    %v4837 = vpack.c.b16 %v4777, %v4773
    %v4838 = vpack.c.b16 %v4782, %v4778
    %v4839 = vpack.c.b16 %v4783, %v4779
    %v4840 = vpack.c.b16 %v4784, %v4780
    %v4841 = vpack.c.b16 %v4785, %v4781
    %v4842 = vpack.c.b16 %v4790, %v4786
    %v4843 = vpack.c.b16 %v4791, %v4787
    %v4844 = vpack.c.b16 %v4792, %v4788
    %v4845 = vpack.c.b16 %v4793, %v4789
    %v4846 = vpack.c.b16 %v4798, %v4794
    %v4847 = vpack.c.b16 %v4799, %v4795
    %v4848 = vpack.c.b16 %v4800, %v4796
    %v4849 = vpack.c.b16 %v4801, %v4797
    %v4850 = vpack.c.b16 %v4806, %v4802
    %v4851 = vpack.c.b16 %v4807, %v4803
    %v4852 = vpack.c.b16 %v4808, %v4804
    %v4853 = vpack.c.b16 %v4809, %v4805
    %v4854 = vpack.c.b16 %v4814, %v4810
    %v4855 = vpack.c.b16 %v4815, %v4811
    %v4856 = vpack.c.b16 %v4816, %v4812
    %v4857 = vpack.c.b16 %v4817, %v4813
    %v4858 = vpack.c.b16 %v4822, %v4818
    %v4859 = vpack.c.b16 %v4823, %v4819
    %v4860 = vpack.c.b16 %v4824, %v4820
    %v4861 = vpack.c.b16 %v4825, %v4821
    %v4862 = vpack.c.b16 %v4830, %v4826
    %v4863 = vpack.c.b16 %v4831, %v4827
    %v4864 = vpack.c.b16 %v4832, %v4828
    %v4865 = vpack.c.b16 %v4833, %v4829
    %4898 = vmatprep.subr.bf16.mxu0 %v4863
    %4899 = vmatpush1.bf16.msra.mxu0 %v4862
    %4900 = vmatprep.subr.bf16.mxu0 %v4859
    %4901 = vmatpush1.bf16.msra.mxu0 %v4858
    %4902 = vmatprep.subr.bf16.mxu0 %v4855
    %4903 = vmatpush1.bf16.msra.mxu0 %v4854
    %4904 = vmatprep.subr.bf16.mxu0 %v4851
    %4905 = vmatpush1.bf16.msra.mxu0 %v4850
    %4906 = vmatprep.subr.bf16.mxu0 %v4847
    %4907 = vmatpush1.bf16.msra.mxu0 %v4846
    %4908 = vmatprep.subr.bf16.mxu0 %v4843
    %4909 = vmatpush1.bf16.msra.mxu0 %v4842
    %4910 = vmatprep.subr.bf16.mxu0 %v4839
    %4911 = vmatpush1.bf16.msra.mxu0 %v4838
    %4912 = vmatprep.subr.bf16.mxu0 %v4835
    %4913 = vmatpush1.bf16.msra.mxu0 %v4834
    %4914 = vmatprep.subr.bf16.mxu0 0
    %4915 = vmatpush2.bf16.msra.mxu0 0
    %4916 = vmatprep.subr.bf16.mxu0 0
    %4917 = vmatpush2.bf16.msra.mxu0 0
    %4918 = vmatprep.subr.bf16.mxu0 0
    %4919 = vmatpush2.bf16.msra.mxu0 0
    %4920 = vmatprep.subr.bf16.mxu0 0
    %4921 = vmatpush2.bf16.msra.mxu0 0
    %4922 = vmatprep.subr.bf16.mxu0 0
    %4923 = vmatpush2.bf16.msra.mxu0 0
    %4924 = vmatprep.subr.bf16.mxu0 0
    %4925 = vmatpush2.bf16.msra.mxu0 0
    %4926 = vmatprep.subr.bf16.mxu0 0
    %4927 = vmatpush2.bf16.msra.mxu0 0
    %4928 = vmatprep.subr.bf16.mxu0 0
    %4929 = vmatpush2.bf16.msra.mxu0 0
    %4930 = vmatprep.mubr.bf16.mxu0 0
    %4931 = vmatmul.mubr.bf16.gmra.mxu0 %v4705
    %v4932 = vpop.f32.mrf.mxu0
    %v4933 = vadd.f32 0.0, %v4932
    %v4934 = vpop.f32.mrf.mxu0
    %v4935 = vadd.f32 0.0, %v4934
    %v4936 = vpop.f32.mrf.mxu0
    %v4937 = vpop.f32.mrf.mxu0
    %4938 = vdwg.mxu0
    %4939 = vmatprep.subr.bf16.mxu0 %v4865
    %4940 = vmatpush1.bf16.msra.mxu0 %v4864
    %4941 = vmatprep.subr.bf16.mxu0 %v4861
    %4942 = vmatpush1.bf16.msra.mxu0 %v4860
    %4943 = vmatprep.subr.bf16.mxu0 %v4857
    %4944 = vmatpush1.bf16.msra.mxu0 %v4856
    %4945 = vmatprep.subr.bf16.mxu0 %v4853
    %4946 = vmatpush1.bf16.msra.mxu0 %v4852
    %4947 = vmatprep.subr.bf16.mxu0 %v4849
    %4948 = vmatpush1.bf16.msra.mxu0 %v4848
    %4949 = vmatprep.subr.bf16.mxu0 %v4845
    %4950 = vmatpush1.bf16.msra.mxu0 %v4844
    %4951 = vmatprep.subr.bf16.mxu0 %v4841
    %4952 = vmatpush1.bf16.msra.mxu0 %v4840
    %4953 = vmatprep.subr.bf16.mxu0 %v4837
    %4954 = vmatpush1.bf16.msra.mxu0 %v4836
    %4955 = vmatprep.subr.bf16.mxu0 0
    %4956 = vmatpush2.bf16.msra.mxu0 0
    %4957 = vmatprep.subr.bf16.mxu0 0
    %4958 = vmatpush2.bf16.msra.mxu0 0
    %4959 = vmatprep.subr.bf16.mxu0 0
    %4960 = vmatpush2.bf16.msra.mxu0 0
    %4961 = vmatprep.subr.bf16.mxu0 0
    %4962 = vmatpush2.bf16.msra.mxu0 0
    %4963 = vmatprep.subr.bf16.mxu0 0
    %4964 = vmatpush2.bf16.msra.mxu0 0
    %4965 = vmatprep.subr.bf16.mxu0 0
    %4966 = vmatpush2.bf16.msra.mxu0 0
    %4967 = vmatprep.subr.bf16.mxu0 0
    %4968 = vmatpush2.bf16.msra.mxu0 0
    %4969 = vmatprep.subr.bf16.mxu0 0
    %4970 = vmatpush2.bf16.msra.mxu0 0
    %4971 = vmatprep.mubr.bf16.mxu0 0
    %4972 = vmatmul.mubr.bf16.gmra.mxu0 %v4705
    %v4973 = vpop.f32.mrf.mxu0
    %v4974 = vadd.f32 0.0, %v4973
    %v4975 = vpop.f32.mrf.mxu0
    %v4976 = vadd.f32 0.0, %v4975
    %v4977 = vpop.f32.mrf.mxu0
    %v4978 = vpop.f32.mrf.mxu0
    %4979 = vdwg.mxu0
    %v4980 = vadd.f32 %v4701, %v4933
    %v4981 = vadd.f32 %v4702, %v4935
    %v4982 = vadd.f32 %v4703, %v4974
    %v4983 = vadd.f32 %v4704, %v4976
    %v4984 = vmul.f32 %v4980, 0.5
    %v4985 = vtanh.pop %v4984
    %v4986 = vmul.f32 %v4985, 0.5
    %v4987 = vadd.f32 %v4986, 0.5
    %v4988 = vmul.f32 %v4981, 0.5
    %v4989 = vtanh.pop %v4988
    %v4990 = vmul.f32 %v4989, 0.5
    %v4991 = vadd.f32 %v4990, 0.5
    %v4992 = vtanh.pop %v4982
    %v4993 = vmul.f32 %v4983, 0.5
    %v4994 = vtanh.pop %v4993
    %v4995 = vmul.f32 %v4994, 0.5
    %v4996 = vadd.f32 %v4995, 0.5
    %v4997 = vmul.f32 %v4991, %v4697
    %v4998 = vmul.f32 %v4987, %v4992
    %v4999 = vadd.f32 %v4997, %v4998
    %v5000 = vtanh.pop %v4999
    %v5001 = vmul.f32 %v4996, %v5000
    %5002 = vst [vmem:[#allocation2 + $0x10] sm:$0xff] %v5001
    %v5003 = vld [vmem:[#allocation3 + $0x60] sm:$0xff]
    %v5004 = vld [vmem:[#allocation3 + $0x68] sm:$0xff]
    %v5005 = vld [vmem:[#allocation3 + $0x70] sm:$0xff]
    %v5006 = vld [vmem:[#allocation3 + $0x78] sm:$0xff]
    %v5007 = vpack.c.bf16 %v5001, %v5001
    %v5008 = vld [vmem:[#allocation9] sm:$0xff]
    %v5009 = vld [vmem:[#allocation9 + $0x8] sm:$0xff]
    %v5010 = vld [vmem:[#allocation9 + $0x10] sm:$0xff]
    %v5011 = vld [vmem:[#allocation9 + $0x18] sm:$0xff]
    %v5012 = vld [vmem:[#allocation9 + $0x20] sm:$0xff]
    %v5013 = vld [vmem:[#allocation9 + $0x28] sm:$0xff]
    %v5014 = vld [vmem:[#allocation9 + $0x30] sm:$0xff]
    %v5015 = vld [vmem:[#allocation9 + $0x38] sm:$0xff]
    %v5016 = vld [vmem:[#allocation9 + $0x40] sm:$0xff]
    %v5017 = vld [vmem:[#allocation9 + $0x48] sm:$0xff]
    %v5018 = vld [vmem:[#allocation9 + $0x50] sm:$0xff]
    %v5019 = vld [vmem:[#allocation9 + $0x58] sm:$0xff]
    %v5020 = vld [vmem:[#allocation9 + $0x60] sm:$0xff]
    %v5021 = vld [vmem:[#allocation9 + $0x68] sm:$0xff]
    %v5022 = vld [vmem:[#allocation9 + $0x70] sm:$0xff]
    %v5023 = vld [vmem:[#allocation9 + $0x78] sm:$0xff]
    %v5024 = vld [vmem:[#allocation9 + $0x80] sm:$0xff]
    %v5025 = vld [vmem:[#allocation9 + $0x88] sm:$0xff]
    %v5026 = vld [vmem:[#allocation9 + $0x90] sm:$0xff]
    %v5027 = vld [vmem:[#allocation9 + $0x98] sm:$0xff]
    %v5028 = vld [vmem:[#allocation9 + $0xa0] sm:$0xff]
    %v5029 = vld [vmem:[#allocation9 + $0xa8] sm:$0xff]
    %v5030 = vld [vmem:[#allocation9 + $0xb0] sm:$0xff]
    %v5031 = vld [vmem:[#allocation9 + $0xb8] sm:$0xff]
    %v5032 = vld [vmem:[#allocation9 + $0xc0] sm:$0xff]
    %v5033 = vld [vmem:[#allocation9 + $0xc8] sm:$0xff]
    %v5034 = vld [vmem:[#allocation9 + $0xd0] sm:$0xff]
    %v5035 = vld [vmem:[#allocation9 + $0xd8] sm:$0xff]
    %v5036 = vld [vmem:[#allocation9 + $0xe0] sm:$0xff]
    %v5037 = vld [vmem:[#allocation9 + $0xe8] sm:$0xff]
    %v5038 = vld [vmem:[#allocation9 + $0xf0] sm:$0xff]
    %v5039 = vld [vmem:[#allocation9 + $0xf8] sm:$0xff]
    %v5072 = vunpack.c.l.b16 %v5008
    %v5073 = vunpack.c.h.b16 %v5008
    %v5074 = vunpack.c.l.b16 %v5009
    %v5075 = vunpack.c.h.b16 %v5009
    %v5076 = vunpack.c.l.b16 %v5010
    %v5077 = vunpack.c.h.b16 %v5010
    %v5078 = vunpack.c.l.b16 %v5011
    %v5079 = vunpack.c.h.b16 %v5011
    %v5080 = vunpack.c.l.b16 %v5012
    %v5081 = vunpack.c.h.b16 %v5012
    %v5082 = vunpack.c.l.b16 %v5013
    %v5083 = vunpack.c.h.b16 %v5013
    %v5084 = vunpack.c.l.b16 %v5014
    %v5085 = vunpack.c.h.b16 %v5014
    %v5086 = vunpack.c.l.b16 %v5015
    %v5087 = vunpack.c.h.b16 %v5015
    %v5088 = vunpack.c.l.b16 %v5016
    %v5089 = vunpack.c.h.b16 %v5016
    %v5090 = vunpack.c.l.b16 %v5017
    %v5091 = vunpack.c.h.b16 %v5017
    %v5092 = vunpack.c.l.b16 %v5018
    %v5093 = vunpack.c.h.b16 %v5018
    %v5094 = vunpack.c.l.b16 %v5019
    %v5095 = vunpack.c.h.b16 %v5019
    %v5096 = vunpack.c.l.b16 %v5020
    %v5097 = vunpack.c.h.b16 %v5020
    %v5098 = vunpack.c.l.b16 %v5021
    %v5099 = vunpack.c.h.b16 %v5021
    %v5100 = vunpack.c.l.b16 %v5022
    %v5101 = vunpack.c.h.b16 %v5022
    %v5102 = vunpack.c.l.b16 %v5023
    %v5103 = vunpack.c.h.b16 %v5023
    %v5104 = vunpack.c.l.b16 %v5024
    %v5105 = vunpack.c.h.b16 %v5024
    %v5106 = vunpack.c.l.b16 %v5025
    %v5107 = vunpack.c.h.b16 %v5025
    %v5108 = vunpack.c.l.b16 %v5026
    %v5109 = vunpack.c.h.b16 %v5026
    %v5110 = vunpack.c.l.b16 %v5027
    %v5111 = vunpack.c.h.b16 %v5027
    %v5112 = vunpack.c.l.b16 %v5028
    %v5113 = vunpack.c.h.b16 %v5028
    %v5114 = vunpack.c.l.b16 %v5029
    %v5115 = vunpack.c.h.b16 %v5029
    %v5116 = vunpack.c.l.b16 %v5030
    %v5117 = vunpack.c.h.b16 %v5030
    %v5118 = vunpack.c.l.b16 %v5031
    %v5119 = vunpack.c.h.b16 %v5031
    %v5120 = vunpack.c.l.b16 %v5032
    %v5121 = vunpack.c.h.b16 %v5032
    %v5122 = vunpack.c.l.b16 %v5033
    %v5123 = vunpack.c.h.b16 %v5033
    %v5124 = vunpack.c.l.b16 %v5034
    %v5125 = vunpack.c.h.b16 %v5034
    %v5126 = vunpack.c.l.b16 %v5035
    %v5127 = vunpack.c.h.b16 %v5035
    %v5128 = vunpack.c.l.b16 %v5036
    %v5129 = vunpack.c.h.b16 %v5036
    %v5130 = vunpack.c.l.b16 %v5037
    %v5131 = vunpack.c.h.b16 %v5037
    %v5132 = vunpack.c.l.b16 %v5038
    %v5133 = vunpack.c.h.b16 %v5038
    %v5134 = vunpack.c.l.b16 %v5039
    %v5135 = vunpack.c.h.b16 %v5039
    %v5136 = vpack.c.b16 %v5076, %v5072
    %v5137 = vpack.c.b16 %v5077, %v5073
    %v5138 = vpack.c.b16 %v5078, %v5074
    %v5139 = vpack.c.b16 %v5079, %v5075
    %v5140 = vpack.c.b16 %v5084, %v5080
    %v5141 = vpack.c.b16 %v5085, %v5081
    %v5142 = vpack.c.b16 %v5086, %v5082
    %v5143 = vpack.c.b16 %v5087, %v5083
    %v5144 = vpack.c.b16 %v5092, %v5088
    %v5145 = vpack.c.b16 %v5093, %v5089
    %v5146 = vpack.c.b16 %v5094, %v5090
    %v5147 = vpack.c.b16 %v5095, %v5091
    %v5148 = vpack.c.b16 %v5100, %v5096
    %v5149 = vpack.c.b16 %v5101, %v5097
    %v5150 = vpack.c.b16 %v5102, %v5098
    %v5151 = vpack.c.b16 %v5103, %v5099
    %v5152 = vpack.c.b16 %v5108, %v5104
    %v5153 = vpack.c.b16 %v5109, %v5105
    %v5154 = vpack.c.b16 %v5110, %v5106
    %v5155 = vpack.c.b16 %v5111, %v5107
    %v5156 = vpack.c.b16 %v5116, %v5112
    %v5157 = vpack.c.b16 %v5117, %v5113
    %v5158 = vpack.c.b16 %v5118, %v5114
    %v5159 = vpack.c.b16 %v5119, %v5115
    %v5160 = vpack.c.b16 %v5124, %v5120
    %v5161 = vpack.c.b16 %v5125, %v5121
    %v5162 = vpack.c.b16 %v5126, %v5122
    %v5163 = vpack.c.b16 %v5127, %v5123
    %v5164 = vpack.c.b16 %v5132, %v5128
    %v5165 = vpack.c.b16 %v5133, %v5129
    %v5166 = vpack.c.b16 %v5134, %v5130
    %v5167 = vpack.c.b16 %v5135, %v5131
    %5200 = vmatprep.subr.bf16.mxu0 %v5165
    %5201 = vmatpush1.bf16.msra.mxu0 %v5164
    %5202 = vmatprep.subr.bf16.mxu0 %v5161
    %5203 = vmatpush1.bf16.msra.mxu0 %v5160
    %5204 = vmatprep.subr.bf16.mxu0 %v5157
    %5205 = vmatpush1.bf16.msra.mxu0 %v5156
    %5206 = vmatprep.subr.bf16.mxu0 %v5153
    %5207 = vmatpush1.bf16.msra.mxu0 %v5152
    %5208 = vmatprep.subr.bf16.mxu0 %v5149
    %5209 = vmatpush1.bf16.msra.mxu0 %v5148
    %5210 = vmatprep.subr.bf16.mxu0 %v5145
    %5211 = vmatpush1.bf16.msra.mxu0 %v5144
    %5212 = vmatprep.subr.bf16.mxu0 %v5141
    %5213 = vmatpush1.bf16.msra.mxu0 %v5140
    %5214 = vmatprep.subr.bf16.mxu0 %v5137
    %5215 = vmatpush1.bf16.msra.mxu0 %v5136
    %5216 = vmatprep.subr.bf16.mxu0 0
    %5217 = vmatpush2.bf16.msra.mxu0 0
    %5218 = vmatprep.subr.bf16.mxu0 0
    %5219 = vmatpush2.bf16.msra.mxu0 0
    %5220 = vmatprep.subr.bf16.mxu0 0
    %5221 = vmatpush2.bf16.msra.mxu0 0
    %5222 = vmatprep.subr.bf16.mxu0 0
    %5223 = vmatpush2.bf16.msra.mxu0 0
    %5224 = vmatprep.subr.bf16.mxu0 0
    %5225 = vmatpush2.bf16.msra.mxu0 0
    %5226 = vmatprep.subr.bf16.mxu0 0
    %5227 = vmatpush2.bf16.msra.mxu0 0
    %5228 = vmatprep.subr.bf16.mxu0 0
    %5229 = vmatpush2.bf16.msra.mxu0 0
    %5230 = vmatprep.subr.bf16.mxu0 0
    %5231 = vmatpush2.bf16.msra.mxu0 0
    %5232 = vmatprep.mubr.bf16.mxu0 0
    %5233 = vmatmul.mubr.bf16.gmra.mxu0 %v5007
    %v5234 = vpop.f32.mrf.mxu0
    %v5235 = vadd.f32 0.0, %v5234
    %v5236 = vpop.f32.mrf.mxu0
    %v5237 = vadd.f32 0.0, %v5236
    %v5238 = vpop.f32.mrf.mxu0
    %v5239 = vpop.f32.mrf.mxu0
    %5240 = vdwg.mxu0
    %5241 = vmatprep.subr.bf16.mxu0 %v5167
    %5242 = vmatpush1.bf16.msra.mxu0 %v5166
    %5243 = vmatprep.subr.bf16.mxu0 %v5163
    %5244 = vmatpush1.bf16.msra.mxu0 %v5162
    %5245 = vmatprep.subr.bf16.mxu0 %v5159
    %5246 = vmatpush1.bf16.msra.mxu0 %v5158
    %5247 = vmatprep.subr.bf16.mxu0 %v5155
    %5248 = vmatpush1.bf16.msra.mxu0 %v5154
    %5249 = vmatprep.subr.bf16.mxu0 %v5151
    %5250 = vmatpush1.bf16.msra.mxu0 %v5150
    %5251 = vmatprep.subr.bf16.mxu0 %v5147
    %5252 = vmatpush1.bf16.msra.mxu0 %v5146
    %5253 = vmatprep.subr.bf16.mxu0 %v5143
    %5254 = vmatpush1.bf16.msra.mxu0 %v5142
    %5255 = vmatprep.subr.bf16.mxu0 %v5139
    %5256 = vmatpush1.bf16.msra.mxu0 %v5138
    %5257 = vmatprep.subr.bf16.mxu0 0
    %5258 = vmatpush2.bf16.msra.mxu0 0
    %5259 = vmatprep.subr.bf16.mxu0 0
    %5260 = vmatpush2.bf16.msra.mxu0 0
    %5261 = vmatprep.subr.bf16.mxu0 0
    %5262 = vmatpush2.bf16.msra.mxu0 0
    %5263 = vmatprep.subr.bf16.mxu0 0
    %5264 = vmatpush2.bf16.msra.mxu0 0
    %5265 = vmatprep.subr.bf16.mxu0 0
    %5266 = vmatpush2.bf16.msra.mxu0 0
    %5267 = vmatprep.subr.bf16.mxu0 0
    %5268 = vmatpush2.bf16.msra.mxu0 0
    %5269 = vmatprep.subr.bf16.mxu0 0
    %5270 = vmatpush2.bf16.msra.mxu0 0
    %5271 = vmatprep.subr.bf16.mxu0 0
    %5272 = vmatpush2.bf16.msra.mxu0 0
    %5273 = vmatprep.mubr.bf16.mxu0 0
    %5274 = vmatmul.mubr.bf16.gmra.mxu0 %v5007
    %v5275 = vpop.f32.mrf.mxu0
    %v5276 = vadd.f32 0.0, %v5275
    %v5277 = vpop.f32.mrf.mxu0
    %v5278 = vadd.f32 0.0, %v5277
    %v5279 = vpop.f32.mrf.mxu0
    %v5280 = vpop.f32.mrf.mxu0
    %5281 = vdwg.mxu0
    %v5282 = vadd.f32 %v5003, %v5235
    %v5283 = vadd.f32 %v5004, %v5237
    %v5284 = vadd.f32 %v5005, %v5276
    %v5285 = vadd.f32 %v5006, %v5278
    %v5286 = vmul.f32 %v5282, 0.5
    %v5287 = vtanh.pop %v5286
    %v5288 = vmul.f32 %v5287, 0.5
    %v5289 = vadd.f32 %v5288, 0.5
    %v5290 = vmul.f32 %v5283, 0.5
    %v5291 = vtanh.pop %v5290
    %v5292 = vmul.f32 %v5291, 0.5
    %v5293 = vadd.f32 %v5292, 0.5
    %v5294 = vtanh.pop %v5284
    %v5295 = vmul.f32 %v5285, 0.5
    %v5296 = vtanh.pop %v5295
    %v5297 = vmul.f32 %v5296, 0.5
    %v5298 = vadd.f32 %v5297, 0.5
    %v5299 = vmul.f32 %v5293, %v4999
    %v5300 = vmul.f32 %v5289, %v5294
    %v5301 = vadd.f32 %v5299, %v5300
    %v5302 = vtanh.pop %v5301
    %v5303 = vmul.f32 %v5298, %v5302
    %5304 = vst [vmem:[#allocation2 + $0x18] sm:$0xff] %v5303
    %v5305 = vld [vmem:[#allocation3 + $0x80] sm:$0xff]
    %v5306 = vld [vmem:[#allocation3 + $0x88] sm:$0xff]
    %v5307 = vld [vmem:[#allocation3 + $0x90] sm:$0xff]
    %v5308 = vld [vmem:[#allocation3 + $0x98] sm:$0xff]
    %v5309 = vpack.c.bf16 %v5303, %v5303
    %v5310 = vld [vmem:[#allocation9] sm:$0xff]
    %v5311 = vld [vmem:[#allocation9 + $0x8] sm:$0xff]
    %v5312 = vld [vmem:[#allocation9 + $0x10] sm:$0xff]
    %v5313 = vld [vmem:[#allocation9 + $0x18] sm:$0xff]
    %v5314 = vld [vmem:[#allocation9 + $0x20] sm:$0xff]
    %v5315 = vld [vmem:[#allocation9 + $0x28] sm:$0xff]
    %v5316 = vld [vmem:[#allocation9 + $0x30] sm:$0xff]
    %v5317 = vld [vmem:[#allocation9 + $0x38] sm:$0xff]
    %v5318 = vld [vmem:[#allocation9 + $0x40] sm:$0xff]
    %v5319 = vld [vmem:[#allocation9 + $0x48] sm:$0xff]
    %v5320 = vld [vmem:[#allocation9 + $0x50] sm:$0xff]
    %v5321 = vld [vmem:[#allocation9 + $0x58] sm:$0xff]
    %v5322 = vld [vmem:[#allocation9 + $0x60] sm:$0xff]
    %v5323 = vld [vmem:[#allocation9 + $0x68] sm:$0xff]
    %v5324 = vld [vmem:[#allocation9 + $0x70] sm:$0xff]
    %v5325 = vld [vmem:[#allocation9 + $0x78] sm:$0xff]
    %v5326 = vld [vmem:[#allocation9 + $0x80] sm:$0xff]
    %v5327 = vld [vmem:[#allocation9 + $0x88] sm:$0xff]
    %v5328 = vld [vmem:[#allocation9 + $0x90] sm:$0xff]
    %v5329 = vld [vmem:[#allocation9 + $0x98] sm:$0xff]
    %v5330 = vld [vmem:[#allocation9 + $0xa0] sm:$0xff]
    %v5331 = vld [vmem:[#allocation9 + $0xa8] sm:$0xff]
    %v5332 = vld [vmem:[#allocation9 + $0xb0] sm:$0xff]
    %v5333 = vld [vmem:[#allocation9 + $0xb8] sm:$0xff]
    %v5334 = vld [vmem:[#allocation9 + $0xc0] sm:$0xff]
    %v5335 = vld [vmem:[#allocation9 + $0xc8] sm:$0xff]
    %v5336 = vld [vmem:[#allocation9 + $0xd0] sm:$0xff]
    %v5337 = vld [vmem:[#allocation9 + $0xd8] sm:$0xff]
    %v5338 = vld [vmem:[#allocation9 + $0xe0] sm:$0xff]
    %v5339 = vld [vmem:[#allocation9 + $0xe8] sm:$0xff]
    %v5340 = vld [vmem:[#allocation9 + $0xf0] sm:$0xff]
    %v5341 = vld [vmem:[#allocation9 + $0xf8] sm:$0xff]
    %v5374 = vunpack.c.l.b16 %v5310
    %v5375 = vunpack.c.h.b16 %v5310
    %v5376 = vunpack.c.l.b16 %v5311
    %v5377 = vunpack.c.h.b16 %v5311
    %v5378 = vunpack.c.l.b16 %v5312
    %v5379 = vunpack.c.h.b16 %v5312
    %v5380 = vunpack.c.l.b16 %v5313
    %v5381 = vunpack.c.h.b16 %v5313
    %v5382 = vunpack.c.l.b16 %v5314
    %v5383 = vunpack.c.h.b16 %v5314
    %v5384 = vunpack.c.l.b16 %v5315
    %v5385 = vunpack.c.h.b16 %v5315
    %v5386 = vunpack.c.l.b16 %v5316
    %v5387 = vunpack.c.h.b16 %v5316
    %v5388 = vunpack.c.l.b16 %v5317
    %v5389 = vunpack.c.h.b16 %v5317
    %v5390 = vunpack.c.l.b16 %v5318
    %v5391 = vunpack.c.h.b16 %v5318
    %v5392 = vunpack.c.l.b16 %v5319
    %v5393 = vunpack.c.h.b16 %v5319
    %v5394 = vunpack.c.l.b16 %v5320
    %v5395 = vunpack.c.h.b16 %v5320
    %v5396 = vunpack.c.l.b16 %v5321
    %v5397 = vunpack.c.h.b16 %v5321
    %v5398 = vunpack.c.l.b16 %v5322
    %v5399 = vunpack.c.h.b16 %v5322
    %v5400 = vunpack.c.l.b16 %v5323
    %v5401 = vunpack.c.h.b16 %v5323
    %v5402 = vunpack.c.l.b16 %v5324
    %v5403 = vunpack.c.h.b16 %v5324
    %v5404 = vunpack.c.l.b16 %v5325
    %v5405 = vunpack.c.h.b16 %v5325
    %v5406 = vunpack.c.l.b16 %v5326
    %v5407 = vunpack.c.h.b16 %v5326
    %v5408 = vunpack.c.l.b16 %v5327
    %v5409 = vunpack.c.h.b16 %v5327
    %v5410 = vunpack.c.l.b16 %v5328
    %v5411 = vunpack.c.h.b16 %v5328
    %v5412 = vunpack.c.l.b16 %v5329
    %v5413 = vunpack.c.h.b16 %v5329
    %v5414 = vunpack.c.l.b16 %v5330
    %v5415 = vunpack.c.h.b16 %v5330
    %v5416 = vunpack.c.l.b16 %v5331
    %v5417 = vunpack.c.h.b16 %v5331
    %v5418 = vunpack.c.l.b16 %v5332
    %v5419 = vunpack.c.h.b16 %v5332
    %v5420 = vunpack.c.l.b16 %v5333
    %v5421 = vunpack.c.h.b16 %v5333
    %v5422 = vunpack.c.l.b16 %v5334
    %v5423 = vunpack.c.h.b16 %v5334
    %v5424 = vunpack.c.l.b16 %v5335
    %v5425 = vunpack.c.h.b16 %v5335
    %v5426 = vunpack.c.l.b16 %v5336
    %v5427 = vunpack.c.h.b16 %v5336
    %v5428 = vunpack.c.l.b16 %v5337
    %v5429 = vunpack.c.h.b16 %v5337
    %v5430 = vunpack.c.l.b16 %v5338
    %v5431 = vunpack.c.h.b16 %v5338
    %v5432 = vunpack.c.l.b16 %v5339
    %v5433 = vunpack.c.h.b16 %v5339
    %v5434 = vunpack.c.l.b16 %v5340
    %v5435 = vunpack.c.h.b16 %v5340
    %v5436 = vunpack.c.l.b16 %v5341
    %v5437 = vunpack.c.h.b16 %v5341
    %v5438 = vpack.c.b16 %v5378, %v5374
    %v5439 = vpack.c.b16 %v5379, %v5375
    %v5440 = vpack.c.b16 %v5380, %v5376
    %v5441 = vpack.c.b16 %v5381, %v5377
    %v5442 = vpack.c.b16 %v5386, %v5382
    %v5443 = vpack.c.b16 %v5387, %v5383
    %v5444 = vpack.c.b16 %v5388, %v5384
    %v5445 = vpack.c.b16 %v5389, %v5385
    %v5446 = vpack.c.b16 %v5394, %v5390
    %v5447 = vpack.c.b16 %v5395, %v5391
    %v5448 = vpack.c.b16 %v5396, %v5392
    %v5449 = vpack.c.b16 %v5397, %v5393
    %v5450 = vpack.c.b16 %v5402, %v5398
    %v5451 = vpack.c.b16 %v5403, %v5399
    %v5452 = vpack.c.b16 %v5404, %v5400
    %v5453 = vpack.c.b16 %v5405, %v5401
    %v5454 = vpack.c.b16 %v5410, %v5406
    %v5455 = vpack.c.b16 %v5411, %v5407
    %v5456 = vpack.c.b16 %v5412, %v5408
    %v5457 = vpack.c.b16 %v5413, %v5409
    %v5458 = vpack.c.b16 %v5418, %v5414
    %v5459 = vpack.c.b16 %v5419, %v5415
    %v5460 = vpack.c.b16 %v5420, %v5416
    %v5461 = vpack.c.b16 %v5421, %v5417
    %v5462 = vpack.c.b16 %v5426, %v5422
    %v5463 = vpack.c.b16 %v5427, %v5423
    %v5464 = vpack.c.b16 %v5428, %v5424
    %v5465 = vpack.c.b16 %v5429, %v5425
    %v5466 = vpack.c.b16 %v5434, %v5430
    %v5467 = vpack.c.b16 %v5435, %v5431
    %v5468 = vpack.c.b16 %v5436, %v5432
    %v5469 = vpack.c.b16 %v5437, %v5433
    %5502 = vmatprep.subr.bf16.mxu0 %v5467
    %5503 = vmatpush1.bf16.msra.mxu0 %v5466
    %5504 = vmatprep.subr.bf16.mxu0 %v5463
    %5505 = vmatpush1.bf16.msra.mxu0 %v5462
    %5506 = vmatprep.subr.bf16.mxu0 %v5459
    %5507 = vmatpush1.bf16.msra.mxu0 %v5458
    %5508 = vmatprep.subr.bf16.mxu0 %v5455
    %5509 = vmatpush1.bf16.msra.mxu0 %v5454
    %5510 = vmatprep.subr.bf16.mxu0 %v5451
    %5511 = vmatpush1.bf16.msra.mxu0 %v5450
    %5512 = vmatprep.subr.bf16.mxu0 %v5447
    %5513 = vmatpush1.bf16.msra.mxu0 %v5446
    %5514 = vmatprep.subr.bf16.mxu0 %v5443
    %5515 = vmatpush1.bf16.msra.mxu0 %v5442
    %5516 = vmatprep.subr.bf16.mxu0 %v5439
    %5517 = vmatpush1.bf16.msra.mxu0 %v5438
    %5518 = vmatprep.subr.bf16.mxu0 0
    %5519 = vmatpush2.bf16.msra.mxu0 0
    %5520 = vmatprep.subr.bf16.mxu0 0
    %5521 = vmatpush2.bf16.msra.mxu0 0
    %5522 = vmatprep.subr.bf16.mxu0 0
    %5523 = vmatpush2.bf16.msra.mxu0 0
    %5524 = vmatprep.subr.bf16.mxu0 0
    %5525 = vmatpush2.bf16.msra.mxu0 0
    %5526 = vmatprep.subr.bf16.mxu0 0
    %5527 = vmatpush2.bf16.msra.mxu0 0
    %5528 = vmatprep.subr.bf16.mxu0 0
    %5529 = vmatpush2.bf16.msra.mxu0 0
    %5530 = vmatprep.subr.bf16.mxu0 0
    %5531 = vmatpush2.bf16.msra.mxu0 0
    %5532 = vmatprep.subr.bf16.mxu0 0
    %5533 = vmatpush2.bf16.msra.mxu0 0
    %5534 = vmatprep.mubr.bf16.mxu0 0
    %5535 = vmatmul.mubr.bf16.gmra.mxu0 %v5309
    %v5536 = vpop.f32.mrf.mxu0
    %v5537 = vadd.f32 0.0, %v5536
    %v5538 = vpop.f32.mrf.mxu0
    %v5539 = vadd.f32 0.0, %v5538
    %v5540 = vpop.f32.mrf.mxu0
    %v5541 = vpop.f32.mrf.mxu0
    %5542 = vdwg.mxu0
    %5543 = vmatprep.subr.bf16.mxu0 %v5469
    %5544 = vmatpush1.bf16.msra.mxu0 %v5468
    %5545 = vmatprep.subr.bf16.mxu0 %v5465
    %5546 = vmatpush1.bf16.msra.mxu0 %v5464
    %5547 = vmatprep.subr.bf16.mxu0 %v5461
    %5548 = vmatpush1.bf16.msra.mxu0 %v5460
    %5549 = vmatprep.subr.bf16.mxu0 %v5457
    %5550 = vmatpush1.bf16.msra.mxu0 %v5456
    %5551 = vmatprep.subr.bf16.mxu0 %v5453
    %5552 = vmatpush1.bf16.msra.mxu0 %v5452
    %5553 = vmatprep.subr.bf16.mxu0 %v5449
    %5554 = vmatpush1.bf16.msra.mxu0 %v5448
    %5555 = vmatprep.subr.bf16.mxu0 %v5445
    %5556 = vmatpush1.bf16.msra.mxu0 %v5444
    %5557 = vmatprep.subr.bf16.mxu0 %v5441
    %5558 = vmatpush1.bf16.msra.mxu0 %v5440
    %5559 = vmatprep.subr.bf16.mxu0 0
    %5560 = vmatpush2.bf16.msra.mxu0 0
    %5561 = vmatprep.subr.bf16.mxu0 0
    %5562 = vmatpush2.bf16.msra.mxu0 0
    %5563 = vmatprep.subr.bf16.mxu0 0
    %5564 = vmatpush2.bf16.msra.mxu0 0
    %5565 = vmatprep.subr.bf16.mxu0 0
    %5566 = vmatpush2.bf16.msra.mxu0 0
    %5567 = vmatprep.subr.bf16.mxu0 0
    %5568 = vmatpush2.bf16.msra.mxu0 0
    %5569 = vmatprep.subr.bf16.mxu0 0
    %5570 = vmatpush2.bf16.msra.mxu0 0
    %5571 = vmatprep.subr.bf16.mxu0 0
    %5572 = vmatpush2.bf16.msra.mxu0 0
    %5573 = vmatprep.subr.bf16.mxu0 0
    %5574 = vmatpush2.bf16.msra.mxu0 0
    %5575 = vmatprep.mubr.bf16.mxu0 0
    %5576 = vmatmul.mubr.bf16.gmra.mxu0 %v5309
    %v5577 = vpop.f32.mrf.mxu0
    %v5578 = vadd.f32 0.0, %v5577
    %v5579 = vpop.f32.mrf.mxu0
    %v5580 = vadd.f32 0.0, %v5579
    %v5581 = vpop.f32.mrf.mxu0
    %v5582 = vpop.f32.mrf.mxu0
    %5583 = vdwg.mxu0
    %v5584 = vadd.f32 %v5305, %v5537
    %v5585 = vadd.f32 %v5306, %v5539
    %v5586 = vadd.f32 %v5307, %v5578
    %v5587 = vadd.f32 %v5308, %v5580
    %v5588 = vmul.f32 %v5584, 0.5
    %v5589 = vtanh.pop %v5588
    %v5590 = vmul.f32 %v5589, 0.5
    %v5591 = vadd.f32 %v5590, 0.5
    %v5592 = vmul.f32 %v5585, 0.5
    %v5593 = vtanh.pop %v5592
    %v5594 = vmul.f32 %v5593, 0.5
    %v5595 = vadd.f32 %v5594, 0.5
    %v5596 = vtanh.pop %v5586
    %v5597 = vmul.f32 %v5587, 0.5
    %v5598 = vtanh.pop %v5597
    %v5599 = vmul.f32 %v5598, 0.5
    %v5600 = vadd.f32 %v5599, 0.5
    %v5601 = vmul.f32 %v5595, %v5301
    %v5602 = vmul.f32 %v5591, %v5596
    %v5603 = vadd.f32 %v5601, %v5602
    %v5604 = vtanh.pop %v5603
    %v5605 = vmul.f32 %v5600, %v5604
    %5606 = vst [vmem:[#allocation2 + $0x20] sm:$0xff] %v5605
    %v5607 = vld [vmem:[#allocation3 + $0xa0] sm:$0xff]
    %v5608 = vld [vmem:[#allocation3 + $0xa8] sm:$0xff]
    %v5609 = vld [vmem:[#allocation3 + $0xb0] sm:$0xff]
    %v5610 = vld [vmem:[#allocation3 + $0xb8] sm:$0xff]
    %v5611 = vpack.c.bf16 %v5605, %v5605
    %v5612 = vld [vmem:[#allocation9] sm:$0xff]
    %v5613 = vld [vmem:[#allocation9 + $0x8] sm:$0xff]
    %v5614 = vld [vmem:[#allocation9 + $0x10] sm:$0xff]
    %v5615 = vld [vmem:[#allocation9 + $0x18] sm:$0xff]
    %v5616 = vld [vmem:[#allocation9 + $0x20] sm:$0xff]
    %v5617 = vld [vmem:[#allocation9 + $0x28] sm:$0xff]
    %v5618 = vld [vmem:[#allocation9 + $0x30] sm:$0xff]
    %v5619 = vld [vmem:[#allocation9 + $0x38] sm:$0xff]
    %v5620 = vld [vmem:[#allocation9 + $0x40] sm:$0xff]
    %v5621 = vld [vmem:[#allocation9 + $0x48] sm:$0xff]
    %v5622 = vld [vmem:[#allocation9 + $0x50] sm:$0xff]
    %v5623 = vld [vmem:[#allocation9 + $0x58] sm:$0xff]
    %v5624 = vld [vmem:[#allocation9 + $0x60] sm:$0xff]
    %v5625 = vld [vmem:[#allocation9 + $0x68] sm:$0xff]
    %v5626 = vld [vmem:[#allocation9 + $0x70] sm:$0xff]
    %v5627 = vld [vmem:[#allocation9 + $0x78] sm:$0xff]
    %v5628 = vld [vmem:[#allocation9 + $0x80] sm:$0xff]
    %v5629 = vld [vmem:[#allocation9 + $0x88] sm:$0xff]
    %v5630 = vld [vmem:[#allocation9 + $0x90] sm:$0xff]
    %v5631 = vld [vmem:[#allocation9 + $0x98] sm:$0xff]
    %v5632 = vld [vmem:[#allocation9 + $0xa0] sm:$0xff]
    %v5633 = vld [vmem:[#allocation9 + $0xa8] sm:$0xff]
    %v5634 = vld [vmem:[#allocation9 + $0xb0] sm:$0xff]
    %v5635 = vld [vmem:[#allocation9 + $0xb8] sm:$0xff]
    %v5636 = vld [vmem:[#allocation9 + $0xc0] sm:$0xff]
    %v5637 = vld [vmem:[#allocation9 + $0xc8] sm:$0xff]
    %v5638 = vld [vmem:[#allocation9 + $0xd0] sm:$0xff]
    %v5639 = vld [vmem:[#allocation9 + $0xd8] sm:$0xff]
    %v5640 = vld [vmem:[#allocation9 + $0xe0] sm:$0xff]
    %v5641 = vld [vmem:[#allocation9 + $0xe8] sm:$0xff]
    %v5642 = vld [vmem:[#allocation9 + $0xf0] sm:$0xff]
    %v5643 = vld [vmem:[#allocation9 + $0xf8] sm:$0xff]
    %v5676 = vunpack.c.l.b16 %v5612
    %v5677 = vunpack.c.h.b16 %v5612
    %v5678 = vunpack.c.l.b16 %v5613
    %v5679 = vunpack.c.h.b16 %v5613
    %v5680 = vunpack.c.l.b16 %v5614
    %v5681 = vunpack.c.h.b16 %v5614
    %v5682 = vunpack.c.l.b16 %v5615
    %v5683 = vunpack.c.h.b16 %v5615
    %v5684 = vunpack.c.l.b16 %v5616
    %v5685 = vunpack.c.h.b16 %v5616
    %v5686 = vunpack.c.l.b16 %v5617
    %v5687 = vunpack.c.h.b16 %v5617
    %v5688 = vunpack.c.l.b16 %v5618
    %v5689 = vunpack.c.h.b16 %v5618
    %v5690 = vunpack.c.l.b16 %v5619
    %v5691 = vunpack.c.h.b16 %v5619
    %v5692 = vunpack.c.l.b16 %v5620
    %v5693 = vunpack.c.h.b16 %v5620
    %v5694 = vunpack.c.l.b16 %v5621
    %v5695 = vunpack.c.h.b16 %v5621
    %v5696 = vunpack.c.l.b16 %v5622
    %v5697 = vunpack.c.h.b16 %v5622
    %v5698 = vunpack.c.l.b16 %v5623
    %v5699 = vunpack.c.h.b16 %v5623
    %v5700 = vunpack.c.l.b16 %v5624
    %v5701 = vunpack.c.h.b16 %v5624
    %v5702 = vunpack.c.l.b16 %v5625
    %v5703 = vunpack.c.h.b16 %v5625
    %v5704 = vunpack.c.l.b16 %v5626
    %v5705 = vunpack.c.h.b16 %v5626
    %v5706 = vunpack.c.l.b16 %v5627
    %v5707 = vunpack.c.h.b16 %v5627
    %v5708 = vunpack.c.l.b16 %v5628
    %v5709 = vunpack.c.h.b16 %v5628
    %v5710 = vunpack.c.l.b16 %v5629
    %v5711 = vunpack.c.h.b16 %v5629
    %v5712 = vunpack.c.l.b16 %v5630
    %v5713 = vunpack.c.h.b16 %v5630
    %v5714 = vunpack.c.l.b16 %v5631
    %v5715 = vunpack.c.h.b16 %v5631
    %v5716 = vunpack.c.l.b16 %v5632
    %v5717 = vunpack.c.h.b16 %v5632
    %v5718 = vunpack.c.l.b16 %v5633
    %v5719 = vunpack.c.h.b16 %v5633
    %v5720 = vunpack.c.l.b16 %v5634
    %v5721 = vunpack.c.h.b16 %v5634
    %v5722 = vunpack.c.l.b16 %v5635
    %v5723 = vunpack.c.h.b16 %v5635
    %v5724 = vunpack.c.l.b16 %v5636
    %v5725 = vunpack.c.h.b16 %v5636
    %v5726 = vunpack.c.l.b16 %v5637
    %v5727 = vunpack.c.h.b16 %v5637
    %v5728 = vunpack.c.l.b16 %v5638
    %v5729 = vunpack.c.h.b16 %v5638
    %v5730 = vunpack.c.l.b16 %v5639
    %v5731 = vunpack.c.h.b16 %v5639
    %v5732 = vunpack.c.l.b16 %v5640
    %v5733 = vunpack.c.h.b16 %v5640
    %v5734 = vunpack.c.l.b16 %v5641
    %v5735 = vunpack.c.h.b16 %v5641
    %v5736 = vunpack.c.l.b16 %v5642
    %v5737 = vunpack.c.h.b16 %v5642
    %v5738 = vunpack.c.l.b16 %v5643
    %v5739 = vunpack.c.h.b16 %v5643
    %v5740 = vpack.c.b16 %v5680, %v5676
    %v5741 = vpack.c.b16 %v5681, %v5677
    %v5742 = vpack.c.b16 %v5682, %v5678
    %v5743 = vpack.c.b16 %v5683, %v5679
    %v5744 = vpack.c.b16 %v5688, %v5684
    %v5745 = vpack.c.b16 %v5689, %v5685
    %v5746 = vpack.c.b16 %v5690, %v5686
    %v5747 = vpack.c.b16 %v5691, %v5687
    %v5748 = vpack.c.b16 %v5696, %v5692
    %v5749 = vpack.c.b16 %v5697, %v5693
    %v5750 = vpack.c.b16 %v5698, %v5694
    %v5751 = vpack.c.b16 %v5699, %v5695
    %v5752 = vpack.c.b16 %v5704, %v5700
    %v5753 = vpack.c.b16 %v5705, %v5701
    %v5754 = vpack.c.b16 %v5706, %v5702
    %v5755 = vpack.c.b16 %v5707, %v5703
    %v5756 = vpack.c.b16 %v5712, %v5708
    %v5757 = vpack.c.b16 %v5713, %v5709
    %v5758 = vpack.c.b16 %v5714, %v5710
    %v5759 = vpack.c.b16 %v5715, %v5711
    %v5760 = vpack.c.b16 %v5720, %v5716
    %v5761 = vpack.c.b16 %v5721, %v5717
    %v5762 = vpack.c.b16 %v5722, %v5718
    %v5763 = vpack.c.b16 %v5723, %v5719
    %v5764 = vpack.c.b16 %v5728, %v5724
    %v5765 = vpack.c.b16 %v5729, %v5725
    %v5766 = vpack.c.b16 %v5730, %v5726
    %v5767 = vpack.c.b16 %v5731, %v5727
    %v5768 = vpack.c.b16 %v5736, %v5732
    %v5769 = vpack.c.b16 %v5737, %v5733
    %v5770 = vpack.c.b16 %v5738, %v5734
    %v5771 = vpack.c.b16 %v5739, %v5735
    %5804 = vmatprep.subr.bf16.mxu0 %v5769
    %5805 = vmatpush1.bf16.msra.mxu0 %v5768
    %5806 = vmatprep.subr.bf16.mxu0 %v5765
    %5807 = vmatpush1.bf16.msra.mxu0 %v5764
    %5808 = vmatprep.subr.bf16.mxu0 %v5761
    %5809 = vmatpush1.bf16.msra.mxu0 %v5760
    %5810 = vmatprep.subr.bf16.mxu0 %v5757
    %5811 = vmatpush1.bf16.msra.mxu0 %v5756
    %5812 = vmatprep.subr.bf16.mxu0 %v5753
    %5813 = vmatpush1.bf16.msra.mxu0 %v5752
    %5814 = vmatprep.subr.bf16.mxu0 %v5749
    %5815 = vmatpush1.bf16.msra.mxu0 %v5748
    %5816 = vmatprep.subr.bf16.mxu0 %v5745
    %5817 = vmatpush1.bf16.msra.mxu0 %v5744
    %5818 = vmatprep.subr.bf16.mxu0 %v5741
    %5819 = vmatpush1.bf16.msra.mxu0 %v5740
    %5820 = vmatprep.subr.bf16.mxu0 0
    %5821 = vmatpush2.bf16.msra.mxu0 0
    %5822 = vmatprep.subr.bf16.mxu0 0
    %5823 = vmatpush2.bf16.msra.mxu0 0
    %5824 = vmatprep.subr.bf16.mxu0 0
    %5825 = vmatpush2.bf16.msra.mxu0 0
    %5826 = vmatprep.subr.bf16.mxu0 0
    %5827 = vmatpush2.bf16.msra.mxu0 0
    %5828 = vmatprep.subr.bf16.mxu0 0
    %5829 = vmatpush2.bf16.msra.mxu0 0
    %5830 = vmatprep.subr.bf16.mxu0 0
    %5831 = vmatpush2.bf16.msra.mxu0 0
    %5832 = vmatprep.subr.bf16.mxu0 0
    %5833 = vmatpush2.bf16.msra.mxu0 0
    %5834 = vmatprep.subr.bf16.mxu0 0
    %5835 = vmatpush2.bf16.msra.mxu0 0
    %5836 = vmatprep.mubr.bf16.mxu0 0
    %5837 = vmatmul.mubr.bf16.gmra.mxu0 %v5611
    %v5838 = vpop.f32.mrf.mxu0
    %v5839 = vadd.f32 0.0, %v5838
    %v5840 = vpop.f32.mrf.mxu0
    %v5841 = vadd.f32 0.0, %v5840
    %v5842 = vpop.f32.mrf.mxu0
    %v5843 = vpop.f32.mrf.mxu0
    %5844 = vdwg.mxu0
    %5845 = vmatprep.subr.bf16.mxu0 %v5771
    %5846 = vmatpush1.bf16.msra.mxu0 %v5770
    %5847 = vmatprep.subr.bf16.mxu0 %v5767
    %5848 = vmatpush1.bf16.msra.mxu0 %v5766
    %5849 = vmatprep.subr.bf16.mxu0 %v5763
    %5850 = vmatpush1.bf16.msra.mxu0 %v5762
    %5851 = vmatprep.subr.bf16.mxu0 %v5759
    %5852 = vmatpush1.bf16.msra.mxu0 %v5758
    %5853 = vmatprep.subr.bf16.mxu0 %v5755
    %5854 = vmatpush1.bf16.msra.mxu0 %v5754
    %5855 = vmatprep.subr.bf16.mxu0 %v5751
    %5856 = vmatpush1.bf16.msra.mxu0 %v5750
    %5857 = vmatprep.subr.bf16.mxu0 %v5747
    %5858 = vmatpush1.bf16.msra.mxu0 %v5746
    %5859 = vmatprep.subr.bf16.mxu0 %v5743
    %5860 = vmatpush1.bf16.msra.mxu0 %v5742
    %5861 = vmatprep.subr.bf16.mxu0 0
    %5862 = vmatpush2.bf16.msra.mxu0 0
    %5863 = vmatprep.subr.bf16.mxu0 0
    %5864 = vmatpush2.bf16.msra.mxu0 0
    %5865 = vmatprep.subr.bf16.mxu0 0
    %5866 = vmatpush2.bf16.msra.mxu0 0
    %5867 = vmatprep.subr.bf16.mxu0 0
    %5868 = vmatpush2.bf16.msra.mxu0 0
    %5869 = vmatprep.subr.bf16.mxu0 0
    %5870 = vmatpush2.bf16.msra.mxu0 0
    %5871 = vmatprep.subr.bf16.mxu0 0
    %5872 = vmatpush2.bf16.msra.mxu0 0
    %5873 = vmatprep.subr.bf16.mxu0 0
    %5874 = vmatpush2.bf16.msra.mxu0 0
    %5875 = vmatprep.subr.bf16.mxu0 0
    %5876 = vmatpush2.bf16.msra.mxu0 0
    %5877 = vmatprep.mubr.bf16.mxu0 0
    %5878 = vmatmul.mubr.bf16.gmra.mxu0 %v5611
    %v5879 = vpop.f32.mrf.mxu0
    %v5880 = vadd.f32 0.0, %v5879
    %v5881 = vpop.f32.mrf.mxu0
    %v5882 = vadd.f32 0.0, %v5881
    %v5883 = vpop.f32.mrf.mxu0
    %v5884 = vpop.f32.mrf.mxu0
    %5885 = vdwg.mxu0
    %v5886 = vadd.f32 %v5607, %v5839
    %v5887 = vadd.f32 %v5608, %v5841
    %v5888 = vadd.f32 %v5609, %v5880
    %v5889 = vadd.f32 %v5610, %v5882
    %v5890 = vmul.f32 %v5886, 0.5
    %v5891 = vtanh.pop %v5890
    %v5892 = vmul.f32 %v5891, 0.5
    %v5893 = vadd.f32 %v5892, 0.5
    %v5894 = vmul.f32 %v5887, 0.5
    %v5895 = vtanh.pop %v5894
    %v5896 = vmul.f32 %v5895, 0.5
    %v5897 = vadd.f32 %v5896, 0.5
    %v5898 = vtanh.pop %v5888
    %v5899 = vmul.f32 %v5889, 0.5
    %v5900 = vtanh.pop %v5899
    %v5901 = vmul.f32 %v5900, 0.5
    %v5902 = vadd.f32 %v5901, 0.5
    %v5903 = vmul.f32 %v5897, %v5603
    %v5904 = vmul.f32 %v5893, %v5898
    %v5905 = vadd.f32 %v5903, %v5904
    %v5906 = vtanh.pop %v5905
    %v5907 = vmul.f32 %v5902, %v5906
    %5908 = vst [vmem:[#allocation2 + $0x28] sm:$0xff] %v5907
    %v5909 = vld [vmem:[#allocation3 + $0xc0] sm:$0xff]
    %v5910 = vld [vmem:[#allocation3 + $0xc8] sm:$0xff]
    %v5911 = vld [vmem:[#allocation3 + $0xd0] sm:$0xff]
    %v5912 = vld [vmem:[#allocation3 + $0xd8] sm:$0xff]
    %v5913 = vpack.c.bf16 %v5907, %v5907
    %v5914 = vld [vmem:[#allocation9] sm:$0xff]
    %v5915 = vld [vmem:[#allocation9 + $0x8] sm:$0xff]
    %v5916 = vld [vmem:[#allocation9 + $0x10] sm:$0xff]
    %v5917 = vld [vmem:[#allocation9 + $0x18] sm:$0xff]
    %v5918 = vld [vmem:[#allocation9 + $0x20] sm:$0xff]
    %v5919 = vld [vmem:[#allocation9 + $0x28] sm:$0xff]
    %v5920 = vld [vmem:[#allocation9 + $0x30] sm:$0xff]
    %v5921 = vld [vmem:[#allocation9 + $0x38] sm:$0xff]
    %v5922 = vld [vmem:[#allocation9 + $0x40] sm:$0xff]
    %v5923 = vld [vmem:[#allocation9 + $0x48] sm:$0xff]
    %v5924 = vld [vmem:[#allocation9 + $0x50] sm:$0xff]
    %v5925 = vld [vmem:[#allocation9 + $0x58] sm:$0xff]
    %v5926 = vld [vmem:[#allocation9 + $0x60] sm:$0xff]
    %v5927 = vld [vmem:[#allocation9 + $0x68] sm:$0xff]
    %v5928 = vld [vmem:[#allocation9 + $0x70] sm:$0xff]
    %v5929 = vld [vmem:[#allocation9 + $0x78] sm:$0xff]
    %v5930 = vld [vmem:[#allocation9 + $0x80] sm:$0xff]
    %v5931 = vld [vmem:[#allocation9 + $0x88] sm:$0xff]
    %v5932 = vld [vmem:[#allocation9 + $0x90] sm:$0xff]
    %v5933 = vld [vmem:[#allocation9 + $0x98] sm:$0xff]
    %v5934 = vld [vmem:[#allocation9 + $0xa0] sm:$0xff]
    %v5935 = vld [vmem:[#allocation9 + $0xa8] sm:$0xff]
    %v5936 = vld [vmem:[#allocation9 + $0xb0] sm:$0xff]
    %v5937 = vld [vmem:[#allocation9 + $0xb8] sm:$0xff]
    %v5938 = vld [vmem:[#allocation9 + $0xc0] sm:$0xff]
    %v5939 = vld [vmem:[#allocation9 + $0xc8] sm:$0xff]
    %v5940 = vld [vmem:[#allocation9 + $0xd0] sm:$0xff]
    %v5941 = vld [vmem:[#allocation9 + $0xd8] sm:$0xff]
    %v5942 = vld [vmem:[#allocation9 + $0xe0] sm:$0xff]
    %v5943 = vld [vmem:[#allocation9 + $0xe8] sm:$0xff]
    %v5944 = vld [vmem:[#allocation9 + $0xf0] sm:$0xff]
    %v5945 = vld [vmem:[#allocation9 + $0xf8] sm:$0xff]
    %v5978 = vunpack.c.l.b16 %v5914
    %v5979 = vunpack.c.h.b16 %v5914
    %v5980 = vunpack.c.l.b16 %v5915
    %v5981 = vunpack.c.h.b16 %v5915
    %v5982 = vunpack.c.l.b16 %v5916
    %v5983 = vunpack.c.h.b16 %v5916
    %v5984 = vunpack.c.l.b16 %v5917
    %v5985 = vunpack.c.h.b16 %v5917
    %v5986 = vunpack.c.l.b16 %v5918
    %v5987 = vunpack.c.h.b16 %v5918
    %v5988 = vunpack.c.l.b16 %v5919
    %v5989 = vunpack.c.h.b16 %v5919
    %v5990 = vunpack.c.l.b16 %v5920
    %v5991 = vunpack.c.h.b16 %v5920
    %v5992 = vunpack.c.l.b16 %v5921
    %v5993 = vunpack.c.h.b16 %v5921
    %v5994 = vunpack.c.l.b16 %v5922
    %v5995 = vunpack.c.h.b16 %v5922
    %v5996 = vunpack.c.l.b16 %v5923
    %v5997 = vunpack.c.h.b16 %v5923
    %v5998 = vunpack.c.l.b16 %v5924
    %v5999 = vunpack.c.h.b16 %v5924
    %v6000 = vunpack.c.l.b16 %v5925
    %v6001 = vunpack.c.h.b16 %v5925
    %v6002 = vunpack.c.l.b16 %v5926
    %v6003 = vunpack.c.h.b16 %v5926
    %v6004 = vunpack.c.l.b16 %v5927
    %v6005 = vunpack.c.h.b16 %v5927
    %v6006 = vunpack.c.l.b16 %v5928
    %v6007 = vunpack.c.h.b16 %v5928
    %v6008 = vunpack.c.l.b16 %v5929
    %v6009 = vunpack.c.h.b16 %v5929
    %v6010 = vunpack.c.l.b16 %v5930
    %v6011 = vunpack.c.h.b16 %v5930
    %v6012 = vunpack.c.l.b16 %v5931
    %v6013 = vunpack.c.h.b16 %v5931
    %v6014 = vunpack.c.l.b16 %v5932
    %v6015 = vunpack.c.h.b16 %v5932
    %v6016 = vunpack.c.l.b16 %v5933
    %v6017 = vunpack.c.h.b16 %v5933
    %v6018 = vunpack.c.l.b16 %v5934
    %v6019 = vunpack.c.h.b16 %v5934
    %v6020 = vunpack.c.l.b16 %v5935
    %v6021 = vunpack.c.h.b16 %v5935
    %v6022 = vunpack.c.l.b16 %v5936
    %v6023 = vunpack.c.h.b16 %v5936
    %v6024 = vunpack.c.l.b16 %v5937
    %v6025 = vunpack.c.h.b16 %v5937
    %v6026 = vunpack.c.l.b16 %v5938
    %v6027 = vunpack.c.h.b16 %v5938
    %v6028 = vunpack.c.l.b16 %v5939
    %v6029 = vunpack.c.h.b16 %v5939
    %v6030 = vunpack.c.l.b16 %v5940
    %v6031 = vunpack.c.h.b16 %v5940
    %v6032 = vunpack.c.l.b16 %v5941
    %v6033 = vunpack.c.h.b16 %v5941
    %v6034 = vunpack.c.l.b16 %v5942
    %v6035 = vunpack.c.h.b16 %v5942
    %v6036 = vunpack.c.l.b16 %v5943
    %v6037 = vunpack.c.h.b16 %v5943
    %v6038 = vunpack.c.l.b16 %v5944
    %v6039 = vunpack.c.h.b16 %v5944
    %v6040 = vunpack.c.l.b16 %v5945
    %v6041 = vunpack.c.h.b16 %v5945
    %v6042 = vpack.c.b16 %v5982, %v5978
    %v6043 = vpack.c.b16 %v5983, %v5979
    %v6044 = vpack.c.b16 %v5984, %v5980
    %v6045 = vpack.c.b16 %v5985, %v5981
    %v6046 = vpack.c.b16 %v5990, %v5986
    %v6047 = vpack.c.b16 %v5991, %v5987
    %v6048 = vpack.c.b16 %v5992, %v5988
    %v6049 = vpack.c.b16 %v5993, %v5989
    %v6050 = vpack.c.b16 %v5998, %v5994
    %v6051 = vpack.c.b16 %v5999, %v5995
    %v6052 = vpack.c.b16 %v6000, %v5996
    %v6053 = vpack.c.b16 %v6001, %v5997
    %v6054 = vpack.c.b16 %v6006, %v6002
    %v6055 = vpack.c.b16 %v6007, %v6003
    %v6056 = vpack.c.b16 %v6008, %v6004
    %v6057 = vpack.c.b16 %v6009, %v6005
    %v6058 = vpack.c.b16 %v6014, %v6010
    %v6059 = vpack.c.b16 %v6015, %v6011
    %v6060 = vpack.c.b16 %v6016, %v6012
    %v6061 = vpack.c.b16 %v6017, %v6013
    %v6062 = vpack.c.b16 %v6022, %v6018
    %v6063 = vpack.c.b16 %v6023, %v6019
    %v6064 = vpack.c.b16 %v6024, %v6020
    %v6065 = vpack.c.b16 %v6025, %v6021
    %v6066 = vpack.c.b16 %v6030, %v6026
    %v6067 = vpack.c.b16 %v6031, %v6027
    %v6068 = vpack.c.b16 %v6032, %v6028
    %v6069 = vpack.c.b16 %v6033, %v6029
    %v6070 = vpack.c.b16 %v6038, %v6034
    %v6071 = vpack.c.b16 %v6039, %v6035
    %v6072 = vpack.c.b16 %v6040, %v6036
    %v6073 = vpack.c.b16 %v6041, %v6037
    %6106 = vmatprep.subr.bf16.mxu0 %v6071
    %6107 = vmatpush1.bf16.msra.mxu0 %v6070
    %6108 = vmatprep.subr.bf16.mxu0 %v6067
    %6109 = vmatpush1.bf16.msra.mxu0 %v6066
    %6110 = vmatprep.subr.bf16.mxu0 %v6063
    %6111 = vmatpush1.bf16.msra.mxu0 %v6062
    %6112 = vmatprep.subr.bf16.mxu0 %v6059
    %6113 = vmatpush1.bf16.msra.mxu0 %v6058
    %6114 = vmatprep.subr.bf16.mxu0 %v6055
    %6115 = vmatpush1.bf16.msra.mxu0 %v6054
    %6116 = vmatprep.subr.bf16.mxu0 %v6051
    %6117 = vmatpush1.bf16.msra.mxu0 %v6050
    %6118 = vmatprep.subr.bf16.mxu0 %v6047
    %6119 = vmatpush1.bf16.msra.mxu0 %v6046
    %6120 = vmatprep.subr.bf16.mxu0 %v6043
    %6121 = vmatpush1.bf16.msra.mxu0 %v6042
    %6122 = vmatprep.subr.bf16.mxu0 0
    %6123 = vmatpush2.bf16.msra.mxu0 0
    %6124 = vmatprep.subr.bf16.mxu0 0
    %6125 = vmatpush2.bf16.msra.mxu0 0
    %6126 = vmatprep.subr.bf16.mxu0 0
    %6127 = vmatpush2.bf16.msra.mxu0 0
    %6128 = vmatprep.subr.bf16.mxu0 0
    %6129 = vmatpush2.bf16.msra.mxu0 0
    %6130 = vmatprep.subr.bf16.mxu0 0
    %6131 = vmatpush2.bf16.msra.mxu0 0
    %6132 = vmatprep.subr.bf16.mxu0 0
    %6133 = vmatpush2.bf16.msra.mxu0 0
    %6134 = vmatprep.subr.bf16.mxu0 0
    %6135 = vmatpush2.bf16.msra.mxu0 0
    %6136 = vmatprep.subr.bf16.mxu0 0
    %6137 = vmatpush2.bf16.msra.mxu0 0
    %6138 = vmatprep.mubr.bf16.mxu0 0
    %6139 = vmatmul.mubr.bf16.gmra.mxu0 %v5913
    %v6140 = vpop.f32.mrf.mxu0
    %v6141 = vadd.f32 0.0, %v6140
    %v6142 = vpop.f32.mrf.mxu0
    %v6143 = vadd.f32 0.0, %v6142
    %v6144 = vpop.f32.mrf.mxu0
    %v6145 = vpop.f32.mrf.mxu0
    %6146 = vdwg.mxu0
    %6147 = vmatprep.subr.bf16.mxu0 %v6073
    %6148 = vmatpush1.bf16.msra.mxu0 %v6072
    %6149 = vmatprep.subr.bf16.mxu0 %v6069
    %6150 = vmatpush1.bf16.msra.mxu0 %v6068
    %6151 = vmatprep.subr.bf16.mxu0 %v6065
    %6152 = vmatpush1.bf16.msra.mxu0 %v6064
    %6153 = vmatprep.subr.bf16.mxu0 %v6061
    %6154 = vmatpush1.bf16.msra.mxu0 %v6060
    %6155 = vmatprep.subr.bf16.mxu0 %v6057
    %6156 = vmatpush1.bf16.msra.mxu0 %v6056
    %6157 = vmatprep.subr.bf16.mxu0 %v6053
    %6158 = vmatpush1.bf16.msra.mxu0 %v6052
    %6159 = vmatprep.subr.bf16.mxu0 %v6049
    %6160 = vmatpush1.bf16.msra.mxu0 %v6048
    %6161 = vmatprep.subr.bf16.mxu0 %v6045
    %6162 = vmatpush1.bf16.msra.mxu0 %v6044
    %6163 = vmatprep.subr.bf16.mxu0 0
    %6164 = vmatpush2.bf16.msra.mxu0 0
    %6165 = vmatprep.subr.bf16.mxu0 0
    %6166 = vmatpush2.bf16.msra.mxu0 0
    %6167 = vmatprep.subr.bf16.mxu0 0
    %6168 = vmatpush2.bf16.msra.mxu0 0
    %6169 = vmatprep.subr.bf16.mxu0 0
    %6170 = vmatpush2.bf16.msra.mxu0 0
    %6171 = vmatprep.subr.bf16.mxu0 0
    %6172 = vmatpush2.bf16.msra.mxu0 0
    %6173 = vmatprep.subr.bf16.mxu0 0
    %6174 = vmatpush2.bf16.msra.mxu0 0
    %6175 = vmatprep.subr.bf16.mxu0 0
    %6176 = vmatpush2.bf16.msra.mxu0 0
    %6177 = vmatprep.subr.bf16.mxu0 0
    %6178 = vmatpush2.bf16.msra.mxu0 0
    %6179 = vmatprep.mubr.bf16.mxu0 0
    %6180 = vmatmul.mubr.bf16.gmra.mxu0 %v5913
    %v6181 = vpop.f32.mrf.mxu0
    %v6182 = vadd.f32 0.0, %v6181
    %v6183 = vpop.f32.mrf.mxu0
    %v6184 = vadd.f32 0.0, %v6183
    %v6185 = vpop.f32.mrf.mxu0
    %v6186 = vpop.f32.mrf.mxu0
    %6187 = vdwg.mxu0
    %v6188 = vadd.f32 %v5909, %v6141
    %v6189 = vadd.f32 %v5910, %v6143
    %v6190 = vadd.f32 %v5911, %v6182
    %v6191 = vadd.f32 %v5912, %v6184
    %v6192 = vmul.f32 %v6188, 0.5
    %v6193 = vtanh.pop %v6192
    %v6194 = vmul.f32 %v6193, 0.5
    %v6195 = vadd.f32 %v6194, 0.5
    %v6196 = vmul.f32 %v6189, 0.5
    %v6197 = vtanh.pop %v6196
    %v6198 = vmul.f32 %v6197, 0.5
    %v6199 = vadd.f32 %v6198, 0.5
    %v6200 = vtanh.pop %v6190
    %v6201 = vmul.f32 %v6191, 0.5
    %v6202 = vtanh.pop %v6201
    %v6203 = vmul.f32 %v6202, 0.5
    %v6204 = vadd.f32 %v6203, 0.5
    %v6205 = vmul.f32 %v6199, %v5905
    %v6206 = vmul.f32 %v6195, %v6200
    %v6207 = vadd.f32 %v6205, %v6206
    %v6208 = vtanh.pop %v6207
    %v6209 = vmul.f32 %v6204, %v6208
    %6210 = vst [vmem:[#allocation2 + $0x30] sm:$0xff] %v6209
    %v6211 = vld [vmem:[#allocation3 + $0xe0] sm:$0xff]
    %v6212 = vld [vmem:[#allocation3 + $0xe8] sm:$0xff]
    %v6213 = vld [vmem:[#allocation3 + $0xf0] sm:$0xff]
    %v6214 = vld [vmem:[#allocation3 + $0xf8] sm:$0xff]
    %v6215 = vpack.c.bf16 %v6209, %v6209
    %v6216 = vld [vmem:[#allocation9] sm:$0xff]
    %v6217 = vld [vmem:[#allocation9 + $0x8] sm:$0xff]
    %v6218 = vld [vmem:[#allocation9 + $0x10] sm:$0xff]
    %v6219 = vld [vmem:[#allocation9 + $0x18] sm:$0xff]
    %v6220 = vld [vmem:[#allocation9 + $0x20] sm:$0xff]
    %v6221 = vld [vmem:[#allocation9 + $0x28] sm:$0xff]
    %v6222 = vld [vmem:[#allocation9 + $0x30] sm:$0xff]
    %v6223 = vld [vmem:[#allocation9 + $0x38] sm:$0xff]
    %v6224 = vld [vmem:[#allocation9 + $0x40] sm:$0xff]
    %v6225 = vld [vmem:[#allocation9 + $0x48] sm:$0xff]
    %v6226 = vld [vmem:[#allocation9 + $0x50] sm:$0xff]
    %v6227 = vld [vmem:[#allocation9 + $0x58] sm:$0xff]
    %v6228 = vld [vmem:[#allocation9 + $0x60] sm:$0xff]
    %v6229 = vld [vmem:[#allocation9 + $0x68] sm:$0xff]
    %v6230 = vld [vmem:[#allocation9 + $0x70] sm:$0xff]
    %v6231 = vld [vmem:[#allocation9 + $0x78] sm:$0xff]
    %v6232 = vld [vmem:[#allocation9 + $0x80] sm:$0xff]
    %v6233 = vld [vmem:[#allocation9 + $0x88] sm:$0xff]
    %v6234 = vld [vmem:[#allocation9 + $0x90] sm:$0xff]
    %v6235 = vld [vmem:[#allocation9 + $0x98] sm:$0xff]
    %v6236 = vld [vmem:[#allocation9 + $0xa0] sm:$0xff]
    %v6237 = vld [vmem:[#allocation9 + $0xa8] sm:$0xff]
    %v6238 = vld [vmem:[#allocation9 + $0xb0] sm:$0xff]
    %v6239 = vld [vmem:[#allocation9 + $0xb8] sm:$0xff]
    %v6240 = vld [vmem:[#allocation9 + $0xc0] sm:$0xff]
    %v6241 = vld [vmem:[#allocation9 + $0xc8] sm:$0xff]
    %v6242 = vld [vmem:[#allocation9 + $0xd0] sm:$0xff]
    %v6243 = vld [vmem:[#allocation9 + $0xd8] sm:$0xff]
    %v6244 = vld [vmem:[#allocation9 + $0xe0] sm:$0xff]
    %v6245 = vld [vmem:[#allocation9 + $0xe8] sm:$0xff]
    %v6246 = vld [vmem:[#allocation9 + $0xf0] sm:$0xff]
    %v6247 = vld [vmem:[#allocation9 + $0xf8] sm:$0xff]
    %v6280 = vunpack.c.l.b16 %v6216
    %v6281 = vunpack.c.h.b16 %v6216
    %v6282 = vunpack.c.l.b16 %v6217
    %v6283 = vunpack.c.h.b16 %v6217
    %v6284 = vunpack.c.l.b16 %v6218
    %v6285 = vunpack.c.h.b16 %v6218
    %v6286 = vunpack.c.l.b16 %v6219
    %v6287 = vunpack.c.h.b16 %v6219
    %v6288 = vunpack.c.l.b16 %v6220
    %v6289 = vunpack.c.h.b16 %v6220
    %v6290 = vunpack.c.l.b16 %v6221
    %v6291 = vunpack.c.h.b16 %v6221
    %v6292 = vunpack.c.l.b16 %v6222
    %v6293 = vunpack.c.h.b16 %v6222
    %v6294 = vunpack.c.l.b16 %v6223
    %v6295 = vunpack.c.h.b16 %v6223
    %v6296 = vunpack.c.l.b16 %v6224
    %v6297 = vunpack.c.h.b16 %v6224
    %v6298 = vunpack.c.l.b16 %v6225
    %v6299 = vunpack.c.h.b16 %v6225
    %v6300 = vunpack.c.l.b16 %v6226
    %v6301 = vunpack.c.h.b16 %v6226
    %v6302 = vunpack.c.l.b16 %v6227
    %v6303 = vunpack.c.h.b16 %v6227
    %v6304 = vunpack.c.l.b16 %v6228
    %v6305 = vunpack.c.h.b16 %v6228
    %v6306 = vunpack.c.l.b16 %v6229
    %v6307 = vunpack.c.h.b16 %v6229
    %v6308 = vunpack.c.l.b16 %v6230
    %v6309 = vunpack.c.h.b16 %v6230
    %v6310 = vunpack.c.l.b16 %v6231
    %v6311 = vunpack.c.h.b16 %v6231
    %v6312 = vunpack.c.l.b16 %v6232
    %v6313 = vunpack.c.h.b16 %v6232
    %v6314 = vunpack.c.l.b16 %v6233
    %v6315 = vunpack.c.h.b16 %v6233
    %v6316 = vunpack.c.l.b16 %v6234
    %v6317 = vunpack.c.h.b16 %v6234
    %v6318 = vunpack.c.l.b16 %v6235
    %v6319 = vunpack.c.h.b16 %v6235
    %v6320 = vunpack.c.l.b16 %v6236
    %v6321 = vunpack.c.h.b16 %v6236
    %v6322 = vunpack.c.l.b16 %v6237
    %v6323 = vunpack.c.h.b16 %v6237
    %v6324 = vunpack.c.l.b16 %v6238
    %v6325 = vunpack.c.h.b16 %v6238
    %v6326 = vunpack.c.l.b16 %v6239
    %v6327 = vunpack.c.h.b16 %v6239
    %v6328 = vunpack.c.l.b16 %v6240
    %v6329 = vunpack.c.h.b16 %v6240
    %v6330 = vunpack.c.l.b16 %v6241
    %v6331 = vunpack.c.h.b16 %v6241
    %v6332 = vunpack.c.l.b16 %v6242
    %v6333 = vunpack.c.h.b16 %v6242
    %v6334 = vunpack.c.l.b16 %v6243
    %v6335 = vunpack.c.h.b16 %v6243
    %v6336 = vunpack.c.l.b16 %v6244
    %v6337 = vunpack.c.h.b16 %v6244
    %v6338 = vunpack.c.l.b16 %v6245
    %v6339 = vunpack.c.h.b16 %v6245
    %v6340 = vunpack.c.l.b16 %v6246
    %v6341 = vunpack.c.h.b16 %v6246
    %v6342 = vunpack.c.l.b16 %v6247
    %v6343 = vunpack.c.h.b16 %v6247
    %v6344 = vpack.c.b16 %v6284, %v6280
    %v6345 = vpack.c.b16 %v6285, %v6281
    %v6346 = vpack.c.b16 %v6286, %v6282
    %v6347 = vpack.c.b16 %v6287, %v6283
    %v6348 = vpack.c.b16 %v6292, %v6288
    %v6349 = vpack.c.b16 %v6293, %v6289
    %v6350 = vpack.c.b16 %v6294, %v6290
    %v6351 = vpack.c.b16 %v6295, %v6291
    %v6352 = vpack.c.b16 %v6300, %v6296
    %v6353 = vpack.c.b16 %v6301, %v6297
    %v6354 = vpack.c.b16 %v6302, %v6298
    %v6355 = vpack.c.b16 %v6303, %v6299
    %v6356 = vpack.c.b16 %v6308, %v6304
    %v6357 = vpack.c.b16 %v6309, %v6305
    %v6358 = vpack.c.b16 %v6310, %v6306
    %v6359 = vpack.c.b16 %v6311, %v6307
    %v6360 = vpack.c.b16 %v6316, %v6312
    %v6361 = vpack.c.b16 %v6317, %v6313
    %v6362 = vpack.c.b16 %v6318, %v6314
    %v6363 = vpack.c.b16 %v6319, %v6315
    %v6364 = vpack.c.b16 %v6324, %v6320
    %v6365 = vpack.c.b16 %v6325, %v6321
    %v6366 = vpack.c.b16 %v6326, %v6322
    %v6367 = vpack.c.b16 %v6327, %v6323
    %v6368 = vpack.c.b16 %v6332, %v6328
    %v6369 = vpack.c.b16 %v6333, %v6329
    %v6370 = vpack.c.b16 %v6334, %v6330
    %v6371 = vpack.c.b16 %v6335, %v6331
    %v6372 = vpack.c.b16 %v6340, %v6336
    %v6373 = vpack.c.b16 %v6341, %v6337
    %v6374 = vpack.c.b16 %v6342, %v6338
    %v6375 = vpack.c.b16 %v6343, %v6339
    %6408 = vmatprep.subr.bf16.mxu0 %v6373
    %6409 = vmatpush1.bf16.msra.mxu0 %v6372
    %6410 = vmatprep.subr.bf16.mxu0 %v6369
    %6411 = vmatpush1.bf16.msra.mxu0 %v6368
    %6412 = vmatprep.subr.bf16.mxu0 %v6365
    %6413 = vmatpush1.bf16.msra.mxu0 %v6364
    %6414 = vmatprep.subr.bf16.mxu0 %v6361
    %6415 = vmatpush1.bf16.msra.mxu0 %v6360
    %6416 = vmatprep.subr.bf16.mxu0 %v6357
    %6417 = vmatpush1.bf16.msra.mxu0 %v6356
    %6418 = vmatprep.subr.bf16.mxu0 %v6353
    %6419 = vmatpush1.bf16.msra.mxu0 %v6352
    %6420 = vmatprep.subr.bf16.mxu0 %v6349
    %6421 = vmatpush1.bf16.msra.mxu0 %v6348
    %6422 = vmatprep.subr.bf16.mxu0 %v6345
    %6423 = vmatpush1.bf16.msra.mxu0 %v6344
    %6424 = vmatprep.subr.bf16.mxu0 0
    %6425 = vmatpush2.bf16.msra.mxu0 0
    %6426 = vmatprep.subr.bf16.mxu0 0
    %6427 = vmatpush2.bf16.msra.mxu0 0
    %6428 = vmatprep.subr.bf16.mxu0 0
    %6429 = vmatpush2.bf16.msra.mxu0 0
    %6430 = vmatprep.subr.bf16.mxu0 0
    %6431 = vmatpush2.bf16.msra.mxu0 0
    %6432 = vmatprep.subr.bf16.mxu0 0
    %6433 = vmatpush2.bf16.msra.mxu0 0
    %6434 = vmatprep.subr.bf16.mxu0 0
    %6435 = vmatpush2.bf16.msra.mxu0 0
    %6436 = vmatprep.subr.bf16.mxu0 0
    %6437 = vmatpush2.bf16.msra.mxu0 0
    %6438 = vmatprep.subr.bf16.mxu0 0
    %6439 = vmatpush2.bf16.msra.mxu0 0
    %6440 = vmatprep.mubr.bf16.mxu0 0
    %6441 = vmatmul.mubr.bf16.gmra.mxu0 %v6215
    %v6442 = vpop.f32.mrf.mxu0
    %v6443 = vadd.f32 0.0, %v6442
    %v6444 = vpop.f32.mrf.mxu0
    %v6445 = vadd.f32 0.0, %v6444
    %v6446 = vpop.f32.mrf.mxu0
    %v6447 = vpop.f32.mrf.mxu0
    %6448 = vdwg.mxu0
    %6449 = vmatprep.subr.bf16.mxu0 %v6375
    %6450 = vmatpush1.bf16.msra.mxu0 %v6374
    %6451 = vmatprep.subr.bf16.mxu0 %v6371
    %6452 = vmatpush1.bf16.msra.mxu0 %v6370
    %6453 = vmatprep.subr.bf16.mxu0 %v6367
    %6454 = vmatpush1.bf16.msra.mxu0 %v6366
    %6455 = vmatprep.subr.bf16.mxu0 %v6363
    %6456 = vmatpush1.bf16.msra.mxu0 %v6362
    %6457 = vmatprep.subr.bf16.mxu0 %v6359
    %6458 = vmatpush1.bf16.msra.mxu0 %v6358
    %6459 = vmatprep.subr.bf16.mxu0 %v6355
    %6460 = vmatpush1.bf16.msra.mxu0 %v6354
    %6461 = vmatprep.subr.bf16.mxu0 %v6351
    %6462 = vmatpush1.bf16.msra.mxu0 %v6350
    %6463 = vmatprep.subr.bf16.mxu0 %v6347
    %6464 = vmatpush1.bf16.msra.mxu0 %v6346
    %6465 = vmatprep.subr.bf16.mxu0 0
    %6466 = vmatpush2.bf16.msra.mxu0 0
    %6467 = vmatprep.subr.bf16.mxu0 0
    %6468 = vmatpush2.bf16.msra.mxu0 0
    %6469 = vmatprep.subr.bf16.mxu0 0
    %6470 = vmatpush2.bf16.msra.mxu0 0
    %6471 = vmatprep.subr.bf16.mxu0 0
    %6472 = vmatpush2.bf16.msra.mxu0 0
    %6473 = vmatprep.subr.bf16.mxu0 0
    %6474 = vmatpush2.bf16.msra.mxu0 0
    %6475 = vmatprep.subr.bf16.mxu0 0
    %6476 = vmatpush2.bf16.msra.mxu0 0
    %6477 = vmatprep.subr.bf16.mxu0 0
    %6478 = vmatpush2.bf16.msra.mxu0 0
    %6479 = vmatprep.subr.bf16.mxu0 0
    %6480 = vmatpush2.bf16.msra.mxu0 0
    %6481 = vmatprep.mubr.bf16.mxu0 0
    %6482 = vmatmul.mubr.bf16.gmra.mxu0 %v6215
    %v6483 = vpop.f32.mrf.mxu0
    %v6484 = vadd.f32 0.0, %v6483
    %v6485 = vpop.f32.mrf.mxu0
    %v6486 = vadd.f32 0.0, %v6485
    %v6487 = vpop.f32.mrf.mxu0
    %v6488 = vpop.f32.mrf.mxu0
    %6489 = vdwg.mxu0
    %v6490 = vadd.f32 %v6211, %v6443
    %v6491 = vadd.f32 %v6212, %v6445
    %v6492 = vadd.f32 %v6213, %v6484
    %v6493 = vadd.f32 %v6214, %v6486
    %v6494 = vmul.f32 %v6490, 0.5
    %v6495 = vtanh.pop %v6494
    %v6496 = vmul.f32 %v6495, 0.5
    %v6497 = vadd.f32 %v6496, 0.5
    %v6498 = vmul.f32 %v6491, 0.5
    %v6499 = vtanh.pop %v6498
    %v6500 = vmul.f32 %v6499, 0.5
    %v6501 = vadd.f32 %v6500, 0.5
    %v6502 = vtanh.pop %v6492
    %v6503 = vmul.f32 %v6493, 0.5
    %v6504 = vtanh.pop %v6503
    %v6505 = vmul.f32 %v6504, 0.5
    %v6506 = vadd.f32 %v6505, 0.5
    %v6507 = vmul.f32 %v6501, %v6207
    %v6508 = vmul.f32 %v6497, %v6502
    %v6509 = vadd.f32 %v6507, %v6508
    %v6510 = vtanh.pop %v6509
    %v6511 = vmul.f32 %v6506, %v6510
    %6512 = vst [vmem:[#allocation2 + $0x38] sm:$0xff] %v6511
    %v6513 = vld [vmem:[#allocation2] sm:$0xff]
    %v6514 = vld [vmem:[#allocation2 + $0x8] sm:$0xff]
    %v6515 = vld [vmem:[#allocation2 + $0x10] sm:$0xff]
    %v6516 = vld [vmem:[#allocation2 + $0x18] sm:$0xff]
    %v6517 = vld [vmem:[#allocation2 + $0x20] sm:$0xff]
    %v6518 = vld [vmem:[#allocation2 + $0x28] sm:$0xff]
    %v6519 = vld [vmem:[#allocation2 + $0x30] sm:$0xff]
    %v6520 = vld [vmem:[#allocation2 + $0x38] sm:$0xff]
    %v6521 = vpack.c.bf16 %v6514, %v6513
    %v6522 = vpack.c.bf16 %v6516, %v6515
    %v6523 = vpack.c.bf16 %v6518, %v6517
    %v6524 = vpack.c.bf16 %v6520, %v6519
    %v6525 = vld [vmem:[#allocation10] sm:$0xff]
    %v6526 = vld [vmem:[#allocation10 + $0x8] sm:$0xff]
    %v6527 = vld [vmem:[#allocation10 + $0x10] sm:$0xff]
    %v6528 = vld [vmem:[#allocation10 + $0x18] sm:$0xff]
    %v6529 = vld [vmem:[#allocation10 + $0x20] sm:$0xff]
    %v6530 = vld [vmem:[#allocation10 + $0x28] sm:$0xff]
    %v6531 = vld [vmem:[#allocation10 + $0x30] sm:$0xff]
    %v6532 = vld [vmem:[#allocation10 + $0x38] sm:$0xff]
    %v6533 = vld [vmem:[#allocation10 + $0x40] sm:$0xff]
    %v6534 = vld [vmem:[#allocation10 + $0x48] sm:$0xff]
    %v6535 = vld [vmem:[#allocation10 + $0x50] sm:$0xff]
    %v6536 = vld [vmem:[#allocation10 + $0x58] sm:$0xff]
    %v6537 = vld [vmem:[#allocation10 + $0x60] sm:$0xff]
    %v6538 = vld [vmem:[#allocation10 + $0x68] sm:$0xff]
    %v6539 = vld [vmem:[#allocation10 + $0x70] sm:$0xff]
    %v6540 = vld [vmem:[#allocation10 + $0x78] sm:$0xff]
    %v6541 = vld [vmem:[#allocation10 + $0x80] sm:$0xff]
    %v6542 = vld [vmem:[#allocation10 + $0x88] sm:$0xff]
    %v6543 = vld [vmem:[#allocation10 + $0x90] sm:$0xff]
    %v6544 = vld [vmem:[#allocation10 + $0x98] sm:$0xff]
    %v6545 = vld [vmem:[#allocation10 + $0xa0] sm:$0xff]
    %v6546 = vld [vmem:[#allocation10 + $0xa8] sm:$0xff]
    %v6547 = vld [vmem:[#allocation10 + $0xb0] sm:$0xff]
    %v6548 = vld [vmem:[#allocation10 + $0xb8] sm:$0xff]
    %v6549 = vld [vmem:[#allocation10 + $0xc0] sm:$0xff]
    %v6550 = vld [vmem:[#allocation10 + $0xc8] sm:$0xff]
    %v6551 = vld [vmem:[#allocation10 + $0xd0] sm:$0xff]
    %v6552 = vld [vmem:[#allocation10 + $0xd8] sm:$0xff]
    %v6553 = vld [vmem:[#allocation10 + $0xe0] sm:$0xff]
    %v6554 = vld [vmem:[#allocation10 + $0xe8] sm:$0xff]
    %v6555 = vld [vmem:[#allocation10 + $0xf0] sm:$0xff]
    %v6556 = vld [vmem:[#allocation10 + $0xf8] sm:$0xff]
    %v6557 = vld [vmem:[%s9] sm:$0xf]
    %v6559 = vlaneseq
    %v6560 = vshrl.u32 %v6559, 7
    %v6561 = vsub.s32 0, %v6560
    %v6562 = vrot.slane %v6557, %v6561
    %v6563 = vlaneseq
    %v6564 = vshrl.u32 %v6563, 7
    %v6565 = vsub.s32 1, %v6564
    %v6566 = vrot.slane %v6557, %v6565
    %v6567 = vlaneseq
    %v6568 = vshrl.u32 %v6567, 7
    %v6569 = vsub.s32 2, %v6568
    %v6570 = vrot.slane %v6557, %v6569
    %v6571 = vlaneseq
    %v6572 = vshrl.u32 %v6571, 7
    %v6573 = vsub.s32 3, %v6572
    %v6574 = vrot.slane %v6557, %v6573
    %v6611 = vunpack.c.l.b16 %v6525
    %v6612 = vunpack.c.h.b16 %v6525
    %v6613 = vunpack.c.l.b16 %v6526
    %v6614 = vunpack.c.h.b16 %v6526
    %v6615 = vunpack.c.l.b16 %v6527
    %v6616 = vunpack.c.h.b16 %v6527
    %v6617 = vunpack.c.l.b16 %v6528
    %v6618 = vunpack.c.h.b16 %v6528
    %v6619 = vunpack.c.l.b16 %v6529
    %v6620 = vunpack.c.h.b16 %v6529
    %v6621 = vunpack.c.l.b16 %v6530
    %v6622 = vunpack.c.h.b16 %v6530
    %v6623 = vunpack.c.l.b16 %v6531
    %v6624 = vunpack.c.h.b16 %v6531
    %v6625 = vunpack.c.l.b16 %v6532
    %v6626 = vunpack.c.h.b16 %v6532
    %v6627 = vunpack.c.l.b16 %v6533
    %v6628 = vunpack.c.h.b16 %v6533
    %v6629 = vunpack.c.l.b16 %v6534
    %v6630 = vunpack.c.h.b16 %v6534
    %v6631 = vunpack.c.l.b16 %v6535
    %v6632 = vunpack.c.h.b16 %v6535
    %v6633 = vunpack.c.l.b16 %v6536
    %v6634 = vunpack.c.h.b16 %v6536
    %v6635 = vunpack.c.l.b16 %v6537
    %v6636 = vunpack.c.h.b16 %v6537
    %v6637 = vunpack.c.l.b16 %v6538
    %v6638 = vunpack.c.h.b16 %v6538
    %v6639 = vunpack.c.l.b16 %v6539
    %v6640 = vunpack.c.h.b16 %v6539
    %v6641 = vunpack.c.l.b16 %v6540
    %v6642 = vunpack.c.h.b16 %v6540
    %v6643 = vunpack.c.l.b16 %v6541
    %v6644 = vunpack.c.h.b16 %v6541
    %v6645 = vunpack.c.l.b16 %v6542
    %v6646 = vunpack.c.h.b16 %v6542
    %v6647 = vunpack.c.l.b16 %v6543
    %v6648 = vunpack.c.h.b16 %v6543
    %v6649 = vunpack.c.l.b16 %v6544
    %v6650 = vunpack.c.h.b16 %v6544
    %v6651 = vunpack.c.l.b16 %v6545
    %v6652 = vunpack.c.h.b16 %v6545
    %v6653 = vunpack.c.l.b16 %v6546
    %v6654 = vunpack.c.h.b16 %v6546
    %v6655 = vunpack.c.l.b16 %v6547
    %v6656 = vunpack.c.h.b16 %v6547
    %v6657 = vunpack.c.l.b16 %v6548
    %v6658 = vunpack.c.h.b16 %v6548
    %v6659 = vunpack.c.l.b16 %v6549
    %v6660 = vunpack.c.h.b16 %v6549
    %v6661 = vunpack.c.l.b16 %v6550
    %v6662 = vunpack.c.h.b16 %v6550
    %v6663 = vunpack.c.l.b16 %v6551
    %v6664 = vunpack.c.h.b16 %v6551
    %v6665 = vunpack.c.l.b16 %v6552
    %v6666 = vunpack.c.h.b16 %v6552
    %v6667 = vunpack.c.l.b16 %v6553
    %v6668 = vunpack.c.h.b16 %v6553
    %v6669 = vunpack.c.l.b16 %v6554
    %v6670 = vunpack.c.h.b16 %v6554
    %v6671 = vunpack.c.l.b16 %v6555
    %v6672 = vunpack.c.h.b16 %v6555
    %v6673 = vunpack.c.l.b16 %v6556
    %v6674 = vunpack.c.h.b16 %v6556
    %v6675 = vpack.c.b16 %v6615, %v6611
    %v6676 = vpack.c.b16 %v6616, %v6612
    %v6677 = vpack.c.b16 %v6617, %v6613
    %v6678 = vpack.c.b16 %v6618, %v6614
    %v6679 = vpack.c.b16 %v6623, %v6619
    %v6680 = vpack.c.b16 %v6624, %v6620
    %v6681 = vpack.c.b16 %v6625, %v6621
    %v6682 = vpack.c.b16 %v6626, %v6622
    %v6683 = vpack.c.b16 %v6631, %v6627
    %v6684 = vpack.c.b16 %v6632, %v6628
    %v6685 = vpack.c.b16 %v6633, %v6629
    %v6686 = vpack.c.b16 %v6634, %v6630
    %v6687 = vpack.c.b16 %v6639, %v6635
    %v6688 = vpack.c.b16 %v6640, %v6636
    %v6689 = vpack.c.b16 %v6641, %v6637
    %v6690 = vpack.c.b16 %v6642, %v6638
    %v6691 = vpack.c.b16 %v6647, %v6643
    %v6692 = vpack.c.b16 %v6648, %v6644
    %v6693 = vpack.c.b16 %v6649, %v6645
    %v6694 = vpack.c.b16 %v6650, %v6646
    %v6695 = vpack.c.b16 %v6655, %v6651
    %v6696 = vpack.c.b16 %v6656, %v6652
    %v6697 = vpack.c.b16 %v6657, %v6653
    %v6698 = vpack.c.b16 %v6658, %v6654
    %v6699 = vpack.c.b16 %v6663, %v6659
    %v6700 = vpack.c.b16 %v6664, %v6660
    %v6701 = vpack.c.b16 %v6665, %v6661
    %v6702 = vpack.c.b16 %v6666, %v6662
    %v6703 = vpack.c.b16 %v6671, %v6667
    %v6704 = vpack.c.b16 %v6672, %v6668
    %v6705 = vpack.c.b16 %v6673, %v6669
    %v6706 = vpack.c.b16 %v6674, %v6670
    %6739 = vmatprep.subr.bf16.mxu0 %v6704
    %6740 = vmatpush1.bf16.msra.mxu0 %v6703
    %6741 = vmatprep.subr.bf16.mxu0 %v6700
    %6742 = vmatpush1.bf16.msra.mxu0 %v6699
    %6743 = vmatprep.subr.bf16.mxu0 %v6696
    %6744 = vmatpush1.bf16.msra.mxu0 %v6695
    %6745 = vmatprep.subr.bf16.mxu0 %v6692
    %6746 = vmatpush1.bf16.msra.mxu0 %v6691
    %6747 = vmatprep.subr.bf16.mxu0 %v6688
    %6748 = vmatpush1.bf16.msra.mxu0 %v6687
    %6749 = vmatprep.subr.bf16.mxu0 %v6684
    %6750 = vmatpush1.bf16.msra.mxu0 %v6683
    %6751 = vmatprep.subr.bf16.mxu0 %v6680
    %6752 = vmatpush1.bf16.msra.mxu0 %v6679
    %6753 = vmatprep.subr.bf16.mxu0 %v6676
    %6754 = vmatpush1.bf16.msra.mxu0 %v6675
    %6755 = vmatprep.subr.bf16.mxu0 0
    %6756 = vmatpush2.bf16.msra.mxu0 0
    %6757 = vmatprep.subr.bf16.mxu0 0
    %6758 = vmatpush2.bf16.msra.mxu0 0
    %6759 = vmatprep.subr.bf16.mxu0 0
    %6760 = vmatpush2.bf16.msra.mxu0 0
    %6761 = vmatprep.subr.bf16.mxu0 0
    %6762 = vmatpush2.bf16.msra.mxu0 0
    %6763 = vmatprep.subr.bf16.mxu0 0
    %6764 = vmatpush2.bf16.msra.mxu0 0
    %6765 = vmatprep.subr.bf16.mxu0 0
    %6766 = vmatpush2.bf16.msra.mxu0 0
    %6767 = vmatprep.subr.bf16.mxu0 0
    %6768 = vmatpush2.bf16.msra.mxu0 0
    %6769 = vmatprep.subr.bf16.mxu0 0
    %6770 = vmatpush2.bf16.msra.mxu0 0
    %6771 = vmatprep.mubr.bf16.mxu0 0
    %6772 = vmatmul.mubr.bf16.gmra.mxu0 %v6521
    %v6773 = vpop.f32.mrf.mxu0
    %v6774 = vadd.f32 %v6562, %v6773
    %v6775 = vpop.f32.mrf.mxu0
    %v6776 = vadd.f32 %v6566, %v6775
    %v6777 = vpop.f32.mrf.mxu0
    %v6778 = vadd.f32 %v6562, %v6777
    %v6779 = vpop.f32.mrf.mxu0
    %v6780 = vadd.f32 %v6566, %v6779
    %6781 = vmatprep.mubr.bf16.mxu0 0
    %6782 = vmatmul.mubr.bf16.gmra.mxu0 %v6522
    %v6783 = vpop.f32.mrf.mxu0
    %v6784 = vadd.f32 %v6562, %v6783
    %v6785 = vpop.f32.mrf.mxu0
    %v6786 = vadd.f32 %v6566, %v6785
    %v6787 = vpop.f32.mrf.mxu0
    %v6788 = vadd.f32 %v6562, %v6787
    %v6789 = vpop.f32.mrf.mxu0
    %v6790 = vadd.f32 %v6566, %v6789
    %6791 = vmatprep.mubr.bf16.mxu0 0
    %6792 = vmatmul.mubr.bf16.gmra.mxu0 %v6523
    %v6793 = vpop.f32.mrf.mxu0
    %v6794 = vadd.f32 %v6562, %v6793
    %v6795 = vpop.f32.mrf.mxu0
    %v6796 = vadd.f32 %v6566, %v6795
    %v6797 = vpop.f32.mrf.mxu0
    %v6798 = vadd.f32 %v6562, %v6797
    %v6799 = vpop.f32.mrf.mxu0
    %v6800 = vadd.f32 %v6566, %v6799
    %6801 = vmatprep.mubr.bf16.mxu0 0
    %6802 = vmatmul.mubr.bf16.gmra.mxu0 %v6524
    %v6803 = vpop.f32.mrf.mxu0
    %v6804 = vadd.f32 %v6562, %v6803
    %v6805 = vpop.f32.mrf.mxu0
    %v6806 = vadd.f32 %v6566, %v6805
    %v6807 = vpop.f32.mrf.mxu0
    %v6808 = vadd.f32 %v6562, %v6807
    %v6809 = vpop.f32.mrf.mxu0
    %v6810 = vadd.f32 %v6566, %v6809
    %6811 = vdwg.mxu0
    %6812 = vmatprep.subr.bf16.mxu0 %v6706
    %6813 = vmatpush1.bf16.msra.mxu0 %v6705
    %6814 = vmatprep.subr.bf16.mxu0 %v6702
    %6815 = vmatpush1.bf16.msra.mxu0 %v6701
    %6816 = vmatprep.subr.bf16.mxu0 %v6698
    %6817 = vmatpush1.bf16.msra.mxu0 %v6697
    %6818 = vmatprep.subr.bf16.mxu0 %v6694
    %6819 = vmatpush1.bf16.msra.mxu0 %v6693
    %6820 = vmatprep.subr.bf16.mxu0 %v6690
    %6821 = vmatpush1.bf16.msra.mxu0 %v6689
    %6822 = vmatprep.subr.bf16.mxu0 %v6686
    %6823 = vmatpush1.bf16.msra.mxu0 %v6685
    %6824 = vmatprep.subr.bf16.mxu0 %v6682
    %6825 = vmatpush1.bf16.msra.mxu0 %v6681
    %6826 = vmatprep.subr.bf16.mxu0 %v6678
    %6827 = vmatpush1.bf16.msra.mxu0 %v6677
    %6828 = vmatprep.subr.bf16.mxu0 0
    %6829 = vmatpush2.bf16.msra.mxu0 0
    %6830 = vmatprep.subr.bf16.mxu0 0
    %6831 = vmatpush2.bf16.msra.mxu0 0
    %6832 = vmatprep.subr.bf16.mxu0 0
    %6833 = vmatpush2.bf16.msra.mxu0 0
    %6834 = vmatprep.subr.bf16.mxu0 0
    %6835 = vmatpush2.bf16.msra.mxu0 0
    %6836 = vmatprep.subr.bf16.mxu0 0
    %6837 = vmatpush2.bf16.msra.mxu0 0
    %6838 = vmatprep.subr.bf16.mxu0 0
    %6839 = vmatpush2.bf16.msra.mxu0 0
    %6840 = vmatprep.subr.bf16.mxu0 0
    %6841 = vmatpush2.bf16.msra.mxu0 0
    %6842 = vmatprep.subr.bf16.mxu0 0
    %6843 = vmatpush2.bf16.msra.mxu0 0
    %6844 = vmatprep.mubr.bf16.mxu0 0
    %6845 = vmatmul.mubr.bf16.gmra.mxu0 %v6521
    %v6846 = vpop.f32.mrf.mxu0
    %v6847 = vadd.f32 %v6570, %v6846
    %v6848 = vpop.f32.mrf.mxu0
    %v6849 = vadd.f32 %v6574, %v6848
    %v6850 = vpop.f32.mrf.mxu0
    %v6851 = vadd.f32 %v6570, %v6850
    %v6852 = vpop.f32.mrf.mxu0
    %v6853 = vadd.f32 %v6574, %v6852
    %6854 = vmatprep.mubr.bf16.mxu0 0
    %6855 = vmatmul.mubr.bf16.gmra.mxu0 %v6522
    %v6856 = vpop.f32.mrf.mxu0
    %v6857 = vadd.f32 %v6570, %v6856
    %v6858 = vpop.f32.mrf.mxu0
    %v6859 = vadd.f32 %v6574, %v6858
    %v6860 = vpop.f32.mrf.mxu0
    %v6861 = vadd.f32 %v6570, %v6860
    %v6862 = vpop.f32.mrf.mxu0
    %v6863 = vadd.f32 %v6574, %v6862
    %6864 = vmatprep.mubr.bf16.mxu0 0
    %6865 = vmatmul.mubr.bf16.gmra.mxu0 %v6523
    %v6866 = vpop.f32.mrf.mxu0
    %v6867 = vadd.f32 %v6570, %v6866
    %v6868 = vpop.f32.mrf.mxu0
    %v6869 = vadd.f32 %v6574, %v6868
    %v6870 = vpop.f32.mrf.mxu0
    %v6871 = vadd.f32 %v6570, %v6870
    %v6872 = vpop.f32.mrf.mxu0
    %v6873 = vadd.f32 %v6574, %v6872
    %6874 = vmatprep.mubr.bf16.mxu0 0
    %6875 = vmatmul.mubr.bf16.gmra.mxu0 %v6524
    %v6876 = vpop.f32.mrf.mxu0
    %v6877 = vadd.f32 %v6570, %v6876
    %v6878 = vpop.f32.mrf.mxu0
    %v6879 = vadd.f32 %v6574, %v6878
    %v6880 = vpop.f32.mrf.mxu0
    %v6881 = vadd.f32 %v6570, %v6880
    %v6882 = vpop.f32.mrf.mxu0
    %v6883 = vadd.f32 %v6574, %v6882
    %6884 = vdwg.mxu0
    %6885 = vst [vmem:[#allocation3] sm:$0xff] %v6774
    %6886 = vst [vmem:[#allocation3 + $0x8] sm:$0xff] %v6776
    %6887 = vst [vmem:[#allocation3 + $0x10] sm:$0xff] %v6847
    %6888 = vst [vmem:[#allocation3 + $0x18] sm:$0xff] %v6849
    %6889 = vst [vmem:[#allocation3 + $0x20] sm:$0xff] %v6778
    %6890 = vst [vmem:[#allocation3 + $0x28] sm:$0xff] %v6780
    %6891 = vst [vmem:[#allocation3 + $0x30] sm:$0xff] %v6851
    %6892 = vst [vmem:[#allocation3 + $0x38] sm:$0xff] %v6853
    %6893 = vst [vmem:[#allocation3 + $0x40] sm:$0xff] %v6784
    %6894 = vst [vmem:[#allocation3 + $0x48] sm:$0xff] %v6786
    %6895 = vst [vmem:[#allocation3 + $0x50] sm:$0xff] %v6857
    %6896 = vst [vmem:[#allocation3 + $0x58] sm:$0xff] %v6859
    %6897 = vst [vmem:[#allocation3 + $0x60] sm:$0xff] %v6788
    %6898 = vst [vmem:[#allocation3 + $0x68] sm:$0xff] %v6790
    %6899 = vst [vmem:[#allocation3 + $0x70] sm:$0xff] %v6861
    %6900 = vst [vmem:[#allocation3 + $0x78] sm:$0xff] %v6863
    %6901 = vst [vmem:[#allocation3 + $0x80] sm:$0xff] %v6794
    %6902 = vst [vmem:[#allocation3 + $0x88] sm:$0xff] %v6796
    %6903 = vst [vmem:[#allocation3 + $0x90] sm:$0xff] %v6867
    %6904 = vst [vmem:[#allocation3 + $0x98] sm:$0xff] %v6869
    %6905 = vst [vmem:[#allocation3 + $0xa0] sm:$0xff] %v6798
    %6906 = vst [vmem:[#allocation3 + $0xa8] sm:$0xff] %v6800
    %6907 = vst [vmem:[#allocation3 + $0xb0] sm:$0xff] %v6871
    %6908 = vst [vmem:[#allocation3 + $0xb8] sm:$0xff] %v6873
    %6909 = vst [vmem:[#allocation3 + $0xc0] sm:$0xff] %v6804
    %6910 = vst [vmem:[#allocation3 + $0xc8] sm:$0xff] %v6806
    %6911 = vst [vmem:[#allocation3 + $0xd0] sm:$0xff] %v6877
    %6912 = vst [vmem:[#allocation3 + $0xd8] sm:$0xff] %v6879
    %6913 = vst [vmem:[#allocation3 + $0xe0] sm:$0xff] %v6808
    %6914 = vst [vmem:[#allocation3 + $0xe8] sm:$0xff] %v6810
    %6915 = vst [vmem:[#allocation3 + $0xf0] sm:$0xff] %v6881
    %6916 = vst [vmem:[#allocation3 + $0xf8] sm:$0xff] %v6883
    %v6917 = vld [vmem:[#allocation3] sm:$0xff]
    %v6918 = vld [vmem:[#allocation3 + $0x8] sm:$0xff]
    %v6919 = vld [vmem:[#allocation3 + $0x10] sm:$0xff]
    %v6920 = vld [vmem:[#allocation3 + $0x18] sm:$0xff]
    %v6921 = vld [vmem:[#allocation12] sm:$0xff]
    %v6922 = vld [vmem:[#allocation12 + $0x8] sm:$0xff]
    %v6923 = vld [vmem:[#allocation12 + $0x10] sm:$0xff]
    %v6924 = vld [vmem:[#allocation12 + $0x18] sm:$0xff]
    %v6925 = vld [vmem:[#allocation12 + $0x20] sm:$0xff]
    %v6926 = vld [vmem:[#allocation12 + $0x28] sm:$0xff]
    %v6927 = vld [vmem:[#allocation12 + $0x30] sm:$0xff]
    %v6928 = vld [vmem:[#allocation12 + $0x38] sm:$0xff]
    %v6929 = vld [vmem:[#allocation12 + $0x40] sm:$0xff]
    %v6930 = vld [vmem:[#allocation12 + $0x48] sm:$0xff]
    %v6931 = vld [vmem:[#allocation12 + $0x50] sm:$0xff]
    %v6932 = vld [vmem:[#allocation12 + $0x58] sm:$0xff]
    %v6933 = vld [vmem:[#allocation12 + $0x60] sm:$0xff]
    %v6934 = vld [vmem:[#allocation12 + $0x68] sm:$0xff]
    %v6935 = vld [vmem:[#allocation12 + $0x70] sm:$0xff]
    %v6936 = vld [vmem:[#allocation12 + $0x78] sm:$0xff]
    %v6937 = vld [vmem:[#allocation12 + $0x80] sm:$0xff]
    %v6938 = vld [vmem:[#allocation12 + $0x88] sm:$0xff]
    %v6939 = vld [vmem:[#allocation12 + $0x90] sm:$0xff]
    %v6940 = vld [vmem:[#allocation12 + $0x98] sm:$0xff]
    %v6941 = vld [vmem:[#allocation12 + $0xa0] sm:$0xff]
    %v6942 = vld [vmem:[#allocation12 + $0xa8] sm:$0xff]
    %v6943 = vld [vmem:[#allocation12 + $0xb0] sm:$0xff]
    %v6944 = vld [vmem:[#allocation12 + $0xb8] sm:$0xff]
    %v6945 = vld [vmem:[#allocation12 + $0xc0] sm:$0xff]
    %v6946 = vld [vmem:[#allocation12 + $0xc8] sm:$0xff]
    %v6947 = vld [vmem:[#allocation12 + $0xd0] sm:$0xff]
    %v6948 = vld [vmem:[#allocation12 + $0xd8] sm:$0xff]
    %v6949 = vld [vmem:[#allocation12 + $0xe0] sm:$0xff]
    %v6950 = vld [vmem:[#allocation12 + $0xe8] sm:$0xff]
    %v6951 = vld [vmem:[#allocation12 + $0xf0] sm:$0xff]
    %v6952 = vld [vmem:[#allocation12 + $0xf8] sm:$0xff]
    %v6985 = vunpack.c.l.b16 %v6921
    %v6986 = vunpack.c.h.b16 %v6921
    %v6987 = vunpack.c.l.b16 %v6922
    %v6988 = vunpack.c.h.b16 %v6922
    %v6989 = vunpack.c.l.b16 %v6923
    %v6990 = vunpack.c.h.b16 %v6923
    %v6991 = vunpack.c.l.b16 %v6924
    %v6992 = vunpack.c.h.b16 %v6924
    %v6993 = vunpack.c.l.b16 %v6925
    %v6994 = vunpack.c.h.b16 %v6925
    %v6995 = vunpack.c.l.b16 %v6926
    %v6996 = vunpack.c.h.b16 %v6926
    %v6997 = vunpack.c.l.b16 %v6927
    %v6998 = vunpack.c.h.b16 %v6927
    %v6999 = vunpack.c.l.b16 %v6928
    %v7000 = vunpack.c.h.b16 %v6928
    %v7001 = vunpack.c.l.b16 %v6929
    %v7002 = vunpack.c.h.b16 %v6929
    %v7003 = vunpack.c.l.b16 %v6930
    %v7004 = vunpack.c.h.b16 %v6930
    %v7005 = vunpack.c.l.b16 %v6931
    %v7006 = vunpack.c.h.b16 %v6931
    %v7007 = vunpack.c.l.b16 %v6932
    %v7008 = vunpack.c.h.b16 %v6932
    %v7009 = vunpack.c.l.b16 %v6933
    %v7010 = vunpack.c.h.b16 %v6933
    %v7011 = vunpack.c.l.b16 %v6934
    %v7012 = vunpack.c.h.b16 %v6934
    %v7013 = vunpack.c.l.b16 %v6935
    %v7014 = vunpack.c.h.b16 %v6935
    %v7015 = vunpack.c.l.b16 %v6936
    %v7016 = vunpack.c.h.b16 %v6936
    %v7017 = vunpack.c.l.b16 %v6937
    %v7018 = vunpack.c.h.b16 %v6937
    %v7019 = vunpack.c.l.b16 %v6938
    %v7020 = vunpack.c.h.b16 %v6938
    %v7021 = vunpack.c.l.b16 %v6939
    %v7022 = vunpack.c.h.b16 %v6939
    %v7023 = vunpack.c.l.b16 %v6940
    %v7024 = vunpack.c.h.b16 %v6940
    %v7025 = vunpack.c.l.b16 %v6941
    %v7026 = vunpack.c.h.b16 %v6941
    %v7027 = vunpack.c.l.b16 %v6942
    %v7028 = vunpack.c.h.b16 %v6942
    %v7029 = vunpack.c.l.b16 %v6943
    %v7030 = vunpack.c.h.b16 %v6943
    %v7031 = vunpack.c.l.b16 %v6944
    %v7032 = vunpack.c.h.b16 %v6944
    %v7033 = vunpack.c.l.b16 %v6945
    %v7034 = vunpack.c.h.b16 %v6945
    %v7035 = vunpack.c.l.b16 %v6946
    %v7036 = vunpack.c.h.b16 %v6946
    %v7037 = vunpack.c.l.b16 %v6947
    %v7038 = vunpack.c.h.b16 %v6947
    %v7039 = vunpack.c.l.b16 %v6948
    %v7040 = vunpack.c.h.b16 %v6948
    %v7041 = vunpack.c.l.b16 %v6949
    %v7042 = vunpack.c.h.b16 %v6949
    %v7043 = vunpack.c.l.b16 %v6950
    %v7044 = vunpack.c.h.b16 %v6950
    %v7045 = vunpack.c.l.b16 %v6951
    %v7046 = vunpack.c.h.b16 %v6951
    %v7047 = vunpack.c.l.b16 %v6952
    %v7048 = vunpack.c.h.b16 %v6952
    %v7049 = vpack.c.b16 %v6989, %v6985
    %v7050 = vpack.c.b16 %v6990, %v6986
    %v7051 = vpack.c.b16 %v6991, %v6987
    %v7052 = vpack.c.b16 %v6992, %v6988
    %v7053 = vpack.c.b16 %v6997, %v6993
    %v7054 = vpack.c.b16 %v6998, %v6994
    %v7055 = vpack.c.b16 %v6999, %v6995
    %v7056 = vpack.c.b16 %v7000, %v6996
    %v7057 = vpack.c.b16 %v7005, %v7001
    %v7058 = vpack.c.b16 %v7006, %v7002
    %v7059 = vpack.c.b16 %v7007, %v7003
    %v7060 = vpack.c.b16 %v7008, %v7004
    %v7061 = vpack.c.b16 %v7013, %v7009
    %v7062 = vpack.c.b16 %v7014, %v7010
    %v7063 = vpack.c.b16 %v7015, %v7011
    %v7064 = vpack.c.b16 %v7016, %v7012
    %v7065 = vpack.c.b16 %v7021, %v7017
    %v7066 = vpack.c.b16 %v7022, %v7018
    %v7067 = vpack.c.b16 %v7023, %v7019
    %v7068 = vpack.c.b16 %v7024, %v7020
    %v7069 = vpack.c.b16 %v7029, %v7025
    %v7070 = vpack.c.b16 %v7030, %v7026
    %v7071 = vpack.c.b16 %v7031, %v7027
    %v7072 = vpack.c.b16 %v7032, %v7028
    %v7073 = vpack.c.b16 %v7037, %v7033
    %v7074 = vpack.c.b16 %v7038, %v7034
    %v7075 = vpack.c.b16 %v7039, %v7035
    %v7076 = vpack.c.b16 %v7040, %v7036
    %v7077 = vpack.c.b16 %v7045, %v7041
    %v7078 = vpack.c.b16 %v7046, %v7042
    %v7079 = vpack.c.b16 %v7047, %v7043
    %v7080 = vpack.c.b16 %v7048, %v7044
    %7113 = vmatprep.subr.bf16.mxu0 %v7078
    %7114 = vmatpush1.bf16.msra.mxu0 %v7077
    %7115 = vmatprep.subr.bf16.mxu0 %v7074
    %7116 = vmatpush1.bf16.msra.mxu0 %v7073
    %7117 = vmatprep.subr.bf16.mxu0 %v7070
    %7118 = vmatpush1.bf16.msra.mxu0 %v7069
    %7119 = vmatprep.subr.bf16.mxu0 %v7066
    %7120 = vmatpush1.bf16.msra.mxu0 %v7065
    %7121 = vmatprep.subr.bf16.mxu0 %v7062
    %7122 = vmatpush1.bf16.msra.mxu0 %v7061
    %7123 = vmatprep.subr.bf16.mxu0 %v7058
    %7124 = vmatpush1.bf16.msra.mxu0 %v7057
    %7125 = vmatprep.subr.bf16.mxu0 %v7054
    %7126 = vmatpush1.bf16.msra.mxu0 %v7053
    %7127 = vmatprep.subr.bf16.mxu0 %v7050
    %7128 = vmatpush1.bf16.msra.mxu0 %v7049
    %7129 = vmatprep.subr.bf16.mxu0 0
    %7130 = vmatpush2.bf16.msra.mxu0 0
    %7131 = vmatprep.subr.bf16.mxu0 0
    %7132 = vmatpush2.bf16.msra.mxu0 0
    %7133 = vmatprep.subr.bf16.mxu0 0
    %7134 = vmatpush2.bf16.msra.mxu0 0
    %7135 = vmatprep.subr.bf16.mxu0 0
    %7136 = vmatpush2.bf16.msra.mxu0 0
    %7137 = vmatprep.subr.bf16.mxu0 0
    %7138 = vmatpush2.bf16.msra.mxu0 0
    %7139 = vmatprep.subr.bf16.mxu0 0
    %7140 = vmatpush2.bf16.msra.mxu0 0
    %7141 = vmatprep.subr.bf16.mxu0 0
    %7142 = vmatpush2.bf16.msra.mxu0 0
    %7143 = vmatprep.subr.bf16.mxu0 0
    %7144 = vmatpush2.bf16.msra.mxu0 0
    %7145 = vmatprep.mubr.bf16.mxu0 0
    %7146 = vmatmul.mubr.bf16.gmra.mxu0 0
    %v7147 = vpop.f32.mrf.mxu0
    %v7148 = vadd.f32 0.0, %v7147
    %v7149 = vpop.f32.mrf.mxu0
    %v7150 = vadd.f32 0.0, %v7149
    %v7151 = vpop.f32.mrf.mxu0
    %v7152 = vpop.f32.mrf.mxu0
    %7153 = vdwg.mxu0
    %7154 = vmatprep.subr.bf16.mxu0 %v7080
    %7155 = vmatpush1.bf16.msra.mxu0 %v7079
    %7156 = vmatprep.subr.bf16.mxu0 %v7076
    %7157 = vmatpush1.bf16.msra.mxu0 %v7075
    %7158 = vmatprep.subr.bf16.mxu0 %v7072
    %7159 = vmatpush1.bf16.msra.mxu0 %v7071
    %7160 = vmatprep.subr.bf16.mxu0 %v7068
    %7161 = vmatpush1.bf16.msra.mxu0 %v7067
    %7162 = vmatprep.subr.bf16.mxu0 %v7064
    %7163 = vmatpush1.bf16.msra.mxu0 %v7063
    %7164 = vmatprep.subr.bf16.mxu0 %v7060
    %7165 = vmatpush1.bf16.msra.mxu0 %v7059
    %7166 = vmatprep.subr.bf16.mxu0 %v7056
    %7167 = vmatpush1.bf16.msra.mxu0 %v7055
    %7168 = vmatprep.subr.bf16.mxu0 %v7052
    %7169 = vmatpush1.bf16.msra.mxu0 %v7051
    %7170 = vmatprep.subr.bf16.mxu0 0
    %7171 = vmatpush2.bf16.msra.mxu0 0
    %7172 = vmatprep.subr.bf16.mxu0 0
    %7173 = vmatpush2.bf16.msra.mxu0 0
    %7174 = vmatprep.subr.bf16.mxu0 0
    %7175 = vmatpush2.bf16.msra.mxu0 0
    %7176 = vmatprep.subr.bf16.mxu0 0
    %7177 = vmatpush2.bf16.msra.mxu0 0
    %7178 = vmatprep.subr.bf16.mxu0 0
    %7179 = vmatpush2.bf16.msra.mxu0 0
    %7180 = vmatprep.subr.bf16.mxu0 0
    %7181 = vmatpush2.bf16.msra.mxu0 0
    %7182 = vmatprep.subr.bf16.mxu0 0
    %7183 = vmatpush2.bf16.msra.mxu0 0
    %7184 = vmatprep.subr.bf16.mxu0 0
    %7185 = vmatpush2.bf16.msra.mxu0 0
    %7186 = vmatprep.mubr.bf16.mxu0 0
    %7187 = vmatmul.mubr.bf16.gmra.mxu0 0
    %v7188 = vpop.f32.mrf.mxu0
    %v7189 = vadd.f32 0.0, %v7188
    %v7190 = vpop.f32.mrf.mxu0
    %v7191 = vadd.f32 0.0, %v7190
    %v7192 = vpop.f32.mrf.mxu0
    %v7193 = vpop.f32.mrf.mxu0
    %7194 = vdwg.mxu0
    %v7195 = vadd.f32 %v6917, %v7148
    %v7196 = vadd.f32 %v6918, %v7150
    %v7197 = vadd.f32 %v6919, %v7189
    %v7198 = vadd.f32 %v6920, %v7191
    %v7199 = vmul.f32 %v7195, 0.5
    %v7200 = vtanh.pop %v7199
    %v7201 = vmul.f32 %v7200, 0.5
    %v7202 = vadd.f32 %v7201, 0.5
    %v7203 = vmul.f32 %v7196, 0.5
    %v7204 = vtanh.pop %v7203
    %v7205 = vmul.f32 %v7204, 0.5
    %v7206 = vadd.f32 %v7205, 0.5
    %v7207 = vtanh.pop %v7197
    %v7208 = vmul.f32 %v7198, 0.5
    %v7209 = vtanh.pop %v7208
    %v7210 = vmul.f32 %v7209, 0.5
    %v7211 = vadd.f32 %v7210, 0.5
    %v7212 = vmul.f32 %v7206, 0.0
    %v7213 = vmul.f32 %v7202, %v7207
    %v7214 = vadd.f32 %v7212, %v7213
    %v7215 = vtanh.pop %v7214
    %v7216 = vmul.f32 %v7211, %v7215
    %v7217 = vld [vmem:[#allocation3 + $0x20] sm:$0xff]
    %v7218 = vld [vmem:[#allocation3 + $0x28] sm:$0xff]
    %v7219 = vld [vmem:[#allocation3 + $0x30] sm:$0xff]
    %v7220 = vld [vmem:[#allocation3 + $0x38] sm:$0xff]
    %v7221 = vpack.c.bf16 %v7216, %v7216
    %7222 = vmatprep.subr.bf16.mxu0 %v7078
    %7223 = vmatpush1.bf16.msra.mxu0 %v7077
    %7224 = vmatprep.subr.bf16.mxu0 %v7074
    %7225 = vmatpush1.bf16.msra.mxu0 %v7073
    %7226 = vmatprep.subr.bf16.mxu0 %v7070
    %7227 = vmatpush1.bf16.msra.mxu0 %v7069
    %7228 = vmatprep.subr.bf16.mxu0 %v7066
    %7229 = vmatpush1.bf16.msra.mxu0 %v7065
    %7230 = vmatprep.subr.bf16.mxu0 %v7062
    %7231 = vmatpush1.bf16.msra.mxu0 %v7061
    %7232 = vmatprep.subr.bf16.mxu0 %v7058
    %7233 = vmatpush1.bf16.msra.mxu0 %v7057
    %7234 = vmatprep.subr.bf16.mxu0 %v7054
    %7235 = vmatpush1.bf16.msra.mxu0 %v7053
    %7236 = vmatprep.subr.bf16.mxu0 %v7050
    %7237 = vmatpush1.bf16.msra.mxu0 %v7049
    %7238 = vmatprep.subr.bf16.mxu0 0
    %7239 = vmatpush2.bf16.msra.mxu0 0
    %7240 = vmatprep.subr.bf16.mxu0 0
    %7241 = vmatpush2.bf16.msra.mxu0 0
    %7242 = vmatprep.subr.bf16.mxu0 0
    %7243 = vmatpush2.bf16.msra.mxu0 0
    %7244 = vmatprep.subr.bf16.mxu0 0
    %7245 = vmatpush2.bf16.msra.mxu0 0
    %7246 = vmatprep.subr.bf16.mxu0 0
    %7247 = vmatpush2.bf16.msra.mxu0 0
    %7248 = vmatprep.subr.bf16.mxu0 0
    %7249 = vmatpush2.bf16.msra.mxu0 0
    %7250 = vmatprep.subr.bf16.mxu0 0
    %7251 = vmatpush2.bf16.msra.mxu0 0
    %7252 = vmatprep.subr.bf16.mxu0 0
    %7253 = vmatpush2.bf16.msra.mxu0 0
    %7254 = vmatprep.mubr.bf16.mxu0 0
    %7255 = vmatmul.mubr.bf16.gmra.mxu0 %v7221
    %v7256 = vpop.f32.mrf.mxu0
    %v7257 = vadd.f32 0.0, %v7256
    %v7258 = vpop.f32.mrf.mxu0
    %v7259 = vadd.f32 0.0, %v7258
    %v7260 = vpop.f32.mrf.mxu0
    %v7261 = vpop.f32.mrf.mxu0
    %7262 = vdwg.mxu0
    %7263 = vmatprep.subr.bf16.mxu0 %v7080
    %7264 = vmatpush1.bf16.msra.mxu0 %v7079
    %7265 = vmatprep.subr.bf16.mxu0 %v7076
    %7266 = vmatpush1.bf16.msra.mxu0 %v7075
    %7267 = vmatprep.subr.bf16.mxu0 %v7072
    %7268 = vmatpush1.bf16.msra.mxu0 %v7071
    %7269 = vmatprep.subr.bf16.mxu0 %v7068
    %7270 = vmatpush1.bf16.msra.mxu0 %v7067
    %7271 = vmatprep.subr.bf16.mxu0 %v7064
    %7272 = vmatpush1.bf16.msra.mxu0 %v7063
    %7273 = vmatprep.subr.bf16.mxu0 %v7060
    %7274 = vmatpush1.bf16.msra.mxu0 %v7059
    %7275 = vmatprep.subr.bf16.mxu0 %v7056
    %7276 = vmatpush1.bf16.msra.mxu0 %v7055
    %7277 = vmatprep.subr.bf16.mxu0 %v7052
    %7278 = vmatpush1.bf16.msra.mxu0 %v7051
    %7279 = vmatprep.subr.bf16.mxu0 0
    %7280 = vmatpush2.bf16.msra.mxu0 0
    %7281 = vmatprep.subr.bf16.mxu0 0
    %7282 = vmatpush2.bf16.msra.mxu0 0
    %7283 = vmatprep.subr.bf16.mxu0 0
    %7284 = vmatpush2.bf16.msra.mxu0 0
    %7285 = vmatprep.subr.bf16.mxu0 0
    %7286 = vmatpush2.bf16.msra.mxu0 0
    %7287 = vmatprep.subr.bf16.mxu0 0
    %7288 = vmatpush2.bf16.msra.mxu0 0
    %7289 = vmatprep.subr.bf16.mxu0 0
    %7290 = vmatpush2.bf16.msra.mxu0 0
    %7291 = vmatprep.subr.bf16.mxu0 0
    %7292 = vmatpush2.bf16.msra.mxu0 0
    %7293 = vmatprep.subr.bf16.mxu0 0
    %7294 = vmatpush2.bf16.msra.mxu0 0
    %7295 = vmatprep.mubr.bf16.mxu0 0
    %7296 = vmatmul.mubr.bf16.gmra.mxu0 %v7221
    %v7297 = vpop.f32.mrf.mxu0
    %v7298 = vadd.f32 0.0, %v7297
    %v7299 = vpop.f32.mrf.mxu0
    %v7300 = vadd.f32 0.0, %v7299
    %v7301 = vpop.f32.mrf.mxu0
    %v7302 = vpop.f32.mrf.mxu0
    %7303 = vdwg.mxu0
    %v7304 = vadd.f32 %v7217, %v7257
    %v7305 = vadd.f32 %v7218, %v7259
    %v7306 = vadd.f32 %v7219, %v7298
    %v7307 = vadd.f32 %v7220, %v7300
    %v7308 = vmul.f32 %v7304, 0.5
    %v7309 = vtanh.pop %v7308
    %v7310 = vmul.f32 %v7309, 0.5
    %v7311 = vadd.f32 %v7310, 0.5
    %v7312 = vmul.f32 %v7305, 0.5
    %v7313 = vtanh.pop %v7312
    %v7314 = vmul.f32 %v7313, 0.5
    %v7315 = vadd.f32 %v7314, 0.5
    %v7316 = vtanh.pop %v7306
    %v7317 = vmul.f32 %v7307, 0.5
    %v7318 = vtanh.pop %v7317
    %v7319 = vmul.f32 %v7318, 0.5
    %v7320 = vadd.f32 %v7319, 0.5
    %v7321 = vmul.f32 %v7315, %v7214
    %v7322 = vmul.f32 %v7311, %v7316
    %v7323 = vadd.f32 %v7321, %v7322
    %v7324 = vtanh.pop %v7323
    %v7325 = vmul.f32 %v7320, %v7324
    %v7326 = vld [vmem:[#allocation3 + $0x40] sm:$0xff]
    %v7327 = vld [vmem:[#allocation3 + $0x48] sm:$0xff]
    %v7328 = vld [vmem:[#allocation3 + $0x50] sm:$0xff]
    %v7329 = vld [vmem:[#allocation3 + $0x58] sm:$0xff]
    %v7330 = vpack.c.bf16 %v7325, %v7325
    %7331 = vmatprep.subr.bf16.mxu0 %v7078
    %7332 = vmatpush1.bf16.msra.mxu0 %v7077
    %7333 = vmatprep.subr.bf16.mxu0 %v7074
    %7334 = vmatpush1.bf16.msra.mxu0 %v7073
    %7335 = vmatprep.subr.bf16.mxu0 %v7070
    %7336 = vmatpush1.bf16.msra.mxu0 %v7069
    %7337 = vmatprep.subr.bf16.mxu0 %v7066
    %7338 = vmatpush1.bf16.msra.mxu0 %v7065
    %7339 = vmatprep.subr.bf16.mxu0 %v7062
    %7340 = vmatpush1.bf16.msra.mxu0 %v7061
    %7341 = vmatprep.subr.bf16.mxu0 %v7058
    %7342 = vmatpush1.bf16.msra.mxu0 %v7057
    %7343 = vmatprep.subr.bf16.mxu0 %v7054
    %7344 = vmatpush1.bf16.msra.mxu0 %v7053
    %7345 = vmatprep.subr.bf16.mxu0 %v7050
    %7346 = vmatpush1.bf16.msra.mxu0 %v7049
    %7347 = vmatprep.subr.bf16.mxu0 0
    %7348 = vmatpush2.bf16.msra.mxu0 0
    %7349 = vmatprep.subr.bf16.mxu0 0
    %7350 = vmatpush2.bf16.msra.mxu0 0
    %7351 = vmatprep.subr.bf16.mxu0 0
    %7352 = vmatpush2.bf16.msra.mxu0 0
    %7353 = vmatprep.subr.bf16.mxu0 0
    %7354 = vmatpush2.bf16.msra.mxu0 0
    %7355 = vmatprep.subr.bf16.mxu0 0
    %7356 = vmatpush2.bf16.msra.mxu0 0
    %7357 = vmatprep.subr.bf16.mxu0 0
    %7358 = vmatpush2.bf16.msra.mxu0 0
    %7359 = vmatprep.subr.bf16.mxu0 0
    %7360 = vmatpush2.bf16.msra.mxu0 0
    %7361 = vmatprep.subr.bf16.mxu0 0
    %7362 = vmatpush2.bf16.msra.mxu0 0
    %7363 = vmatprep.mubr.bf16.mxu0 0
    %7364 = vmatmul.mubr.bf16.gmra.mxu0 %v7330
    %v7365 = vpop.f32.mrf.mxu0
    %v7366 = vadd.f32 0.0, %v7365
    %v7367 = vpop.f32.mrf.mxu0
    %v7368 = vadd.f32 0.0, %v7367
    %v7369 = vpop.f32.mrf.mxu0
    %v7370 = vpop.f32.mrf.mxu0
    %7371 = vdwg.mxu0
    %7372 = vmatprep.subr.bf16.mxu0 %v7080
    %7373 = vmatpush1.bf16.msra.mxu0 %v7079
    %7374 = vmatprep.subr.bf16.mxu0 %v7076
    %7375 = vmatpush1.bf16.msra.mxu0 %v7075
    %7376 = vmatprep.subr.bf16.mxu0 %v7072
    %7377 = vmatpush1.bf16.msra.mxu0 %v7071
    %7378 = vmatprep.subr.bf16.mxu0 %v7068
    %7379 = vmatpush1.bf16.msra.mxu0 %v7067
    %7380 = vmatprep.subr.bf16.mxu0 %v7064
    %7381 = vmatpush1.bf16.msra.mxu0 %v7063
    %7382 = vmatprep.subr.bf16.mxu0 %v7060
    %7383 = vmatpush1.bf16.msra.mxu0 %v7059
    %7384 = vmatprep.subr.bf16.mxu0 %v7056
    %7385 = vmatpush1.bf16.msra.mxu0 %v7055
    %7386 = vmatprep.subr.bf16.mxu0 %v7052
    %7387 = vmatpush1.bf16.msra.mxu0 %v7051
    %7388 = vmatprep.subr.bf16.mxu0 0
    %7389 = vmatpush2.bf16.msra.mxu0 0
    %7390 = vmatprep.subr.bf16.mxu0 0
    %7391 = vmatpush2.bf16.msra.mxu0 0
    %7392 = vmatprep.subr.bf16.mxu0 0
    %7393 = vmatpush2.bf16.msra.mxu0 0
    %7394 = vmatprep.subr.bf16.mxu0 0
    %7395 = vmatpush2.bf16.msra.mxu0 0
    %7396 = vmatprep.subr.bf16.mxu0 0
    %7397 = vmatpush2.bf16.msra.mxu0 0
    %7398 = vmatprep.subr.bf16.mxu0 0
    %7399 = vmatpush2.bf16.msra.mxu0 0
    %7400 = vmatprep.subr.bf16.mxu0 0
    %7401 = vmatpush2.bf16.msra.mxu0 0
    %7402 = vmatprep.subr.bf16.mxu0 0
    %7403 = vmatpush2.bf16.msra.mxu0 0
    %7404 = vmatprep.mubr.bf16.mxu0 0
    %7405 = vmatmul.mubr.bf16.gmra.mxu0 %v7330
    %v7406 = vpop.f32.mrf.mxu0
    %v7407 = vadd.f32 0.0, %v7406
    %v7408 = vpop.f32.mrf.mxu0
    %v7409 = vadd.f32 0.0, %v7408
    %v7410 = vpop.f32.mrf.mxu0
    %v7411 = vpop.f32.mrf.mxu0
    %7412 = vdwg.mxu0
    %v7413 = vadd.f32 %v7326, %v7366
    %v7414 = vadd.f32 %v7327, %v7368
    %v7415 = vadd.f32 %v7328, %v7407
    %v7416 = vadd.f32 %v7329, %v7409
    %v7417 = vmul.f32 %v7413, 0.5
    %v7418 = vtanh.pop %v7417
    %v7419 = vmul.f32 %v7418, 0.5
    %v7420 = vadd.f32 %v7419, 0.5
    %v7421 = vmul.f32 %v7414, 0.5
    %v7422 = vtanh.pop %v7421
    %v7423 = vmul.f32 %v7422, 0.5
    %v7424 = vadd.f32 %v7423, 0.5
    %v7425 = vtanh.pop %v7415
    %v7426 = vmul.f32 %v7416, 0.5
    %v7427 = vtanh.pop %v7426
    %v7428 = vmul.f32 %v7427, 0.5
    %v7429 = vadd.f32 %v7428, 0.5
    %v7430 = vmul.f32 %v7424, %v7323
    %v7431 = vmul.f32 %v7420, %v7425
    %v7432 = vadd.f32 %v7430, %v7431
    %v7433 = vtanh.pop %v7432
    %v7434 = vmul.f32 %v7429, %v7433
    %v7435 = vld [vmem:[#allocation3 + $0x60] sm:$0xff]
    %v7436 = vld [vmem:[#allocation3 + $0x68] sm:$0xff]
    %v7437 = vld [vmem:[#allocation3 + $0x70] sm:$0xff]
    %v7438 = vld [vmem:[#allocation3 + $0x78] sm:$0xff]
    %v7439 = vpack.c.bf16 %v7434, %v7434
    %7440 = vmatprep.subr.bf16.mxu0 %v7078
    %7441 = vmatpush1.bf16.msra.mxu0 %v7077
    %7442 = vmatprep.subr.bf16.mxu0 %v7074
    %7443 = vmatpush1.bf16.msra.mxu0 %v7073
    %7444 = vmatprep.subr.bf16.mxu0 %v7070
    %7445 = vmatpush1.bf16.msra.mxu0 %v7069
    %7446 = vmatprep.subr.bf16.mxu0 %v7066
    %7447 = vmatpush1.bf16.msra.mxu0 %v7065
    %7448 = vmatprep.subr.bf16.mxu0 %v7062
    %7449 = vmatpush1.bf16.msra.mxu0 %v7061
    %7450 = vmatprep.subr.bf16.mxu0 %v7058
    %7451 = vmatpush1.bf16.msra.mxu0 %v7057
    %7452 = vmatprep.subr.bf16.mxu0 %v7054
    %7453 = vmatpush1.bf16.msra.mxu0 %v7053
    %7454 = vmatprep.subr.bf16.mxu0 %v7050
    %7455 = vmatpush1.bf16.msra.mxu0 %v7049
    %7456 = vmatprep.subr.bf16.mxu0 0
    %7457 = vmatpush2.bf16.msra.mxu0 0
    %7458 = vmatprep.subr.bf16.mxu0 0
    %7459 = vmatpush2.bf16.msra.mxu0 0
    %7460 = vmatprep.subr.bf16.mxu0 0
    %7461 = vmatpush2.bf16.msra.mxu0 0
    %7462 = vmatprep.subr.bf16.mxu0 0
    %7463 = vmatpush2.bf16.msra.mxu0 0
    %7464 = vmatprep.subr.bf16.mxu0 0
    %7465 = vmatpush2.bf16.msra.mxu0 0
    %7466 = vmatprep.subr.bf16.mxu0 0
    %7467 = vmatpush2.bf16.msra.mxu0 0
    %7468 = vmatprep.subr.bf16.mxu0 0
    %7469 = vmatpush2.bf16.msra.mxu0 0
    %7470 = vmatprep.subr.bf16.mxu0 0
    %7471 = vmatpush2.bf16.msra.mxu0 0
    %7472 = vmatprep.mubr.bf16.mxu0 0
    %7473 = vmatmul.mubr.bf16.gmra.mxu0 %v7439
    %v7474 = vpop.f32.mrf.mxu0
    %v7475 = vadd.f32 0.0, %v7474
    %v7476 = vpop.f32.mrf.mxu0
    %v7477 = vadd.f32 0.0, %v7476
    %v7478 = vpop.f32.mrf.mxu0
    %v7479 = vpop.f32.mrf.mxu0
    %7480 = vdwg.mxu0
    %7481 = vmatprep.subr.bf16.mxu0 %v7080
    %7482 = vmatpush1.bf16.msra.mxu0 %v7079
    %7483 = vmatprep.subr.bf16.mxu0 %v7076
    %7484 = vmatpush1.bf16.msra.mxu0 %v7075
    %7485 = vmatprep.subr.bf16.mxu0 %v7072
    %7486 = vmatpush1.bf16.msra.mxu0 %v7071
    %7487 = vmatprep.subr.bf16.mxu0 %v7068
    %7488 = vmatpush1.bf16.msra.mxu0 %v7067
    %7489 = vmatprep.subr.bf16.mxu0 %v7064
    %7490 = vmatpush1.bf16.msra.mxu0 %v7063
    %7491 = vmatprep.subr.bf16.mxu0 %v7060
    %7492 = vmatpush1.bf16.msra.mxu0 %v7059
    %7493 = vmatprep.subr.bf16.mxu0 %v7056
    %7494 = vmatpush1.bf16.msra.mxu0 %v7055
    %7495 = vmatprep.subr.bf16.mxu0 %v7052
    %7496 = vmatpush1.bf16.msra.mxu0 %v7051
    %7497 = vmatprep.subr.bf16.mxu0 0
    %7498 = vmatpush2.bf16.msra.mxu0 0
    %7499 = vmatprep.subr.bf16.mxu0 0
    %7500 = vmatpush2.bf16.msra.mxu0 0
    %7501 = vmatprep.subr.bf16.mxu0 0
    %7502 = vmatpush2.bf16.msra.mxu0 0
    %7503 = vmatprep.subr.bf16.mxu0 0
    %7504 = vmatpush2.bf16.msra.mxu0 0
    %7505 = vmatprep.subr.bf16.mxu0 0
    %7506 = vmatpush2.bf16.msra.mxu0 0
    %7507 = vmatprep.subr.bf16.mxu0 0
    %7508 = vmatpush2.bf16.msra.mxu0 0
    %7509 = vmatprep.subr.bf16.mxu0 0
    %7510 = vmatpush2.bf16.msra.mxu0 0
    %7511 = vmatprep.subr.bf16.mxu0 0
    %7512 = vmatpush2.bf16.msra.mxu0 0
    %7513 = vmatprep.mubr.bf16.mxu0 0
    %7514 = vmatmul.mubr.bf16.gmra.mxu0 %v7439
    %v7515 = vpop.f32.mrf.mxu0
    %v7516 = vadd.f32 0.0, %v7515
    %v7517 = vpop.f32.mrf.mxu0
    %v7518 = vadd.f32 0.0, %v7517
    %v7519 = vpop.f32.mrf.mxu0
    %v7520 = vpop.f32.mrf.mxu0
    %7521 = vdwg.mxu0
    %v7522 = vadd.f32 %v7435, %v7475
    %v7523 = vadd.f32 %v7436, %v7477
    %v7524 = vadd.f32 %v7437, %v7516
    %v7525 = vadd.f32 %v7438, %v7518
    %v7526 = vmul.f32 %v7522, 0.5
    %v7527 = vtanh.pop %v7526
    %v7528 = vmul.f32 %v7527, 0.5
    %v7529 = vadd.f32 %v7528, 0.5
    %v7530 = vmul.f32 %v7523, 0.5
    %v7531 = vtanh.pop %v7530
    %v7532 = vmul.f32 %v7531, 0.5
    %v7533 = vadd.f32 %v7532, 0.5
    %v7534 = vtanh.pop %v7524
    %v7535 = vmul.f32 %v7525, 0.5
    %v7536 = vtanh.pop %v7535
    %v7537 = vmul.f32 %v7536, 0.5
    %v7538 = vadd.f32 %v7537, 0.5
    %v7539 = vmul.f32 %v7533, %v7432
    %v7540 = vmul.f32 %v7529, %v7534
    %v7541 = vadd.f32 %v7539, %v7540
    %v7542 = vtanh.pop %v7541
    %v7543 = vmul.f32 %v7538, %v7542
    %v7544 = vld [vmem:[#allocation3 + $0x80] sm:$0xff]
    %v7545 = vld [vmem:[#allocation3 + $0x88] sm:$0xff]
    %v7546 = vld [vmem:[#allocation3 + $0x90] sm:$0xff]
    %v7547 = vld [vmem:[#allocation3 + $0x98] sm:$0xff]
    %v7548 = vpack.c.bf16 %v7543, %v7543
    %7549 = vmatprep.subr.bf16.mxu0 %v7078
    %7550 = vmatpush1.bf16.msra.mxu0 %v7077
    %7551 = vmatprep.subr.bf16.mxu0 %v7074
    %7552 = vmatpush1.bf16.msra.mxu0 %v7073
    %7553 = vmatprep.subr.bf16.mxu0 %v7070
    %7554 = vmatpush1.bf16.msra.mxu0 %v7069
    %7555 = vmatprep.subr.bf16.mxu0 %v7066
    %7556 = vmatpush1.bf16.msra.mxu0 %v7065
    %7557 = vmatprep.subr.bf16.mxu0 %v7062
    %7558 = vmatpush1.bf16.msra.mxu0 %v7061
    %7559 = vmatprep.subr.bf16.mxu0 %v7058
    %7560 = vmatpush1.bf16.msra.mxu0 %v7057
    %7561 = vmatprep.subr.bf16.mxu0 %v7054
    %7562 = vmatpush1.bf16.msra.mxu0 %v7053
    %7563 = vmatprep.subr.bf16.mxu0 %v7050
    %7564 = vmatpush1.bf16.msra.mxu0 %v7049
    %7565 = vmatprep.subr.bf16.mxu0 0
    %7566 = vmatpush2.bf16.msra.mxu0 0
    %7567 = vmatprep.subr.bf16.mxu0 0
    %7568 = vmatpush2.bf16.msra.mxu0 0
    %7569 = vmatprep.subr.bf16.mxu0 0
    %7570 = vmatpush2.bf16.msra.mxu0 0
    %7571 = vmatprep.subr.bf16.mxu0 0
    %7572 = vmatpush2.bf16.msra.mxu0 0
    %7573 = vmatprep.subr.bf16.mxu0 0
    %7574 = vmatpush2.bf16.msra.mxu0 0
    %7575 = vmatprep.subr.bf16.mxu0 0
    %7576 = vmatpush2.bf16.msra.mxu0 0
    %7577 = vmatprep.subr.bf16.mxu0 0
    %7578 = vmatpush2.bf16.msra.mxu0 0
    %7579 = vmatprep.subr.bf16.mxu0 0
    %7580 = vmatpush2.bf16.msra.mxu0 0
    %7581 = vmatprep.mubr.bf16.mxu0 0
    %7582 = vmatmul.mubr.bf16.gmra.mxu0 %v7548
    %v7583 = vpop.f32.mrf.mxu0
    %v7584 = vadd.f32 0.0, %v7583
    %v7585 = vpop.f32.mrf.mxu0
    %v7586 = vadd.f32 0.0, %v7585
    %v7587 = vpop.f32.mrf.mxu0
    %v7588 = vpop.f32.mrf.mxu0
    %7589 = vdwg.mxu0
    %7590 = vmatprep.subr.bf16.mxu0 %v7080
    %7591 = vmatpush1.bf16.msra.mxu0 %v7079
    %7592 = vmatprep.subr.bf16.mxu0 %v7076
    %7593 = vmatpush1.bf16.msra.mxu0 %v7075
    %7594 = vmatprep.subr.bf16.mxu0 %v7072
    %7595 = vmatpush1.bf16.msra.mxu0 %v7071
    %7596 = vmatprep.subr.bf16.mxu0 %v7068
    %7597 = vmatpush1.bf16.msra.mxu0 %v7067
    %7598 = vmatprep.subr.bf16.mxu0 %v7064
    %7599 = vmatpush1.bf16.msra.mxu0 %v7063
    %7600 = vmatprep.subr.bf16.mxu0 %v7060
    %7601 = vmatpush1.bf16.msra.mxu0 %v7059
    %7602 = vmatprep.subr.bf16.mxu0 %v7056
    %7603 = vmatpush1.bf16.msra.mxu0 %v7055
    %7604 = vmatprep.subr.bf16.mxu0 %v7052
    %7605 = vmatpush1.bf16.msra.mxu0 %v7051
    %7606 = vmatprep.subr.bf16.mxu0 0
    %7607 = vmatpush2.bf16.msra.mxu0 0
    %7608 = vmatprep.subr.bf16.mxu0 0
    %7609 = vmatpush2.bf16.msra.mxu0 0
    %7610 = vmatprep.subr.bf16.mxu0 0
    %7611 = vmatpush2.bf16.msra.mxu0 0
    %7612 = vmatprep.subr.bf16.mxu0 0
    %7613 = vmatpush2.bf16.msra.mxu0 0
    %7614 = vmatprep.subr.bf16.mxu0 0
    %7615 = vmatpush2.bf16.msra.mxu0 0
    %7616 = vmatprep.subr.bf16.mxu0 0
    %7617 = vmatpush2.bf16.msra.mxu0 0
    %7618 = vmatprep.subr.bf16.mxu0 0
    %7619 = vmatpush2.bf16.msra.mxu0 0
    %7620 = vmatprep.subr.bf16.mxu0 0
    %7621 = vmatpush2.bf16.msra.mxu0 0
    %7622 = vmatprep.mubr.bf16.mxu0 0
    %7623 = vmatmul.mubr.bf16.gmra.mxu0 %v7548
    %v7624 = vpop.f32.mrf.mxu0
    %v7625 = vadd.f32 0.0, %v7624
    %v7626 = vpop.f32.mrf.mxu0
    %v7627 = vadd.f32 0.0, %v7626
    %v7628 = vpop.f32.mrf.mxu0
    %v7629 = vpop.f32.mrf.mxu0
    %7630 = vdwg.mxu0
    %v7631 = vadd.f32 %v7544, %v7584
    %v7632 = vadd.f32 %v7545, %v7586
    %v7633 = vadd.f32 %v7546, %v7625
    %v7634 = vadd.f32 %v7547, %v7627
    %v7635 = vmul.f32 %v7631, 0.5
    %v7636 = vtanh.pop %v7635
    %v7637 = vmul.f32 %v7636, 0.5
    %v7638 = vadd.f32 %v7637, 0.5
    %v7639 = vmul.f32 %v7632, 0.5
    %v7640 = vtanh.pop %v7639
    %v7641 = vmul.f32 %v7640, 0.5
    %v7642 = vadd.f32 %v7641, 0.5
    %v7643 = vtanh.pop %v7633
    %v7644 = vmul.f32 %v7634, 0.5
    %v7645 = vtanh.pop %v7644
    %v7646 = vmul.f32 %v7645, 0.5
    %v7647 = vadd.f32 %v7646, 0.5
    %v7648 = vmul.f32 %v7642, %v7541
    %v7649 = vmul.f32 %v7638, %v7643
    %v7650 = vadd.f32 %v7648, %v7649
    %v7651 = vtanh.pop %v7650
    %v7652 = vmul.f32 %v7647, %v7651
    %v7653 = vld [vmem:[#allocation3 + $0xa0] sm:$0xff]
    %v7654 = vld [vmem:[#allocation3 + $0xa8] sm:$0xff]
    %v7655 = vld [vmem:[#allocation3 + $0xb0] sm:$0xff]
    %v7656 = vld [vmem:[#allocation3 + $0xb8] sm:$0xff]
    %v7657 = vpack.c.bf16 %v7652, %v7652
    %7658 = vmatprep.subr.bf16.mxu0 %v7078
    %7659 = vmatpush1.bf16.msra.mxu0 %v7077
    %7660 = vmatprep.subr.bf16.mxu0 %v7074
    %7661 = vmatpush1.bf16.msra.mxu0 %v7073
    %7662 = vmatprep.subr.bf16.mxu0 %v7070
    %7663 = vmatpush1.bf16.msra.mxu0 %v7069
    %7664 = vmatprep.subr.bf16.mxu0 %v7066
    %7665 = vmatpush1.bf16.msra.mxu0 %v7065
    %7666 = vmatprep.subr.bf16.mxu0 %v7062
    %7667 = vmatpush1.bf16.msra.mxu0 %v7061
    %7668 = vmatprep.subr.bf16.mxu0 %v7058
    %7669 = vmatpush1.bf16.msra.mxu0 %v7057
    %7670 = vmatprep.subr.bf16.mxu0 %v7054
    %7671 = vmatpush1.bf16.msra.mxu0 %v7053
    %7672 = vmatprep.subr.bf16.mxu0 %v7050
    %7673 = vmatpush1.bf16.msra.mxu0 %v7049
    %7674 = vmatprep.subr.bf16.mxu0 0
    %7675 = vmatpush2.bf16.msra.mxu0 0
    %7676 = vmatprep.subr.bf16.mxu0 0
    %7677 = vmatpush2.bf16.msra.mxu0 0
    %7678 = vmatprep.subr.bf16.mxu0 0
    %7679 = vmatpush2.bf16.msra.mxu0 0
    %7680 = vmatprep.subr.bf16.mxu0 0
    %7681 = vmatpush2.bf16.msra.mxu0 0
    %7682 = vmatprep.subr.bf16.mxu0 0
    %7683 = vmatpush2.bf16.msra.mxu0 0
    %7684 = vmatprep.subr.bf16.mxu0 0
    %7685 = vmatpush2.bf16.msra.mxu0 0
    %7686 = vmatprep.subr.bf16.mxu0 0
    %7687 = vmatpush2.bf16.msra.mxu0 0
    %7688 = vmatprep.subr.bf16.mxu0 0
    %7689 = vmatpush2.bf16.msra.mxu0 0
    %7690 = vmatprep.mubr.bf16.mxu0 0
    %7691 = vmatmul.mubr.bf16.gmra.mxu0 %v7657
    %v7692 = vpop.f32.mrf.mxu0
    %v7693 = vadd.f32 0.0, %v7692
    %v7694 = vpop.f32.mrf.mxu0
    %v7695 = vadd.f32 0.0, %v7694
    %v7696 = vpop.f32.mrf.mxu0
    %v7697 = vpop.f32.mrf.mxu0
    %7698 = vdwg.mxu0
    %7699 = vmatprep.subr.bf16.mxu0 %v7080
    %7700 = vmatpush1.bf16.msra.mxu0 %v7079
    %7701 = vmatprep.subr.bf16.mxu0 %v7076
    %7702 = vmatpush1.bf16.msra.mxu0 %v7075
    %7703 = vmatprep.subr.bf16.mxu0 %v7072
    %7704 = vmatpush1.bf16.msra.mxu0 %v7071
    %7705 = vmatprep.subr.bf16.mxu0 %v7068
    %7706 = vmatpush1.bf16.msra.mxu0 %v7067
    %7707 = vmatprep.subr.bf16.mxu0 %v7064
    %7708 = vmatpush1.bf16.msra.mxu0 %v7063
    %7709 = vmatprep.subr.bf16.mxu0 %v7060
    %7710 = vmatpush1.bf16.msra.mxu0 %v7059
    %7711 = vmatprep.subr.bf16.mxu0 %v7056
    %7712 = vmatpush1.bf16.msra.mxu0 %v7055
    %7713 = vmatprep.subr.bf16.mxu0 %v7052
    %7714 = vmatpush1.bf16.msra.mxu0 %v7051
    %7715 = vmatprep.subr.bf16.mxu0 0
    %7716 = vmatpush2.bf16.msra.mxu0 0
    %7717 = vmatprep.subr.bf16.mxu0 0
    %7718 = vmatpush2.bf16.msra.mxu0 0
    %7719 = vmatprep.subr.bf16.mxu0 0
    %7720 = vmatpush2.bf16.msra.mxu0 0
    %7721 = vmatprep.subr.bf16.mxu0 0
    %7722 = vmatpush2.bf16.msra.mxu0 0
    %7723 = vmatprep.subr.bf16.mxu0 0
    %7724 = vmatpush2.bf16.msra.mxu0 0
    %7725 = vmatprep.subr.bf16.mxu0 0
    %7726 = vmatpush2.bf16.msra.mxu0 0
    %7727 = vmatprep.subr.bf16.mxu0 0
    %7728 = vmatpush2.bf16.msra.mxu0 0
    %7729 = vmatprep.subr.bf16.mxu0 0
    %7730 = vmatpush2.bf16.msra.mxu0 0
    %7731 = vmatprep.mubr.bf16.mxu0 0
    %7732 = vmatmul.mubr.bf16.gmra.mxu0 %v7657
    %v7733 = vpop.f32.mrf.mxu0
    %v7734 = vadd.f32 0.0, %v7733
    %v7735 = vpop.f32.mrf.mxu0
    %v7736 = vadd.f32 0.0, %v7735
    %v7737 = vpop.f32.mrf.mxu0
    %v7738 = vpop.f32.mrf.mxu0
    %7739 = vdwg.mxu0
    %v7740 = vadd.f32 %v7653, %v7693
    %v7741 = vadd.f32 %v7654, %v7695
    %v7742 = vadd.f32 %v7655, %v7734
    %v7743 = vadd.f32 %v7656, %v7736
    %v7744 = vmul.f32 %v7740, 0.5
    %v7745 = vtanh.pop %v7744
    %v7746 = vmul.f32 %v7745, 0.5
    %v7747 = vadd.f32 %v7746, 0.5
    %v7748 = vmul.f32 %v7741, 0.5
    %v7749 = vtanh.pop %v7748
    %v7750 = vmul.f32 %v7749, 0.5
    %v7751 = vadd.f32 %v7750, 0.5
    %v7752 = vtanh.pop %v7742
    %v7753 = vmul.f32 %v7743, 0.5
    %v7754 = vtanh.pop %v7753
    %v7755 = vmul.f32 %v7754, 0.5
    %v7756 = vadd.f32 %v7755, 0.5
    %v7757 = vmul.f32 %v7751, %v7650
    %v7758 = vmul.f32 %v7747, %v7752
    %v7759 = vadd.f32 %v7757, %v7758
    %v7760 = vtanh.pop %v7759
    %v7761 = vmul.f32 %v7756, %v7760
    %v7762 = vld [vmem:[#allocation3 + $0xc0] sm:$0xff]
    %v7763 = vld [vmem:[#allocation3 + $0xc8] sm:$0xff]
    %v7764 = vld [vmem:[#allocation3 + $0xd0] sm:$0xff]
    %v7765 = vld [vmem:[#allocation3 + $0xd8] sm:$0xff]
    %v7766 = vpack.c.bf16 %v7761, %v7761
    %7767 = vmatprep.subr.bf16.mxu0 %v7078
    %7768 = vmatpush1.bf16.msra.mxu0 %v7077
    %7769 = vmatprep.subr.bf16.mxu0 %v7074
    %7770 = vmatpush1.bf16.msra.mxu0 %v7073
    %7771 = vmatprep.subr.bf16.mxu0 %v7070
    %7772 = vmatpush1.bf16.msra.mxu0 %v7069
    %7773 = vmatprep.subr.bf16.mxu0 %v7066
    %7774 = vmatpush1.bf16.msra.mxu0 %v7065
    %7775 = vmatprep.subr.bf16.mxu0 %v7062
    %7776 = vmatpush1.bf16.msra.mxu0 %v7061
    %7777 = vmatprep.subr.bf16.mxu0 %v7058
    %7778 = vmatpush1.bf16.msra.mxu0 %v7057
    %7779 = vmatprep.subr.bf16.mxu0 %v7054
    %7780 = vmatpush1.bf16.msra.mxu0 %v7053
    %7781 = vmatprep.subr.bf16.mxu0 %v7050
    %7782 = vmatpush1.bf16.msra.mxu0 %v7049
    %7783 = vmatprep.subr.bf16.mxu0 0
    %7784 = vmatpush2.bf16.msra.mxu0 0
    %7785 = vmatprep.subr.bf16.mxu0 0
    %7786 = vmatpush2.bf16.msra.mxu0 0
    %7787 = vmatprep.subr.bf16.mxu0 0
    %7788 = vmatpush2.bf16.msra.mxu0 0
    %7789 = vmatprep.subr.bf16.mxu0 0
    %7790 = vmatpush2.bf16.msra.mxu0 0
    %7791 = vmatprep.subr.bf16.mxu0 0
    %7792 = vmatpush2.bf16.msra.mxu0 0
    %7793 = vmatprep.subr.bf16.mxu0 0
    %7794 = vmatpush2.bf16.msra.mxu0 0
    %7795 = vmatprep.subr.bf16.mxu0 0
    %7796 = vmatpush2.bf16.msra.mxu0 0
    %7797 = vmatprep.subr.bf16.mxu0 0
    %7798 = vmatpush2.bf16.msra.mxu0 0
    %7799 = vmatprep.mubr.bf16.mxu0 0
    %7800 = vmatmul.mubr.bf16.gmra.mxu0 %v7766
    %v7801 = vpop.f32.mrf.mxu0
    %v7802 = vadd.f32 0.0, %v7801
    %v7803 = vpop.f32.mrf.mxu0
    %v7804 = vadd.f32 0.0, %v7803
    %v7805 = vpop.f32.mrf.mxu0
    %v7806 = vpop.f32.mrf.mxu0
    %7807 = vdwg.mxu0
    %7808 = vmatprep.subr.bf16.mxu0 %v7080
    %7809 = vmatpush1.bf16.msra.mxu0 %v7079
    %7810 = vmatprep.subr.bf16.mxu0 %v7076
    %7811 = vmatpush1.bf16.msra.mxu0 %v7075
    %7812 = vmatprep.subr.bf16.mxu0 %v7072
    %7813 = vmatpush1.bf16.msra.mxu0 %v7071
    %7814 = vmatprep.subr.bf16.mxu0 %v7068
    %7815 = vmatpush1.bf16.msra.mxu0 %v7067
    %7816 = vmatprep.subr.bf16.mxu0 %v7064
    %7817 = vmatpush1.bf16.msra.mxu0 %v7063
    %7818 = vmatprep.subr.bf16.mxu0 %v7060
    %7819 = vmatpush1.bf16.msra.mxu0 %v7059
    %7820 = vmatprep.subr.bf16.mxu0 %v7056
    %7821 = vmatpush1.bf16.msra.mxu0 %v7055
    %7822 = vmatprep.subr.bf16.mxu0 %v7052
    %7823 = vmatpush1.bf16.msra.mxu0 %v7051
    %7824 = vmatprep.subr.bf16.mxu0 0
    %7825 = vmatpush2.bf16.msra.mxu0 0
    %7826 = vmatprep.subr.bf16.mxu0 0
    %7827 = vmatpush2.bf16.msra.mxu0 0
    %7828 = vmatprep.subr.bf16.mxu0 0
    %7829 = vmatpush2.bf16.msra.mxu0 0
    %7830 = vmatprep.subr.bf16.mxu0 0
    %7831 = vmatpush2.bf16.msra.mxu0 0
    %7832 = vmatprep.subr.bf16.mxu0 0
    %7833 = vmatpush2.bf16.msra.mxu0 0
    %7834 = vmatprep.subr.bf16.mxu0 0
    %7835 = vmatpush2.bf16.msra.mxu0 0
    %7836 = vmatprep.subr.bf16.mxu0 0
    %7837 = vmatpush2.bf16.msra.mxu0 0
    %7838 = vmatprep.subr.bf16.mxu0 0
    %7839 = vmatpush2.bf16.msra.mxu0 0
    %7840 = vmatprep.mubr.bf16.mxu0 0
    %7841 = vmatmul.mubr.bf16.gmra.mxu0 %v7766
    %v7842 = vpop.f32.mrf.mxu0
    %v7843 = vadd.f32 0.0, %v7842
    %v7844 = vpop.f32.mrf.mxu0
    %v7845 = vadd.f32 0.0, %v7844
    %v7846 = vpop.f32.mrf.mxu0
    %v7847 = vpop.f32.mrf.mxu0
    %7848 = vdwg.mxu0
    %v7849 = vadd.f32 %v7762, %v7802
    %v7850 = vadd.f32 %v7763, %v7804
    %v7851 = vadd.f32 %v7764, %v7843
    %v7852 = vadd.f32 %v7765, %v7845
    %v7853 = vmul.f32 %v7849, 0.5
    %v7854 = vtanh.pop %v7853
    %v7855 = vmul.f32 %v7854, 0.5
    %v7856 = vadd.f32 %v7855, 0.5
    %v7857 = vmul.f32 %v7850, 0.5
    %v7858 = vtanh.pop %v7857
    %v7859 = vmul.f32 %v7858, 0.5
    %v7860 = vadd.f32 %v7859, 0.5
    %v7861 = vtanh.pop %v7851
    %v7862 = vmul.f32 %v7852, 0.5
    %v7863 = vtanh.pop %v7862
    %v7864 = vmul.f32 %v7863, 0.5
    %v7865 = vadd.f32 %v7864, 0.5
    %v7866 = vmul.f32 %v7860, %v7759
    %v7867 = vmul.f32 %v7856, %v7861
    %v7868 = vadd.f32 %v7866, %v7867
    %v7869 = vtanh.pop %v7868
    %v7870 = vmul.f32 %v7865, %v7869
    %v7871 = vld [vmem:[#allocation3 + $0xe0] sm:$0xff]
    %v7872 = vld [vmem:[#allocation3 + $0xe8] sm:$0xff]
    %v7873 = vld [vmem:[#allocation3 + $0xf0] sm:$0xff]
    %v7874 = vld [vmem:[#allocation3 + $0xf8] sm:$0xff]
    %v7875 = vpack.c.bf16 %v7870, %v7870
    %7876 = vmatprep.subr.bf16.mxu0 %v7078
    %7877 = vmatpush1.bf16.msra.mxu0 %v7077
    %7878 = vmatprep.subr.bf16.mxu0 %v7074
    %7879 = vmatpush1.bf16.msra.mxu0 %v7073
    %7880 = vmatprep.subr.bf16.mxu0 %v7070
    %7881 = vmatpush1.bf16.msra.mxu0 %v7069
    %7882 = vmatprep.subr.bf16.mxu0 %v7066
    %7883 = vmatpush1.bf16.msra.mxu0 %v7065
    %7884 = vmatprep.subr.bf16.mxu0 %v7062
    %7885 = vmatpush1.bf16.msra.mxu0 %v7061
    %7886 = vmatprep.subr.bf16.mxu0 %v7058
    %7887 = vmatpush1.bf16.msra.mxu0 %v7057
    %7888 = vmatprep.subr.bf16.mxu0 %v7054
    %7889 = vmatpush1.bf16.msra.mxu0 %v7053
    %7890 = vmatprep.subr.bf16.mxu0 %v7050
    %7891 = vmatpush1.bf16.msra.mxu0 %v7049
    %7892 = vmatprep.subr.bf16.mxu0 0
    %7893 = vmatpush2.bf16.msra.mxu0 0
    %7894 = vmatprep.subr.bf16.mxu0 0
    %7895 = vmatpush2.bf16.msra.mxu0 0
    %7896 = vmatprep.subr.bf16.mxu0 0
    %7897 = vmatpush2.bf16.msra.mxu0 0
    %7898 = vmatprep.subr.bf16.mxu0 0
    %7899 = vmatpush2.bf16.msra.mxu0 0
    %7900 = vmatprep.subr.bf16.mxu0 0
    %7901 = vmatpush2.bf16.msra.mxu0 0
    %7902 = vmatprep.subr.bf16.mxu0 0
    %7903 = vmatpush2.bf16.msra.mxu0 0
    %7904 = vmatprep.subr.bf16.mxu0 0
    %7905 = vmatpush2.bf16.msra.mxu0 0
    %7906 = vmatprep.subr.bf16.mxu0 0
    %7907 = vmatpush2.bf16.msra.mxu0 0
    %7908 = vmatprep.mubr.bf16.mxu0 0
    %7909 = vmatmul.mubr.bf16.gmra.mxu0 %v7875
    %v7910 = vpop.f32.mrf.mxu0
    %v7911 = vadd.f32 0.0, %v7910
    %v7912 = vpop.f32.mrf.mxu0
    %v7913 = vadd.f32 0.0, %v7912
    %v7914 = vpop.f32.mrf.mxu0
    %v7915 = vpop.f32.mrf.mxu0
    %7916 = vdwg.mxu0
    %7917 = vmatprep.subr.bf16.mxu0 %v7080
    %7918 = vmatpush1.bf16.msra.mxu0 %v7079
    %7919 = vmatprep.subr.bf16.mxu0 %v7076
    %7920 = vmatpush1.bf16.msra.mxu0 %v7075
    %7921 = vmatprep.subr.bf16.mxu0 %v7072
    %7922 = vmatpush1.bf16.msra.mxu0 %v7071
    %7923 = vmatprep.subr.bf16.mxu0 %v7068
    %7924 = vmatpush1.bf16.msra.mxu0 %v7067
    %7925 = vmatprep.subr.bf16.mxu0 %v7064
    %7926 = vmatpush1.bf16.msra.mxu0 %v7063
    %7927 = vmatprep.subr.bf16.mxu0 %v7060
    %7928 = vmatpush1.bf16.msra.mxu0 %v7059
    %7929 = vmatprep.subr.bf16.mxu0 %v7056
    %7930 = vmatpush1.bf16.msra.mxu0 %v7055
    %7931 = vmatprep.subr.bf16.mxu0 %v7052
    %7932 = vmatpush1.bf16.msra.mxu0 %v7051
    %7933 = vmatprep.subr.bf16.mxu0 0
    %7934 = vmatpush2.bf16.msra.mxu0 0
    %7935 = vmatprep.subr.bf16.mxu0 0
    %7936 = vmatpush2.bf16.msra.mxu0 0
    %7937 = vmatprep.subr.bf16.mxu0 0
    %7938 = vmatpush2.bf16.msra.mxu0 0
    %7939 = vmatprep.subr.bf16.mxu0 0
    %7940 = vmatpush2.bf16.msra.mxu0 0
    %7941 = vmatprep.subr.bf16.mxu0 0
    %7942 = vmatpush2.bf16.msra.mxu0 0
    %7943 = vmatprep.subr.bf16.mxu0 0
    %7944 = vmatpush2.bf16.msra.mxu0 0
    %7945 = vmatprep.subr.bf16.mxu0 0
    %7946 = vmatpush2.bf16.msra.mxu0 0
    %7947 = vmatprep.subr.bf16.mxu0 0
    %7948 = vmatpush2.bf16.msra.mxu0 0
    %7949 = vmatprep.mubr.bf16.mxu0 0
    %7950 = vmatmul.mubr.bf16.gmra.mxu0 %v7875
    %v7951 = vpop.f32.mrf.mxu0
    %v7952 = vadd.f32 0.0, %v7951
    %v7953 = vpop.f32.mrf.mxu0
    %v7954 = vadd.f32 0.0, %v7953
    %v7955 = vpop.f32.mrf.mxu0
    %v7956 = vpop.f32.mrf.mxu0
    %7957 = vdwg.mxu0
    %v7958 = vadd.f32 %v7871, %v7911
    %v7959 = vadd.f32 %v7872, %v7913
    %v7960 = vadd.f32 %v7873, %v7952
    %v7961 = vadd.f32 %v7874, %v7954
    %v7962 = vmul.f32 %v7958, 0.5
    %v7963 = vtanh.pop %v7962
    %v7964 = vmul.f32 %v7963, 0.5
    %v7965 = vadd.f32 %v7964, 0.5
    %v7966 = vmul.f32 %v7959, 0.5
    %v7967 = vtanh.pop %v7966
    %v7968 = vmul.f32 %v7967, 0.5
    %v7969 = vadd.f32 %v7968, 0.5
    %v7970 = vtanh.pop %v7960
    %v7971 = vmul.f32 %v7961, 0.5
    %v7972 = vtanh.pop %v7971
    %v7973 = vmul.f32 %v7972, 0.5
    %v7974 = vadd.f32 %v7973, 0.5
    %v7975 = vmul.f32 %v7969, %v7868
    %v7976 = vmul.f32 %v7965, %v7970
    %v7977 = vadd.f32 %v7975, %v7976
    %v7978 = vtanh.pop %v7977
    %v7979 = vmul.f32 %v7974, %v7978
    %v7980 = vpack.c.bf16 %v7979, %v7979
    %v7981 = vld [vmem:[%s10] sm:$0xf]
    %v7982 = vld [vmem:[%s10 + $0x4] sm:$0xf]
    %v7983 = vld [vmem:[%s10 + $0x8] sm:$0xf]
    %v7984 = vld [vmem:[%s10 + $0xc] sm:$0xf]
    %v7985 = vld [vmem:[%s10 + $0x10] sm:$0xf]
    %v7986 = vld [vmem:[%s10 + $0x14] sm:$0xf]
    %v7987 = vld [vmem:[%s10 + $0x18] sm:$0xf]
    %v7988 = vld [vmem:[%s10 + $0x1c] sm:$0xf]
    %v7989 = vld [vmem:[%s10 + $0x20] sm:$0xf]
    %v7990 = vld [vmem:[%s10 + $0x24] sm:$0xf]
    %v7991 = vld [vmem:[%s10 + $0x28] sm:$0xf]
    %v7992 = vld [vmem:[%s10 + $0x2c] sm:$0xf]
    %v7993 = vld [vmem:[%s10 + $0x30] sm:$0xf]
    %v7994 = vld [vmem:[%s10 + $0x34] sm:$0xf]
    %v7995 = vld [vmem:[%s10 + $0x38] sm:$0xf]
    %v7996 = vld [vmem:[%s10 + $0x3c] sm:$0xf]
    %v7997 = vld [vmem:[%s11] sm:$0x1]
    %v7999 = vlaneseq
    %v8000 = vshrl.u32 %v7999, 7
    %v8001 = vsub.s32 0, %v8000
    %v8002 = vrot.slane %v7997, %v8001
    %v8020 = vunpack.c.l.b16 %v7981
    %v8021 = vunpack.c.l.b16 %v7982
    %v8022 = vunpack.c.l.b16 %v7983
    %v8023 = vunpack.c.l.b16 %v7984
    %v8024 = vunpack.c.l.b16 %v7985
    %v8025 = vunpack.c.l.b16 %v7986
    %v8026 = vunpack.c.l.b16 %v7987
    %v8027 = vunpack.c.l.b16 %v7988
    %v8028 = vunpack.c.l.b16 %v7989
    %v8029 = vunpack.c.l.b16 %v7990
    %v8030 = vunpack.c.l.b16 %v7991
    %v8031 = vunpack.c.l.b16 %v7992
    %v8032 = vunpack.c.l.b16 %v7993
    %v8033 = vunpack.c.l.b16 %v7994
    %v8034 = vunpack.c.l.b16 %v7995
    %v8035 = vunpack.c.l.b16 %v7996
    %v8036 = vpack.c.b16 %v8021, %v8020
    %v8037 = vpack.c.b16 %v8023, %v8022
    %v8038 = vpack.c.b16 %v8025, %v8024
    %v8039 = vpack.c.b16 %v8027, %v8026
    %v8040 = vpack.c.b16 %v8029, %v8028
    %v8041 = vpack.c.b16 %v8031, %v8030
    %v8042 = vpack.c.b16 %v8033, %v8032
    %v8043 = vpack.c.b16 %v8035, %v8034
    %8052 = vmatprep.subr.bf16.mxu0 0
    %8053 = vmatpush1.bf16.msra.mxu0 %v8043
    %8054 = vmatprep.subr.bf16.mxu0 0
    %8055 = vmatpush1.bf16.msra.mxu0 %v8042
    %8056 = vmatprep.subr.bf16.mxu0 0
    %8057 = vmatpush1.bf16.msra.mxu0 %v8041
    %8058 = vmatprep.subr.bf16.mxu0 0
    %8059 = vmatpush1.bf16.msra.mxu0 %v8040
    %8060 = vmatprep.subr.bf16.mxu0 0
    %8061 = vmatpush1.bf16.msra.mxu0 %v8039
    %8062 = vmatprep.subr.bf16.mxu0 0
    %8063 = vmatpush1.bf16.msra.mxu0 %v8038
    %8064 = vmatprep.subr.bf16.mxu0 0
    %8065 = vmatpush1.bf16.msra.mxu0 %v8037
    %8066 = vmatprep.subr.bf16.mxu0 0
    %8067 = vmatpush1.bf16.msra.mxu0 %v8036
    %8068 = vmatprep.subr.bf16.mxu0 0
    %8069 = vmatpush2.bf16.msra.mxu0 0
    %8070 = vmatprep.subr.bf16.mxu0 0
    %8071 = vmatpush2.bf16.msra.mxu0 0
    %8072 = vmatprep.subr.bf16.mxu0 0
    %8073 = vmatpush2.bf16.msra.mxu0 0
    %8074 = vmatprep.subr.bf16.mxu0 0
    %8075 = vmatpush2.bf16.msra.mxu0 0
    %8076 = vmatprep.subr.bf16.mxu0 0
    %8077 = vmatpush2.bf16.msra.mxu0 0
    %8078 = vmatprep.subr.bf16.mxu0 0
    %8079 = vmatpush2.bf16.msra.mxu0 0
    %8080 = vmatprep.subr.bf16.mxu0 0
    %8081 = vmatpush2.bf16.msra.mxu0 0
    %8082 = vmatprep.subr.bf16.mxu0 0
    %8083 = vmatpush2.bf16.msra.mxu0 0
    %8084 = vmatprep.mubr.bf16.mxu0 0
    %8085 = vmatmul.mubr.bf16.gmra.mxu0 %v7980
    %v8086 = vpop.f32.mrf.mxu0
    %v8087 = vadd.f32 %v8002, %v8086
    %v8088 = vpop.f32.mrf.mxu0
    %v8089 = vpop.f32.mrf.mxu0
    %v8090 = vpop.f32.mrf.mxu0
    %8091 = vdwg.mxu0
    %v8092 = vmax.f32 %v8087, 0.0
    %v8093 = vpack.c.bf16 %v8092, %v8092
    %v8094 = vld [vmem:[%s12] sm:$0xf]
    %v8095 = vld [vmem:[%s12 + $0x4] sm:$0xf]
    %v8096 = vld [vmem:[%s12 + $0x8] sm:$0xf]
    %v8097 = vld [vmem:[%s12 + $0xc] sm:$0xf]
    %v8098 = vld [vmem:[%s12 + $0x10] sm:$0xf]
    %v8099 = vld [vmem:[%s12 + $0x14] sm:$0xf]
    %v8100 = vld [vmem:[%s12 + $0x18] sm:$0xf]
    %v8101 = vld [vmem:[%s12 + $0x1c] sm:$0xf]
    %v8102 = vld [vmem:[#allocation4] sm:$0x1]
    %v8104 = vlaneseq
    %v8105 = vshrl.u32 %v8104, 7
    %v8106 = vsub.s32 0, %v8105
    %v8107 = vrot.slane %v8102, %v8106
    %v8117 = vunpack.c.l.b16 %v8094
    %v8118 = vunpack.c.l.b16 %v8095
    %v8119 = vunpack.c.l.b16 %v8096
    %v8120 = vunpack.c.l.b16 %v8097
    %v8121 = vunpack.c.l.b16 %v8098
    %v8122 = vunpack.c.l.b16 %v8099
    %v8123 = vunpack.c.l.b16 %v8100
    %v8124 = vunpack.c.l.b16 %v8101
    %v8125 = vpack.c.b16 %v8118, %v8117
    %v8126 = vpack.c.b16 %v8120, %v8119
    %v8127 = vpack.c.b16 %v8122, %v8121
    %v8128 = vpack.c.b16 %v8124, %v8123
    %vm8133 = vcmask 523264
    %v8135 = vsel %vm8133, %v8093, 0
    %8137 = vmatprep.subr.bf16.mxu0 0
    %8138 = vmatpush1.bf16.msra.mxu0 0
    %8139 = vmatprep.subr.bf16.mxu0 0
    %8140 = vmatpush1.bf16.msra.mxu0 0
    %8141 = vmatprep.subr.bf16.mxu0 0
    %8142 = vmatpush1.bf16.msra.mxu0 0
    %8143 = vmatprep.subr.bf16.mxu0 0
    %8144 = vmatpush1.bf16.msra.mxu0 0
    %8145 = vmatprep.subr.bf16.mxu0 0
    %8146 = vmatpush1.bf16.msra.mxu0 %v8128
    %8147 = vmatprep.subr.bf16.mxu0 0
    %8148 = vmatpush1.bf16.msra.mxu0 %v8127
    %8149 = vmatprep.subr.bf16.mxu0 0
    %8150 = vmatpush1.bf16.msra.mxu0 %v8126
    %8151 = vmatprep.subr.bf16.mxu0 0
    %8152 = vmatpush1.bf16.msra.mxu0 %v8125
    %8153 = vmatprep.subr.bf16.mxu0 0
    %8154 = vmatpush2.bf16.msra.mxu0 0
    %8155 = vmatprep.subr.bf16.mxu0 0
    %8156 = vmatpush2.bf16.msra.mxu0 0
    %8157 = vmatprep.subr.bf16.mxu0 0
    %8158 = vmatpush2.bf16.msra.mxu0 0
    %8159 = vmatprep.subr.bf16.mxu0 0
    %8160 = vmatpush2.bf16.msra.mxu0 0
    %8161 = vmatprep.subr.bf16.mxu0 0
    %8162 = vmatpush2.bf16.msra.mxu0 0
    %8163 = vmatprep.subr.bf16.mxu0 0
    %8164 = vmatpush2.bf16.msra.mxu0 0
    %8165 = vmatprep.subr.bf16.mxu0 0
    %8166 = vmatpush2.bf16.msra.mxu0 0
    %8167 = vmatprep.subr.bf16.mxu0 0
    %8168 = vmatpush2.bf16.msra.mxu0 0
    %8169 = vmatprep.mubr.bf16.mxu0 0
    %8170 = vmatmul.mubr.bf16.gmra.mxu0 %v8135
    %v8171 = vpop.f32.mrf.mxu0
    %v8172 = vadd.f32 %v8107, %v8171
    %v8173 = vpop.f32.mrf.mxu0
    %v8174 = vpop.f32.mrf.mxu0
    %v8175 = vpop.f32.mrf.mxu0
    %8176 = vdwg.mxu0
    %vm8177 = vcmask 7168
    %8178 = vst.msk [vmem:[%s14] sm:$0xff] %vm8177, %v8172
    // Predicated region
    $region78: #{tpu_custom_call.1} parent=1 // pred_check
      _
    $region79: #{tpu_custom_call.1} parent=1 // pred_check_branch
      %8180 = sbr.rel (0) target = $region81
    $region80: #{tpu_custom_call.1} parent=1 // pred_region
      _
    $region81: #{tpu_custom_call.1} parent=1 // pred_fallthru
      _
    // Predicated region
    $region82: #{tpu_custom_call.1} parent=1 // pred_check
      _
    $region83: #{tpu_custom_call.1} parent=1 // pred_check_branch
      %8182 = sbr.rel (0) target = $region85
    $region84: #{tpu_custom_call.1} parent=1 // pred_region
      _
    $region85: #{tpu_custom_call.1} parent=1 // pred_fallthru
      _
    %8183 = vsyncpa [#allocation6], 1
    %8184 = vsyncpa [#allocation8], 1
    %8185 = vsyncpa [#allocation11], 1

</llo_original>
